<compile_context>
chip_gen: v7x
topology: tpu7x:2x2x1
jax: 0.10.0
libtpu: 0.0.40
codegen_flags: <defaults>
</compile_context>

<pallas_src>
import functools

import jax
import jax.numpy as jnp
import numpy as np
from jax.experimental import pallas as pl
from jax.experimental.pallas import tpu as pltpu


@functools.lru_cache(maxsize=None)
def _bilinear_resize_matrix(in_size: int, out_size: int) -> np.ndarray:
    """R of shape (out, in): out = R @ in, PyTorch bilinear align_corners=False.
    Built host-side with numpy so it is computed once per (in, out) pair and
    constant-folds under jit."""
    scale = in_size / out_size
    i = np.arange(out_size, dtype=np.float64)
    src = (i + 0.5) * scale - 0.5
    src = np.maximum(src, 0.0)                       # PyTorch clamps negative src to 0
    i0 = np.clip(np.floor(src).astype(np.int64), 0, in_size - 1)
    i1 = np.minimum(i0 + 1, in_size - 1)
    w1 = (src - i0).astype(np.float32)
    w0 = 1.0 - w1
    R = np.zeros((out_size, in_size), np.float32)
    rows = np.arange(out_size)
    R[rows, i0] += w0
    R[rows, i1] += w1
    return R


def _kernel(x_ref, w_ref, b_ref, rwt_ref, rh_ref, o_ref, lp_ref, a_ref):
    # x_ref  : (Bb, D, H*W)      w_ref : (C, D)     b_ref : (C, 1)
    # rwt_ref: (W, S)  (= Rw^T)  rh_ref: (S, H)  (= Rh)
    # o_ref  : (Bb, C, S, S)
    # lp_ref : (C, H*W) scratch  a_ref : (C, H, S) scratch
    bb = x_ref.shape[0]
    c = w_ref.shape[0]
    w_in = rwt_ref.shape[0]
    h_in = rh_ref.shape[1]

    # Hoist constant loads out of the batch loop.
    w_mat = w_ref[...]
    bias = b_ref[...]
    rwt = rwt_ref[...]
    rh = rh_ref[...]

    for b in range(bb):                                   # static unroll over the local batch
        # 1x1 conv as one lane-dense MXU matmul: (C, D) @ (D, H*W) -> (C, H*W)
        logits = jnp.dot(w_mat, x_ref[b], preferred_element_type=jnp.float32) + bias
        # numerically-stable log-softmax over the channel (sublane) axis
        mx = jnp.max(logits, axis=0, keepdims=True)
        lse = jnp.log(jnp.sum(jnp.exp(logits - mx), axis=0, keepdims=True)) + mx
        lp_ref[...] = logits - lse                        # (C, H*W), VMEM-resident

        # Separable bilinear resize (align_corners=False): only 2-D dots + ref slices.
        # stage 1: resize along W.  For each input row h: (C, W) @ (W, S) -> (C, S)
        for h in range(h_in):
            a_ref[:, h, :] = jnp.dot(lp_ref[:, h * w_in:(h + 1) * w_in], rwt,
                                     preferred_element_type=jnp.float32)
        # stage 2: resize along H.  For each class c: (S, H) @ (H, S) -> (S, S)
        for ch in range(c):
            o_ref[b, ch] = jnp.dot(rh, a_ref[ch],
                                   preferred_element_type=jnp.float32).astype(o_ref.dtype)


def _padded_vmem_bytes(shape, itemsize=4):
    """Bytes of one VMEM buffer with (8, 128) tile padding on the last two dims."""
    s = list(shape) if len(shape) >= 2 else [1] + list(shape)
    s[-1] = -(-s[-1] // 128) * 128
    s[-2] = -(-s[-2] // 8) * 8
    n = 1
    for d in s:
        n *= d
    return n * itemsize


def _grid_batches(batch: int) -> int:
    """Grid steps for the batch axis.
    Multi-TensorCore chips (v7x: 2 TCs) -> parallel batch axis, one slice per core.
    Single-TC chips (v5e/v6e) -> fold the whole batch into one grid step."""
    try:
        kind = jax.devices()[0].device_kind.lower()
    except Exception:
        kind = ""
    n_tc = 2 if "v7" in kind else 1
    return n_tc if (n_tc > 1 and batch % n_tc == 0) else 1


def resize_and_classify(x_nchw, conv_w, conv_b, size: int):
    """x_nchw: (B, D, H, W); conv_w: (C, D, 1, 1); conv_b: (C,). Returns (B, C, size, size)."""
    B, D, H, W = x_nchw.shape
    C = conv_w.shape[0]
    HW = H * W
    S = size

    # Layout plumbing is pure reshape (no HBM transposes).
    x_t = x_nchw.reshape(B, D, HW).astype(jnp.float32)                # (B, D, HW)
    w_mat = conv_w[:, :, 0, 0].astype(jnp.float32)                    # (C, D)
    b_mat = conv_b.reshape(C, 1).astype(jnp.float32)                  # (C, 1)

    # Separable resize operators, built host-side once per (H, W, size); ~4 KB total,
    # VMEM-resident across all grid steps (constant block index).
    rh = jnp.asarray(_bilinear_resize_matrix(H, S))                   # (S, H)
    rwt = jnp.asarray(_bilinear_resize_matrix(W, S).T)                # (W, S)

    nb = _grid_batches(B)
    Bb = B // nb

    flops = 2 * B * (C * D * HW + C * H * W * S + C * S * H * S)
    bytes_accessed = 4 * (B * D * HW + C * D + C + W * S + S * H + B * C * S * S)
    cost = pl.CostEstimate(flops=flops,
                           transcendentals=B * HW * (C + 1),
                           bytes_accessed=bytes_accessed)

    # VMEM budget from the real block/scratch footprints (double-buffered blocks) + slack.
    block_bytes = (_padded_vmem_bytes((Bb, D, HW)) + _padded_vmem_bytes((Bb, C, S, S))
                   + _padded_vmem_bytes((C, D)) + _padded_vmem_bytes((C, 1))
                   + _padded_vmem_bytes((W, S)) + _padded_vmem_bytes((S, H)))
    scratch_bytes = _padded_vmem_bytes((C, HW)) + _padded_vmem_bytes((C, H, S))
    vmem_limit = max(2 * block_bytes + scratch_bytes + (2 << 20), 4 << 20)

    out = pl.pallas_call(
        _kernel,
        out_shape=jax.ShapeDtypeStruct((B, C, S, S), jnp.float32),
        grid_spec=pltpu.PrefetchScalarGridSpec(
            num_scalar_prefetch=0,
            grid=(nb,),
            in_specs=[
                pl.BlockSpec((Bb, D, HW), lambda i: (i, 0, 0)),
                # constant operands: same block every step -> stay VMEM-resident
                pl.BlockSpec((C, D), lambda i: (0, 0)),
                pl.BlockSpec((C, 1), lambda i: (0, 0)),
                pl.BlockSpec((W, S), lambda i: (0, 0)),
                pl.BlockSpec((S, H), lambda i: (0, 0)),
            ],
            out_specs=pl.BlockSpec((Bb, C, S, S), lambda i: (i, 0, 0, 0)),
            scratch_shapes=[
                pltpu.VMEM((C, HW), jnp.float32),      # log-probs
                pltpu.VMEM((C, H, S), jnp.float32),    # W-resized intermediate
            ],
        ),
        compiler_params=pltpu.CompilerParams(
            dimension_semantics=("parallel",),
            vmem_limit_bytes=int(vmem_limit)),
        cost_estimate=cost,
    )(x_t, w_mat, b_mat, rwt, rh)

    return out


def _reference(x_nchw, conv_w, conv_b, size: int):
    """Pure-JAX reference of the PyTorch forward, for a correctness check."""
    B, D, H, W = x_nchw.shape
    C = conv_w.shape[0]
    logits = jnp.einsum('bdhw,cd->bchw', x_nchw.astype(jnp.float32),
                        conv_w[:, :, 0, 0].astype(jnp.float32)) + conv_b.reshape(1, C, 1, 1)
    logp = jax.nn.log_softmax(logits, axis=1)
    Rh = jnp.asarray(_bilinear_resize_matrix(H, size))
    Rw = jnp.asarray(_bilinear_resize_matrix(W, size))
    return jnp.einsum('ih,bchw,jw->bcij', Rh, logp, Rw)


if __name__ == "__main__":
    # small shapes consistent with the module: dim=32 input channels,
    # n_classes=8, 16x16 input resized to 32x32
    B, D, H, W = 2, 32, 16, 16
    n_classes, size = 8, 32

    key = jax.random.PRNGKey(0)
    kx, kw, kb = jax.random.split(key, 3)
    x = jax.random.normal(kx, (B, D, H, W), jnp.float32)
    conv_w = jax.random.normal(kw, (n_classes, D, 1, 1), jnp.float32) * 0.1
    conv_b = jax.random.normal(kb, (n_classes,), jnp.float32) * 0.1

    run = jax.jit(resize_and_classify, static_argnums=3)
    out = jax.block_until_ready(run(x, conv_w, conv_b, size))

    ref = jax.block_until_ready(_reference(x, conv_w, conv_b, size))
    assert out.shape == (B, n_classes, size, size)
    assert jnp.allclose(out, ref, rtol=1e-4, atol=1e-5), float(jnp.max(jnp.abs(out - ref)))

    print("KERNEL_OK")
</pallas_src>

<mosaic_0001>
module attributes {stable_mosaic.version = 11 : i64} {
  func.func @_kernel(%arg0: i32, %arg1: memref<2x32x256xf32, #tpu.memory_space<vmem>>, %arg2: memref<8x32xf32, #tpu.memory_space<vmem>>, %arg3: memref<8x1xf32, #tpu.memory_space<vmem>>, %arg4: memref<16x32xf32, #tpu.memory_space<vmem>>, %arg5: memref<32x16xf32, #tpu.memory_space<vmem>>, %arg6: memref<2x8x32x32xf32, #tpu.memory_space<vmem>>, %arg7: memref<8x256xf32, #tpu.memory_space<vmem>>, %arg8: memref<8x16x32xf32, #tpu.memory_space<vmem>>) attributes {dimension_semantics = [#tpu.dimension_semantics<parallel>], iteration_bounds = array<i64: 1>, scalar_prefetch = 0 : i64, scratch_operands = 2 : i64, tpu.core_type = #tpu.core_type<tc>, window_params = [{transform_indices = @transform_0, window_bounds = array<i64: 2, 32, 256>}, {pipeline_mode = #tpu.pipeline_mode<synchronous>, transform_indices = @transform_1, window_bounds = array<i64: 8, 32>}, {pipeline_mode = #tpu.pipeline_mode<synchronous>, transform_indices = @transform_2, window_bounds = array<i64: 8, 1>}, {pipeline_mode = #tpu.pipeline_mode<synchronous>, transform_indices = @transform_3, window_bounds = array<i64: 16, 32>}, {pipeline_mode = #tpu.pipeline_mode<synchronous>, transform_indices = @transform_4, window_bounds = array<i64: 32, 16>}, {transform_indices = @transform_5, window_bounds = array<i64: 2, 8, 32, 32>}]} {
    %c0 = arith.constant 0 : index
    %c0_0 = arith.constant 0 : index
    %0 = vector.load %arg2[%c0, %c0_0] : memref<8x32xf32, #tpu.memory_space<vmem>>, vector<8x32xf32>
    %c0_1 = arith.constant 0 : index
    %c0_2 = arith.constant 0 : index
    %1 = vector.load %arg3[%c0_1, %c0_2] : memref<8x1xf32, #tpu.memory_space<vmem>>, vector<8x1xf32>
    %c0_3 = arith.constant 0 : index
    %c0_4 = arith.constant 0 : index
    %2 = vector.load %arg4[%c0_3, %c0_4] : memref<16x32xf32, #tpu.memory_space<vmem>>, vector<16x32xf32>
    %c0_5 = arith.constant 0 : index
    %c0_6 = arith.constant 0 : index
    %3 = vector.load %arg5[%c0_5, %c0_6] : memref<32x16xf32, #tpu.memory_space<vmem>>, vector<32x16xf32>
    %c0_7 = arith.constant 0 : index
    %c0_8 = arith.constant 0 : index
    %c0_9 = arith.constant 0 : index
    %4 = vector.load %arg1[%c0_7, %c0_8, %c0_9] : memref<2x32x256xf32, #tpu.memory_space<vmem>>, vector<1x32x256xf32>
    %5 = vector.shape_cast %4 : vector<1x32x256xf32> to vector<32x256xf32>
    %cst = arith.constant dense<0.000000e+00> : vector<8x256xf32>
    %6 = tpu.matmul %0, %5, %cst {dimension_numbers = #tpu.dot_dimension_numbers<[1], [0], [0], [1], [0, 0, 1, 1], [], []>} : vector<8x32xf32>, vector<32x256xf32>, vector<8x256xf32> -> vector<8x256xf32>
    %7 = vector.broadcast %1 : vector<8x1xf32> to vector<8x256xf32>
    %8 = arith.addf %6, %7 : vector<8x256xf32>
    %cst_10 = arith.constant dense<0xFF800000> : vector<256xf32>
    %9 = vector.multi_reduction <maximumf>, %8, %cst_10 [0] : vector<8x256xf32> to vector<256xf32>
    %10 = vector.shape_cast %9 : vector<256xf32> to vector<1x256xf32>
    %11 = vector.broadcast %10 : vector<1x256xf32> to vector<8x256xf32>
    %12 = arith.subf %8, %11 : vector<8x256xf32>
    %13 = math.exp %12 : vector<8x256xf32>
    %cst_11 = arith.constant dense<0.000000e+00> : vector<256xf32>
    %14 = vector.multi_reduction <add>, %13, %cst_11 [0] : vector<8x256xf32> to vector<256xf32>
    %15 = vector.shape_cast %14 : vector<256xf32> to vector<1x256xf32>
    %16 = math.log %15 : vector<1x256xf32>
    %17 = arith.addf %16, %10 : vector<1x256xf32>
    %18 = vector.broadcast %17 : vector<1x256xf32> to vector<8x256xf32>
    %19 = arith.subf %8, %18 : vector<8x256xf32>
    %c0_12 = arith.constant 0 : index
    %c0_13 = arith.constant 0 : index
    %20 = vector.load %arg7[%c0_12, %c0_13] : memref<8x256xf32, #tpu.memory_space<vmem>>, vector<8x256xf32>
    tpu.vector_store %arg7[%c0_12, %c0_13], %19 {strides = array<i32>} : memref<8x256xf32, #tpu.memory_space<vmem>>, vector<8x256xf32>,
    %c0_14 = arith.constant 0 : index
    %c0_15 = arith.constant 0 : index
    %21 = vector.load %arg7[%c0_14, %c0_15] : memref<8x256xf32, #tpu.memory_space<vmem>>, vector<8x16xf32>
    %cst_16 = arith.constant dense<0.000000e+00> : vector<8x32xf32>
    %22 = tpu.matmul %21, %2, %cst_16 {dimension_numbers = #tpu.dot_dimension_numbers<[1], [0], [0], [1], [0, 0, 1, 1], [], []>} : vector<8x16xf32>, vector<16x32xf32>, vector<8x32xf32> -> vector<8x32xf32>
    %c0_17 = arith.constant 0 : index
    %c0_18 = arith.constant 0 : index
    %c0_19 = arith.constant 0 : index
    %23 = vector.load %arg8[%c0_17, %c0_18, %c0_19] : memref<8x16x32xf32, #tpu.memory_space<vmem>>, vector<8x1x32xf32>
    %24 = vector.shape_cast %23 : vector<8x1x32xf32> to vector<8x32xf32>
    %25 = vector.shape_cast %22 : vector<8x32xf32> to vector<8x1x32xf32>
    tpu.vector_store %arg8[%c0_17, %c0_18, %c0_19], %25 {strides = array<i32>} : memref<8x16x32xf32, #tpu.memory_space<vmem>>, vector<8x1x32xf32>,
    %c0_20 = arith.constant 0 : index
    %c16 = arith.constant 16 : index
    %26 = vector.load %arg7[%c0_20, %c16] : memref<8x256xf32, #tpu.memory_space<vmem>>, vector<8x16xf32>
    %cst_21 = arith.constant dense<0.000000e+00> : vector<8x32xf32>
    %27 = tpu.matmul %26, %2, %cst_21 {dimension_numbers = #tpu.dot_dimension_numbers<[1], [0], [0], [1], [0, 0, 1, 1], [], []>} : vector<8x16xf32>, vector<16x32xf32>, vector<8x32xf32> -> vector<8x32xf32>
    %c0_22 = arith.constant 0 : index
    %c1 = arith.constant 1 : index
    %c0_23 = arith.constant 0 : index
    %28 = vector.load %arg8[%c0_22, %c1, %c0_23] : memref<8x16x32xf32, #tpu.memory_space<vmem>>, vector<8x1x32xf32>
    %29 = vector.shape_cast %28 : vector<8x1x32xf32> to vector<8x32xf32>
    %30 = vector.shape_cast %27 : vector<8x32xf32> to vector<8x1x32xf32>
    tpu.vector_store %arg8[%c0_22, %c1, %c0_23], %30 {strides = array<i32>} : memref<8x16x32xf32, #tpu.memory_space<vmem>>, vector<8x1x32xf32>,
    %c0_24 = arith.constant 0 : index
    %c32 = arith.constant 32 : index
    %31 = vector.load %arg7[%c0_24, %c32] : memref<8x256xf32, #tpu.memory_space<vmem>>, vector<8x16xf32>
    %cst_25 = arith.constant dense<0.000000e+00> : vector<8x32xf32>
    %32 = tpu.matmul %31, %2, %cst_25 {dimension_numbers = #tpu.dot_dimension_numbers<[1], [0], [0], [1], [0, 0, 1, 1], [], []>} : vector<8x16xf32>, vector<16x32xf32>, vector<8x32xf32> -> vector<8x32xf32>
    %c0_26 = arith.constant 0 : index
    %c2 = arith.constant 2 : index
    %c0_27 = arith.constant 0 : index
    %33 = vector.load %arg8[%c0_26, %c2, %c0_27] : memref<8x16x32xf32, #tpu.memory_space<vmem>>, vector<8x1x32xf32>
    %34 = vector.shape_cast %33 : vector<8x1x32xf32> to vector<8x32xf32>
    %35 = vector.shape_cast %32 : vector<8x32xf32> to vector<8x1x32xf32>
    tpu.vector_store %arg8[%c0_26, %c2, %c0_27], %35 {strides = array<i32>} : memref<8x16x32xf32, #tpu.memory_space<vmem>>, vector<8x1x32xf32>,
    %c0_28 = arith.constant 0 : index
    %c48 = arith.constant 48 : index
    %36 = vector.load %arg7[%c0_28, %c48] : memref<8x256xf32, #tpu.memory_space<vmem>>, vector<8x16xf32>
    %cst_29 = arith.constant dense<0.000000e+00> : vector<8x32xf32>
    %37 = tpu.matmul %36, %2, %cst_29 {dimension_numbers = #tpu.dot_dimension_numbers<[1], [0], [0], [1], [0, 0, 1, 1], [], []>} : vector<8x16xf32>, vector<16x32xf32>, vector<8x32xf32> -> vector<8x32xf32>
    %c0_30 = arith.constant 0 : index
    %c3 = arith.constant 3 : index
    %c0_31 = arith.constant 0 : index
    %38 = vector.load %arg8[%c0_30, %c3, %c0_31] : memref<8x16x32xf32, #tpu.memory_space<vmem>>, vector<8x1x32xf32>
    %39 = vector.shape_cast %38 : vector<8x1x32xf32> to vector<8x32xf32>
    %40 = vector.shape_cast %37 : vector<8x32xf32> to vector<8x1x32xf32>
    tpu.vector_store %arg8[%c0_30, %c3, %c0_31], %40 {strides = array<i32>} : memref<8x16x32xf32, #tpu.memory_space<vmem>>, vector<8x1x32xf32>,
    %c0_32 = arith.constant 0 : index
    %c64 = arith.constant 64 : index
    %41 = vector.load %arg7[%c0_32, %c64] : memref<8x256xf32, #tpu.memory_space<vmem>>, vector<8x16xf32>
    %cst_33 = arith.constant dense<0.000000e+00> : vector<8x32xf32>
    %42 = tpu.matmul %41, %2, %cst_33 {dimension_numbers = #tpu.dot_dimension_numbers<[1], [0], [0], [1], [0, 0, 1, 1], [], []>} : vector<8x16xf32>, vector<16x32xf32>, vector<8x32xf32> -> vector<8x32xf32>
    %c0_34 = arith.constant 0 : index
    %c4 = arith.constant 4 : index
    %c0_35 = arith.constant 0 : index
    %43 = vector.load %arg8[%c0_34, %c4, %c0_35] : memref<8x16x32xf32, #tpu.memory_space<vmem>>, vector<8x1x32xf32>
    %44 = vector.shape_cast %43 : vector<8x1x32xf32> to vector<8x32xf32>
    %45 = vector.shape_cast %42 : vector<8x32xf32> to vector<8x1x32xf32>
    tpu.vector_store %arg8[%c0_34, %c4, %c0_35], %45 {strides = array<i32>} : memref<8x16x32xf32, #tpu.memory_space<vmem>>, vector<8x1x32xf32>,
    %c0_36 = arith.constant 0 : index
    %c80 = arith.constant 80 : index
    %46 = vector.load %arg7[%c0_36, %c80] : memref<8x256xf32, #tpu.memory_space<vmem>>, vector<8x16xf32>
    %cst_37 = arith.constant dense<0.000000e+00> : vector<8x32xf32>
    %47 = tpu.matmul %46, %2, %cst_37 {dimension_numbers = #tpu.dot_dimension_numbers<[1], [0], [0], [1], [0, 0, 1, 1], [], []>} : vector<8x16xf32>, vector<16x32xf32>, vector<8x32xf32> -> vector<8x32xf32>
    %c0_38 = arith.constant 0 : index
    %c5 = arith.constant 5 : index
    %c0_39 = arith.constant 0 : index
    %48 = vector.load %arg8[%c0_38, %c5, %c0_39] : memref<8x16x32xf32, #tpu.memory_space<vmem>>, vector<8x1x32xf32>
    %49 = vector.shape_cast %48 : vector<8x1x32xf32> to vector<8x32xf32>
    %50 = vector.shape_cast %47 : vector<8x32xf32> to vector<8x1x32xf32>
    tpu.vector_store %arg8[%c0_38, %c5, %c0_39], %50 {strides = array<i32>} : memref<8x16x32xf32, #tpu.memory_space<vmem>>, vector<8x1x32xf32>,
    %c0_40 = arith.constant 0 : index
    %c96 = arith.constant 96 : index
    %51 = vector.load %arg7[%c0_40, %c96] : memref<8x256xf32, #tpu.memory_space<vmem>>, vector<8x16xf32>
    %cst_41 = arith.constant dense<0.000000e+00> : vector<8x32xf32>
    %52 = tpu.matmul %51, %2, %cst_41 {dimension_numbers = #tpu.dot_dimension_numbers<[1], [0], [0], [1], [0, 0, 1, 1], [], []>} : vector<8x16xf32>, vector<16x32xf32>, vector<8x32xf32> -> vector<8x32xf32>
    %c0_42 = arith.constant 0 : index
    %c6 = arith.constant 6 : index
    %c0_43 = arith.constant 0 : index
    %53 = vector.load %arg8[%c0_42, %c6, %c0_43] : memref<8x16x32xf32, #tpu.memory_space<vmem>>, vector<8x1x32xf32>
    %54 = vector.shape_cast %53 : vector<8x1x32xf32> to vector<8x32xf32>
    %55 = vector.shape_cast %52 : vector<8x32xf32> to vector<8x1x32xf32>
    tpu.vector_store %arg8[%c0_42, %c6, %c0_43], %55 {strides = array<i32>} : memref<8x16x32xf32, #tpu.memory_space<vmem>>, vector<8x1x32xf32>,
    %c0_44 = arith.constant 0 : index
    %c112 = arith.constant 112 : index
    %56 = vector.load %arg7[%c0_44, %c112] : memref<8x256xf32, #tpu.memory_space<vmem>>, vector<8x16xf32>
    %cst_45 = arith.constant dense<0.000000e+00> : vector<8x32xf32>
    %57 = tpu.matmul %56, %2, %cst_45 {dimension_numbers = #tpu.dot_dimension_numbers<[1], [0], [0], [1], [0, 0, 1, 1], [], []>} : vector<8x16xf32>, vector<16x32xf32>, vector<8x32xf32> -> vector<8x32xf32>
    %c0_46 = arith.constant 0 : index
    %c7 = arith.constant 7 : index
    %c0_47 = arith.constant 0 : index
    %58 = vector.load %arg8[%c0_46, %c7, %c0_47] : memref<8x16x32xf32, #tpu.memory_space<vmem>>, vector<8x1x32xf32>
    %59 = vector.shape_cast %58 : vector<8x1x32xf32> to vector<8x32xf32>
    %60 = vector.shape_cast %57 : vector<8x32xf32> to vector<8x1x32xf32>
    tpu.vector_store %arg8[%c0_46, %c7, %c0_47], %60 {strides = array<i32>} : memref<8x16x32xf32, #tpu.memory_space<vmem>>, vector<8x1x32xf32>,
    %c0_48 = arith.constant 0 : index
    %c128 = arith.constant 128 : index
    %61 = vector.load %arg7[%c0_48, %c128] : memref<8x256xf32, #tpu.memory_space<vmem>>, vector<8x16xf32>
    %cst_49 = arith.constant dense<0.000000e+00> : vector<8x32xf32>
    %62 = tpu.matmul %61, %2, %cst_49 {dimension_numbers = #tpu.dot_dimension_numbers<[1], [0], [0], [1], [0, 0, 1, 1], [], []>} : vector<8x16xf32>, vector<16x32xf32>, vector<8x32xf32> -> vector<8x32xf32>
    %c0_50 = arith.constant 0 : index
    %c8 = arith.constant 8 : index
    %c0_51 = arith.constant 0 : index
    %63 = vector.load %arg8[%c0_50, %c8, %c0_51] : memref<8x16x32xf32, #tpu.memory_space<vmem>>, vector<8x1x32xf32>
    %64 = vector.shape_cast %63 : vector<8x1x32xf32> to vector<8x32xf32>
    %65 = vector.shape_cast %62 : vector<8x32xf32> to vector<8x1x32xf32>
    tpu.vector_store %arg8[%c0_50, %c8, %c0_51], %65 {strides = array<i32>} : memref<8x16x32xf32, #tpu.memory_space<vmem>>, vector<8x1x32xf32>,
    %c0_52 = arith.constant 0 : index
    %c144 = arith.constant 144 : index
    %66 = vector.load %arg7[%c0_52, %c144] : memref<8x256xf32, #tpu.memory_space<vmem>>, vector<8x16xf32>
    %cst_53 = arith.constant dense<0.000000e+00> : vector<8x32xf32>
    %67 = tpu.matmul %66, %2, %cst_53 {dimension_numbers = #tpu.dot_dimension_numbers<[1], [0], [0], [1], [0, 0, 1, 1], [], []>} : vector<8x16xf32>, vector<16x32xf32>, vector<8x32xf32> -> vector<8x32xf32>
    %c0_54 = arith.constant 0 : index
    %c9 = arith.constant 9 : index
    %c0_55 = arith.constant 0 : index
    %68 = vector.load %arg8[%c0_54, %c9, %c0_55] : memref<8x16x32xf32, #tpu.memory_space<vmem>>, vector<8x1x32xf32>
    %69 = vector.shape_cast %68 : vector<8x1x32xf32> to vector<8x32xf32>
    %70 = vector.shape_cast %67 : vector<8x32xf32> to vector<8x1x32xf32>
    tpu.vector_store %arg8[%c0_54, %c9, %c0_55], %70 {strides = array<i32>} : memref<8x16x32xf32, #tpu.memory_space<vmem>>, vector<8x1x32xf32>,
    %c0_56 = arith.constant 0 : index
    %c160 = arith.constant 160 : index
    %71 = vector.load %arg7[%c0_56, %c160] : memref<8x256xf32, #tpu.memory_space<vmem>>, vector<8x16xf32>
    %cst_57 = arith.constant dense<0.000000e+00> : vector<8x32xf32>
    %72 = tpu.matmul %71, %2, %cst_57 {dimension_numbers = #tpu.dot_dimension_numbers<[1], [0], [0], [1], [0, 0, 1, 1], [], []>} : vector<8x16xf32>, vector<16x32xf32>, vector<8x32xf32> -> vector<8x32xf32>
    %c0_58 = arith.constant 0 : index
    %c10 = arith.constant 10 : index
    %c0_59 = arith.constant 0 : index
    %73 = vector.load %arg8[%c0_58, %c10, %c0_59] : memref<8x16x32xf32, #tpu.memory_space<vmem>>, vector<8x1x32xf32>
    %74 = vector.shape_cast %73 : vector<8x1x32xf32> to vector<8x32xf32>
    %75 = vector.shape_cast %72 : vector<8x32xf32> to vector<8x1x32xf32>
    tpu.vector_store %arg8[%c0_58, %c10, %c0_59], %75 {strides = array<i32>} : memref<8x16x32xf32, #tpu.memory_space<vmem>>, vector<8x1x32xf32>,
    %c0_60 = arith.constant 0 : index
    %c176 = arith.constant 176 : index
    %76 = vector.load %arg7[%c0_60, %c176] : memref<8x256xf32, #tpu.memory_space<vmem>>, vector<8x16xf32>
    %cst_61 = arith.constant dense<0.000000e+00> : vector<8x32xf32>
    %77 = tpu.matmul %76, %2, %cst_61 {dimension_numbers = #tpu.dot_dimension_numbers<[1], [0], [0], [1], [0, 0, 1, 1], [], []>} : vector<8x16xf32>, vector<16x32xf32>, vector<8x32xf32> -> vector<8x32xf32>
    %c0_62 = arith.constant 0 : index
    %c11 = arith.constant 11 : index
    %c0_63 = arith.constant 0 : index
    %78 = vector.load %arg8[%c0_62, %c11, %c0_63] : memref<8x16x32xf32, #tpu.memory_space<vmem>>, vector<8x1x32xf32>
    %79 = vector.shape_cast %78 : vector<8x1x32xf32> to vector<8x32xf32>
    %80 = vector.shape_cast %77 : vector<8x32xf32> to vector<8x1x32xf32>
    tpu.vector_store %arg8[%c0_62, %c11, %c0_63], %80 {strides = array<i32>} : memref<8x16x32xf32, #tpu.memory_space<vmem>>, vector<8x1x32xf32>,
    %c0_64 = arith.constant 0 : index
    %c192 = arith.constant 192 : index
    %81 = vector.load %arg7[%c0_64, %c192] : memref<8x256xf32, #tpu.memory_space<vmem>>, vector<8x16xf32>
    %cst_65 = arith.constant dense<0.000000e+00> : vector<8x32xf32>
    %82 = tpu.matmul %81, %2, %cst_65 {dimension_numbers = #tpu.dot_dimension_numbers<[1], [0], [0], [1], [0, 0, 1, 1], [], []>} : vector<8x16xf32>, vector<16x32xf32>, vector<8x32xf32> -> vector<8x32xf32>
    %c0_66 = arith.constant 0 : index
    %c12 = arith.constant 12 : index
    %c0_67 = arith.constant 0 : index
    %83 = vector.load %arg8[%c0_66, %c12, %c0_67] : memref<8x16x32xf32, #tpu.memory_space<vmem>>, vector<8x1x32xf32>
    %84 = vector.shape_cast %83 : vector<8x1x32xf32> to vector<8x32xf32>
    %85 = vector.shape_cast %82 : vector<8x32xf32> to vector<8x1x32xf32>
    tpu.vector_store %arg8[%c0_66, %c12, %c0_67], %85 {strides = array<i32>} : memref<8x16x32xf32, #tpu.memory_space<vmem>>, vector<8x1x32xf32>,
    %c0_68 = arith.constant 0 : index
    %c208 = arith.constant 208 : index
    %86 = vector.load %arg7[%c0_68, %c208] : memref<8x256xf32, #tpu.memory_space<vmem>>, vector<8x16xf32>
    %cst_69 = arith.constant dense<0.000000e+00> : vector<8x32xf32>
    %87 = tpu.matmul %86, %2, %cst_69 {dimension_numbers = #tpu.dot_dimension_numbers<[1], [0], [0], [1], [0, 0, 1, 1], [], []>} : vector<8x16xf32>, vector<16x32xf32>, vector<8x32xf32> -> vector<8x32xf32>
    %c0_70 = arith.constant 0 : index
    %c13 = arith.constant 13 : index
    %c0_71 = arith.constant 0 : index
    %88 = vector.load %arg8[%c0_70, %c13, %c0_71] : memref<8x16x32xf32, #tpu.memory_space<vmem>>, vector<8x1x32xf32>
    %89 = vector.shape_cast %88 : vector<8x1x32xf32> to vector<8x32xf32>
    %90 = vector.shape_cast %87 : vector<8x32xf32> to vector<8x1x32xf32>
    tpu.vector_store %arg8[%c0_70, %c13, %c0_71], %90 {strides = array<i32>} : memref<8x16x32xf32, #tpu.memory_space<vmem>>, vector<8x1x32xf32>,
    %c0_72 = arith.constant 0 : index
    %c224 = arith.constant 224 : index
    %91 = vector.load %arg7[%c0_72, %c224] : memref<8x256xf32, #tpu.memory_space<vmem>>, vector<8x16xf32>
    %cst_73 = arith.constant dense<0.000000e+00> : vector<8x32xf32>
    %92 = tpu.matmul %91, %2, %cst_73 {dimension_numbers = #tpu.dot_dimension_numbers<[1], [0], [0], [1], [0, 0, 1, 1], [], []>} : vector<8x16xf32>, vector<16x32xf32>, vector<8x32xf32> -> vector<8x32xf32>
    %c0_74 = arith.constant 0 : index
    %c14 = arith.constant 14 : index
    %c0_75 = arith.constant 0 : index
    %93 = vector.load %arg8[%c0_74, %c14, %c0_75] : memref<8x16x32xf32, #tpu.memory_space<vmem>>, vector<8x1x32xf32>
    %94 = vector.shape_cast %93 : vector<8x1x32xf32> to vector<8x32xf32>
    %95 = vector.shape_cast %92 : vector<8x32xf32> to vector<8x1x32xf32>
    tpu.vector_store %arg8[%c0_74, %c14, %c0_75], %95 {strides = array<i32>} : memref<8x16x32xf32, #tpu.memory_space<vmem>>, vector<8x1x32xf32>,
    %c0_76 = arith.constant 0 : index
    %c240 = arith.constant 240 : index
    %96 = vector.load %arg7[%c0_76, %c240] : memref<8x256xf32, #tpu.memory_space<vmem>>, vector<8x16xf32>
    %cst_77 = arith.constant dense<0.000000e+00> : vector<8x32xf32>
    %97 = tpu.matmul %96, %2, %cst_77 {dimension_numbers = #tpu.dot_dimension_numbers<[1], [0], [0], [1], [0, 0, 1, 1], [], []>} : vector<8x16xf32>, vector<16x32xf32>, vector<8x32xf32> -> vector<8x32xf32>
    %c0_78 = arith.constant 0 : index
    %c15 = arith.constant 15 : index
    %c0_79 = arith.constant 0 : index
    %98 = vector.load %arg8[%c0_78, %c15, %c0_79] : memref<8x16x32xf32, #tpu.memory_space<vmem>>, vector<8x1x32xf32>
    %99 = vector.shape_cast %98 : vector<8x1x32xf32> to vector<8x32xf32>
    %100 = vector.shape_cast %97 : vector<8x32xf32> to vector<8x1x32xf32>
    tpu.vector_store %arg8[%c0_78, %c15, %c0_79], %100 {strides = array<i32>} : memref<8x16x32xf32, #tpu.memory_space<vmem>>, vector<8x1x32xf32>,
    %c0_80 = arith.constant 0 : index
    %c0_81 = arith.constant 0 : index
    %c0_82 = arith.constant 0 : index
    %101 = vector.load %arg8[%c0_80, %c0_81, %c0_82] : memref<8x16x32xf32, #tpu.memory_space<vmem>>, vector<1x16x32xf32>
    %102 = vector.shape_cast %101 : vector<1x16x32xf32> to vector<16x32xf32>
    %cst_83 = arith.constant dense<0.000000e+00> : vector<32x32xf32>
    %103 = tpu.matmul %3, %102, %cst_83 {dimension_numbers = #tpu.dot_dimension_numbers<[1], [0], [0], [1], [0, 0, 1, 1], [], []>} : vector<32x16xf32>, vector<16x32xf32>, vector<32x32xf32> -> vector<32x32xf32>
    %c0_84 = arith.constant 0 : index
    %c0_85 = arith.constant 0 : index
    %c0_86 = arith.constant 0 : index
    %c0_87 = arith.constant 0 : index
    %104 = vector.load %arg6[%c0_84, %c0_85, %c0_86, %c0_87] : memref<2x8x32x32xf32, #tpu.memory_space<vmem>>, vector<1x1x32x32xf32>
    %105 = vector.shape_cast %104 : vector<1x1x32x32xf32> to vector<32x32xf32>
    %106 = vector.shape_cast %103 : vector<32x32xf32> to vector<1x1x32x32xf32>
    tpu.vector_store %arg6[%c0_84, %c0_85, %c0_86, %c0_87], %106 {strides = array<i32>} : memref<2x8x32x32xf32, #tpu.memory_space<vmem>>, vector<1x1x32x32xf32>,
    %c1_88 = arith.constant 1 : index
    %c0_89 = arith.constant 0 : index
    %c0_90 = arith.constant 0 : index
    %107 = vector.load %arg8[%c1_88, %c0_89, %c0_90] : memref<8x16x32xf32, #tpu.memory_space<vmem>>, vector<1x16x32xf32>
    %108 = vector.shape_cast %107 : vector<1x16x32xf32> to vector<16x32xf32>
    %cst_91 = arith.constant dense<0.000000e+00> : vector<32x32xf32>
    %109 = tpu.matmul %3, %108, %cst_91 {dimension_numbers = #tpu.dot_dimension_numbers<[1], [0], [0], [1], [0, 0, 1, 1], [], []>} : vector<32x16xf32>, vector<16x32xf32>, vector<32x32xf32> -> vector<32x32xf32>
    %c0_92 = arith.constant 0 : index
    %c1_93 = arith.constant 1 : index
    %c0_94 = arith.constant 0 : index
    %c0_95 = arith.constant 0 : index
    %110 = vector.load %arg6[%c0_92, %c1_93, %c0_94, %c0_95] : memref<2x8x32x32xf32, #tpu.memory_space<vmem>>, vector<1x1x32x32xf32>
    %111 = vector.shape_cast %110 : vector<1x1x32x32xf32> to vector<32x32xf32>
    %112 = vector.shape_cast %109 : vector<32x32xf32> to vector<1x1x32x32xf32>
    tpu.vector_store %arg6[%c0_92, %c1_93, %c0_94, %c0_95], %112 {strides = array<i32>} : memref<2x8x32x32xf32, #tpu.memory_space<vmem>>, vector<1x1x32x32xf32>,
    %c2_96 = arith.constant 2 : index
    %c0_97 = arith.constant 0 : index
    %c0_98 = arith.constant 0 : index
    %113 = vector.load %arg8[%c2_96, %c0_97, %c0_98] : memref<8x16x32xf32, #tpu.memory_space<vmem>>, vector<1x16x32xf32>
    %114 = vector.shape_cast %113 : vector<1x16x32xf32> to vector<16x32xf32>
    %cst_99 = arith.constant dense<0.000000e+00> : vector<32x32xf32>
    %115 = tpu.matmul %3, %114, %cst_99 {dimension_numbers = #tpu.dot_dimension_numbers<[1], [0], [0], [1], [0, 0, 1, 1], [], []>} : vector<32x16xf32>, vector<16x32xf32>, vector<32x32xf32> -> vector<32x32xf32>
    %c0_100 = arith.constant 0 : index
    %c2_101 = arith.constant 2 : index
    %c0_102 = arith.constant 0 : index
    %c0_103 = arith.constant 0 : index
    %116 = vector.load %arg6[%c0_100, %c2_101, %c0_102, %c0_103] : memref<2x8x32x32xf32, #tpu.memory_space<vmem>>, vector<1x1x32x32xf32>
    %117 = vector.shape_cast %116 : vector<1x1x32x32xf32> to vector<32x32xf32>
    %118 = vector.shape_cast %115 : vector<32x32xf32> to vector<1x1x32x32xf32>
    tpu.vector_store %arg6[%c0_100, %c2_101, %c0_102, %c0_103], %118 {strides = array<i32>} : memref<2x8x32x32xf32, #tpu.memory_space<vmem>>, vector<1x1x32x32xf32>,
    %c3_104 = arith.constant 3 : index
    %c0_105 = arith.constant 0 : index
    %c0_106 = arith.constant 0 : index
    %119 = vector.load %arg8[%c3_104, %c0_105, %c0_106] : memref<8x16x32xf32, #tpu.memory_space<vmem>>, vector<1x16x32xf32>
    %120 = vector.shape_cast %119 : vector<1x16x32xf32> to vector<16x32xf32>
    %cst_107 = arith.constant dense<0.000000e+00> : vector<32x32xf32>
    %121 = tpu.matmul %3, %120, %cst_107 {dimension_numbers = #tpu.dot_dimension_numbers<[1], [0], [0], [1], [0, 0, 1, 1], [], []>} : vector<32x16xf32>, vector<16x32xf32>, vector<32x32xf32> -> vector<32x32xf32>
    %c0_108 = arith.constant 0 : index
    %c3_109 = arith.constant 3 : index
    %c0_110 = arith.constant 0 : index
    %c0_111 = arith.constant 0 : index
    %122 = vector.load %arg6[%c0_108, %c3_109, %c0_110, %c0_111] : memref<2x8x32x32xf32, #tpu.memory_space<vmem>>, vector<1x1x32x32xf32>
    %123 = vector.shape_cast %122 : vector<1x1x32x32xf32> to vector<32x32xf32>
    %124 = vector.shape_cast %121 : vector<32x32xf32> to vector<1x1x32x32xf32>
    tpu.vector_store %arg6[%c0_108, %c3_109, %c0_110, %c0_111], %124 {strides = array<i32>} : memref<2x8x32x32xf32, #tpu.memory_space<vmem>>, vector<1x1x32x32xf32>,
    %c4_112 = arith.constant 4 : index
    %c0_113 = arith.constant 0 : index
    %c0_114 = arith.constant 0 : index
    %125 = vector.load %arg8[%c4_112, %c0_113, %c0_114] : memref<8x16x32xf32, #tpu.memory_space<vmem>>, vector<1x16x32xf32>
    %126 = vector.shape_cast %125 : vector<1x16x32xf32> to vector<16x32xf32>
    %cst_115 = arith.constant dense<0.000000e+00> : vector<32x32xf32>
    %127 = tpu.matmul %3, %126, %cst_115 {dimension_numbers = #tpu.dot_dimension_numbers<[1], [0], [0], [1], [0, 0, 1, 1], [], []>} : vector<32x16xf32>, vector<16x32xf32>, vector<32x32xf32> -> vector<32x32xf32>
    %c0_116 = arith.constant 0 : index
    %c4_117 = arith.constant 4 : index
    %c0_118 = arith.constant 0 : index
    %c0_119 = arith.constant 0 : index
    %128 = vector.load %arg6[%c0_116, %c4_117, %c0_118, %c0_119] : memref<2x8x32x32xf32, #tpu.memory_space<vmem>>, vector<1x1x32x32xf32>
    %129 = vector.shape_cast %128 : vector<1x1x32x32xf32> to vector<32x32xf32>
    %130 = vector.shape_cast %127 : vector<32x32xf32> to vector<1x1x32x32xf32>
    tpu.vector_store %arg6[%c0_116, %c4_117, %c0_118, %c0_119], %130 {strides = array<i32>} : memref<2x8x32x32xf32, #tpu.memory_space<vmem>>, vector<1x1x32x32xf32>,
    %c5_120 = arith.constant 5 : index
    %c0_121 = arith.constant 0 : index
    %c0_122 = arith.constant 0 : index
    %131 = vector.load %arg8[%c5_120, %c0_121, %c0_122] : memref<8x16x32xf32, #tpu.memory_space<vmem>>, vector<1x16x32xf32>
    %132 = vector.shape_cast %131 : vector<1x16x32xf32> to vector<16x32xf32>
    %cst_123 = arith.constant dense<0.000000e+00> : vector<32x32xf32>
    %133 = tpu.matmul %3, %132, %cst_123 {dimension_numbers = #tpu.dot_dimension_numbers<[1], [0], [0], [1], [0, 0, 1, 1], [], []>} : vector<32x16xf32>, vector<16x32xf32>, vector<32x32xf32> -> vector<32x32xf32>
    %c0_124 = arith.constant 0 : index
    %c5_125 = arith.constant 5 : index
    %c0_126 = arith.constant 0 : index
    %c0_127 = arith.constant 0 : index
    %134 = vector.load %arg6[%c0_124, %c5_125, %c0_126, %c0_127] : memref<2x8x32x32xf32, #tpu.memory_space<vmem>>, vector<1x1x32x32xf32>
    %135 = vector.shape_cast %134 : vector<1x1x32x32xf32> to vector<32x32xf32>
    %136 = vector.shape_cast %133 : vector<32x32xf32> to vector<1x1x32x32xf32>
    tpu.vector_store %arg6[%c0_124, %c5_125, %c0_126, %c0_127], %136 {strides = array<i32>} : memref<2x8x32x32xf32, #tpu.memory_space<vmem>>, vector<1x1x32x32xf32>,
    %c6_128 = arith.constant 6 : index
    %c0_129 = arith.constant 0 : index
    %c0_130 = arith.constant 0 : index
    %137 = vector.load %arg8[%c6_128, %c0_129, %c0_130] : memref<8x16x32xf32, #tpu.memory_space<vmem>>, vector<1x16x32xf32>
    %138 = vector.shape_cast %137 : vector<1x16x32xf32> to vector<16x32xf32>
    %cst_131 = arith.constant dense<0.000000e+00> : vector<32x32xf32>
    %139 = tpu.matmul %3, %138, %cst_131 {dimension_numbers = #tpu.dot_dimension_numbers<[1], [0], [0], [1], [0, 0, 1, 1], [], []>} : vector<32x16xf32>, vector<16x32xf32>, vector<32x32xf32> -> vector<32x32xf32>
    %c0_132 = arith.constant 0 : index
    %c6_133 = arith.constant 6 : index
    %c0_134 = arith.constant 0 : index
    %c0_135 = arith.constant 0 : index
    %140 = vector.load %arg6[%c0_132, %c6_133, %c0_134, %c0_135] : memref<2x8x32x32xf32, #tpu.memory_space<vmem>>, vector<1x1x32x32xf32>
    %141 = vector.shape_cast %140 : vector<1x1x32x32xf32> to vector<32x32xf32>
    %142 = vector.shape_cast %139 : vector<32x32xf32> to vector<1x1x32x32xf32>
    tpu.vector_store %arg6[%c0_132, %c6_133, %c0_134, %c0_135], %142 {strides = array<i32>} : memref<2x8x32x32xf32, #tpu.memory_space<vmem>>, vector<1x1x32x32xf32>,
    %c7_136 = arith.constant 7 : index
    %c0_137 = arith.constant 0 : index
    %c0_138 = arith.constant 0 : index
    %143 = vector.load %arg8[%c7_136, %c0_137, %c0_138] : memref<8x16x32xf32, #tpu.memory_space<vmem>>, vector<1x16x32xf32>
    %144 = vector.shape_cast %143 : vector<1x16x32xf32> to vector<16x32xf32>
    %cst_139 = arith.constant dense<0.000000e+00> : vector<32x32xf32>
    %145 = tpu.matmul %3, %144, %cst_139 {dimension_numbers = #tpu.dot_dimension_numbers<[1], [0], [0], [1], [0, 0, 1, 1], [], []>} : vector<32x16xf32>, vector<16x32xf32>, vector<32x32xf32> -> vector<32x32xf32>
    %c0_140 = arith.constant 0 : index
    %c7_141 = arith.constant 7 : index
    %c0_142 = arith.constant 0 : index
    %c0_143 = arith.constant 0 : index
    %146 = vector.load %arg6[%c0_140, %c7_141, %c0_142, %c0_143] : memref<2x8x32x32xf32, #tpu.memory_space<vmem>>, vector<1x1x32x32xf32>
    %147 = vector.shape_cast %146 : vector<1x1x32x32xf32> to vector<32x32xf32>
    %148 = vector.shape_cast %145 : vector<32x32xf32> to vector<1x1x32x32xf32>
    tpu.vector_store %arg6[%c0_140, %c7_141, %c0_142, %c0_143], %148 {strides = array<i32>} : memref<2x8x32x32xf32, #tpu.memory_space<vmem>>, vector<1x1x32x32xf32>,
    %c1_144 = arith.constant 1 : index
    %c0_145 = arith.constant 0 : index
    %c0_146 = arith.constant 0 : index
    %149 = vector.load %arg1[%c1_144, %c0_145, %c0_146] : memref<2x32x256xf32, #tpu.memory_space<vmem>>, vector<1x32x256xf32>
    %150 = vector.shape_cast %149 : vector<1x32x256xf32> to vector<32x256xf32>
    %cst_147 = arith.constant dense<0.000000e+00> : vector<8x256xf32>
    %151 = tpu.matmul %0, %150, %cst_147 {dimension_numbers = #tpu.dot_dimension_numbers<[1], [0], [0], [1], [0, 0, 1, 1], [], []>} : vector<8x32xf32>, vector<32x256xf32>, vector<8x256xf32> -> vector<8x256xf32>
    %152 = vector.broadcast %1 : vector<8x1xf32> to vector<8x256xf32>
    %153 = arith.addf %151, %152 : vector<8x256xf32>
    %cst_148 = arith.constant dense<0xFF800000> : vector<256xf32>
    %154 = vector.multi_reduction <maximumf>, %153, %cst_148 [0] : vector<8x256xf32> to vector<256xf32>
    %155 = vector.shape_cast %154 : vector<256xf32> to vector<1x256xf32>
    %156 = vector.broadcast %155 : vector<1x256xf32> to vector<8x256xf32>
    %157 = arith.subf %153, %156 : vector<8x256xf32>
    %158 = math.exp %157 : vector<8x256xf32>
    %cst_149 = arith.constant dense<0.000000e+00> : vector<256xf32>
    %159 = vector.multi_reduction <add>, %158, %cst_149 [0] : vector<8x256xf32> to vector<256xf32>
    %160 = vector.shape_cast %159 : vector<256xf32> to vector<1x256xf32>
    %161 = math.log %160 : vector<1x256xf32>
    %162 = arith.addf %161, %155 : vector<1x256xf32>
    %163 = vector.broadcast %162 : vector<1x256xf32> to vector<8x256xf32>
    %164 = arith.subf %153, %163 : vector<8x256xf32>
    %c0_150 = arith.constant 0 : index
    %c0_151 = arith.constant 0 : index
    %165 = vector.load %arg7[%c0_150, %c0_151] : memref<8x256xf32, #tpu.memory_space<vmem>>, vector<8x256xf32>
    tpu.vector_store %arg7[%c0_150, %c0_151], %164 {strides = array<i32>} : memref<8x256xf32, #tpu.memory_space<vmem>>, vector<8x256xf32>,
    %c0_152 = arith.constant 0 : index
    %c0_153 = arith.constant 0 : index
    %166 = vector.load %arg7[%c0_152, %c0_153] : memref<8x256xf32, #tpu.memory_space<vmem>>, vector<8x16xf32>
    %cst_154 = arith.constant dense<0.000000e+00> : vector<8x32xf32>
    %167 = tpu.matmul %166, %2, %cst_154 {dimension_numbers = #tpu.dot_dimension_numbers<[1], [0], [0], [1], [0, 0, 1, 1], [], []>} : vector<8x16xf32>, vector<16x32xf32>, vector<8x32xf32> -> vector<8x32xf32>
    %c0_155 = arith.constant 0 : index
    %c0_156 = arith.constant 0 : index
    %c0_157 = arith.constant 0 : index
    %168 = vector.load %arg8[%c0_155, %c0_156, %c0_157] : memref<8x16x32xf32, #tpu.memory_space<vmem>>, vector<8x1x32xf32>
    %169 = vector.shape_cast %168 : vector<8x1x32xf32> to vector<8x32xf32>
    %170 = vector.shape_cast %167 : vector<8x32xf32> to vector<8x1x32xf32>
    tpu.vector_store %arg8[%c0_155, %c0_156, %c0_157], %170 {strides = array<i32>} : memref<8x16x32xf32, #tpu.memory_space<vmem>>, vector<8x1x32xf32>,
    %c0_158 = arith.constant 0 : index
    %c16_159 = arith.constant 16 : index
    %171 = vector.load %arg7[%c0_158, %c16_159] : memref<8x256xf32, #tpu.memory_space<vmem>>, vector<8x16xf32>
    %cst_160 = arith.constant dense<0.000000e+00> : vector<8x32xf32>
    %172 = tpu.matmul %171, %2, %cst_160 {dimension_numbers = #tpu.dot_dimension_numbers<[1], [0], [0], [1], [0, 0, 1, 1], [], []>} : vector<8x16xf32>, vector<16x32xf32>, vector<8x32xf32> -> vector<8x32xf32>
    %c0_161 = arith.constant 0 : index
    %c1_162 = arith.constant 1 : index
    %c0_163 = arith.constant 0 : index
    %173 = vector.load %arg8[%c0_161, %c1_162, %c0_163] : memref<8x16x32xf32, #tpu.memory_space<vmem>>, vector<8x1x32xf32>
    %174 = vector.shape_cast %173 : vector<8x1x32xf32> to vector<8x32xf32>
    %175 = vector.shape_cast %172 : vector<8x32xf32> to vector<8x1x32xf32>
    tpu.vector_store %arg8[%c0_161, %c1_162, %c0_163], %175 {strides = array<i32>} : memref<8x16x32xf32, #tpu.memory_space<vmem>>, vector<8x1x32xf32>,
    %c0_164 = arith.constant 0 : index
    %c32_165 = arith.constant 32 : index
    %176 = vector.load %arg7[%c0_164, %c32_165] : memref<8x256xf32, #tpu.memory_space<vmem>>, vector<8x16xf32>
    %cst_166 = arith.constant dense<0.000000e+00> : vector<8x32xf32>
    %177 = tpu.matmul %176, %2, %cst_166 {dimension_numbers = #tpu.dot_dimension_numbers<[1], [0], [0], [1], [0, 0, 1, 1], [], []>} : vector<8x16xf32>, vector<16x32xf32>, vector<8x32xf32> -> vector<8x32xf32>
    %c0_167 = arith.constant 0 : index
    %c2_168 = arith.constant 2 : index
    %c0_169 = arith.constant 0 : index
    %178 = vector.load %arg8[%c0_167, %c2_168, %c0_169] : memref<8x16x32xf32, #tpu.memory_space<vmem>>, vector<8x1x32xf32>
    %179 = vector.shape_cast %178 : vector<8x1x32xf32> to vector<8x32xf32>
    %180 = vector.shape_cast %177 : vector<8x32xf32> to vector<8x1x32xf32>
    tpu.vector_store %arg8[%c0_167, %c2_168, %c0_169], %180 {strides = array<i32>} : memref<8x16x32xf32, #tpu.memory_space<vmem>>, vector<8x1x32xf32>,
    %c0_170 = arith.constant 0 : index
    %c48_171 = arith.constant 48 : index
    %181 = vector.load %arg7[%c0_170, %c48_171] : memref<8x256xf32, #tpu.memory_space<vmem>>, vector<8x16xf32>
    %cst_172 = arith.constant dense<0.000000e+00> : vector<8x32xf32>
    %182 = tpu.matmul %181, %2, %cst_172 {dimension_numbers = #tpu.dot_dimension_numbers<[1], [0], [0], [1], [0, 0, 1, 1], [], []>} : vector<8x16xf32>, vector<16x32xf32>, vector<8x32xf32> -> vector<8x32xf32>
    %c0_173 = arith.constant 0 : index
    %c3_174 = arith.constant 3 : index
    %c0_175 = arith.constant 0 : index
    %183 = vector.load %arg8[%c0_173, %c3_174, %c0_175] : memref<8x16x32xf32, #tpu.memory_space<vmem>>, vector<8x1x32xf32>
    %184 = vector.shape_cast %183 : vector<8x1x32xf32> to vector<8x32xf32>
    %185 = vector.shape_cast %182 : vector<8x32xf32> to vector<8x1x32xf32>
    tpu.vector_store %arg8[%c0_173, %c3_174, %c0_175], %185 {strides = array<i32>} : memref<8x16x32xf32, #tpu.memory_space<vmem>>, vector<8x1x32xf32>,
    %c0_176 = arith.constant 0 : index
    %c64_177 = arith.constant 64 : index
    %186 = vector.load %arg7[%c0_176, %c64_177] : memref<8x256xf32, #tpu.memory_space<vmem>>, vector<8x16xf32>
    %cst_178 = arith.constant dense<0.000000e+00> : vector<8x32xf32>
    %187 = tpu.matmul %186, %2, %cst_178 {dimension_numbers = #tpu.dot_dimension_numbers<[1], [0], [0], [1], [0, 0, 1, 1], [], []>} : vector<8x16xf32>, vector<16x32xf32>, vector<8x32xf32> -> vector<8x32xf32>
    %c0_179 = arith.constant 0 : index
    %c4_180 = arith.constant 4 : index
    %c0_181 = arith.constant 0 : index
    %188 = vector.load %arg8[%c0_179, %c4_180, %c0_181] : memref<8x16x32xf32, #tpu.memory_space<vmem>>, vector<8x1x32xf32>
    %189 = vector.shape_cast %188 : vector<8x1x32xf32> to vector<8x32xf32>
    %190 = vector.shape_cast %187 : vector<8x32xf32> to vector<8x1x32xf32>
    tpu.vector_store %arg8[%c0_179, %c4_180, %c0_181], %190 {strides = array<i32>} : memref<8x16x32xf32, #tpu.memory_space<vmem>>, vector<8x1x32xf32>,
    %c0_182 = arith.constant 0 : index
    %c80_183 = arith.constant 80 : index
    %191 = vector.load %arg7[%c0_182, %c80_183] : memref<8x256xf32, #tpu.memory_space<vmem>>, vector<8x16xf32>
    %cst_184 = arith.constant dense<0.000000e+00> : vector<8x32xf32>
    %192 = tpu.matmul %191, %2, %cst_184 {dimension_numbers = #tpu.dot_dimension_numbers<[1], [0], [0], [1], [0, 0, 1, 1], [], []>} : vector<8x16xf32>, vector<16x32xf32>, vector<8x32xf32> -> vector<8x32xf32>
    %c0_185 = arith.constant 0 : index
    %c5_186 = arith.constant 5 : index
    %c0_187 = arith.constant 0 : index
    %193 = vector.load %arg8[%c0_185, %c5_186, %c0_187] : memref<8x16x32xf32, #tpu.memory_space<vmem>>, vector<8x1x32xf32>
    %194 = vector.shape_cast %193 : vector<8x1x32xf32> to vector<8x32xf32>
    %195 = vector.shape_cast %192 : vector<8x32xf32> to vector<8x1x32xf32>
    tpu.vector_store %arg8[%c0_185, %c5_186, %c0_187], %195 {strides = array<i32>} : memref<8x16x32xf32, #tpu.memory_space<vmem>>, vector<8x1x32xf32>,
    %c0_188 = arith.constant 0 : index
    %c96_189 = arith.constant 96 : index
    %196 = vector.load %arg7[%c0_188, %c96_189] : memref<8x256xf32, #tpu.memory_space<vmem>>, vector<8x16xf32>
    %cst_190 = arith.constant dense<0.000000e+00> : vector<8x32xf32>
    %197 = tpu.matmul %196, %2, %cst_190 {dimension_numbers = #tpu.dot_dimension_numbers<[1], [0], [0], [1], [0, 0, 1, 1], [], []>} : vector<8x16xf32>, vector<16x32xf32>, vector<8x32xf32> -> vector<8x32xf32>
    %c0_191 = arith.constant 0 : index
    %c6_192 = arith.constant 6 : index
    %c0_193 = arith.constant 0 : index
    %198 = vector.load %arg8[%c0_191, %c6_192, %c0_193] : memref<8x16x32xf32, #tpu.memory_space<vmem>>, vector<8x1x32xf32>
    %199 = vector.shape_cast %198 : vector<8x1x32xf32> to vector<8x32xf32>
    %200 = vector.shape_cast %197 : vector<8x32xf32> to vector<8x1x32xf32>
    tpu.vector_store %arg8[%c0_191, %c6_192, %c0_193], %200 {strides = array<i32>} : memref<8x16x32xf32, #tpu.memory_space<vmem>>, vector<8x1x32xf32>,
    %c0_194 = arith.constant 0 : index
    %c112_195 = arith.constant 112 : index
    %201 = vector.load %arg7[%c0_194, %c112_195] : memref<8x256xf32, #tpu.memory_space<vmem>>, vector<8x16xf32>
    %cst_196 = arith.constant dense<0.000000e+00> : vector<8x32xf32>
    %202 = tpu.matmul %201, %2, %cst_196 {dimension_numbers = #tpu.dot_dimension_numbers<[1], [0], [0], [1], [0, 0, 1, 1], [], []>} : vector<8x16xf32>, vector<16x32xf32>, vector<8x32xf32> -> vector<8x32xf32>
    %c0_197 = arith.constant 0 : index
    %c7_198 = arith.constant 7 : index
    %c0_199 = arith.constant 0 : index
    %203 = vector.load %arg8[%c0_197, %c7_198, %c0_199] : memref<8x16x32xf32, #tpu.memory_space<vmem>>, vector<8x1x32xf32>
    %204 = vector.shape_cast %203 : vector<8x1x32xf32> to vector<8x32xf32>
    %205 = vector.shape_cast %202 : vector<8x32xf32> to vector<8x1x32xf32>
    tpu.vector_store %arg8[%c0_197, %c7_198, %c0_199], %205 {strides = array<i32>} : memref<8x16x32xf32, #tpu.memory_space<vmem>>, vector<8x1x32xf32>,
    %c0_200 = arith.constant 0 : index
    %c128_201 = arith.constant 128 : index
    %206 = vector.load %arg7[%c0_200, %c128_201] : memref<8x256xf32, #tpu.memory_space<vmem>>, vector<8x16xf32>
    %cst_202 = arith.constant dense<0.000000e+00> : vector<8x32xf32>
    %207 = tpu.matmul %206, %2, %cst_202 {dimension_numbers = #tpu.dot_dimension_numbers<[1], [0], [0], [1], [0, 0, 1, 1], [], []>} : vector<8x16xf32>, vector<16x32xf32>, vector<8x32xf32> -> vector<8x32xf32>
    %c0_203 = arith.constant 0 : index
    %c8_204 = arith.constant 8 : index
    %c0_205 = arith.constant 0 : index
    %208 = vector.load %arg8[%c0_203, %c8_204, %c0_205] : memref<8x16x32xf32, #tpu.memory_space<vmem>>, vector<8x1x32xf32>
    %209 = vector.shape_cast %208 : vector<8x1x32xf32> to vector<8x32xf32>
    %210 = vector.shape_cast %207 : vector<8x32xf32> to vector<8x1x32xf32>
    tpu.vector_store %arg8[%c0_203, %c8_204, %c0_205], %210 {strides = array<i32>} : memref<8x16x32xf32, #tpu.memory_space<vmem>>, vector<8x1x32xf32>,
    %c0_206 = arith.constant 0 : index
    %c144_207 = arith.constant 144 : index
    %211 = vector.load %arg7[%c0_206, %c144_207] : memref<8x256xf32, #tpu.memory_space<vmem>>, vector<8x16xf32>
    %cst_208 = arith.constant dense<0.000000e+00> : vector<8x32xf32>
    %212 = tpu.matmul %211, %2, %cst_208 {dimension_numbers = #tpu.dot_dimension_numbers<[1], [0], [0], [1], [0, 0, 1, 1], [], []>} : vector<8x16xf32>, vector<16x32xf32>, vector<8x32xf32> -> vector<8x32xf32>
    %c0_209 = arith.constant 0 : index
    %c9_210 = arith.constant 9 : index
    %c0_211 = arith.constant 0 : index
    %213 = vector.load %arg8[%c0_209, %c9_210, %c0_211] : memref<8x16x32xf32, #tpu.memory_space<vmem>>, vector<8x1x32xf32>
    %214 = vector.shape_cast %213 : vector<8x1x32xf32> to vector<8x32xf32>
    %215 = vector.shape_cast %212 : vector<8x32xf32> to vector<8x1x32xf32>
    tpu.vector_store %arg8[%c0_209, %c9_210, %c0_211], %215 {strides = array<i32>} : memref<8x16x32xf32, #tpu.memory_space<vmem>>, vector<8x1x32xf32>,
    %c0_212 = arith.constant 0 : index
    %c160_213 = arith.constant 160 : index
    %216 = vector.load %arg7[%c0_212, %c160_213] : memref<8x256xf32, #tpu.memory_space<vmem>>, vector<8x16xf32>
    %cst_214 = arith.constant dense<0.000000e+00> : vector<8x32xf32>
    %217 = tpu.matmul %216, %2, %cst_214 {dimension_numbers = #tpu.dot_dimension_numbers<[1], [0], [0], [1], [0, 0, 1, 1], [], []>} : vector<8x16xf32>, vector<16x32xf32>, vector<8x32xf32> -> vector<8x32xf32>
    %c0_215 = arith.constant 0 : index
    %c10_216 = arith.constant 10 : index
    %c0_217 = arith.constant 0 : index
    %218 = vector.load %arg8[%c0_215, %c10_216, %c0_217] : memref<8x16x32xf32, #tpu.memory_space<vmem>>, vector<8x1x32xf32>
    %219 = vector.shape_cast %218 : vector<8x1x32xf32> to vector<8x32xf32>
    %220 = vector.shape_cast %217 : vector<8x32xf32> to vector<8x1x32xf32>
    tpu.vector_store %arg8[%c0_215, %c10_216, %c0_217], %220 {strides = array<i32>} : memref<8x16x32xf32, #tpu.memory_space<vmem>>, vector<8x1x32xf32>,
    %c0_218 = arith.constant 0 : index
    %c176_219 = arith.constant 176 : index
    %221 = vector.load %arg7[%c0_218, %c176_219] : memref<8x256xf32, #tpu.memory_space<vmem>>, vector<8x16xf32>
    %cst_220 = arith.constant dense<0.000000e+00> : vector<8x32xf32>
    %222 = tpu.matmul %221, %2, %cst_220 {dimension_numbers = #tpu.dot_dimension_numbers<[1], [0], [0], [1], [0, 0, 1, 1], [], []>} : vector<8x16xf32>, vector<16x32xf32>, vector<8x32xf32> -> vector<8x32xf32>
    %c0_221 = arith.constant 0 : index
    %c11_222 = arith.constant 11 : index
    %c0_223 = arith.constant 0 : index
    %223 = vector.load %arg8[%c0_221, %c11_222, %c0_223] : memref<8x16x32xf32, #tpu.memory_space<vmem>>, vector<8x1x32xf32>
    %224 = vector.shape_cast %223 : vector<8x1x32xf32> to vector<8x32xf32>
    %225 = vector.shape_cast %222 : vector<8x32xf32> to vector<8x1x32xf32>
    tpu.vector_store %arg8[%c0_221, %c11_222, %c0_223], %225 {strides = array<i32>} : memref<8x16x32xf32, #tpu.memory_space<vmem>>, vector<8x1x32xf32>,
    %c0_224 = arith.constant 0 : index
    %c192_225 = arith.constant 192 : index
    %226 = vector.load %arg7[%c0_224, %c192_225] : memref<8x256xf32, #tpu.memory_space<vmem>>, vector<8x16xf32>
    %cst_226 = arith.constant dense<0.000000e+00> : vector<8x32xf32>
    %227 = tpu.matmul %226, %2, %cst_226 {dimension_numbers = #tpu.dot_dimension_numbers<[1], [0], [0], [1], [0, 0, 1, 1], [], []>} : vector<8x16xf32>, vector<16x32xf32>, vector<8x32xf32> -> vector<8x32xf32>
    %c0_227 = arith.constant 0 : index
    %c12_228 = arith.constant 12 : index
    %c0_229 = arith.constant 0 : index
    %228 = vector.load %arg8[%c0_227, %c12_228, %c0_229] : memref<8x16x32xf32, #tpu.memory_space<vmem>>, vector<8x1x32xf32>
    %229 = vector.shape_cast %228 : vector<8x1x32xf32> to vector<8x32xf32>
    %230 = vector.shape_cast %227 : vector<8x32xf32> to vector<8x1x32xf32>
    tpu.vector_store %arg8[%c0_227, %c12_228, %c0_229], %230 {strides = array<i32>} : memref<8x16x32xf32, #tpu.memory_space<vmem>>, vector<8x1x32xf32>,
    %c0_230 = arith.constant 0 : index
    %c208_231 = arith.constant 208 : index
    %231 = vector.load %arg7[%c0_230, %c208_231] : memref<8x256xf32, #tpu.memory_space<vmem>>, vector<8x16xf32>
    %cst_232 = arith.constant dense<0.000000e+00> : vector<8x32xf32>
    %232 = tpu.matmul %231, %2, %cst_232 {dimension_numbers = #tpu.dot_dimension_numbers<[1], [0], [0], [1], [0, 0, 1, 1], [], []>} : vector<8x16xf32>, vector<16x32xf32>, vector<8x32xf32> -> vector<8x32xf32>
    %c0_233 = arith.constant 0 : index
    %c13_234 = arith.constant 13 : index
    %c0_235 = arith.constant 0 : index
    %233 = vector.load %arg8[%c0_233, %c13_234, %c0_235] : memref<8x16x32xf32, #tpu.memory_space<vmem>>, vector<8x1x32xf32>
    %234 = vector.shape_cast %233 : vector<8x1x32xf32> to vector<8x32xf32>
    %235 = vector.shape_cast %232 : vector<8x32xf32> to vector<8x1x32xf32>
    tpu.vector_store %arg8[%c0_233, %c13_234, %c0_235], %235 {strides = array<i32>} : memref<8x16x32xf32, #tpu.memory_space<vmem>>, vector<8x1x32xf32>,
    %c0_236 = arith.constant 0 : index
    %c224_237 = arith.constant 224 : index
    %236 = vector.load %arg7[%c0_236, %c224_237] : memref<8x256xf32, #tpu.memory_space<vmem>>, vector<8x16xf32>
    %cst_238 = arith.constant dense<0.000000e+00> : vector<8x32xf32>
    %237 = tpu.matmul %236, %2, %cst_238 {dimension_numbers = #tpu.dot_dimension_numbers<[1], [0], [0], [1], [0, 0, 1, 1], [], []>} : vector<8x16xf32>, vector<16x32xf32>, vector<8x32xf32> -> vector<8x32xf32>
    %c0_239 = arith.constant 0 : index
    %c14_240 = arith.constant 14 : index
    %c0_241 = arith.constant 0 : index
    %238 = vector.load %arg8[%c0_239, %c14_240, %c0_241] : memref<8x16x32xf32, #tpu.memory_space<vmem>>, vector<8x1x32xf32>
    %239 = vector.shape_cast %238 : vector<8x1x32xf32> to vector<8x32xf32>
    %240 = vector.shape_cast %237 : vector<8x32xf32> to vector<8x1x32xf32>
    tpu.vector_store %arg8[%c0_239, %c14_240, %c0_241], %240 {strides = array<i32>} : memref<8x16x32xf32, #tpu.memory_space<vmem>>, vector<8x1x32xf32>,
    %c0_242 = arith.constant 0 : index
    %c240_243 = arith.constant 240 : index
    %241 = vector.load %arg7[%c0_242, %c240_243] : memref<8x256xf32, #tpu.memory_space<vmem>>, vector<8x16xf32>
    %cst_244 = arith.constant dense<0.000000e+00> : vector<8x32xf32>
    %242 = tpu.matmul %241, %2, %cst_244 {dimension_numbers = #tpu.dot_dimension_numbers<[1], [0], [0], [1], [0, 0, 1, 1], [], []>} : vector<8x16xf32>, vector<16x32xf32>, vector<8x32xf32> -> vector<8x32xf32>
    %c0_245 = arith.constant 0 : index
    %c15_246 = arith.constant 15 : index
    %c0_247 = arith.constant 0 : index
    %243 = vector.load %arg8[%c0_245, %c15_246, %c0_247] : memref<8x16x32xf32, #tpu.memory_space<vmem>>, vector<8x1x32xf32>
    %244 = vector.shape_cast %243 : vector<8x1x32xf32> to vector<8x32xf32>
    %245 = vector.shape_cast %242 : vector<8x32xf32> to vector<8x1x32xf32>
    tpu.vector_store %arg8[%c0_245, %c15_246, %c0_247], %245 {strides = array<i32>} : memref<8x16x32xf32, #tpu.memory_space<vmem>>, vector<8x1x32xf32>,
    %c0_248 = arith.constant 0 : index
    %c0_249 = arith.constant 0 : index
    %c0_250 = arith.constant 0 : index
    %246 = vector.load %arg8[%c0_248, %c0_249, %c0_250] : memref<8x16x32xf32, #tpu.memory_space<vmem>>, vector<1x16x32xf32>
    %247 = vector.shape_cast %246 : vector<1x16x32xf32> to vector<16x32xf32>
    %cst_251 = arith.constant dense<0.000000e+00> : vector<32x32xf32>
    %248 = tpu.matmul %3, %247, %cst_251 {dimension_numbers = #tpu.dot_dimension_numbers<[1], [0], [0], [1], [0, 0, 1, 1], [], []>} : vector<32x16xf32>, vector<16x32xf32>, vector<32x32xf32> -> vector<32x32xf32>
    %c1_252 = arith.constant 1 : index
    %c0_253 = arith.constant 0 : index
    %c0_254 = arith.constant 0 : index
    %c0_255 = arith.constant 0 : index
    %249 = vector.load %arg6[%c1_252, %c0_253, %c0_254, %c0_255] : memref<2x8x32x32xf32, #tpu.memory_space<vmem>>, vector<1x1x32x32xf32>
    %250 = vector.shape_cast %249 : vector<1x1x32x32xf32> to vector<32x32xf32>
    %251 = vector.shape_cast %248 : vector<32x32xf32> to vector<1x1x32x32xf32>
    tpu.vector_store %arg6[%c1_252, %c0_253, %c0_254, %c0_255], %251 {strides = array<i32>} : memref<2x8x32x32xf32, #tpu.memory_space<vmem>>, vector<1x1x32x32xf32>,
    %c1_256 = arith.constant 1 : index
    %c0_257 = arith.constant 0 : index
    %c0_258 = arith.constant 0 : index
    %252 = vector.load %arg8[%c1_256, %c0_257, %c0_258] : memref<8x16x32xf32, #tpu.memory_space<vmem>>, vector<1x16x32xf32>
    %253 = vector.shape_cast %252 : vector<1x16x32xf32> to vector<16x32xf32>
    %cst_259 = arith.constant dense<0.000000e+00> : vector<32x32xf32>
    %254 = tpu.matmul %3, %253, %cst_259 {dimension_numbers = #tpu.dot_dimension_numbers<[1], [0], [0], [1], [0, 0, 1, 1], [], []>} : vector<32x16xf32>, vector<16x32xf32>, vector<32x32xf32> -> vector<32x32xf32>
    %c1_260 = arith.constant 1 : index
    %c1_261 = arith.constant 1 : index
    %c0_262 = arith.constant 0 : index
    %c0_263 = arith.constant 0 : index
    %255 = vector.load %arg6[%c1_260, %c1_261, %c0_262, %c0_263] : memref<2x8x32x32xf32, #tpu.memory_space<vmem>>, vector<1x1x32x32xf32>
    %256 = vector.shape_cast %255 : vector<1x1x32x32xf32> to vector<32x32xf32>
    %257 = vector.shape_cast %254 : vector<32x32xf32> to vector<1x1x32x32xf32>
    tpu.vector_store %arg6[%c1_260, %c1_261, %c0_262, %c0_263], %257 {strides = array<i32>} : memref<2x8x32x32xf32, #tpu.memory_space<vmem>>, vector<1x1x32x32xf32>,
    %c2_264 = arith.constant 2 : index
    %c0_265 = arith.constant 0 : index
    %c0_266 = arith.constant 0 : index
    %258 = vector.load %arg8[%c2_264, %c0_265, %c0_266] : memref<8x16x32xf32, #tpu.memory_space<vmem>>, vector<1x16x32xf32>
    %259 = vector.shape_cast %258 : vector<1x16x32xf32> to vector<16x32xf32>
    %cst_267 = arith.constant dense<0.000000e+00> : vector<32x32xf32>
    %260 = tpu.matmul %3, %259, %cst_267 {dimension_numbers = #tpu.dot_dimension_numbers<[1], [0], [0], [1], [0, 0, 1, 1], [], []>} : vector<32x16xf32>, vector<16x32xf32>, vector<32x32xf32> -> vector<32x32xf32>
    %c1_268 = arith.constant 1 : index
    %c2_269 = arith.constant 2 : index
    %c0_270 = arith.constant 0 : index
    %c0_271 = arith.constant 0 : index
    %261 = vector.load %arg6[%c1_268, %c2_269, %c0_270, %c0_271] : memref<2x8x32x32xf32, #tpu.memory_space<vmem>>, vector<1x1x32x32xf32>
    %262 = vector.shape_cast %261 : vector<1x1x32x32xf32> to vector<32x32xf32>
    %263 = vector.shape_cast %260 : vector<32x32xf32> to vector<1x1x32x32xf32>
    tpu.vector_store %arg6[%c1_268, %c2_269, %c0_270, %c0_271], %263 {strides = array<i32>} : memref<2x8x32x32xf32, #tpu.memory_space<vmem>>, vector<1x1x32x32xf32>,
    %c3_272 = arith.constant 3 : index
    %c0_273 = arith.constant 0 : index
    %c0_274 = arith.constant 0 : index
    %264 = vector.load %arg8[%c3_272, %c0_273, %c0_274] : memref<8x16x32xf32, #tpu.memory_space<vmem>>, vector<1x16x32xf32>
    %265 = vector.shape_cast %264 : vector<1x16x32xf32> to vector<16x32xf32>
    %cst_275 = arith.constant dense<0.000000e+00> : vector<32x32xf32>
    %266 = tpu.matmul %3, %265, %cst_275 {dimension_numbers = #tpu.dot_dimension_numbers<[1], [0], [0], [1], [0, 0, 1, 1], [], []>} : vector<32x16xf32>, vector<16x32xf32>, vector<32x32xf32> -> vector<32x32xf32>
    %c1_276 = arith.constant 1 : index
    %c3_277 = arith.constant 3 : index
    %c0_278 = arith.constant 0 : index
    %c0_279 = arith.constant 0 : index
    %267 = vector.load %arg6[%c1_276, %c3_277, %c0_278, %c0_279] : memref<2x8x32x32xf32, #tpu.memory_space<vmem>>, vector<1x1x32x32xf32>
    %268 = vector.shape_cast %267 : vector<1x1x32x32xf32> to vector<32x32xf32>
    %269 = vector.shape_cast %266 : vector<32x32xf32> to vector<1x1x32x32xf32>
    tpu.vector_store %arg6[%c1_276, %c3_277, %c0_278, %c0_279], %269 {strides = array<i32>} : memref<2x8x32x32xf32, #tpu.memory_space<vmem>>, vector<1x1x32x32xf32>,
    %c4_280 = arith.constant 4 : index
    %c0_281 = arith.constant 0 : index
    %c0_282 = arith.constant 0 : index
    %270 = vector.load %arg8[%c4_280, %c0_281, %c0_282] : memref<8x16x32xf32, #tpu.memory_space<vmem>>, vector<1x16x32xf32>
    %271 = vector.shape_cast %270 : vector<1x16x32xf32> to vector<16x32xf32>
    %cst_283 = arith.constant dense<0.000000e+00> : vector<32x32xf32>
    %272 = tpu.matmul %3, %271, %cst_283 {dimension_numbers = #tpu.dot_dimension_numbers<[1], [0], [0], [1], [0, 0, 1, 1], [], []>} : vector<32x16xf32>, vector<16x32xf32>, vector<32x32xf32> -> vector<32x32xf32>
    %c1_284 = arith.constant 1 : index
    %c4_285 = arith.constant 4 : index
    %c0_286 = arith.constant 0 : index
    %c0_287 = arith.constant 0 : index
    %273 = vector.load %arg6[%c1_284, %c4_285, %c0_286, %c0_287] : memref<2x8x32x32xf32, #tpu.memory_space<vmem>>, vector<1x1x32x32xf32>
    %274 = vector.shape_cast %273 : vector<1x1x32x32xf32> to vector<32x32xf32>
    %275 = vector.shape_cast %272 : vector<32x32xf32> to vector<1x1x32x32xf32>
    tpu.vector_store %arg6[%c1_284, %c4_285, %c0_286, %c0_287], %275 {strides = array<i32>} : memref<2x8x32x32xf32, #tpu.memory_space<vmem>>, vector<1x1x32x32xf32>,
    %c5_288 = arith.constant 5 : index
    %c0_289 = arith.constant 0 : index
    %c0_290 = arith.constant 0 : index
    %276 = vector.load %arg8[%c5_288, %c0_289, %c0_290] : memref<8x16x32xf32, #tpu.memory_space<vmem>>, vector<1x16x32xf32>
    %277 = vector.shape_cast %276 : vector<1x16x32xf32> to vector<16x32xf32>
    %cst_291 = arith.constant dense<0.000000e+00> : vector<32x32xf32>
    %278 = tpu.matmul %3, %277, %cst_291 {dimension_numbers = #tpu.dot_dimension_numbers<[1], [0], [0], [1], [0, 0, 1, 1], [], []>} : vector<32x16xf32>, vector<16x32xf32>, vector<32x32xf32> -> vector<32x32xf32>
    %c1_292 = arith.constant 1 : index
    %c5_293 = arith.constant 5 : index
    %c0_294 = arith.constant 0 : index
    %c0_295 = arith.constant 0 : index
    %279 = vector.load %arg6[%c1_292, %c5_293, %c0_294, %c0_295] : memref<2x8x32x32xf32, #tpu.memory_space<vmem>>, vector<1x1x32x32xf32>
    %280 = vector.shape_cast %279 : vector<1x1x32x32xf32> to vector<32x32xf32>
    %281 = vector.shape_cast %278 : vector<32x32xf32> to vector<1x1x32x32xf32>
    tpu.vector_store %arg6[%c1_292, %c5_293, %c0_294, %c0_295], %281 {strides = array<i32>} : memref<2x8x32x32xf32, #tpu.memory_space<vmem>>, vector<1x1x32x32xf32>,
    %c6_296 = arith.constant 6 : index
    %c0_297 = arith.constant 0 : index
    %c0_298 = arith.constant 0 : index
    %282 = vector.load %arg8[%c6_296, %c0_297, %c0_298] : memref<8x16x32xf32, #tpu.memory_space<vmem>>, vector<1x16x32xf32>
    %283 = vector.shape_cast %282 : vector<1x16x32xf32> to vector<16x32xf32>
    %cst_299 = arith.constant dense<0.000000e+00> : vector<32x32xf32>
    %284 = tpu.matmul %3, %283, %cst_299 {dimension_numbers = #tpu.dot_dimension_numbers<[1], [0], [0], [1], [0, 0, 1, 1], [], []>} : vector<32x16xf32>, vector<16x32xf32>, vector<32x32xf32> -> vector<32x32xf32>
    %c1_300 = arith.constant 1 : index
    %c6_301 = arith.constant 6 : index
    %c0_302 = arith.constant 0 : index
    %c0_303 = arith.constant 0 : index
    %285 = vector.load %arg6[%c1_300, %c6_301, %c0_302, %c0_303] : memref<2x8x32x32xf32, #tpu.memory_space<vmem>>, vector<1x1x32x32xf32>
    %286 = vector.shape_cast %285 : vector<1x1x32x32xf32> to vector<32x32xf32>
    %287 = vector.shape_cast %284 : vector<32x32xf32> to vector<1x1x32x32xf32>
    tpu.vector_store %arg6[%c1_300, %c6_301, %c0_302, %c0_303], %287 {strides = array<i32>} : memref<2x8x32x32xf32, #tpu.memory_space<vmem>>, vector<1x1x32x32xf32>,
    %c7_304 = arith.constant 7 : index
    %c0_305 = arith.constant 0 : index
    %c0_306 = arith.constant 0 : index
    %288 = vector.load %arg8[%c7_304, %c0_305, %c0_306] : memref<8x16x32xf32, #tpu.memory_space<vmem>>, vector<1x16x32xf32>
    %289 = vector.shape_cast %288 : vector<1x16x32xf32> to vector<16x32xf32>
    %cst_307 = arith.constant dense<0.000000e+00> : vector<32x32xf32>
    %290 = tpu.matmul %3, %289, %cst_307 {dimension_numbers = #tpu.dot_dimension_numbers<[1], [0], [0], [1], [0, 0, 1, 1], [], []>} : vector<32x16xf32>, vector<16x32xf32>, vector<32x32xf32> -> vector<32x32xf32>
    %c1_308 = arith.constant 1 : index
    %c7_309 = arith.constant 7 : index
    %c0_310 = arith.constant 0 : index
    %c0_311 = arith.constant 0 : index
    %291 = vector.load %arg6[%c1_308, %c7_309, %c0_310, %c0_311] : memref<2x8x32x32xf32, #tpu.memory_space<vmem>>, vector<1x1x32x32xf32>
    %292 = vector.shape_cast %291 : vector<1x1x32x32xf32> to vector<32x32xf32>
    %293 = vector.shape_cast %290 : vector<32x32xf32> to vector<1x1x32x32xf32>
    tpu.vector_store %arg6[%c1_308, %c7_309, %c0_310, %c0_311], %293 {strides = array<i32>} : memref<2x8x32x32xf32, #tpu.memory_space<vmem>>, vector<1x1x32x32xf32>,
    return
  }
  func.func @transform_0(%arg0: i32) -> (i32, i32, i32) {
    %c0_i32 = arith.constant 0 : i32
    %c0_i32_0 = arith.constant 0 : i32
    %c0_i32_1 = arith.constant 0 : i32
    return %arg0, %c0_i32, %c0_i32_0 : i32, i32, i32
  }
  func.func @transform_1(%arg0: i32) -> (i32, i32) {
    %c0_i32 = arith.constant 0 : i32
    %c0_i32_0 = arith.constant 0 : i32
    %c0_i32_1 = arith.constant 0 : i32
    return %c0_i32, %c0_i32_0 : i32, i32
  }
  func.func @transform_2(%arg0: i32) -> (i32, i32) {
    %c0_i32 = arith.constant 0 : i32
    %c0_i32_0 = arith.constant 0 : i32
    %c0_i32_1 = arith.constant 0 : i32
    return %c0_i32, %c0_i32_0 : i32, i32
  }
  func.func @transform_3(%arg0: i32) -> (i32, i32) {
    %c0_i32 = arith.constant 0 : i32
    %c0_i32_0 = arith.constant 0 : i32
    %c0_i32_1 = arith.constant 0 : i32
    return %c0_i32, %c0_i32_0 : i32, i32
  }
  func.func @transform_4(%arg0: i32) -> (i32, i32) {
    %c0_i32 = arith.constant 0 : i32
    %c0_i32_0 = arith.constant 0 : i32
    %c0_i32_1 = arith.constant 0 : i32
    return %c0_i32, %c0_i32_0 : i32, i32
  }
  func.func @transform_5(%arg0: i32) -> (i32, i32, i32, i32) {
    %c0_i32 = arith.constant 0 : i32
    %c0_i32_0 = arith.constant 0 : i32
    %c0_i32_1 = arith.constant 0 : i32
    %c0_i32_2 = arith.constant 0 : i32
    return %arg0, %c0_i32, %c0_i32_0, %c0_i32_1 : i32, i32, i32, i32
  }
}

</mosaic_0001>

<llo_original>
// kernel: resize_and_classify.1
$region0: #{resize_and_classify.1}
  #allocation0 [shape = 'u32[]', space=smem, size = 0x4, offset = 0x4, fixed_abs, tag = 'smem constant byte address 0x4 - core index']
  #allocation1 [shape = 'u32[144,128]{1,0:T(1,128)}', space=vmem, size = 0x12000, scoped, tag = 'internal scratch']
  #allocation2 [shape = 'f32[8,256]{1,0:T(8,128)}', space=vmem, size = 0x2000, scoped, tag = 'scratch operand']
  #allocation3 [shape = 'f32[8,16,32]{2,1,0:T(8,128)}', space=vmem, size = 0x10000, scoped, tag = 'scratch operand']
  %s0 = inlined_call_operand.vmem [shape: f32[2,32,256], index: 0, kind: input, shape index: {}]
  %s1 = inlined_call_operand.vmem [shape: f32[8,32], index: 1, kind: input, shape index: {}]
  %s2 = inlined_call_operand.vmem [shape: f32[8,1], index: 2, kind: input, shape index: {}]
  %s3 = inlined_call_operand.vmem [shape: f32[16,32], index: 3, kind: input, shape index: {}]
  %s4 = inlined_call_operand.vmem [shape: f32[32,16], index: 4, kind: input, shape index: {}]
  %s5 = inlined_call_operand.hbm [shape: f32[2,8,32,32], index: 5, kind: output, shape index: {}]
  %s6 = sld [smem:[#allocation0]]
  $region30: #{resize_and_classify.1} parent=0
    _
  %s8 = ssub.s32 1, %s6
  %s9 = scalar_select 0, %s8, %s6
  $region1: #{resize_and_classify.1} parent=0
    #allocation4 [shape = 'u8[262144]{0}', space=vmem, size = 0x40000, scoped, tag = 'output window, operand 0, single buffered']
    #allocation5 [shape = 's32[1]{0}', space=sflag, size = 0x4, scoped, tag = 'scoped memory for resize_and_classify.1']
    %10 = vsyncpa [#allocation5], 0
    // Predicated region
    $region2: #{resize_and_classify.1} parent=1 // pred_check
      _
    $region3: #{resize_and_classify.1} parent=1 // pred_check_branch
      %12 = sbr.rel (0) target = $region5
    $region4: #{resize_and_classify.1} parent=1 // pred_region
      _
    $region5: #{resize_and_classify.1} parent=1 // pred_fallthru
      _
    // Predicated region
    $region6: #{resize_and_classify.1} parent=1 // pred_check
      _
    $region7: #{resize_and_classify.1} parent=1 // pred_check_branch
      %14 = sbr.rel (0) target = $region9
    $region8: #{resize_and_classify.1} parent=1 // pred_region
      _
    $region9: #{resize_and_classify.1} parent=1 // pred_fallthru
      _
    // Predicated region
    $region10: #{resize_and_classify.1} parent=1 // pred_check
      _
    $region11: #{resize_and_classify.1} parent=1 // pred_check_branch
      %16 = sbr.rel (0) target = $region13
    $region12: #{resize_and_classify.1} parent=1 // pred_region
      _
    $region13: #{resize_and_classify.1} parent=1 // pred_fallthru
      _
    // Predicated region
    $region14: #{resize_and_classify.1} parent=1 // pred_check
      _
    $region15: #{resize_and_classify.1} parent=1 // pred_check_branch
      %18 = sbr.rel (0) target = $region17
    $region16: #{resize_and_classify.1} parent=1 // pred_region
      _
    $region17: #{resize_and_classify.1} parent=1 // pred_fallthru
      _
    // Predicated region
    $region18: #{resize_and_classify.1} parent=1 // pred_check
      _
    $region19: #{resize_and_classify.1} parent=1 // pred_check_branch
      %20 = sbr.rel (0) target = $region21
    $region20: #{resize_and_classify.1} parent=1 // pred_region
      _
    $region21: #{resize_and_classify.1} parent=1 // pred_fallthru
      _
    %v21 = vld [vmem:[%s1] sm:$0xff]
    %v22 = vld [vmem:[%s2] sm:$0xff]
    %v23 = vld [vmem:[%s3] sm:$0xff]
    %v24 = vld [vmem:[%s3 + $0x8] sm:$0xff]
    %v25 = vld [vmem:[%s4] sm:$0xff]
    %v26 = vld [vmem:[%s4 + $0x8] sm:$0xff]
    %v27 = vld [vmem:[%s4 + $0x10] sm:$0xff]
    %v28 = vld [vmem:[%s4 + $0x18] sm:$0xff]
    %v29 = vld [vmem:[%s0] sm:$0xff]
    %v30 = vld [vmem:[%s0 + $0x8] sm:$0xff]
    %v31 = vld [vmem:[%s0 + $0x10] sm:$0xff]
    %v32 = vld [vmem:[%s0 + $0x18] sm:$0xff]
    %v33 = vld [vmem:[%s0 + $0x20] sm:$0xff]
    %v34 = vld [vmem:[%s0 + $0x28] sm:$0xff]
    %v35 = vld [vmem:[%s0 + $0x30] sm:$0xff]
    %v36 = vld [vmem:[%s0 + $0x38] sm:$0xff]
    %38 = vset.pattern.permute.xlu0 0
    %39 = vperm.xlu0 %38, %v22
    %v40 = vpop.permute.xlu0 %39
    %vm42 = vcmask 261120
    %v44 = vsel %vm42, %v21, 0
    %46 = vmatprep.subr.mxu0 %v30
    %47 = vmatpush1.msra.mxu0 %v29
    %48 = vmatprep.subr.mxu0 %v32
    %49 = vmatpush1.msra.mxu0 %v31
    %50 = vmatprep.subr.mxu0 %v34
    %51 = vmatpush1.msra.mxu0 %v33
    %52 = vmatprep.subr.mxu0 %v36
    %53 = vmatpush1.msra.mxu0 %v35
    %54 = vmatprep.subr.mxu0 0.0
    %55 = vmatpush1.msra.mxu0 0.0
    %56 = vmatprep.subr.mxu0 0.0
    %57 = vmatpush1.msra.mxu0 0.0
    %58 = vmatprep.subr.mxu0 0.0
    %59 = vmatpush1.msra.mxu0 0.0
    %60 = vmatprep.subr.mxu0 0.0
    %61 = vmatpush1.msra.mxu0 0.0
    %62 = vmatprep.subr.mxu0 0.0
    %63 = vmatpush1.msra.mxu0 0.0
    %64 = vmatprep.subr.mxu0 0.0
    %65 = vmatpush1.msra.mxu0 0.0
    %66 = vmatprep.subr.mxu0 0.0
    %67 = vmatpush1.msra.mxu0 0.0
    %68 = vmatprep.subr.mxu0 0.0
    %69 = vmatpush1.msra.mxu0 0.0
    %70 = vmatprep.subr.mxu0 0.0
    %71 = vmatpush1.msra.mxu0 0.0
    %72 = vmatprep.subr.mxu0 0.0
    %73 = vmatpush1.msra.mxu0 0.0
    %74 = vmatprep.subr.mxu0 0.0
    %75 = vmatpush1.msra.mxu0 0.0
    %76 = vmatprep.subr.mxu0 0.0
    %77 = vmatpush1.msra.mxu0 0.0
    %78 = vmatprep.subr.mxu0 0.0
    %79 = vmatpush1.msra.mxu0 0.0
    %80 = vmatprep.subr.mxu0 0.0
    %81 = vmatpush1.msra.mxu0 0.0
    %82 = vmatprep.subr.mxu0 0.0
    %83 = vmatpush1.msra.mxu0 0.0
    %84 = vmatprep.subr.mxu0 0.0
    %85 = vmatpush1.msra.mxu0 0.0
    %86 = vmatprep.subr.mxu0 0.0
    %87 = vmatpush1.msra.mxu0 0.0
    %88 = vmatprep.subr.mxu0 0.0
    %89 = vmatpush1.msra.mxu0 0.0
    %90 = vmatprep.subr.mxu0 0.0
    %91 = vmatpush1.msra.mxu0 0.0
    %92 = vmatprep.subr.mxu0 0.0
    %93 = vmatpush1.msra.mxu0 0.0
    %94 = vmatprep.subr.mxu0 0.0
    %95 = vmatpush1.msra.mxu0 0.0
    %96 = vmatprep.subr.mxu0 0.0
    %97 = vmatpush1.msra.mxu0 0.0
    %98 = vmatprep.subr.mxu0 0.0
    %99 = vmatpush1.msra.mxu0 0.0
    %100 = vmatprep.subr.mxu0 0.0
    %101 = vmatpush1.msra.mxu0 0.0
    %102 = vmatprep.subr.mxu0 0.0
    %103 = vmatpush1.msra.mxu0 0.0
    %104 = vmatprep.subr.mxu0 0.0
    %105 = vmatpush1.msra.mxu0 0.0
    %106 = vmatprep.subr.mxu0 0.0
    %107 = vmatpush1.msra.mxu0 0.0
    %108 = vmatprep.subr.mxu0 0.0
    %109 = vmatpush1.msra.mxu0 0.0
    %110 = vmatprep.mubr.f32.mxu0 0.0
    %111 = vmatmul.mubr.f32.gmra.mrb[0].mxu0 %v44
    %v112 = vpop.f32.mrb[0].mxu0
    %v113 = vadd.f32 %v40, %v112
    %v114 = vpop.f32.mrb[0].mxu0
    %v115 = vadd.f32 %v40, %v114
    %116 = vdwg.mxu0
    %v117 = vrot.slane %v113, 4
    %v118 = vmax.f32 %v113, %v117
    %v119 = vrot.slane %v118, 2
    %v120 = vmax.f32 %v118, %v119
    %v121 = vrot.slane %v120, 1
    %v122 = vmax.f32 %v120, %v121
    %v123 = vrot.slane %v115, 4
    %v124 = vmax.f32 %v115, %v123
    %v125 = vrot.slane %v124, 2
    %v126 = vmax.f32 %v124, %v125
    %v127 = vrot.slane %v126, 1
    %v128 = vmax.f32 %v126, %v127
    %v129 = vsub.f32 %v113, %v122
    %v130 = vsub.f32 %v115, %v128
    %v131 = vmul.f32 %v129, 1.442695
    %v132 = vpow.pop %v131
    %v133 = vmul.f32 %v130, 1.442695
    %v134 = vpow.pop %v133
    %v135 = vrot.slane %v132, 4
    %v136 = vadd.f32 %v132, %v135
    %v137 = vrot.slane %v136, 2
    %v138 = vadd.f32 %v136, %v137
    %v139 = vrot.slane %v138, 1
    %v140 = vadd.f32 %v138, %v139
    %v141 = vrot.slane %v134, 4
    %v142 = vadd.f32 %v134, %v141
    %v143 = vrot.slane %v142, 2
    %v144 = vadd.f32 %v142, %v143
    %v145 = vrot.slane %v144, 1
    %v146 = vadd.f32 %v144, %v145
    %v147 = vlog2.pop %v140
    %v148 = vmul.f32 %v147, 0.6931472
    %v149 = vlog2.pop %v146
    %v150 = vmul.f32 %v149, 0.6931472
    %v151 = vadd.f32 %v148, %v122
    %v152 = vadd.f32 %v150, %v128
    %v153 = vsub.f32 %v113, %v151
    %v154 = vsub.f32 %v115, %v152
    %155 = vst [vmem:[#allocation2] sm:$0xff] %v153
    %156 = vst [vmem:[#allocation2 + $0x8] sm:$0xff] %v154
    %v157 = vld [vmem:[#allocation2] sm:$0xff]
    %vm158 = vcmask 130048
    %v160 = vsel %vm158, %v157, 0
    %162 = vmatprep.subr.mxu0 0.0
    %163 = vmatpush1.msra.mxu0 %v23
    %164 = vmatprep.subr.mxu0 0.0
    %165 = vmatpush1.msra.mxu0 %v24
    %166 = vmatprep.subr.mxu0 0.0
    %167 = vmatpush1.msra.mxu0 0.0
    %168 = vmatprep.subr.mxu0 0.0
    %169 = vmatpush1.msra.mxu0 0.0
    %170 = vmatprep.subr.mxu0 0.0
    %171 = vmatpush1.msra.mxu0 0.0
    %172 = vmatprep.subr.mxu0 0.0
    %173 = vmatpush1.msra.mxu0 0.0
    %174 = vmatprep.subr.mxu0 0.0
    %175 = vmatpush1.msra.mxu0 0.0
    %176 = vmatprep.subr.mxu0 0.0
    %177 = vmatpush1.msra.mxu0 0.0
    %178 = vmatprep.subr.mxu0 0.0
    %179 = vmatpush1.msra.mxu0 0.0
    %180 = vmatprep.subr.mxu0 0.0
    %181 = vmatpush1.msra.mxu0 0.0
    %182 = vmatprep.subr.mxu0 0.0
    %183 = vmatpush1.msra.mxu0 0.0
    %184 = vmatprep.subr.mxu0 0.0
    %185 = vmatpush1.msra.mxu0 0.0
    %186 = vmatprep.subr.mxu0 0.0
    %187 = vmatpush1.msra.mxu0 0.0
    %188 = vmatprep.subr.mxu0 0.0
    %189 = vmatpush1.msra.mxu0 0.0
    %190 = vmatprep.subr.mxu0 0.0
    %191 = vmatpush1.msra.mxu0 0.0
    %192 = vmatprep.subr.mxu0 0.0
    %193 = vmatpush1.msra.mxu0 0.0
    %194 = vmatprep.subr.mxu0 0.0
    %195 = vmatpush1.msra.mxu0 0.0
    %196 = vmatprep.subr.mxu0 0.0
    %197 = vmatpush1.msra.mxu0 0.0
    %198 = vmatprep.subr.mxu0 0.0
    %199 = vmatpush1.msra.mxu0 0.0
    %200 = vmatprep.subr.mxu0 0.0
    %201 = vmatpush1.msra.mxu0 0.0
    %202 = vmatprep.subr.mxu0 0.0
    %203 = vmatpush1.msra.mxu0 0.0
    %204 = vmatprep.subr.mxu0 0.0
    %205 = vmatpush1.msra.mxu0 0.0
    %206 = vmatprep.subr.mxu0 0.0
    %207 = vmatpush1.msra.mxu0 0.0
    %208 = vmatprep.subr.mxu0 0.0
    %209 = vmatpush1.msra.mxu0 0.0
    %210 = vmatprep.subr.mxu0 0.0
    %211 = vmatpush1.msra.mxu0 0.0
    %212 = vmatprep.subr.mxu0 0.0
    %213 = vmatpush1.msra.mxu0 0.0
    %214 = vmatprep.subr.mxu0 0.0
    %215 = vmatpush1.msra.mxu0 0.0
    %216 = vmatprep.subr.mxu0 0.0
    %217 = vmatpush1.msra.mxu0 0.0
    %218 = vmatprep.subr.mxu0 0.0
    %219 = vmatpush1.msra.mxu0 0.0
    %220 = vmatprep.subr.mxu0 0.0
    %221 = vmatpush1.msra.mxu0 0.0
    %222 = vmatprep.subr.mxu0 0.0
    %223 = vmatpush1.msra.mxu0 0.0
    %224 = vmatprep.subr.mxu0 0.0
    %225 = vmatpush1.msra.mxu0 0.0
    %226 = vmatprep.mubr.f32.mxu0 0.0
    %227 = vmatmul.mubr.f32.gmra.mrb[0].mxu0 %v160
    %v228 = vpop.f32.mrb[0].mxu0
    %v229 = vadd.f32 0.0, %v228
    %v230 = vpop.f32.mrb[0].mxu0
    %231 = vdwg.mxu0
    %v233 = vcombine.high %v229, %v229
    %v235 = vunpack.c.l.s4 1966171168
    %v236 = vunpack.c.0.s8 %v235
    %v237 = vlaneseq
    %v238 = vshrl.u32 %v237, 7
    %v239 = vsub.s32 %v236, %v238
    %v240 = vrot.slane %v229, %v239
    %v242 = vunpack.c.l.s4 1966171168
    %v243 = vunpack.c.0.s8 %v242
    %v244 = vlaneseq
    %v245 = vshrl.u32 %v244, 7
    %v246 = vsub.s32 %v243, %v245
    %v247 = vrot.slane %v233, %v246
    %v248 = vcombine.high %v240, %v240
    %v249 = vcombine.high %v247, %v247
    %v251 = vunpack.c.l.s4 1966171168
    %v252 = vunpack.c.0.s8 %v251
    %v253 = vlaneseq
    %v254 = vshrl.u32 %v253, 7
    %v255 = vsub.s32 %v252, %v254
    %v256 = vrot.slane %v240, %v255
    %v258 = vunpack.c.l.s4 1966171168
    %v259 = vunpack.c.0.s8 %v258
    %v260 = vlaneseq
    %v261 = vshrl.u32 %v260, 7
    %v262 = vsub.s32 %v259, %v261
    %v263 = vrot.slane %v247, %v262
    %v265 = vunpack.c.l.s4 1966171168
    %v266 = vunpack.c.0.s8 %v265
    %v267 = vlaneseq
    %v268 = vshrl.u32 %v267, 7
    %v269 = vsub.s32 %v266, %v268
    %v270 = vrot.slane %v248, %v269
    %v272 = vunpack.c.l.s4 1966171168
    %v273 = vunpack.c.0.s8 %v272
    %v274 = vlaneseq
    %v275 = vshrl.u32 %v274, 7
    %v276 = vsub.s32 %v273, %v275
    %v277 = vrot.slane %v249, %v276
    %v278 = vcombine.high %v256, %v256
    %v279 = vcombine.high %v263, %v263
    %v280 = vcombine.high %v270, %v270
    %v281 = vcombine.high %v277, %v277
    %vm290 = vcmask 253952
    %291 = vst.msk [vmem:[#allocation3] sm:$0x1] %vm290, %v256
    %292 = vst.msk [vmem:[#allocation3 + $0x10] sm:$0x1] %vm290, %v270
    %293 = vst.msk [vmem:[#allocation3 + $0x20] sm:$0x1] %vm290, %v278
    %294 = vst.msk [vmem:[#allocation3 + $0x30] sm:$0x1] %vm290, %v280
    %295 = vst.msk [vmem:[#allocation3 + $0x40] sm:$0x1] %vm290, %v263
    %296 = vst.msk [vmem:[#allocation3 + $0x50] sm:$0x1] %vm290, %v277
    %297 = vst.msk [vmem:[#allocation3 + $0x60] sm:$0x1] %vm290, %v279
    %298 = vst.msk [vmem:[#allocation3 + $0x70] sm:$0x1] %vm290, %v281
    %v299 = vld [vmem:[#allocation2] sm:$0xff]
    %301 = vrot.lane.b32.xlu0 %v299, 112
    %v302 = vpop.permute.xlu0 %301
    %v303 = vsel %vm158, %v302, 0
    %305 = vmatprep.subr.mxu0 0.0
    %306 = vmatpush1.msra.mxu0 %v23
    %307 = vmatprep.subr.mxu0 0.0
    %308 = vmatpush1.msra.mxu0 %v24
    %309 = vmatprep.subr.mxu0 0.0
    %310 = vmatpush1.msra.mxu0 0.0
    %311 = vmatprep.subr.mxu0 0.0
    %312 = vmatpush1.msra.mxu0 0.0
    %313 = vmatprep.subr.mxu0 0.0
    %314 = vmatpush1.msra.mxu0 0.0
    %315 = vmatprep.subr.mxu0 0.0
    %316 = vmatpush1.msra.mxu0 0.0
    %317 = vmatprep.subr.mxu0 0.0
    %318 = vmatpush1.msra.mxu0 0.0
    %319 = vmatprep.subr.mxu0 0.0
    %320 = vmatpush1.msra.mxu0 0.0
    %321 = vmatprep.subr.mxu0 0.0
    %322 = vmatpush1.msra.mxu0 0.0
    %323 = vmatprep.subr.mxu0 0.0
    %324 = vmatpush1.msra.mxu0 0.0
    %325 = vmatprep.subr.mxu0 0.0
    %326 = vmatpush1.msra.mxu0 0.0
    %327 = vmatprep.subr.mxu0 0.0
    %328 = vmatpush1.msra.mxu0 0.0
    %329 = vmatprep.subr.mxu0 0.0
    %330 = vmatpush1.msra.mxu0 0.0
    %331 = vmatprep.subr.mxu0 0.0
    %332 = vmatpush1.msra.mxu0 0.0
    %333 = vmatprep.subr.mxu0 0.0
    %334 = vmatpush1.msra.mxu0 0.0
    %335 = vmatprep.subr.mxu0 0.0
    %336 = vmatpush1.msra.mxu0 0.0
    %337 = vmatprep.subr.mxu0 0.0
    %338 = vmatpush1.msra.mxu0 0.0
    %339 = vmatprep.subr.mxu0 0.0
    %340 = vmatpush1.msra.mxu0 0.0
    %341 = vmatprep.subr.mxu0 0.0
    %342 = vmatpush1.msra.mxu0 0.0
    %343 = vmatprep.subr.mxu0 0.0
    %344 = vmatpush1.msra.mxu0 0.0
    %345 = vmatprep.subr.mxu0 0.0
    %346 = vmatpush1.msra.mxu0 0.0
    %347 = vmatprep.subr.mxu0 0.0
    %348 = vmatpush1.msra.mxu0 0.0
    %349 = vmatprep.subr.mxu0 0.0
    %350 = vmatpush1.msra.mxu0 0.0
    %351 = vmatprep.subr.mxu0 0.0
    %352 = vmatpush1.msra.mxu0 0.0
    %353 = vmatprep.subr.mxu0 0.0
    %354 = vmatpush1.msra.mxu0 0.0
    %355 = vmatprep.subr.mxu0 0.0
    %356 = vmatpush1.msra.mxu0 0.0
    %357 = vmatprep.subr.mxu0 0.0
    %358 = vmatpush1.msra.mxu0 0.0
    %359 = vmatprep.subr.mxu0 0.0
    %360 = vmatpush1.msra.mxu0 0.0
    %361 = vmatprep.subr.mxu0 0.0
    %362 = vmatpush1.msra.mxu0 0.0
    %363 = vmatprep.subr.mxu0 0.0
    %364 = vmatpush1.msra.mxu0 0.0
    %365 = vmatprep.subr.mxu0 0.0
    %366 = vmatpush1.msra.mxu0 0.0
    %367 = vmatprep.subr.mxu0 0.0
    %368 = vmatpush1.msra.mxu0 0.0
    %369 = vmatprep.mubr.f32.mxu0 0.0
    %370 = vmatmul.mubr.f32.gmra.mrb[0].mxu0 %v303
    %v371 = vpop.f32.mrb[0].mxu0
    %v372 = vadd.f32 0.0, %v371
    %v373 = vpop.f32.mrb[0].mxu0
    %374 = vdwg.mxu0
    %v376 = vcombine.high %v372, %v372
    %v378 = vunpack.c.l.s4 1966171168
    %v379 = vunpack.c.0.s8 %v378
    %v380 = vlaneseq
    %v381 = vshrl.u32 %v380, 7
    %v382 = vsub.s32 %v379, %v381
    %v383 = vrot.slane %v372, %v382
    %v385 = vunpack.c.l.s4 1966171168
    %v386 = vunpack.c.0.s8 %v385
    %v387 = vlaneseq
    %v388 = vshrl.u32 %v387, 7
    %v389 = vsub.s32 %v386, %v388
    %v390 = vrot.slane %v376, %v389
    %v391 = vcombine.high %v383, %v383
    %v392 = vcombine.high %v390, %v390
    %v394 = vunpack.c.l.s4 1966171168
    %v395 = vunpack.c.0.s8 %v394
    %v396 = vlaneseq
    %v397 = vshrl.u32 %v396, 7
    %v398 = vsub.s32 %v395, %v397
    %v399 = vrot.slane %v383, %v398
    %v401 = vunpack.c.l.s4 1966171168
    %v402 = vunpack.c.0.s8 %v401
    %v403 = vlaneseq
    %v404 = vshrl.u32 %v403, 7
    %v405 = vsub.s32 %v402, %v404
    %v406 = vrot.slane %v390, %v405
    %v408 = vunpack.c.l.s4 1966171168
    %v409 = vunpack.c.0.s8 %v408
    %v410 = vlaneseq
    %v411 = vshrl.u32 %v410, 7
    %v412 = vsub.s32 %v409, %v411
    %v413 = vrot.slane %v391, %v412
    %v415 = vunpack.c.l.s4 1966171168
    %v416 = vunpack.c.0.s8 %v415
    %v417 = vlaneseq
    %v418 = vshrl.u32 %v417, 7
    %v419 = vsub.s32 %v416, %v418
    %v420 = vrot.slane %v392, %v419
    %v421 = vcombine.high %v399, %v399
    %v422 = vcombine.high %v406, %v406
    %v423 = vcombine.high %v413, %v413
    %v424 = vcombine.high %v420, %v420
    %433 = vst.msk [vmem:[#allocation3 + $0x1] sm:$0x1] %vm290, %v399
    %434 = vst.msk [vmem:[#allocation3 + $0x11] sm:$0x1] %vm290, %v413
    %435 = vst.msk [vmem:[#allocation3 + $0x21] sm:$0x1] %vm290, %v421
    %436 = vst.msk [vmem:[#allocation3 + $0x31] sm:$0x1] %vm290, %v423
    %437 = vst.msk [vmem:[#allocation3 + $0x41] sm:$0x1] %vm290, %v406
    %438 = vst.msk [vmem:[#allocation3 + $0x51] sm:$0x1] %vm290, %v420
    %439 = vst.msk [vmem:[#allocation3 + $0x61] sm:$0x1] %vm290, %v422
    %440 = vst.msk [vmem:[#allocation3 + $0x71] sm:$0x1] %vm290, %v424
    %v441 = vld [vmem:[#allocation2] sm:$0xff]
    %443 = vrot.lane.b32.xlu0 %v441, 96
    %v444 = vpop.permute.xlu0 %443
    %v445 = vsel %vm158, %v444, 0
    %447 = vmatprep.subr.mxu0 0.0
    %448 = vmatpush1.msra.mxu0 %v23
    %449 = vmatprep.subr.mxu0 0.0
    %450 = vmatpush1.msra.mxu0 %v24
    %451 = vmatprep.subr.mxu0 0.0
    %452 = vmatpush1.msra.mxu0 0.0
    %453 = vmatprep.subr.mxu0 0.0
    %454 = vmatpush1.msra.mxu0 0.0
    %455 = vmatprep.subr.mxu0 0.0
    %456 = vmatpush1.msra.mxu0 0.0
    %457 = vmatprep.subr.mxu0 0.0
    %458 = vmatpush1.msra.mxu0 0.0
    %459 = vmatprep.subr.mxu0 0.0
    %460 = vmatpush1.msra.mxu0 0.0
    %461 = vmatprep.subr.mxu0 0.0
    %462 = vmatpush1.msra.mxu0 0.0
    %463 = vmatprep.subr.mxu0 0.0
    %464 = vmatpush1.msra.mxu0 0.0
    %465 = vmatprep.subr.mxu0 0.0
    %466 = vmatpush1.msra.mxu0 0.0
    %467 = vmatprep.subr.mxu0 0.0
    %468 = vmatpush1.msra.mxu0 0.0
    %469 = vmatprep.subr.mxu0 0.0
    %470 = vmatpush1.msra.mxu0 0.0
    %471 = vmatprep.subr.mxu0 0.0
    %472 = vmatpush1.msra.mxu0 0.0
    %473 = vmatprep.subr.mxu0 0.0
    %474 = vmatpush1.msra.mxu0 0.0
    %475 = vmatprep.subr.mxu0 0.0
    %476 = vmatpush1.msra.mxu0 0.0
    %477 = vmatprep.subr.mxu0 0.0
    %478 = vmatpush1.msra.mxu0 0.0
    %479 = vmatprep.subr.mxu0 0.0
    %480 = vmatpush1.msra.mxu0 0.0
    %481 = vmatprep.subr.mxu0 0.0
    %482 = vmatpush1.msra.mxu0 0.0
    %483 = vmatprep.subr.mxu0 0.0
    %484 = vmatpush1.msra.mxu0 0.0
    %485 = vmatprep.subr.mxu0 0.0
    %486 = vmatpush1.msra.mxu0 0.0
    %487 = vmatprep.subr.mxu0 0.0
    %488 = vmatpush1.msra.mxu0 0.0
    %489 = vmatprep.subr.mxu0 0.0
    %490 = vmatpush1.msra.mxu0 0.0
    %491 = vmatprep.subr.mxu0 0.0
    %492 = vmatpush1.msra.mxu0 0.0
    %493 = vmatprep.subr.mxu0 0.0
    %494 = vmatpush1.msra.mxu0 0.0
    %495 = vmatprep.subr.mxu0 0.0
    %496 = vmatpush1.msra.mxu0 0.0
    %497 = vmatprep.subr.mxu0 0.0
    %498 = vmatpush1.msra.mxu0 0.0
    %499 = vmatprep.subr.mxu0 0.0
    %500 = vmatpush1.msra.mxu0 0.0
    %501 = vmatprep.subr.mxu0 0.0
    %502 = vmatpush1.msra.mxu0 0.0
    %503 = vmatprep.subr.mxu0 0.0
    %504 = vmatpush1.msra.mxu0 0.0
    %505 = vmatprep.subr.mxu0 0.0
    %506 = vmatpush1.msra.mxu0 0.0
    %507 = vmatprep.subr.mxu0 0.0
    %508 = vmatpush1.msra.mxu0 0.0
    %509 = vmatprep.subr.mxu0 0.0
    %510 = vmatpush1.msra.mxu0 0.0
    %511 = vmatprep.mubr.f32.mxu0 0.0
    %512 = vmatmul.mubr.f32.gmra.mrb[0].mxu0 %v445
    %v513 = vpop.f32.mrb[0].mxu0
    %v514 = vadd.f32 0.0, %v513
    %v515 = vpop.f32.mrb[0].mxu0
    %516 = vdwg.mxu0
    %v518 = vcombine.high %v514, %v514
    %v520 = vunpack.c.l.s4 1966171168
    %v521 = vunpack.c.0.s8 %v520
    %v522 = vlaneseq
    %v523 = vshrl.u32 %v522, 7
    %v524 = vsub.s32 %v521, %v523
    %v525 = vrot.slane %v514, %v524
    %v527 = vunpack.c.l.s4 1966171168
    %v528 = vunpack.c.0.s8 %v527
    %v529 = vlaneseq
    %v530 = vshrl.u32 %v529, 7
    %v531 = vsub.s32 %v528, %v530
    %v532 = vrot.slane %v518, %v531
    %v533 = vcombine.high %v525, %v525
    %v534 = vcombine.high %v532, %v532
    %v536 = vunpack.c.l.s4 1966171168
    %v537 = vunpack.c.0.s8 %v536
    %v538 = vlaneseq
    %v539 = vshrl.u32 %v538, 7
    %v540 = vsub.s32 %v537, %v539
    %v541 = vrot.slane %v525, %v540
    %v543 = vunpack.c.l.s4 1966171168
    %v544 = vunpack.c.0.s8 %v543
    %v545 = vlaneseq
    %v546 = vshrl.u32 %v545, 7
    %v547 = vsub.s32 %v544, %v546
    %v548 = vrot.slane %v532, %v547
    %v550 = vunpack.c.l.s4 1966171168
    %v551 = vunpack.c.0.s8 %v550
    %v552 = vlaneseq
    %v553 = vshrl.u32 %v552, 7
    %v554 = vsub.s32 %v551, %v553
    %v555 = vrot.slane %v533, %v554
    %v557 = vunpack.c.l.s4 1966171168
    %v558 = vunpack.c.0.s8 %v557
    %v559 = vlaneseq
    %v560 = vshrl.u32 %v559, 7
    %v561 = vsub.s32 %v558, %v560
    %v562 = vrot.slane %v534, %v561
    %v563 = vcombine.high %v541, %v541
    %v564 = vcombine.high %v548, %v548
    %v565 = vcombine.high %v555, %v555
    %v566 = vcombine.high %v562, %v562
    %575 = vst.msk [vmem:[#allocation3 + $0x2] sm:$0x1] %vm290, %v541
    %576 = vst.msk [vmem:[#allocation3 + $0x12] sm:$0x1] %vm290, %v555
    %577 = vst.msk [vmem:[#allocation3 + $0x22] sm:$0x1] %vm290, %v563
    %578 = vst.msk [vmem:[#allocation3 + $0x32] sm:$0x1] %vm290, %v565
    %579 = vst.msk [vmem:[#allocation3 + $0x42] sm:$0x1] %vm290, %v548
    %580 = vst.msk [vmem:[#allocation3 + $0x52] sm:$0x1] %vm290, %v562
    %581 = vst.msk [vmem:[#allocation3 + $0x62] sm:$0x1] %vm290, %v564
    %582 = vst.msk [vmem:[#allocation3 + $0x72] sm:$0x1] %vm290, %v566
    %v583 = vld [vmem:[#allocation2] sm:$0xff]
    %585 = vrot.lane.b32.xlu0 %v583, 80
    %v586 = vpop.permute.xlu0 %585
    %v587 = vsel %vm158, %v586, 0
    %589 = vmatprep.subr.mxu0 0.0
    %590 = vmatpush1.msra.mxu0 %v23
    %591 = vmatprep.subr.mxu0 0.0
    %592 = vmatpush1.msra.mxu0 %v24
    %593 = vmatprep.subr.mxu0 0.0
    %594 = vmatpush1.msra.mxu0 0.0
    %595 = vmatprep.subr.mxu0 0.0
    %596 = vmatpush1.msra.mxu0 0.0
    %597 = vmatprep.subr.mxu0 0.0
    %598 = vmatpush1.msra.mxu0 0.0
    %599 = vmatprep.subr.mxu0 0.0
    %600 = vmatpush1.msra.mxu0 0.0
    %601 = vmatprep.subr.mxu0 0.0
    %602 = vmatpush1.msra.mxu0 0.0
    %603 = vmatprep.subr.mxu0 0.0
    %604 = vmatpush1.msra.mxu0 0.0
    %605 = vmatprep.subr.mxu0 0.0
    %606 = vmatpush1.msra.mxu0 0.0
    %607 = vmatprep.subr.mxu0 0.0
    %608 = vmatpush1.msra.mxu0 0.0
    %609 = vmatprep.subr.mxu0 0.0
    %610 = vmatpush1.msra.mxu0 0.0
    %611 = vmatprep.subr.mxu0 0.0
    %612 = vmatpush1.msra.mxu0 0.0
    %613 = vmatprep.subr.mxu0 0.0
    %614 = vmatpush1.msra.mxu0 0.0
    %615 = vmatprep.subr.mxu0 0.0
    %616 = vmatpush1.msra.mxu0 0.0
    %617 = vmatprep.subr.mxu0 0.0
    %618 = vmatpush1.msra.mxu0 0.0
    %619 = vmatprep.subr.mxu0 0.0
    %620 = vmatpush1.msra.mxu0 0.0
    %621 = vmatprep.subr.mxu0 0.0
    %622 = vmatpush1.msra.mxu0 0.0
    %623 = vmatprep.subr.mxu0 0.0
    %624 = vmatpush1.msra.mxu0 0.0
    %625 = vmatprep.subr.mxu0 0.0
    %626 = vmatpush1.msra.mxu0 0.0
    %627 = vmatprep.subr.mxu0 0.0
    %628 = vmatpush1.msra.mxu0 0.0
    %629 = vmatprep.subr.mxu0 0.0
    %630 = vmatpush1.msra.mxu0 0.0
    %631 = vmatprep.subr.mxu0 0.0
    %632 = vmatpush1.msra.mxu0 0.0
    %633 = vmatprep.subr.mxu0 0.0
    %634 = vmatpush1.msra.mxu0 0.0
    %635 = vmatprep.subr.mxu0 0.0
    %636 = vmatpush1.msra.mxu0 0.0
    %637 = vmatprep.subr.mxu0 0.0
    %638 = vmatpush1.msra.mxu0 0.0
    %639 = vmatprep.subr.mxu0 0.0
    %640 = vmatpush1.msra.mxu0 0.0
    %641 = vmatprep.subr.mxu0 0.0
    %642 = vmatpush1.msra.mxu0 0.0
    %643 = vmatprep.subr.mxu0 0.0
    %644 = vmatpush1.msra.mxu0 0.0
    %645 = vmatprep.subr.mxu0 0.0
    %646 = vmatpush1.msra.mxu0 0.0
    %647 = vmatprep.subr.mxu0 0.0
    %648 = vmatpush1.msra.mxu0 0.0
    %649 = vmatprep.subr.mxu0 0.0
    %650 = vmatpush1.msra.mxu0 0.0
    %651 = vmatprep.subr.mxu0 0.0
    %652 = vmatpush1.msra.mxu0 0.0
    %653 = vmatprep.mubr.f32.mxu0 0.0
    %654 = vmatmul.mubr.f32.gmra.mrb[0].mxu0 %v587
    %v655 = vpop.f32.mrb[0].mxu0
    %v656 = vadd.f32 0.0, %v655
    %v657 = vpop.f32.mrb[0].mxu0
    %658 = vdwg.mxu0
    %v660 = vcombine.high %v656, %v656
    %v662 = vunpack.c.l.s4 1966171168
    %v663 = vunpack.c.0.s8 %v662
    %v664 = vlaneseq
    %v665 = vshrl.u32 %v664, 7
    %v666 = vsub.s32 %v663, %v665
    %v667 = vrot.slane %v656, %v666
    %v669 = vunpack.c.l.s4 1966171168
    %v670 = vunpack.c.0.s8 %v669
    %v671 = vlaneseq
    %v672 = vshrl.u32 %v671, 7
    %v673 = vsub.s32 %v670, %v672
    %v674 = vrot.slane %v660, %v673
    %v675 = vcombine.high %v667, %v667
    %v676 = vcombine.high %v674, %v674
    %v678 = vunpack.c.l.s4 1966171168
    %v679 = vunpack.c.0.s8 %v678
    %v680 = vlaneseq
    %v681 = vshrl.u32 %v680, 7
    %v682 = vsub.s32 %v679, %v681
    %v683 = vrot.slane %v667, %v682
    %v685 = vunpack.c.l.s4 1966171168
    %v686 = vunpack.c.0.s8 %v685
    %v687 = vlaneseq
    %v688 = vshrl.u32 %v687, 7
    %v689 = vsub.s32 %v686, %v688
    %v690 = vrot.slane %v674, %v689
    %v692 = vunpack.c.l.s4 1966171168
    %v693 = vunpack.c.0.s8 %v692
    %v694 = vlaneseq
    %v695 = vshrl.u32 %v694, 7
    %v696 = vsub.s32 %v693, %v695
    %v697 = vrot.slane %v675, %v696
    %v699 = vunpack.c.l.s4 1966171168
    %v700 = vunpack.c.0.s8 %v699
    %v701 = vlaneseq
    %v702 = vshrl.u32 %v701, 7
    %v703 = vsub.s32 %v700, %v702
    %v704 = vrot.slane %v676, %v703
    %v705 = vcombine.high %v683, %v683
    %v706 = vcombine.high %v690, %v690
    %v707 = vcombine.high %v697, %v697
    %v708 = vcombine.high %v704, %v704
    %717 = vst.msk [vmem:[#allocation3 + $0x3] sm:$0x1] %vm290, %v683
    %718 = vst.msk [vmem:[#allocation3 + $0x13] sm:$0x1] %vm290, %v697
    %719 = vst.msk [vmem:[#allocation3 + $0x23] sm:$0x1] %vm290, %v705
    %720 = vst.msk [vmem:[#allocation3 + $0x33] sm:$0x1] %vm290, %v707
    %721 = vst.msk [vmem:[#allocation3 + $0x43] sm:$0x1] %vm290, %v690
    %722 = vst.msk [vmem:[#allocation3 + $0x53] sm:$0x1] %vm290, %v704
    %723 = vst.msk [vmem:[#allocation3 + $0x63] sm:$0x1] %vm290, %v706
    %724 = vst.msk [vmem:[#allocation3 + $0x73] sm:$0x1] %vm290, %v708
    %v725 = vld [vmem:[#allocation2] sm:$0xff]
    %727 = vrot.lane.b32.xlu0 %v725, 64
    %v728 = vpop.permute.xlu0 %727
    %v729 = vsel %vm158, %v728, 0
    %731 = vmatprep.subr.mxu0 0.0
    %732 = vmatpush1.msra.mxu0 %v23
    %733 = vmatprep.subr.mxu0 0.0
    %734 = vmatpush1.msra.mxu0 %v24
    %735 = vmatprep.subr.mxu0 0.0
    %736 = vmatpush1.msra.mxu0 0.0
    %737 = vmatprep.subr.mxu0 0.0
    %738 = vmatpush1.msra.mxu0 0.0
    %739 = vmatprep.subr.mxu0 0.0
    %740 = vmatpush1.msra.mxu0 0.0
    %741 = vmatprep.subr.mxu0 0.0
    %742 = vmatpush1.msra.mxu0 0.0
    %743 = vmatprep.subr.mxu0 0.0
    %744 = vmatpush1.msra.mxu0 0.0
    %745 = vmatprep.subr.mxu0 0.0
    %746 = vmatpush1.msra.mxu0 0.0
    %747 = vmatprep.subr.mxu0 0.0
    %748 = vmatpush1.msra.mxu0 0.0
    %749 = vmatprep.subr.mxu0 0.0
    %750 = vmatpush1.msra.mxu0 0.0
    %751 = vmatprep.subr.mxu0 0.0
    %752 = vmatpush1.msra.mxu0 0.0
    %753 = vmatprep.subr.mxu0 0.0
    %754 = vmatpush1.msra.mxu0 0.0
    %755 = vmatprep.subr.mxu0 0.0
    %756 = vmatpush1.msra.mxu0 0.0
    %757 = vmatprep.subr.mxu0 0.0
    %758 = vmatpush1.msra.mxu0 0.0
    %759 = vmatprep.subr.mxu0 0.0
    %760 = vmatpush1.msra.mxu0 0.0
    %761 = vmatprep.subr.mxu0 0.0
    %762 = vmatpush1.msra.mxu0 0.0
    %763 = vmatprep.subr.mxu0 0.0
    %764 = vmatpush1.msra.mxu0 0.0
    %765 = vmatprep.subr.mxu0 0.0
    %766 = vmatpush1.msra.mxu0 0.0
    %767 = vmatprep.subr.mxu0 0.0
    %768 = vmatpush1.msra.mxu0 0.0
    %769 = vmatprep.subr.mxu0 0.0
    %770 = vmatpush1.msra.mxu0 0.0
    %771 = vmatprep.subr.mxu0 0.0
    %772 = vmatpush1.msra.mxu0 0.0
    %773 = vmatprep.subr.mxu0 0.0
    %774 = vmatpush1.msra.mxu0 0.0
    %775 = vmatprep.subr.mxu0 0.0
    %776 = vmatpush1.msra.mxu0 0.0
    %777 = vmatprep.subr.mxu0 0.0
    %778 = vmatpush1.msra.mxu0 0.0
    %779 = vmatprep.subr.mxu0 0.0
    %780 = vmatpush1.msra.mxu0 0.0
    %781 = vmatprep.subr.mxu0 0.0
    %782 = vmatpush1.msra.mxu0 0.0
    %783 = vmatprep.subr.mxu0 0.0
    %784 = vmatpush1.msra.mxu0 0.0
    %785 = vmatprep.subr.mxu0 0.0
    %786 = vmatpush1.msra.mxu0 0.0
    %787 = vmatprep.subr.mxu0 0.0
    %788 = vmatpush1.msra.mxu0 0.0
    %789 = vmatprep.subr.mxu0 0.0
    %790 = vmatpush1.msra.mxu0 0.0
    %791 = vmatprep.subr.mxu0 0.0
    %792 = vmatpush1.msra.mxu0 0.0
    %793 = vmatprep.subr.mxu0 0.0
    %794 = vmatpush1.msra.mxu0 0.0
    %795 = vmatprep.mubr.f32.mxu0 0.0
    %796 = vmatmul.mubr.f32.gmra.mrb[0].mxu0 %v729
    %v797 = vpop.f32.mrb[0].mxu0
    %v798 = vadd.f32 0.0, %v797
    %v799 = vpop.f32.mrb[0].mxu0
    %800 = vdwg.mxu0
    %v802 = vcombine.high %v798, %v798
    %v804 = vunpack.c.l.s4 1966171168
    %v805 = vunpack.c.0.s8 %v804
    %v806 = vlaneseq
    %v807 = vshrl.u32 %v806, 7
    %v808 = vsub.s32 %v805, %v807
    %v809 = vrot.slane %v798, %v808
    %v811 = vunpack.c.l.s4 1966171168
    %v812 = vunpack.c.0.s8 %v811
    %v813 = vlaneseq
    %v814 = vshrl.u32 %v813, 7
    %v815 = vsub.s32 %v812, %v814
    %v816 = vrot.slane %v802, %v815
    %v817 = vcombine.high %v809, %v809
    %v818 = vcombine.high %v816, %v816
    %v820 = vunpack.c.l.s4 1966171168
    %v821 = vunpack.c.0.s8 %v820
    %v822 = vlaneseq
    %v823 = vshrl.u32 %v822, 7
    %v824 = vsub.s32 %v821, %v823
    %v825 = vrot.slane %v809, %v824
    %v827 = vunpack.c.l.s4 1966171168
    %v828 = vunpack.c.0.s8 %v827
    %v829 = vlaneseq
    %v830 = vshrl.u32 %v829, 7
    %v831 = vsub.s32 %v828, %v830
    %v832 = vrot.slane %v816, %v831
    %v834 = vunpack.c.l.s4 1966171168
    %v835 = vunpack.c.0.s8 %v834
    %v836 = vlaneseq
    %v837 = vshrl.u32 %v836, 7
    %v838 = vsub.s32 %v835, %v837
    %v839 = vrot.slane %v817, %v838
    %v841 = vunpack.c.l.s4 1966171168
    %v842 = vunpack.c.0.s8 %v841
    %v843 = vlaneseq
    %v844 = vshrl.u32 %v843, 7
    %v845 = vsub.s32 %v842, %v844
    %v846 = vrot.slane %v818, %v845
    %v847 = vcombine.high %v825, %v825
    %v848 = vcombine.high %v832, %v832
    %v849 = vcombine.high %v839, %v839
    %v850 = vcombine.high %v846, %v846
    %859 = vst.msk [vmem:[#allocation3 + $0x4] sm:$0x1] %vm290, %v825
    %860 = vst.msk [vmem:[#allocation3 + $0x14] sm:$0x1] %vm290, %v839
    %861 = vst.msk [vmem:[#allocation3 + $0x24] sm:$0x1] %vm290, %v847
    %862 = vst.msk [vmem:[#allocation3 + $0x34] sm:$0x1] %vm290, %v849
    %863 = vst.msk [vmem:[#allocation3 + $0x44] sm:$0x1] %vm290, %v832
    %864 = vst.msk [vmem:[#allocation3 + $0x54] sm:$0x1] %vm290, %v846
    %865 = vst.msk [vmem:[#allocation3 + $0x64] sm:$0x1] %vm290, %v848
    %866 = vst.msk [vmem:[#allocation3 + $0x74] sm:$0x1] %vm290, %v850
    %v867 = vld [vmem:[#allocation2] sm:$0xff]
    %869 = vrot.lane.b32.xlu0 %v867, 48
    %v870 = vpop.permute.xlu0 %869
    %v871 = vsel %vm158, %v870, 0
    %873 = vmatprep.subr.mxu0 0.0
    %874 = vmatpush1.msra.mxu0 %v23
    %875 = vmatprep.subr.mxu0 0.0
    %876 = vmatpush1.msra.mxu0 %v24
    %877 = vmatprep.subr.mxu0 0.0
    %878 = vmatpush1.msra.mxu0 0.0
    %879 = vmatprep.subr.mxu0 0.0
    %880 = vmatpush1.msra.mxu0 0.0
    %881 = vmatprep.subr.mxu0 0.0
    %882 = vmatpush1.msra.mxu0 0.0
    %883 = vmatprep.subr.mxu0 0.0
    %884 = vmatpush1.msra.mxu0 0.0
    %885 = vmatprep.subr.mxu0 0.0
    %886 = vmatpush1.msra.mxu0 0.0
    %887 = vmatprep.subr.mxu0 0.0
    %888 = vmatpush1.msra.mxu0 0.0
    %889 = vmatprep.subr.mxu0 0.0
    %890 = vmatpush1.msra.mxu0 0.0
    %891 = vmatprep.subr.mxu0 0.0
    %892 = vmatpush1.msra.mxu0 0.0
    %893 = vmatprep.subr.mxu0 0.0
    %894 = vmatpush1.msra.mxu0 0.0
    %895 = vmatprep.subr.mxu0 0.0
    %896 = vmatpush1.msra.mxu0 0.0
    %897 = vmatprep.subr.mxu0 0.0
    %898 = vmatpush1.msra.mxu0 0.0
    %899 = vmatprep.subr.mxu0 0.0
    %900 = vmatpush1.msra.mxu0 0.0
    %901 = vmatprep.subr.mxu0 0.0
    %902 = vmatpush1.msra.mxu0 0.0
    %903 = vmatprep.subr.mxu0 0.0
    %904 = vmatpush1.msra.mxu0 0.0
    %905 = vmatprep.subr.mxu0 0.0
    %906 = vmatpush1.msra.mxu0 0.0
    %907 = vmatprep.subr.mxu0 0.0
    %908 = vmatpush1.msra.mxu0 0.0
    %909 = vmatprep.subr.mxu0 0.0
    %910 = vmatpush1.msra.mxu0 0.0
    %911 = vmatprep.subr.mxu0 0.0
    %912 = vmatpush1.msra.mxu0 0.0
    %913 = vmatprep.subr.mxu0 0.0
    %914 = vmatpush1.msra.mxu0 0.0
    %915 = vmatprep.subr.mxu0 0.0
    %916 = vmatpush1.msra.mxu0 0.0
    %917 = vmatprep.subr.mxu0 0.0
    %918 = vmatpush1.msra.mxu0 0.0
    %919 = vmatprep.subr.mxu0 0.0
    %920 = vmatpush1.msra.mxu0 0.0
    %921 = vmatprep.subr.mxu0 0.0
    %922 = vmatpush1.msra.mxu0 0.0
    %923 = vmatprep.subr.mxu0 0.0
    %924 = vmatpush1.msra.mxu0 0.0
    %925 = vmatprep.subr.mxu0 0.0
    %926 = vmatpush1.msra.mxu0 0.0
    %927 = vmatprep.subr.mxu0 0.0
    %928 = vmatpush1.msra.mxu0 0.0
    %929 = vmatprep.subr.mxu0 0.0
    %930 = vmatpush1.msra.mxu0 0.0
    %931 = vmatprep.subr.mxu0 0.0
    %932 = vmatpush1.msra.mxu0 0.0
    %933 = vmatprep.subr.mxu0 0.0
    %934 = vmatpush1.msra.mxu0 0.0
    %935 = vmatprep.subr.mxu0 0.0
    %936 = vmatpush1.msra.mxu0 0.0
    %937 = vmatprep.mubr.f32.mxu0 0.0
    %938 = vmatmul.mubr.f32.gmra.mrb[0].mxu0 %v871
    %v939 = vpop.f32.mrb[0].mxu0
    %v940 = vadd.f32 0.0, %v939
    %v941 = vpop.f32.mrb[0].mxu0
    %942 = vdwg.mxu0
    %v944 = vcombine.high %v940, %v940
    %v946 = vunpack.c.l.s4 1966171168
    %v947 = vunpack.c.0.s8 %v946
    %v948 = vlaneseq
    %v949 = vshrl.u32 %v948, 7
    %v950 = vsub.s32 %v947, %v949
    %v951 = vrot.slane %v940, %v950
    %v953 = vunpack.c.l.s4 1966171168
    %v954 = vunpack.c.0.s8 %v953
    %v955 = vlaneseq
    %v956 = vshrl.u32 %v955, 7
    %v957 = vsub.s32 %v954, %v956
    %v958 = vrot.slane %v944, %v957
    %v959 = vcombine.high %v951, %v951
    %v960 = vcombine.high %v958, %v958
    %v962 = vunpack.c.l.s4 1966171168
    %v963 = vunpack.c.0.s8 %v962
    %v964 = vlaneseq
    %v965 = vshrl.u32 %v964, 7
    %v966 = vsub.s32 %v963, %v965
    %v967 = vrot.slane %v951, %v966
    %v969 = vunpack.c.l.s4 1966171168
    %v970 = vunpack.c.0.s8 %v969
    %v971 = vlaneseq
    %v972 = vshrl.u32 %v971, 7
    %v973 = vsub.s32 %v970, %v972
    %v974 = vrot.slane %v958, %v973
    %v976 = vunpack.c.l.s4 1966171168
    %v977 = vunpack.c.0.s8 %v976
    %v978 = vlaneseq
    %v979 = vshrl.u32 %v978, 7
    %v980 = vsub.s32 %v977, %v979
    %v981 = vrot.slane %v959, %v980
    %v983 = vunpack.c.l.s4 1966171168
    %v984 = vunpack.c.0.s8 %v983
    %v985 = vlaneseq
    %v986 = vshrl.u32 %v985, 7
    %v987 = vsub.s32 %v984, %v986
    %v988 = vrot.slane %v960, %v987
    %v989 = vcombine.high %v967, %v967
    %v990 = vcombine.high %v974, %v974
    %v991 = vcombine.high %v981, %v981
    %v992 = vcombine.high %v988, %v988
    %1001 = vst.msk [vmem:[#allocation3 + $0x5] sm:$0x1] %vm290, %v967
    %1002 = vst.msk [vmem:[#allocation3 + $0x15] sm:$0x1] %vm290, %v981
    %1003 = vst.msk [vmem:[#allocation3 + $0x25] sm:$0x1] %vm290, %v989
    %1004 = vst.msk [vmem:[#allocation3 + $0x35] sm:$0x1] %vm290, %v991
    %1005 = vst.msk [vmem:[#allocation3 + $0x45] sm:$0x1] %vm290, %v974
    %1006 = vst.msk [vmem:[#allocation3 + $0x55] sm:$0x1] %vm290, %v988
    %1007 = vst.msk [vmem:[#allocation3 + $0x65] sm:$0x1] %vm290, %v990
    %1008 = vst.msk [vmem:[#allocation3 + $0x75] sm:$0x1] %vm290, %v992
    %v1009 = vld [vmem:[#allocation2] sm:$0xff]
    %1011 = vrot.lane.b32.xlu0 %v1009, 32
    %v1012 = vpop.permute.xlu0 %1011
    %v1013 = vsel %vm158, %v1012, 0
    %1015 = vmatprep.subr.mxu0 0.0
    %1016 = vmatpush1.msra.mxu0 %v23
    %1017 = vmatprep.subr.mxu0 0.0
    %1018 = vmatpush1.msra.mxu0 %v24
    %1019 = vmatprep.subr.mxu0 0.0
    %1020 = vmatpush1.msra.mxu0 0.0
    %1021 = vmatprep.subr.mxu0 0.0
    %1022 = vmatpush1.msra.mxu0 0.0
    %1023 = vmatprep.subr.mxu0 0.0
    %1024 = vmatpush1.msra.mxu0 0.0
    %1025 = vmatprep.subr.mxu0 0.0
    %1026 = vmatpush1.msra.mxu0 0.0
    %1027 = vmatprep.subr.mxu0 0.0
    %1028 = vmatpush1.msra.mxu0 0.0
    %1029 = vmatprep.subr.mxu0 0.0
    %1030 = vmatpush1.msra.mxu0 0.0
    %1031 = vmatprep.subr.mxu0 0.0
    %1032 = vmatpush1.msra.mxu0 0.0
    %1033 = vmatprep.subr.mxu0 0.0
    %1034 = vmatpush1.msra.mxu0 0.0
    %1035 = vmatprep.subr.mxu0 0.0
    %1036 = vmatpush1.msra.mxu0 0.0
    %1037 = vmatprep.subr.mxu0 0.0
    %1038 = vmatpush1.msra.mxu0 0.0
    %1039 = vmatprep.subr.mxu0 0.0
    %1040 = vmatpush1.msra.mxu0 0.0
    %1041 = vmatprep.subr.mxu0 0.0
    %1042 = vmatpush1.msra.mxu0 0.0
    %1043 = vmatprep.subr.mxu0 0.0
    %1044 = vmatpush1.msra.mxu0 0.0
    %1045 = vmatprep.subr.mxu0 0.0
    %1046 = vmatpush1.msra.mxu0 0.0
    %1047 = vmatprep.subr.mxu0 0.0
    %1048 = vmatpush1.msra.mxu0 0.0
    %1049 = vmatprep.subr.mxu0 0.0
    %1050 = vmatpush1.msra.mxu0 0.0
    %1051 = vmatprep.subr.mxu0 0.0
    %1052 = vmatpush1.msra.mxu0 0.0
    %1053 = vmatprep.subr.mxu0 0.0
    %1054 = vmatpush1.msra.mxu0 0.0
    %1055 = vmatprep.subr.mxu0 0.0
    %1056 = vmatpush1.msra.mxu0 0.0
    %1057 = vmatprep.subr.mxu0 0.0
    %1058 = vmatpush1.msra.mxu0 0.0
    %1059 = vmatprep.subr.mxu0 0.0
    %1060 = vmatpush1.msra.mxu0 0.0
    %1061 = vmatprep.subr.mxu0 0.0
    %1062 = vmatpush1.msra.mxu0 0.0
    %1063 = vmatprep.subr.mxu0 0.0
    %1064 = vmatpush1.msra.mxu0 0.0
    %1065 = vmatprep.subr.mxu0 0.0
    %1066 = vmatpush1.msra.mxu0 0.0
    %1067 = vmatprep.subr.mxu0 0.0
    %1068 = vmatpush1.msra.mxu0 0.0
    %1069 = vmatprep.subr.mxu0 0.0
    %1070 = vmatpush1.msra.mxu0 0.0
    %1071 = vmatprep.subr.mxu0 0.0
    %1072 = vmatpush1.msra.mxu0 0.0
    %1073 = vmatprep.subr.mxu0 0.0
    %1074 = vmatpush1.msra.mxu0 0.0
    %1075 = vmatprep.subr.mxu0 0.0
    %1076 = vmatpush1.msra.mxu0 0.0
    %1077 = vmatprep.subr.mxu0 0.0
    %1078 = vmatpush1.msra.mxu0 0.0
    %1079 = vmatprep.mubr.f32.mxu0 0.0
    %1080 = vmatmul.mubr.f32.gmra.mrb[0].mxu0 %v1013
    %v1081 = vpop.f32.mrb[0].mxu0
    %v1082 = vadd.f32 0.0, %v1081
    %v1083 = vpop.f32.mrb[0].mxu0
    %1084 = vdwg.mxu0
    %v1086 = vcombine.high %v1082, %v1082
    %v1088 = vunpack.c.l.s4 1966171168
    %v1089 = vunpack.c.0.s8 %v1088
    %v1090 = vlaneseq
    %v1091 = vshrl.u32 %v1090, 7
    %v1092 = vsub.s32 %v1089, %v1091
    %v1093 = vrot.slane %v1082, %v1092
    %v1095 = vunpack.c.l.s4 1966171168
    %v1096 = vunpack.c.0.s8 %v1095
    %v1097 = vlaneseq
    %v1098 = vshrl.u32 %v1097, 7
    %v1099 = vsub.s32 %v1096, %v1098
    %v1100 = vrot.slane %v1086, %v1099
    %v1101 = vcombine.high %v1093, %v1093
    %v1102 = vcombine.high %v1100, %v1100
    %v1104 = vunpack.c.l.s4 1966171168
    %v1105 = vunpack.c.0.s8 %v1104
    %v1106 = vlaneseq
    %v1107 = vshrl.u32 %v1106, 7
    %v1108 = vsub.s32 %v1105, %v1107
    %v1109 = vrot.slane %v1093, %v1108
    %v1111 = vunpack.c.l.s4 1966171168
    %v1112 = vunpack.c.0.s8 %v1111
    %v1113 = vlaneseq
    %v1114 = vshrl.u32 %v1113, 7
    %v1115 = vsub.s32 %v1112, %v1114
    %v1116 = vrot.slane %v1100, %v1115
    %v1118 = vunpack.c.l.s4 1966171168
    %v1119 = vunpack.c.0.s8 %v1118
    %v1120 = vlaneseq
    %v1121 = vshrl.u32 %v1120, 7
    %v1122 = vsub.s32 %v1119, %v1121
    %v1123 = vrot.slane %v1101, %v1122
    %v1125 = vunpack.c.l.s4 1966171168
    %v1126 = vunpack.c.0.s8 %v1125
    %v1127 = vlaneseq
    %v1128 = vshrl.u32 %v1127, 7
    %v1129 = vsub.s32 %v1126, %v1128
    %v1130 = vrot.slane %v1102, %v1129
    %v1131 = vcombine.high %v1109, %v1109
    %v1132 = vcombine.high %v1116, %v1116
    %v1133 = vcombine.high %v1123, %v1123
    %v1134 = vcombine.high %v1130, %v1130
    %1143 = vst.msk [vmem:[#allocation3 + $0x6] sm:$0x1] %vm290, %v1109
    %1144 = vst.msk [vmem:[#allocation3 + $0x16] sm:$0x1] %vm290, %v1123
    %1145 = vst.msk [vmem:[#allocation3 + $0x26] sm:$0x1] %vm290, %v1131
    %1146 = vst.msk [vmem:[#allocation3 + $0x36] sm:$0x1] %vm290, %v1133
    %1147 = vst.msk [vmem:[#allocation3 + $0x46] sm:$0x1] %vm290, %v1116
    %1148 = vst.msk [vmem:[#allocation3 + $0x56] sm:$0x1] %vm290, %v1130
    %1149 = vst.msk [vmem:[#allocation3 + $0x66] sm:$0x1] %vm290, %v1132
    %1150 = vst.msk [vmem:[#allocation3 + $0x76] sm:$0x1] %vm290, %v1134
    %v1151 = vld [vmem:[#allocation2] sm:$0xff]
    %1153 = vrot.lane.b32.xlu0 %v1151, 16
    %v1154 = vpop.permute.xlu0 %1153
    %v1155 = vsel %vm158, %v1154, 0
    %1157 = vmatprep.subr.mxu0 0.0
    %1158 = vmatpush1.msra.mxu0 %v23
    %1159 = vmatprep.subr.mxu0 0.0
    %1160 = vmatpush1.msra.mxu0 %v24
    %1161 = vmatprep.subr.mxu0 0.0
    %1162 = vmatpush1.msra.mxu0 0.0
    %1163 = vmatprep.subr.mxu0 0.0
    %1164 = vmatpush1.msra.mxu0 0.0
    %1165 = vmatprep.subr.mxu0 0.0
    %1166 = vmatpush1.msra.mxu0 0.0
    %1167 = vmatprep.subr.mxu0 0.0
    %1168 = vmatpush1.msra.mxu0 0.0
    %1169 = vmatprep.subr.mxu0 0.0
    %1170 = vmatpush1.msra.mxu0 0.0
    %1171 = vmatprep.subr.mxu0 0.0
    %1172 = vmatpush1.msra.mxu0 0.0
    %1173 = vmatprep.subr.mxu0 0.0
    %1174 = vmatpush1.msra.mxu0 0.0
    %1175 = vmatprep.subr.mxu0 0.0
    %1176 = vmatpush1.msra.mxu0 0.0
    %1177 = vmatprep.subr.mxu0 0.0
    %1178 = vmatpush1.msra.mxu0 0.0
    %1179 = vmatprep.subr.mxu0 0.0
    %1180 = vmatpush1.msra.mxu0 0.0
    %1181 = vmatprep.subr.mxu0 0.0
    %1182 = vmatpush1.msra.mxu0 0.0
    %1183 = vmatprep.subr.mxu0 0.0
    %1184 = vmatpush1.msra.mxu0 0.0
    %1185 = vmatprep.subr.mxu0 0.0
    %1186 = vmatpush1.msra.mxu0 0.0
    %1187 = vmatprep.subr.mxu0 0.0
    %1188 = vmatpush1.msra.mxu0 0.0
    %1189 = vmatprep.subr.mxu0 0.0
    %1190 = vmatpush1.msra.mxu0 0.0
    %1191 = vmatprep.subr.mxu0 0.0
    %1192 = vmatpush1.msra.mxu0 0.0
    %1193 = vmatprep.subr.mxu0 0.0
    %1194 = vmatpush1.msra.mxu0 0.0
    %1195 = vmatprep.subr.mxu0 0.0
    %1196 = vmatpush1.msra.mxu0 0.0
    %1197 = vmatprep.subr.mxu0 0.0
    %1198 = vmatpush1.msra.mxu0 0.0
    %1199 = vmatprep.subr.mxu0 0.0
    %1200 = vmatpush1.msra.mxu0 0.0
    %1201 = vmatprep.subr.mxu0 0.0
    %1202 = vmatpush1.msra.mxu0 0.0
    %1203 = vmatprep.subr.mxu0 0.0
    %1204 = vmatpush1.msra.mxu0 0.0
    %1205 = vmatprep.subr.mxu0 0.0
    %1206 = vmatpush1.msra.mxu0 0.0
    %1207 = vmatprep.subr.mxu0 0.0
    %1208 = vmatpush1.msra.mxu0 0.0
    %1209 = vmatprep.subr.mxu0 0.0
    %1210 = vmatpush1.msra.mxu0 0.0
    %1211 = vmatprep.subr.mxu0 0.0
    %1212 = vmatpush1.msra.mxu0 0.0
    %1213 = vmatprep.subr.mxu0 0.0
    %1214 = vmatpush1.msra.mxu0 0.0
    %1215 = vmatprep.subr.mxu0 0.0
    %1216 = vmatpush1.msra.mxu0 0.0
    %1217 = vmatprep.subr.mxu0 0.0
    %1218 = vmatpush1.msra.mxu0 0.0
    %1219 = vmatprep.subr.mxu0 0.0
    %1220 = vmatpush1.msra.mxu0 0.0
    %1221 = vmatprep.mubr.f32.mxu0 0.0
    %1222 = vmatmul.mubr.f32.gmra.mrb[0].mxu0 %v1155
    %v1223 = vpop.f32.mrb[0].mxu0
    %v1224 = vadd.f32 0.0, %v1223
    %v1225 = vpop.f32.mrb[0].mxu0
    %1226 = vdwg.mxu0
    %v1228 = vcombine.high %v1224, %v1224
    %v1230 = vunpack.c.l.s4 1966171168
    %v1231 = vunpack.c.0.s8 %v1230
    %v1232 = vlaneseq
    %v1233 = vshrl.u32 %v1232, 7
    %v1234 = vsub.s32 %v1231, %v1233
    %v1235 = vrot.slane %v1224, %v1234
    %v1237 = vunpack.c.l.s4 1966171168
    %v1238 = vunpack.c.0.s8 %v1237
    %v1239 = vlaneseq
    %v1240 = vshrl.u32 %v1239, 7
    %v1241 = vsub.s32 %v1238, %v1240
    %v1242 = vrot.slane %v1228, %v1241
    %v1243 = vcombine.high %v1235, %v1235
    %v1244 = vcombine.high %v1242, %v1242
    %v1246 = vunpack.c.l.s4 1966171168
    %v1247 = vunpack.c.0.s8 %v1246
    %v1248 = vlaneseq
    %v1249 = vshrl.u32 %v1248, 7
    %v1250 = vsub.s32 %v1247, %v1249
    %v1251 = vrot.slane %v1235, %v1250
    %v1253 = vunpack.c.l.s4 1966171168
    %v1254 = vunpack.c.0.s8 %v1253
    %v1255 = vlaneseq
    %v1256 = vshrl.u32 %v1255, 7
    %v1257 = vsub.s32 %v1254, %v1256
    %v1258 = vrot.slane %v1242, %v1257
    %v1260 = vunpack.c.l.s4 1966171168
    %v1261 = vunpack.c.0.s8 %v1260
    %v1262 = vlaneseq
    %v1263 = vshrl.u32 %v1262, 7
    %v1264 = vsub.s32 %v1261, %v1263
    %v1265 = vrot.slane %v1243, %v1264
    %v1267 = vunpack.c.l.s4 1966171168
    %v1268 = vunpack.c.0.s8 %v1267
    %v1269 = vlaneseq
    %v1270 = vshrl.u32 %v1269, 7
    %v1271 = vsub.s32 %v1268, %v1270
    %v1272 = vrot.slane %v1244, %v1271
    %v1273 = vcombine.high %v1251, %v1251
    %v1274 = vcombine.high %v1258, %v1258
    %v1275 = vcombine.high %v1265, %v1265
    %v1276 = vcombine.high %v1272, %v1272
    %1285 = vst.msk [vmem:[#allocation3 + $0x7] sm:$0x1] %vm290, %v1251
    %1286 = vst.msk [vmem:[#allocation3 + $0x17] sm:$0x1] %vm290, %v1265
    %1287 = vst.msk [vmem:[#allocation3 + $0x27] sm:$0x1] %vm290, %v1273
    %1288 = vst.msk [vmem:[#allocation3 + $0x37] sm:$0x1] %vm290, %v1275
    %1289 = vst.msk [vmem:[#allocation3 + $0x47] sm:$0x1] %vm290, %v1258
    %1290 = vst.msk [vmem:[#allocation3 + $0x57] sm:$0x1] %vm290, %v1272
    %1291 = vst.msk [vmem:[#allocation3 + $0x67] sm:$0x1] %vm290, %v1274
    %1292 = vst.msk [vmem:[#allocation3 + $0x77] sm:$0x1] %vm290, %v1276
    %v1293 = vld [vmem:[#allocation2 + $0x8] sm:$0xff]
    %v1295 = vsel %vm158, %v1293, 0
    %1297 = vmatprep.subr.mxu0 0.0
    %1298 = vmatpush1.msra.mxu0 %v23
    %1299 = vmatprep.subr.mxu0 0.0
    %1300 = vmatpush1.msra.mxu0 %v24
    %1301 = vmatprep.subr.mxu0 0.0
    %1302 = vmatpush1.msra.mxu0 0.0
    %1303 = vmatprep.subr.mxu0 0.0
    %1304 = vmatpush1.msra.mxu0 0.0
    %1305 = vmatprep.subr.mxu0 0.0
    %1306 = vmatpush1.msra.mxu0 0.0
    %1307 = vmatprep.subr.mxu0 0.0
    %1308 = vmatpush1.msra.mxu0 0.0
    %1309 = vmatprep.subr.mxu0 0.0
    %1310 = vmatpush1.msra.mxu0 0.0
    %1311 = vmatprep.subr.mxu0 0.0
    %1312 = vmatpush1.msra.mxu0 0.0
    %1313 = vmatprep.subr.mxu0 0.0
    %1314 = vmatpush1.msra.mxu0 0.0
    %1315 = vmatprep.subr.mxu0 0.0
    %1316 = vmatpush1.msra.mxu0 0.0
    %1317 = vmatprep.subr.mxu0 0.0
    %1318 = vmatpush1.msra.mxu0 0.0
    %1319 = vmatprep.subr.mxu0 0.0
    %1320 = vmatpush1.msra.mxu0 0.0
    %1321 = vmatprep.subr.mxu0 0.0
    %1322 = vmatpush1.msra.mxu0 0.0
    %1323 = vmatprep.subr.mxu0 0.0
    %1324 = vmatpush1.msra.mxu0 0.0
    %1325 = vmatprep.subr.mxu0 0.0
    %1326 = vmatpush1.msra.mxu0 0.0
    %1327 = vmatprep.subr.mxu0 0.0
    %1328 = vmatpush1.msra.mxu0 0.0
    %1329 = vmatprep.subr.mxu0 0.0
    %1330 = vmatpush1.msra.mxu0 0.0
    %1331 = vmatprep.subr.mxu0 0.0
    %1332 = vmatpush1.msra.mxu0 0.0
    %1333 = vmatprep.subr.mxu0 0.0
    %1334 = vmatpush1.msra.mxu0 0.0
    %1335 = vmatprep.subr.mxu0 0.0
    %1336 = vmatpush1.msra.mxu0 0.0
    %1337 = vmatprep.subr.mxu0 0.0
    %1338 = vmatpush1.msra.mxu0 0.0
    %1339 = vmatprep.subr.mxu0 0.0
    %1340 = vmatpush1.msra.mxu0 0.0
    %1341 = vmatprep.subr.mxu0 0.0
    %1342 = vmatpush1.msra.mxu0 0.0
    %1343 = vmatprep.subr.mxu0 0.0
    %1344 = vmatpush1.msra.mxu0 0.0
    %1345 = vmatprep.subr.mxu0 0.0
    %1346 = vmatpush1.msra.mxu0 0.0
    %1347 = vmatprep.subr.mxu0 0.0
    %1348 = vmatpush1.msra.mxu0 0.0
    %1349 = vmatprep.subr.mxu0 0.0
    %1350 = vmatpush1.msra.mxu0 0.0
    %1351 = vmatprep.subr.mxu0 0.0
    %1352 = vmatpush1.msra.mxu0 0.0
    %1353 = vmatprep.subr.mxu0 0.0
    %1354 = vmatpush1.msra.mxu0 0.0
    %1355 = vmatprep.subr.mxu0 0.0
    %1356 = vmatpush1.msra.mxu0 0.0
    %1357 = vmatprep.subr.mxu0 0.0
    %1358 = vmatpush1.msra.mxu0 0.0
    %1359 = vmatprep.subr.mxu0 0.0
    %1360 = vmatpush1.msra.mxu0 0.0
    %1361 = vmatprep.mubr.f32.mxu0 0.0
    %1362 = vmatmul.mubr.f32.gmra.mrb[0].mxu0 %v1295
    %v1363 = vpop.f32.mrb[0].mxu0
    %v1364 = vadd.f32 0.0, %v1363
    %v1365 = vpop.f32.mrb[0].mxu0
    %1366 = vdwg.mxu0
    %v1368 = vcombine.high %v1364, %v1364
    %v1370 = vunpack.c.l.s4 1966171168
    %v1371 = vunpack.c.0.s8 %v1370
    %v1372 = vlaneseq
    %v1373 = vshrl.u32 %v1372, 7
    %v1374 = vsub.s32 %v1371, %v1373
    %v1375 = vrot.slane %v1364, %v1374
    %v1377 = vunpack.c.l.s4 1966171168
    %v1378 = vunpack.c.0.s8 %v1377
    %v1379 = vlaneseq
    %v1380 = vshrl.u32 %v1379, 7
    %v1381 = vsub.s32 %v1378, %v1380
    %v1382 = vrot.slane %v1368, %v1381
    %v1383 = vcombine.high %v1375, %v1375
    %v1384 = vcombine.high %v1382, %v1382
    %v1386 = vunpack.c.l.s4 1966171168
    %v1387 = vunpack.c.0.s8 %v1386
    %v1388 = vlaneseq
    %v1389 = vshrl.u32 %v1388, 7
    %v1390 = vsub.s32 %v1387, %v1389
    %v1391 = vrot.slane %v1375, %v1390
    %v1393 = vunpack.c.l.s4 1966171168
    %v1394 = vunpack.c.0.s8 %v1393
    %v1395 = vlaneseq
    %v1396 = vshrl.u32 %v1395, 7
    %v1397 = vsub.s32 %v1394, %v1396
    %v1398 = vrot.slane %v1382, %v1397
    %v1400 = vunpack.c.l.s4 1966171168
    %v1401 = vunpack.c.0.s8 %v1400
    %v1402 = vlaneseq
    %v1403 = vshrl.u32 %v1402, 7
    %v1404 = vsub.s32 %v1401, %v1403
    %v1405 = vrot.slane %v1383, %v1404
    %v1407 = vunpack.c.l.s4 1966171168
    %v1408 = vunpack.c.0.s8 %v1407
    %v1409 = vlaneseq
    %v1410 = vshrl.u32 %v1409, 7
    %v1411 = vsub.s32 %v1408, %v1410
    %v1412 = vrot.slane %v1384, %v1411
    %v1413 = vcombine.high %v1391, %v1391
    %v1414 = vcombine.high %v1398, %v1398
    %v1415 = vcombine.high %v1405, %v1405
    %v1416 = vcombine.high %v1412, %v1412
    %1425 = vst.msk [vmem:[#allocation3 + $0x8] sm:$0x1] %vm290, %v1391
    %1426 = vst.msk [vmem:[#allocation3 + $0x18] sm:$0x1] %vm290, %v1405
    %1427 = vst.msk [vmem:[#allocation3 + $0x28] sm:$0x1] %vm290, %v1413
    %1428 = vst.msk [vmem:[#allocation3 + $0x38] sm:$0x1] %vm290, %v1415
    %1429 = vst.msk [vmem:[#allocation3 + $0x48] sm:$0x1] %vm290, %v1398
    %1430 = vst.msk [vmem:[#allocation3 + $0x58] sm:$0x1] %vm290, %v1412
    %1431 = vst.msk [vmem:[#allocation3 + $0x68] sm:$0x1] %vm290, %v1414
    %1432 = vst.msk [vmem:[#allocation3 + $0x78] sm:$0x1] %vm290, %v1416
    %v1433 = vld [vmem:[#allocation2 + $0x8] sm:$0xff]
    %1435 = vrot.lane.b32.xlu0 %v1433, 112
    %v1436 = vpop.permute.xlu0 %1435
    %v1437 = vsel %vm158, %v1436, 0
    %1439 = vmatprep.subr.mxu0 0.0
    %1440 = vmatpush1.msra.mxu0 %v23
    %1441 = vmatprep.subr.mxu0 0.0
    %1442 = vmatpush1.msra.mxu0 %v24
    %1443 = vmatprep.subr.mxu0 0.0
    %1444 = vmatpush1.msra.mxu0 0.0
    %1445 = vmatprep.subr.mxu0 0.0
    %1446 = vmatpush1.msra.mxu0 0.0
    %1447 = vmatprep.subr.mxu0 0.0
    %1448 = vmatpush1.msra.mxu0 0.0
    %1449 = vmatprep.subr.mxu0 0.0
    %1450 = vmatpush1.msra.mxu0 0.0
    %1451 = vmatprep.subr.mxu0 0.0
    %1452 = vmatpush1.msra.mxu0 0.0
    %1453 = vmatprep.subr.mxu0 0.0
    %1454 = vmatpush1.msra.mxu0 0.0
    %1455 = vmatprep.subr.mxu0 0.0
    %1456 = vmatpush1.msra.mxu0 0.0
    %1457 = vmatprep.subr.mxu0 0.0
    %1458 = vmatpush1.msra.mxu0 0.0
    %1459 = vmatprep.subr.mxu0 0.0
    %1460 = vmatpush1.msra.mxu0 0.0
    %1461 = vmatprep.subr.mxu0 0.0
    %1462 = vmatpush1.msra.mxu0 0.0
    %1463 = vmatprep.subr.mxu0 0.0
    %1464 = vmatpush1.msra.mxu0 0.0
    %1465 = vmatprep.subr.mxu0 0.0
    %1466 = vmatpush1.msra.mxu0 0.0
    %1467 = vmatprep.subr.mxu0 0.0
    %1468 = vmatpush1.msra.mxu0 0.0
    %1469 = vmatprep.subr.mxu0 0.0
    %1470 = vmatpush1.msra.mxu0 0.0
    %1471 = vmatprep.subr.mxu0 0.0
    %1472 = vmatpush1.msra.mxu0 0.0
    %1473 = vmatprep.subr.mxu0 0.0
    %1474 = vmatpush1.msra.mxu0 0.0
    %1475 = vmatprep.subr.mxu0 0.0
    %1476 = vmatpush1.msra.mxu0 0.0
    %1477 = vmatprep.subr.mxu0 0.0
    %1478 = vmatpush1.msra.mxu0 0.0
    %1479 = vmatprep.subr.mxu0 0.0
    %1480 = vmatpush1.msra.mxu0 0.0
    %1481 = vmatprep.subr.mxu0 0.0
    %1482 = vmatpush1.msra.mxu0 0.0
    %1483 = vmatprep.subr.mxu0 0.0
    %1484 = vmatpush1.msra.mxu0 0.0
    %1485 = vmatprep.subr.mxu0 0.0
    %1486 = vmatpush1.msra.mxu0 0.0
    %1487 = vmatprep.subr.mxu0 0.0
    %1488 = vmatpush1.msra.mxu0 0.0
    %1489 = vmatprep.subr.mxu0 0.0
    %1490 = vmatpush1.msra.mxu0 0.0
    %1491 = vmatprep.subr.mxu0 0.0
    %1492 = vmatpush1.msra.mxu0 0.0
    %1493 = vmatprep.subr.mxu0 0.0
    %1494 = vmatpush1.msra.mxu0 0.0
    %1495 = vmatprep.subr.mxu0 0.0
    %1496 = vmatpush1.msra.mxu0 0.0
    %1497 = vmatprep.subr.mxu0 0.0
    %1498 = vmatpush1.msra.mxu0 0.0
    %1499 = vmatprep.subr.mxu0 0.0
    %1500 = vmatpush1.msra.mxu0 0.0
    %1501 = vmatprep.subr.mxu0 0.0
    %1502 = vmatpush1.msra.mxu0 0.0
    %1503 = vmatprep.mubr.f32.mxu0 0.0
    %1504 = vmatmul.mubr.f32.gmra.mrb[0].mxu0 %v1437
    %v1505 = vpop.f32.mrb[0].mxu0
    %v1506 = vadd.f32 0.0, %v1505
    %v1507 = vpop.f32.mrb[0].mxu0
    %1508 = vdwg.mxu0
    %v1510 = vcombine.high %v1506, %v1506
    %v1512 = vunpack.c.l.s4 1966171168
    %v1513 = vunpack.c.0.s8 %v1512
    %v1514 = vlaneseq
    %v1515 = vshrl.u32 %v1514, 7
    %v1516 = vsub.s32 %v1513, %v1515
    %v1517 = vrot.slane %v1506, %v1516
    %v1519 = vunpack.c.l.s4 1966171168
    %v1520 = vunpack.c.0.s8 %v1519
    %v1521 = vlaneseq
    %v1522 = vshrl.u32 %v1521, 7
    %v1523 = vsub.s32 %v1520, %v1522
    %v1524 = vrot.slane %v1510, %v1523
    %v1525 = vcombine.high %v1517, %v1517
    %v1526 = vcombine.high %v1524, %v1524
    %v1528 = vunpack.c.l.s4 1966171168
    %v1529 = vunpack.c.0.s8 %v1528
    %v1530 = vlaneseq
    %v1531 = vshrl.u32 %v1530, 7
    %v1532 = vsub.s32 %v1529, %v1531
    %v1533 = vrot.slane %v1517, %v1532
    %v1535 = vunpack.c.l.s4 1966171168
    %v1536 = vunpack.c.0.s8 %v1535
    %v1537 = vlaneseq
    %v1538 = vshrl.u32 %v1537, 7
    %v1539 = vsub.s32 %v1536, %v1538
    %v1540 = vrot.slane %v1524, %v1539
    %v1542 = vunpack.c.l.s4 1966171168
    %v1543 = vunpack.c.0.s8 %v1542
    %v1544 = vlaneseq
    %v1545 = vshrl.u32 %v1544, 7
    %v1546 = vsub.s32 %v1543, %v1545
    %v1547 = vrot.slane %v1525, %v1546
    %v1549 = vunpack.c.l.s4 1966171168
    %v1550 = vunpack.c.0.s8 %v1549
    %v1551 = vlaneseq
    %v1552 = vshrl.u32 %v1551, 7
    %v1553 = vsub.s32 %v1550, %v1552
    %v1554 = vrot.slane %v1526, %v1553
    %v1555 = vcombine.high %v1533, %v1533
    %v1556 = vcombine.high %v1540, %v1540
    %v1557 = vcombine.high %v1547, %v1547
    %v1558 = vcombine.high %v1554, %v1554
    %1567 = vst.msk [vmem:[#allocation3 + $0x9] sm:$0x1] %vm290, %v1533
    %1568 = vst.msk [vmem:[#allocation3 + $0x19] sm:$0x1] %vm290, %v1547
    %1569 = vst.msk [vmem:[#allocation3 + $0x29] sm:$0x1] %vm290, %v1555
    %1570 = vst.msk [vmem:[#allocation3 + $0x39] sm:$0x1] %vm290, %v1557
    %1571 = vst.msk [vmem:[#allocation3 + $0x49] sm:$0x1] %vm290, %v1540
    %1572 = vst.msk [vmem:[#allocation3 + $0x59] sm:$0x1] %vm290, %v1554
    %1573 = vst.msk [vmem:[#allocation3 + $0x69] sm:$0x1] %vm290, %v1556
    %1574 = vst.msk [vmem:[#allocation3 + $0x79] sm:$0x1] %vm290, %v1558
    %v1575 = vld [vmem:[#allocation2 + $0x8] sm:$0xff]
    %1577 = vrot.lane.b32.xlu0 %v1575, 96
    %v1578 = vpop.permute.xlu0 %1577
    %v1579 = vsel %vm158, %v1578, 0
    %1581 = vmatprep.subr.mxu0 0.0
    %1582 = vmatpush1.msra.mxu0 %v23
    %1583 = vmatprep.subr.mxu0 0.0
    %1584 = vmatpush1.msra.mxu0 %v24
    %1585 = vmatprep.subr.mxu0 0.0
    %1586 = vmatpush1.msra.mxu0 0.0
    %1587 = vmatprep.subr.mxu0 0.0
    %1588 = vmatpush1.msra.mxu0 0.0
    %1589 = vmatprep.subr.mxu0 0.0
    %1590 = vmatpush1.msra.mxu0 0.0
    %1591 = vmatprep.subr.mxu0 0.0
    %1592 = vmatpush1.msra.mxu0 0.0
    %1593 = vmatprep.subr.mxu0 0.0
    %1594 = vmatpush1.msra.mxu0 0.0
    %1595 = vmatprep.subr.mxu0 0.0
    %1596 = vmatpush1.msra.mxu0 0.0
    %1597 = vmatprep.subr.mxu0 0.0
    %1598 = vmatpush1.msra.mxu0 0.0
    %1599 = vmatprep.subr.mxu0 0.0
    %1600 = vmatpush1.msra.mxu0 0.0
    %1601 = vmatprep.subr.mxu0 0.0
    %1602 = vmatpush1.msra.mxu0 0.0
    %1603 = vmatprep.subr.mxu0 0.0
    %1604 = vmatpush1.msra.mxu0 0.0
    %1605 = vmatprep.subr.mxu0 0.0
    %1606 = vmatpush1.msra.mxu0 0.0
    %1607 = vmatprep.subr.mxu0 0.0
    %1608 = vmatpush1.msra.mxu0 0.0
    %1609 = vmatprep.subr.mxu0 0.0
    %1610 = vmatpush1.msra.mxu0 0.0
    %1611 = vmatprep.subr.mxu0 0.0
    %1612 = vmatpush1.msra.mxu0 0.0
    %1613 = vmatprep.subr.mxu0 0.0
    %1614 = vmatpush1.msra.mxu0 0.0
    %1615 = vmatprep.subr.mxu0 0.0
    %1616 = vmatpush1.msra.mxu0 0.0
    %1617 = vmatprep.subr.mxu0 0.0
    %1618 = vmatpush1.msra.mxu0 0.0
    %1619 = vmatprep.subr.mxu0 0.0
    %1620 = vmatpush1.msra.mxu0 0.0
    %1621 = vmatprep.subr.mxu0 0.0
    %1622 = vmatpush1.msra.mxu0 0.0
    %1623 = vmatprep.subr.mxu0 0.0
    %1624 = vmatpush1.msra.mxu0 0.0
    %1625 = vmatprep.subr.mxu0 0.0
    %1626 = vmatpush1.msra.mxu0 0.0
    %1627 = vmatprep.subr.mxu0 0.0
    %1628 = vmatpush1.msra.mxu0 0.0
    %1629 = vmatprep.subr.mxu0 0.0
    %1630 = vmatpush1.msra.mxu0 0.0
    %1631 = vmatprep.subr.mxu0 0.0
    %1632 = vmatpush1.msra.mxu0 0.0
    %1633 = vmatprep.subr.mxu0 0.0
    %1634 = vmatpush1.msra.mxu0 0.0
    %1635 = vmatprep.subr.mxu0 0.0
    %1636 = vmatpush1.msra.mxu0 0.0
    %1637 = vmatprep.subr.mxu0 0.0
    %1638 = vmatpush1.msra.mxu0 0.0
    %1639 = vmatprep.subr.mxu0 0.0
    %1640 = vmatpush1.msra.mxu0 0.0
    %1641 = vmatprep.subr.mxu0 0.0
    %1642 = vmatpush1.msra.mxu0 0.0
    %1643 = vmatprep.subr.mxu0 0.0
    %1644 = vmatpush1.msra.mxu0 0.0
    %1645 = vmatprep.mubr.f32.mxu0 0.0
    %1646 = vmatmul.mubr.f32.gmra.mrb[0].mxu0 %v1579
    %v1647 = vpop.f32.mrb[0].mxu0
    %v1648 = vadd.f32 0.0, %v1647
    %v1649 = vpop.f32.mrb[0].mxu0
    %1650 = vdwg.mxu0
    %v1652 = vcombine.high %v1648, %v1648
    %v1654 = vunpack.c.l.s4 1966171168
    %v1655 = vunpack.c.0.s8 %v1654
    %v1656 = vlaneseq
    %v1657 = vshrl.u32 %v1656, 7
    %v1658 = vsub.s32 %v1655, %v1657
    %v1659 = vrot.slane %v1648, %v1658
    %v1661 = vunpack.c.l.s4 1966171168
    %v1662 = vunpack.c.0.s8 %v1661
    %v1663 = vlaneseq
    %v1664 = vshrl.u32 %v1663, 7
    %v1665 = vsub.s32 %v1662, %v1664
    %v1666 = vrot.slane %v1652, %v1665
    %v1667 = vcombine.high %v1659, %v1659
    %v1668 = vcombine.high %v1666, %v1666
    %v1670 = vunpack.c.l.s4 1966171168
    %v1671 = vunpack.c.0.s8 %v1670
    %v1672 = vlaneseq
    %v1673 = vshrl.u32 %v1672, 7
    %v1674 = vsub.s32 %v1671, %v1673
    %v1675 = vrot.slane %v1659, %v1674
    %v1677 = vunpack.c.l.s4 1966171168
    %v1678 = vunpack.c.0.s8 %v1677
    %v1679 = vlaneseq
    %v1680 = vshrl.u32 %v1679, 7
    %v1681 = vsub.s32 %v1678, %v1680
    %v1682 = vrot.slane %v1666, %v1681
    %v1684 = vunpack.c.l.s4 1966171168
    %v1685 = vunpack.c.0.s8 %v1684
    %v1686 = vlaneseq
    %v1687 = vshrl.u32 %v1686, 7
    %v1688 = vsub.s32 %v1685, %v1687
    %v1689 = vrot.slane %v1667, %v1688
    %v1691 = vunpack.c.l.s4 1966171168
    %v1692 = vunpack.c.0.s8 %v1691
    %v1693 = vlaneseq
    %v1694 = vshrl.u32 %v1693, 7
    %v1695 = vsub.s32 %v1692, %v1694
    %v1696 = vrot.slane %v1668, %v1695
    %v1697 = vcombine.high %v1675, %v1675
    %v1698 = vcombine.high %v1682, %v1682
    %v1699 = vcombine.high %v1689, %v1689
    %v1700 = vcombine.high %v1696, %v1696
    %1709 = vst.msk [vmem:[#allocation3 + $0xa] sm:$0x1] %vm290, %v1675
    %1710 = vst.msk [vmem:[#allocation3 + $0x1a] sm:$0x1] %vm290, %v1689
    %1711 = vst.msk [vmem:[#allocation3 + $0x2a] sm:$0x1] %vm290, %v1697
    %1712 = vst.msk [vmem:[#allocation3 + $0x3a] sm:$0x1] %vm290, %v1699
    %1713 = vst.msk [vmem:[#allocation3 + $0x4a] sm:$0x1] %vm290, %v1682
    %1714 = vst.msk [vmem:[#allocation3 + $0x5a] sm:$0x1] %vm290, %v1696
    %1715 = vst.msk [vmem:[#allocation3 + $0x6a] sm:$0x1] %vm290, %v1698
    %1716 = vst.msk [vmem:[#allocation3 + $0x7a] sm:$0x1] %vm290, %v1700
    %v1717 = vld [vmem:[#allocation2 + $0x8] sm:$0xff]
    %1719 = vrot.lane.b32.xlu0 %v1717, 80
    %v1720 = vpop.permute.xlu0 %1719
    %v1721 = vsel %vm158, %v1720, 0
    %1723 = vmatprep.subr.mxu0 0.0
    %1724 = vmatpush1.msra.mxu0 %v23
    %1725 = vmatprep.subr.mxu0 0.0
    %1726 = vmatpush1.msra.mxu0 %v24
    %1727 = vmatprep.subr.mxu0 0.0
    %1728 = vmatpush1.msra.mxu0 0.0
    %1729 = vmatprep.subr.mxu0 0.0
    %1730 = vmatpush1.msra.mxu0 0.0
    %1731 = vmatprep.subr.mxu0 0.0
    %1732 = vmatpush1.msra.mxu0 0.0
    %1733 = vmatprep.subr.mxu0 0.0
    %1734 = vmatpush1.msra.mxu0 0.0
    %1735 = vmatprep.subr.mxu0 0.0
    %1736 = vmatpush1.msra.mxu0 0.0
    %1737 = vmatprep.subr.mxu0 0.0
    %1738 = vmatpush1.msra.mxu0 0.0
    %1739 = vmatprep.subr.mxu0 0.0
    %1740 = vmatpush1.msra.mxu0 0.0
    %1741 = vmatprep.subr.mxu0 0.0
    %1742 = vmatpush1.msra.mxu0 0.0
    %1743 = vmatprep.subr.mxu0 0.0
    %1744 = vmatpush1.msra.mxu0 0.0
    %1745 = vmatprep.subr.mxu0 0.0
    %1746 = vmatpush1.msra.mxu0 0.0
    %1747 = vmatprep.subr.mxu0 0.0
    %1748 = vmatpush1.msra.mxu0 0.0
    %1749 = vmatprep.subr.mxu0 0.0
    %1750 = vmatpush1.msra.mxu0 0.0
    %1751 = vmatprep.subr.mxu0 0.0
    %1752 = vmatpush1.msra.mxu0 0.0
    %1753 = vmatprep.subr.mxu0 0.0
    %1754 = vmatpush1.msra.mxu0 0.0
    %1755 = vmatprep.subr.mxu0 0.0
    %1756 = vmatpush1.msra.mxu0 0.0
    %1757 = vmatprep.subr.mxu0 0.0
    %1758 = vmatpush1.msra.mxu0 0.0
    %1759 = vmatprep.subr.mxu0 0.0
    %1760 = vmatpush1.msra.mxu0 0.0
    %1761 = vmatprep.subr.mxu0 0.0
    %1762 = vmatpush1.msra.mxu0 0.0
    %1763 = vmatprep.subr.mxu0 0.0
    %1764 = vmatpush1.msra.mxu0 0.0
    %1765 = vmatprep.subr.mxu0 0.0
    %1766 = vmatpush1.msra.mxu0 0.0
    %1767 = vmatprep.subr.mxu0 0.0
    %1768 = vmatpush1.msra.mxu0 0.0
    %1769 = vmatprep.subr.mxu0 0.0
    %1770 = vmatpush1.msra.mxu0 0.0
    %1771 = vmatprep.subr.mxu0 0.0
    %1772 = vmatpush1.msra.mxu0 0.0
    %1773 = vmatprep.subr.mxu0 0.0
    %1774 = vmatpush1.msra.mxu0 0.0
    %1775 = vmatprep.subr.mxu0 0.0
    %1776 = vmatpush1.msra.mxu0 0.0
    %1777 = vmatprep.subr.mxu0 0.0
    %1778 = vmatpush1.msra.mxu0 0.0
    %1779 = vmatprep.subr.mxu0 0.0
    %1780 = vmatpush1.msra.mxu0 0.0
    %1781 = vmatprep.subr.mxu0 0.0
    %1782 = vmatpush1.msra.mxu0 0.0
    %1783 = vmatprep.subr.mxu0 0.0
    %1784 = vmatpush1.msra.mxu0 0.0
    %1785 = vmatprep.subr.mxu0 0.0
    %1786 = vmatpush1.msra.mxu0 0.0
    %1787 = vmatprep.mubr.f32.mxu0 0.0
    %1788 = vmatmul.mubr.f32.gmra.mrb[0].mxu0 %v1721
    %v1789 = vpop.f32.mrb[0].mxu0
    %v1790 = vadd.f32 0.0, %v1789
    %v1791 = vpop.f32.mrb[0].mxu0
    %1792 = vdwg.mxu0
    %v1794 = vcombine.high %v1790, %v1790
    %v1796 = vunpack.c.l.s4 1966171168
    %v1797 = vunpack.c.0.s8 %v1796
    %v1798 = vlaneseq
    %v1799 = vshrl.u32 %v1798, 7
    %v1800 = vsub.s32 %v1797, %v1799
    %v1801 = vrot.slane %v1790, %v1800
    %v1803 = vunpack.c.l.s4 1966171168
    %v1804 = vunpack.c.0.s8 %v1803
    %v1805 = vlaneseq
    %v1806 = vshrl.u32 %v1805, 7
    %v1807 = vsub.s32 %v1804, %v1806
    %v1808 = vrot.slane %v1794, %v1807
    %v1809 = vcombine.high %v1801, %v1801
    %v1810 = vcombine.high %v1808, %v1808
    %v1812 = vunpack.c.l.s4 1966171168
    %v1813 = vunpack.c.0.s8 %v1812
    %v1814 = vlaneseq
    %v1815 = vshrl.u32 %v1814, 7
    %v1816 = vsub.s32 %v1813, %v1815
    %v1817 = vrot.slane %v1801, %v1816
    %v1819 = vunpack.c.l.s4 1966171168
    %v1820 = vunpack.c.0.s8 %v1819
    %v1821 = vlaneseq
    %v1822 = vshrl.u32 %v1821, 7
    %v1823 = vsub.s32 %v1820, %v1822
    %v1824 = vrot.slane %v1808, %v1823
    %v1826 = vunpack.c.l.s4 1966171168
    %v1827 = vunpack.c.0.s8 %v1826
    %v1828 = vlaneseq
    %v1829 = vshrl.u32 %v1828, 7
    %v1830 = vsub.s32 %v1827, %v1829
    %v1831 = vrot.slane %v1809, %v1830
    %v1833 = vunpack.c.l.s4 1966171168
    %v1834 = vunpack.c.0.s8 %v1833
    %v1835 = vlaneseq
    %v1836 = vshrl.u32 %v1835, 7
    %v1837 = vsub.s32 %v1834, %v1836
    %v1838 = vrot.slane %v1810, %v1837
    %v1839 = vcombine.high %v1817, %v1817
    %v1840 = vcombine.high %v1824, %v1824
    %v1841 = vcombine.high %v1831, %v1831
    %v1842 = vcombine.high %v1838, %v1838
    %1851 = vst.msk [vmem:[#allocation3 + $0xb] sm:$0x1] %vm290, %v1817
    %1852 = vst.msk [vmem:[#allocation3 + $0x1b] sm:$0x1] %vm290, %v1831
    %1853 = vst.msk [vmem:[#allocation3 + $0x2b] sm:$0x1] %vm290, %v1839
    %1854 = vst.msk [vmem:[#allocation3 + $0x3b] sm:$0x1] %vm290, %v1841
    %1855 = vst.msk [vmem:[#allocation3 + $0x4b] sm:$0x1] %vm290, %v1824
    %1856 = vst.msk [vmem:[#allocation3 + $0x5b] sm:$0x1] %vm290, %v1838
    %1857 = vst.msk [vmem:[#allocation3 + $0x6b] sm:$0x1] %vm290, %v1840
    %1858 = vst.msk [vmem:[#allocation3 + $0x7b] sm:$0x1] %vm290, %v1842
    %v1859 = vld [vmem:[#allocation2 + $0x8] sm:$0xff]
    %1861 = vrot.lane.b32.xlu0 %v1859, 64
    %v1862 = vpop.permute.xlu0 %1861
    %v1863 = vsel %vm158, %v1862, 0
    %1865 = vmatprep.subr.mxu0 0.0
    %1866 = vmatpush1.msra.mxu0 %v23
    %1867 = vmatprep.subr.mxu0 0.0
    %1868 = vmatpush1.msra.mxu0 %v24
    %1869 = vmatprep.subr.mxu0 0.0
    %1870 = vmatpush1.msra.mxu0 0.0
    %1871 = vmatprep.subr.mxu0 0.0
    %1872 = vmatpush1.msra.mxu0 0.0
    %1873 = vmatprep.subr.mxu0 0.0
    %1874 = vmatpush1.msra.mxu0 0.0
    %1875 = vmatprep.subr.mxu0 0.0
    %1876 = vmatpush1.msra.mxu0 0.0
    %1877 = vmatprep.subr.mxu0 0.0
    %1878 = vmatpush1.msra.mxu0 0.0
    %1879 = vmatprep.subr.mxu0 0.0
    %1880 = vmatpush1.msra.mxu0 0.0
    %1881 = vmatprep.subr.mxu0 0.0
    %1882 = vmatpush1.msra.mxu0 0.0
    %1883 = vmatprep.subr.mxu0 0.0
    %1884 = vmatpush1.msra.mxu0 0.0
    %1885 = vmatprep.subr.mxu0 0.0
    %1886 = vmatpush1.msra.mxu0 0.0
    %1887 = vmatprep.subr.mxu0 0.0
    %1888 = vmatpush1.msra.mxu0 0.0
    %1889 = vmatprep.subr.mxu0 0.0
    %1890 = vmatpush1.msra.mxu0 0.0
    %1891 = vmatprep.subr.mxu0 0.0
    %1892 = vmatpush1.msra.mxu0 0.0
    %1893 = vmatprep.subr.mxu0 0.0
    %1894 = vmatpush1.msra.mxu0 0.0
    %1895 = vmatprep.subr.mxu0 0.0
    %1896 = vmatpush1.msra.mxu0 0.0
    %1897 = vmatprep.subr.mxu0 0.0
    %1898 = vmatpush1.msra.mxu0 0.0
    %1899 = vmatprep.subr.mxu0 0.0
    %1900 = vmatpush1.msra.mxu0 0.0
    %1901 = vmatprep.subr.mxu0 0.0
    %1902 = vmatpush1.msra.mxu0 0.0
    %1903 = vmatprep.subr.mxu0 0.0
    %1904 = vmatpush1.msra.mxu0 0.0
    %1905 = vmatprep.subr.mxu0 0.0
    %1906 = vmatpush1.msra.mxu0 0.0
    %1907 = vmatprep.subr.mxu0 0.0
    %1908 = vmatpush1.msra.mxu0 0.0
    %1909 = vmatprep.subr.mxu0 0.0
    %1910 = vmatpush1.msra.mxu0 0.0
    %1911 = vmatprep.subr.mxu0 0.0
    %1912 = vmatpush1.msra.mxu0 0.0
    %1913 = vmatprep.subr.mxu0 0.0
    %1914 = vmatpush1.msra.mxu0 0.0
    %1915 = vmatprep.subr.mxu0 0.0
    %1916 = vmatpush1.msra.mxu0 0.0
    %1917 = vmatprep.subr.mxu0 0.0
    %1918 = vmatpush1.msra.mxu0 0.0
    %1919 = vmatprep.subr.mxu0 0.0
    %1920 = vmatpush1.msra.mxu0 0.0
    %1921 = vmatprep.subr.mxu0 0.0
    %1922 = vmatpush1.msra.mxu0 0.0
    %1923 = vmatprep.subr.mxu0 0.0
    %1924 = vmatpush1.msra.mxu0 0.0
    %1925 = vmatprep.subr.mxu0 0.0
    %1926 = vmatpush1.msra.mxu0 0.0
    %1927 = vmatprep.subr.mxu0 0.0
    %1928 = vmatpush1.msra.mxu0 0.0
    %1929 = vmatprep.mubr.f32.mxu0 0.0
    %1930 = vmatmul.mubr.f32.gmra.mrb[0].mxu0 %v1863
    %v1931 = vpop.f32.mrb[0].mxu0
    %v1932 = vadd.f32 0.0, %v1931
    %v1933 = vpop.f32.mrb[0].mxu0
    %1934 = vdwg.mxu0
    %v1936 = vcombine.high %v1932, %v1932
    %v1938 = vunpack.c.l.s4 1966171168
    %v1939 = vunpack.c.0.s8 %v1938
    %v1940 = vlaneseq
    %v1941 = vshrl.u32 %v1940, 7
    %v1942 = vsub.s32 %v1939, %v1941
    %v1943 = vrot.slane %v1932, %v1942
    %v1945 = vunpack.c.l.s4 1966171168
    %v1946 = vunpack.c.0.s8 %v1945
    %v1947 = vlaneseq
    %v1948 = vshrl.u32 %v1947, 7
    %v1949 = vsub.s32 %v1946, %v1948
    %v1950 = vrot.slane %v1936, %v1949
    %v1951 = vcombine.high %v1943, %v1943
    %v1952 = vcombine.high %v1950, %v1950
    %v1954 = vunpack.c.l.s4 1966171168
    %v1955 = vunpack.c.0.s8 %v1954
    %v1956 = vlaneseq
    %v1957 = vshrl.u32 %v1956, 7
    %v1958 = vsub.s32 %v1955, %v1957
    %v1959 = vrot.slane %v1943, %v1958
    %v1961 = vunpack.c.l.s4 1966171168
    %v1962 = vunpack.c.0.s8 %v1961
    %v1963 = vlaneseq
    %v1964 = vshrl.u32 %v1963, 7
    %v1965 = vsub.s32 %v1962, %v1964
    %v1966 = vrot.slane %v1950, %v1965
    %v1968 = vunpack.c.l.s4 1966171168
    %v1969 = vunpack.c.0.s8 %v1968
    %v1970 = vlaneseq
    %v1971 = vshrl.u32 %v1970, 7
    %v1972 = vsub.s32 %v1969, %v1971
    %v1973 = vrot.slane %v1951, %v1972
    %v1975 = vunpack.c.l.s4 1966171168
    %v1976 = vunpack.c.0.s8 %v1975
    %v1977 = vlaneseq
    %v1978 = vshrl.u32 %v1977, 7
    %v1979 = vsub.s32 %v1976, %v1978
    %v1980 = vrot.slane %v1952, %v1979
    %v1981 = vcombine.high %v1959, %v1959
    %v1982 = vcombine.high %v1966, %v1966
    %v1983 = vcombine.high %v1973, %v1973
    %v1984 = vcombine.high %v1980, %v1980
    %1993 = vst.msk [vmem:[#allocation3 + $0xc] sm:$0x1] %vm290, %v1959
    %1994 = vst.msk [vmem:[#allocation3 + $0x1c] sm:$0x1] %vm290, %v1973
    %1995 = vst.msk [vmem:[#allocation3 + $0x2c] sm:$0x1] %vm290, %v1981
    %1996 = vst.msk [vmem:[#allocation3 + $0x3c] sm:$0x1] %vm290, %v1983
    %1997 = vst.msk [vmem:[#allocation3 + $0x4c] sm:$0x1] %vm290, %v1966
    %1998 = vst.msk [vmem:[#allocation3 + $0x5c] sm:$0x1] %vm290, %v1980
    %1999 = vst.msk [vmem:[#allocation3 + $0x6c] sm:$0x1] %vm290, %v1982
    %2000 = vst.msk [vmem:[#allocation3 + $0x7c] sm:$0x1] %vm290, %v1984
    %v2001 = vld [vmem:[#allocation2 + $0x8] sm:$0xff]
    %2003 = vrot.lane.b32.xlu0 %v2001, 48
    %v2004 = vpop.permute.xlu0 %2003
    %v2005 = vsel %vm158, %v2004, 0
    %2007 = vmatprep.subr.mxu0 0.0
    %2008 = vmatpush1.msra.mxu0 %v23
    %2009 = vmatprep.subr.mxu0 0.0
    %2010 = vmatpush1.msra.mxu0 %v24
    %2011 = vmatprep.subr.mxu0 0.0
    %2012 = vmatpush1.msra.mxu0 0.0
    %2013 = vmatprep.subr.mxu0 0.0
    %2014 = vmatpush1.msra.mxu0 0.0
    %2015 = vmatprep.subr.mxu0 0.0
    %2016 = vmatpush1.msra.mxu0 0.0
    %2017 = vmatprep.subr.mxu0 0.0
    %2018 = vmatpush1.msra.mxu0 0.0
    %2019 = vmatprep.subr.mxu0 0.0
    %2020 = vmatpush1.msra.mxu0 0.0
    %2021 = vmatprep.subr.mxu0 0.0
    %2022 = vmatpush1.msra.mxu0 0.0
    %2023 = vmatprep.subr.mxu0 0.0
    %2024 = vmatpush1.msra.mxu0 0.0
    %2025 = vmatprep.subr.mxu0 0.0
    %2026 = vmatpush1.msra.mxu0 0.0
    %2027 = vmatprep.subr.mxu0 0.0
    %2028 = vmatpush1.msra.mxu0 0.0
    %2029 = vmatprep.subr.mxu0 0.0
    %2030 = vmatpush1.msra.mxu0 0.0
    %2031 = vmatprep.subr.mxu0 0.0
    %2032 = vmatpush1.msra.mxu0 0.0
    %2033 = vmatprep.subr.mxu0 0.0
    %2034 = vmatpush1.msra.mxu0 0.0
    %2035 = vmatprep.subr.mxu0 0.0
    %2036 = vmatpush1.msra.mxu0 0.0
    %2037 = vmatprep.subr.mxu0 0.0
    %2038 = vmatpush1.msra.mxu0 0.0
    %2039 = vmatprep.subr.mxu0 0.0
    %2040 = vmatpush1.msra.mxu0 0.0
    %2041 = vmatprep.subr.mxu0 0.0
    %2042 = vmatpush1.msra.mxu0 0.0
    %2043 = vmatprep.subr.mxu0 0.0
    %2044 = vmatpush1.msra.mxu0 0.0
    %2045 = vmatprep.subr.mxu0 0.0
    %2046 = vmatpush1.msra.mxu0 0.0
    %2047 = vmatprep.subr.mxu0 0.0
    %2048 = vmatpush1.msra.mxu0 0.0
    %2049 = vmatprep.subr.mxu0 0.0
    %2050 = vmatpush1.msra.mxu0 0.0
    %2051 = vmatprep.subr.mxu0 0.0
    %2052 = vmatpush1.msra.mxu0 0.0
    %2053 = vmatprep.subr.mxu0 0.0
    %2054 = vmatpush1.msra.mxu0 0.0
    %2055 = vmatprep.subr.mxu0 0.0
    %2056 = vmatpush1.msra.mxu0 0.0
    %2057 = vmatprep.subr.mxu0 0.0
    %2058 = vmatpush1.msra.mxu0 0.0
    %2059 = vmatprep.subr.mxu0 0.0
    %2060 = vmatpush1.msra.mxu0 0.0
    %2061 = vmatprep.subr.mxu0 0.0
    %2062 = vmatpush1.msra.mxu0 0.0
    %2063 = vmatprep.subr.mxu0 0.0
    %2064 = vmatpush1.msra.mxu0 0.0
    %2065 = vmatprep.subr.mxu0 0.0
    %2066 = vmatpush1.msra.mxu0 0.0
    %2067 = vmatprep.subr.mxu0 0.0
    %2068 = vmatpush1.msra.mxu0 0.0
    %2069 = vmatprep.subr.mxu0 0.0
    %2070 = vmatpush1.msra.mxu0 0.0
    %2071 = vmatprep.mubr.f32.mxu0 0.0
    %2072 = vmatmul.mubr.f32.gmra.mrb[0].mxu0 %v2005
    %v2073 = vpop.f32.mrb[0].mxu0
    %v2074 = vadd.f32 0.0, %v2073
    %v2075 = vpop.f32.mrb[0].mxu0
    %2076 = vdwg.mxu0
    %v2078 = vcombine.high %v2074, %v2074
    %v2080 = vunpack.c.l.s4 1966171168
    %v2081 = vunpack.c.0.s8 %v2080
    %v2082 = vlaneseq
    %v2083 = vshrl.u32 %v2082, 7
    %v2084 = vsub.s32 %v2081, %v2083
    %v2085 = vrot.slane %v2074, %v2084
    %v2087 = vunpack.c.l.s4 1966171168
    %v2088 = vunpack.c.0.s8 %v2087
    %v2089 = vlaneseq
    %v2090 = vshrl.u32 %v2089, 7
    %v2091 = vsub.s32 %v2088, %v2090
    %v2092 = vrot.slane %v2078, %v2091
    %v2093 = vcombine.high %v2085, %v2085
    %v2094 = vcombine.high %v2092, %v2092
    %v2096 = vunpack.c.l.s4 1966171168
    %v2097 = vunpack.c.0.s8 %v2096
    %v2098 = vlaneseq
    %v2099 = vshrl.u32 %v2098, 7
    %v2100 = vsub.s32 %v2097, %v2099
    %v2101 = vrot.slane %v2085, %v2100
    %v2103 = vunpack.c.l.s4 1966171168
    %v2104 = vunpack.c.0.s8 %v2103
    %v2105 = vlaneseq
    %v2106 = vshrl.u32 %v2105, 7
    %v2107 = vsub.s32 %v2104, %v2106
    %v2108 = vrot.slane %v2092, %v2107
    %v2110 = vunpack.c.l.s4 1966171168
    %v2111 = vunpack.c.0.s8 %v2110
    %v2112 = vlaneseq
    %v2113 = vshrl.u32 %v2112, 7
    %v2114 = vsub.s32 %v2111, %v2113
    %v2115 = vrot.slane %v2093, %v2114
    %v2117 = vunpack.c.l.s4 1966171168
    %v2118 = vunpack.c.0.s8 %v2117
    %v2119 = vlaneseq
    %v2120 = vshrl.u32 %v2119, 7
    %v2121 = vsub.s32 %v2118, %v2120
    %v2122 = vrot.slane %v2094, %v2121
    %v2123 = vcombine.high %v2101, %v2101
    %v2124 = vcombine.high %v2108, %v2108
    %v2125 = vcombine.high %v2115, %v2115
    %v2126 = vcombine.high %v2122, %v2122
    %2135 = vst.msk [vmem:[#allocation3 + $0xd] sm:$0x1] %vm290, %v2101
    %2136 = vst.msk [vmem:[#allocation3 + $0x1d] sm:$0x1] %vm290, %v2115
    %2137 = vst.msk [vmem:[#allocation3 + $0x2d] sm:$0x1] %vm290, %v2123
    %2138 = vst.msk [vmem:[#allocation3 + $0x3d] sm:$0x1] %vm290, %v2125
    %2139 = vst.msk [vmem:[#allocation3 + $0x4d] sm:$0x1] %vm290, %v2108
    %2140 = vst.msk [vmem:[#allocation3 + $0x5d] sm:$0x1] %vm290, %v2122
    %2141 = vst.msk [vmem:[#allocation3 + $0x6d] sm:$0x1] %vm290, %v2124
    %2142 = vst.msk [vmem:[#allocation3 + $0x7d] sm:$0x1] %vm290, %v2126
    %v2143 = vld [vmem:[#allocation2 + $0x8] sm:$0xff]
    %2145 = vrot.lane.b32.xlu0 %v2143, 32
    %v2146 = vpop.permute.xlu0 %2145
    %v2147 = vsel %vm158, %v2146, 0
    %2149 = vmatprep.subr.mxu0 0.0
    %2150 = vmatpush1.msra.mxu0 %v23
    %2151 = vmatprep.subr.mxu0 0.0
    %2152 = vmatpush1.msra.mxu0 %v24
    %2153 = vmatprep.subr.mxu0 0.0
    %2154 = vmatpush1.msra.mxu0 0.0
    %2155 = vmatprep.subr.mxu0 0.0
    %2156 = vmatpush1.msra.mxu0 0.0
    %2157 = vmatprep.subr.mxu0 0.0
    %2158 = vmatpush1.msra.mxu0 0.0
    %2159 = vmatprep.subr.mxu0 0.0
    %2160 = vmatpush1.msra.mxu0 0.0
    %2161 = vmatprep.subr.mxu0 0.0
    %2162 = vmatpush1.msra.mxu0 0.0
    %2163 = vmatprep.subr.mxu0 0.0
    %2164 = vmatpush1.msra.mxu0 0.0
    %2165 = vmatprep.subr.mxu0 0.0
    %2166 = vmatpush1.msra.mxu0 0.0
    %2167 = vmatprep.subr.mxu0 0.0
    %2168 = vmatpush1.msra.mxu0 0.0
    %2169 = vmatprep.subr.mxu0 0.0
    %2170 = vmatpush1.msra.mxu0 0.0
    %2171 = vmatprep.subr.mxu0 0.0
    %2172 = vmatpush1.msra.mxu0 0.0
    %2173 = vmatprep.subr.mxu0 0.0
    %2174 = vmatpush1.msra.mxu0 0.0
    %2175 = vmatprep.subr.mxu0 0.0
    %2176 = vmatpush1.msra.mxu0 0.0
    %2177 = vmatprep.subr.mxu0 0.0
    %2178 = vmatpush1.msra.mxu0 0.0
    %2179 = vmatprep.subr.mxu0 0.0
    %2180 = vmatpush1.msra.mxu0 0.0
    %2181 = vmatprep.subr.mxu0 0.0
    %2182 = vmatpush1.msra.mxu0 0.0
    %2183 = vmatprep.subr.mxu0 0.0
    %2184 = vmatpush1.msra.mxu0 0.0
    %2185 = vmatprep.subr.mxu0 0.0
    %2186 = vmatpush1.msra.mxu0 0.0
    %2187 = vmatprep.subr.mxu0 0.0
    %2188 = vmatpush1.msra.mxu0 0.0
    %2189 = vmatprep.subr.mxu0 0.0
    %2190 = vmatpush1.msra.mxu0 0.0
    %2191 = vmatprep.subr.mxu0 0.0
    %2192 = vmatpush1.msra.mxu0 0.0
    %2193 = vmatprep.subr.mxu0 0.0
    %2194 = vmatpush1.msra.mxu0 0.0
    %2195 = vmatprep.subr.mxu0 0.0
    %2196 = vmatpush1.msra.mxu0 0.0
    %2197 = vmatprep.subr.mxu0 0.0
    %2198 = vmatpush1.msra.mxu0 0.0
    %2199 = vmatprep.subr.mxu0 0.0
    %2200 = vmatpush1.msra.mxu0 0.0
    %2201 = vmatprep.subr.mxu0 0.0
    %2202 = vmatpush1.msra.mxu0 0.0
    %2203 = vmatprep.subr.mxu0 0.0
    %2204 = vmatpush1.msra.mxu0 0.0
    %2205 = vmatprep.subr.mxu0 0.0
    %2206 = vmatpush1.msra.mxu0 0.0
    %2207 = vmatprep.subr.mxu0 0.0
    %2208 = vmatpush1.msra.mxu0 0.0
    %2209 = vmatprep.subr.mxu0 0.0
    %2210 = vmatpush1.msra.mxu0 0.0
    %2211 = vmatprep.subr.mxu0 0.0
    %2212 = vmatpush1.msra.mxu0 0.0
    %2213 = vmatprep.mubr.f32.mxu0 0.0
    %2214 = vmatmul.mubr.f32.gmra.mrb[0].mxu0 %v2147
    %v2215 = vpop.f32.mrb[0].mxu0
    %v2216 = vadd.f32 0.0, %v2215
    %v2217 = vpop.f32.mrb[0].mxu0
    %2218 = vdwg.mxu0
    %v2220 = vcombine.high %v2216, %v2216
    %v2222 = vunpack.c.l.s4 1966171168
    %v2223 = vunpack.c.0.s8 %v2222
    %v2224 = vlaneseq
    %v2225 = vshrl.u32 %v2224, 7
    %v2226 = vsub.s32 %v2223, %v2225
    %v2227 = vrot.slane %v2216, %v2226
    %v2229 = vunpack.c.l.s4 1966171168
    %v2230 = vunpack.c.0.s8 %v2229
    %v2231 = vlaneseq
    %v2232 = vshrl.u32 %v2231, 7
    %v2233 = vsub.s32 %v2230, %v2232
    %v2234 = vrot.slane %v2220, %v2233
    %v2235 = vcombine.high %v2227, %v2227
    %v2236 = vcombine.high %v2234, %v2234
    %v2238 = vunpack.c.l.s4 1966171168
    %v2239 = vunpack.c.0.s8 %v2238
    %v2240 = vlaneseq
    %v2241 = vshrl.u32 %v2240, 7
    %v2242 = vsub.s32 %v2239, %v2241
    %v2243 = vrot.slane %v2227, %v2242
    %v2245 = vunpack.c.l.s4 1966171168
    %v2246 = vunpack.c.0.s8 %v2245
    %v2247 = vlaneseq
    %v2248 = vshrl.u32 %v2247, 7
    %v2249 = vsub.s32 %v2246, %v2248
    %v2250 = vrot.slane %v2234, %v2249
    %v2252 = vunpack.c.l.s4 1966171168
    %v2253 = vunpack.c.0.s8 %v2252
    %v2254 = vlaneseq
    %v2255 = vshrl.u32 %v2254, 7
    %v2256 = vsub.s32 %v2253, %v2255
    %v2257 = vrot.slane %v2235, %v2256
    %v2259 = vunpack.c.l.s4 1966171168
    %v2260 = vunpack.c.0.s8 %v2259
    %v2261 = vlaneseq
    %v2262 = vshrl.u32 %v2261, 7
    %v2263 = vsub.s32 %v2260, %v2262
    %v2264 = vrot.slane %v2236, %v2263
    %v2265 = vcombine.high %v2243, %v2243
    %v2266 = vcombine.high %v2250, %v2250
    %v2267 = vcombine.high %v2257, %v2257
    %v2268 = vcombine.high %v2264, %v2264
    %2277 = vst.msk [vmem:[#allocation3 + $0xe] sm:$0x1] %vm290, %v2243
    %2278 = vst.msk [vmem:[#allocation3 + $0x1e] sm:$0x1] %vm290, %v2257
    %2279 = vst.msk [vmem:[#allocation3 + $0x2e] sm:$0x1] %vm290, %v2265
    %2280 = vst.msk [vmem:[#allocation3 + $0x3e] sm:$0x1] %vm290, %v2267
    %2281 = vst.msk [vmem:[#allocation3 + $0x4e] sm:$0x1] %vm290, %v2250
    %2282 = vst.msk [vmem:[#allocation3 + $0x5e] sm:$0x1] %vm290, %v2264
    %2283 = vst.msk [vmem:[#allocation3 + $0x6e] sm:$0x1] %vm290, %v2266
    %2284 = vst.msk [vmem:[#allocation3 + $0x7e] sm:$0x1] %vm290, %v2268
    %v2285 = vld [vmem:[#allocation2 + $0x8] sm:$0xff]
    %2287 = vrot.lane.b32.xlu0 %v2285, 16
    %v2288 = vpop.permute.xlu0 %2287
    %v2289 = vsel %vm158, %v2288, 0
    %2291 = vmatprep.subr.mxu0 0.0
    %2292 = vmatpush1.msra.mxu0 %v23
    %2293 = vmatprep.subr.mxu0 0.0
    %2294 = vmatpush1.msra.mxu0 %v24
    %2295 = vmatprep.subr.mxu0 0.0
    %2296 = vmatpush1.msra.mxu0 0.0
    %2297 = vmatprep.subr.mxu0 0.0
    %2298 = vmatpush1.msra.mxu0 0.0
    %2299 = vmatprep.subr.mxu0 0.0
    %2300 = vmatpush1.msra.mxu0 0.0
    %2301 = vmatprep.subr.mxu0 0.0
    %2302 = vmatpush1.msra.mxu0 0.0
    %2303 = vmatprep.subr.mxu0 0.0
    %2304 = vmatpush1.msra.mxu0 0.0
    %2305 = vmatprep.subr.mxu0 0.0
    %2306 = vmatpush1.msra.mxu0 0.0
    %2307 = vmatprep.subr.mxu0 0.0
    %2308 = vmatpush1.msra.mxu0 0.0
    %2309 = vmatprep.subr.mxu0 0.0
    %2310 = vmatpush1.msra.mxu0 0.0
    %2311 = vmatprep.subr.mxu0 0.0
    %2312 = vmatpush1.msra.mxu0 0.0
    %2313 = vmatprep.subr.mxu0 0.0
    %2314 = vmatpush1.msra.mxu0 0.0
    %2315 = vmatprep.subr.mxu0 0.0
    %2316 = vmatpush1.msra.mxu0 0.0
    %2317 = vmatprep.subr.mxu0 0.0
    %2318 = vmatpush1.msra.mxu0 0.0
    %2319 = vmatprep.subr.mxu0 0.0
    %2320 = vmatpush1.msra.mxu0 0.0
    %2321 = vmatprep.subr.mxu0 0.0
    %2322 = vmatpush1.msra.mxu0 0.0
    %2323 = vmatprep.subr.mxu0 0.0
    %2324 = vmatpush1.msra.mxu0 0.0
    %2325 = vmatprep.subr.mxu0 0.0
    %2326 = vmatpush1.msra.mxu0 0.0
    %2327 = vmatprep.subr.mxu0 0.0
    %2328 = vmatpush1.msra.mxu0 0.0
    %2329 = vmatprep.subr.mxu0 0.0
    %2330 = vmatpush1.msra.mxu0 0.0
    %2331 = vmatprep.subr.mxu0 0.0
    %2332 = vmatpush1.msra.mxu0 0.0
    %2333 = vmatprep.subr.mxu0 0.0
    %2334 = vmatpush1.msra.mxu0 0.0
    %2335 = vmatprep.subr.mxu0 0.0
    %2336 = vmatpush1.msra.mxu0 0.0
    %2337 = vmatprep.subr.mxu0 0.0
    %2338 = vmatpush1.msra.mxu0 0.0
    %2339 = vmatprep.subr.mxu0 0.0
    %2340 = vmatpush1.msra.mxu0 0.0
    %2341 = vmatprep.subr.mxu0 0.0
    %2342 = vmatpush1.msra.mxu0 0.0
    %2343 = vmatprep.subr.mxu0 0.0
    %2344 = vmatpush1.msra.mxu0 0.0
    %2345 = vmatprep.subr.mxu0 0.0
    %2346 = vmatpush1.msra.mxu0 0.0
    %2347 = vmatprep.subr.mxu0 0.0
    %2348 = vmatpush1.msra.mxu0 0.0
    %2349 = vmatprep.subr.mxu0 0.0
    %2350 = vmatpush1.msra.mxu0 0.0
    %2351 = vmatprep.subr.mxu0 0.0
    %2352 = vmatpush1.msra.mxu0 0.0
    %2353 = vmatprep.subr.mxu0 0.0
    %2354 = vmatpush1.msra.mxu0 0.0
    %2355 = vmatprep.mubr.f32.mxu0 0.0
    %2356 = vmatmul.mubr.f32.gmra.mrb[0].mxu0 %v2289
    %v2357 = vpop.f32.mrb[0].mxu0
    %v2358 = vadd.f32 0.0, %v2357
    %v2359 = vpop.f32.mrb[0].mxu0
    %2360 = vdwg.mxu0
    %v2362 = vcombine.high %v2358, %v2358
    %v2364 = vunpack.c.l.s4 1966171168
    %v2365 = vunpack.c.0.s8 %v2364
    %v2366 = vlaneseq
    %v2367 = vshrl.u32 %v2366, 7
    %v2368 = vsub.s32 %v2365, %v2367
    %v2369 = vrot.slane %v2358, %v2368
    %v2371 = vunpack.c.l.s4 1966171168
    %v2372 = vunpack.c.0.s8 %v2371
    %v2373 = vlaneseq
    %v2374 = vshrl.u32 %v2373, 7
    %v2375 = vsub.s32 %v2372, %v2374
    %v2376 = vrot.slane %v2362, %v2375
    %v2377 = vcombine.high %v2369, %v2369
    %v2378 = vcombine.high %v2376, %v2376
    %v2380 = vunpack.c.l.s4 1966171168
    %v2381 = vunpack.c.0.s8 %v2380
    %v2382 = vlaneseq
    %v2383 = vshrl.u32 %v2382, 7
    %v2384 = vsub.s32 %v2381, %v2383
    %v2385 = vrot.slane %v2369, %v2384
    %v2387 = vunpack.c.l.s4 1966171168
    %v2388 = vunpack.c.0.s8 %v2387
    %v2389 = vlaneseq
    %v2390 = vshrl.u32 %v2389, 7
    %v2391 = vsub.s32 %v2388, %v2390
    %v2392 = vrot.slane %v2376, %v2391
    %v2394 = vunpack.c.l.s4 1966171168
    %v2395 = vunpack.c.0.s8 %v2394
    %v2396 = vlaneseq
    %v2397 = vshrl.u32 %v2396, 7
    %v2398 = vsub.s32 %v2395, %v2397
    %v2399 = vrot.slane %v2377, %v2398
    %v2401 = vunpack.c.l.s4 1966171168
    %v2402 = vunpack.c.0.s8 %v2401
    %v2403 = vlaneseq
    %v2404 = vshrl.u32 %v2403, 7
    %v2405 = vsub.s32 %v2402, %v2404
    %v2406 = vrot.slane %v2378, %v2405
    %v2407 = vcombine.high %v2385, %v2385
    %v2408 = vcombine.high %v2392, %v2392
    %v2409 = vcombine.high %v2399, %v2399
    %v2410 = vcombine.high %v2406, %v2406
    %2419 = vst.msk [vmem:[#allocation3 + $0xf] sm:$0x1] %vm290, %v2385
    %2420 = vst.msk [vmem:[#allocation3 + $0x1f] sm:$0x1] %vm290, %v2399
    %2421 = vst.msk [vmem:[#allocation3 + $0x2f] sm:$0x1] %vm290, %v2407
    %2422 = vst.msk [vmem:[#allocation3 + $0x3f] sm:$0x1] %vm290, %v2409
    %2423 = vst.msk [vmem:[#allocation3 + $0x4f] sm:$0x1] %vm290, %v2392
    %2424 = vst.msk [vmem:[#allocation3 + $0x5f] sm:$0x1] %vm290, %v2406
    %2425 = vst.msk [vmem:[#allocation3 + $0x6f] sm:$0x1] %vm290, %v2408
    %2426 = vst.msk [vmem:[#allocation3 + $0x7f] sm:$0x1] %vm290, %v2410
    %v2427 = vld [vmem:[#allocation3] sm:$0xff]
    %v2428 = vld [vmem:[#allocation3 + $0x8] sm:$0xff]
    %v2430 = vsel %vm158, %v25, 0
    %v2433 = vsel %vm158, %v26, 0
    %v2436 = vsel %vm158, %v27, 0
    %v2439 = vsel %vm158, %v28, 0
    %2441 = vmatprep.subr.mxu0 0.0
    %2442 = vmatpush1.msra.mxu0 %v2427
    %2443 = vmatprep.subr.mxu0 0.0
    %2444 = vmatpush1.msra.mxu0 %v2428
    %2445 = vmatprep.subr.mxu0 0.0
    %2446 = vmatpush1.msra.mxu0 0.0
    %2447 = vmatprep.subr.mxu0 0.0
    %2448 = vmatpush1.msra.mxu0 0.0
    %2449 = vmatprep.subr.mxu0 0.0
    %2450 = vmatpush1.msra.mxu0 0.0
    %2451 = vmatprep.subr.mxu0 0.0
    %2452 = vmatpush1.msra.mxu0 0.0
    %2453 = vmatprep.subr.mxu0 0.0
    %2454 = vmatpush1.msra.mxu0 0.0
    %2455 = vmatprep.subr.mxu0 0.0
    %2456 = vmatpush1.msra.mxu0 0.0
    %2457 = vmatprep.subr.mxu0 0.0
    %2458 = vmatpush1.msra.mxu0 0.0
    %2459 = vmatprep.subr.mxu0 0.0
    %2460 = vmatpush1.msra.mxu0 0.0
    %2461 = vmatprep.subr.mxu0 0.0
    %2462 = vmatpush1.msra.mxu0 0.0
    %2463 = vmatprep.subr.mxu0 0.0
    %2464 = vmatpush1.msra.mxu0 0.0
    %2465 = vmatprep.subr.mxu0 0.0
    %2466 = vmatpush1.msra.mxu0 0.0
    %2467 = vmatprep.subr.mxu0 0.0
    %2468 = vmatpush1.msra.mxu0 0.0
    %2469 = vmatprep.subr.mxu0 0.0
    %2470 = vmatpush1.msra.mxu0 0.0
    %2471 = vmatprep.subr.mxu0 0.0
    %2472 = vmatpush1.msra.mxu0 0.0
    %2473 = vmatprep.subr.mxu0 0.0
    %2474 = vmatpush1.msra.mxu0 0.0
    %2475 = vmatprep.subr.mxu0 0.0
    %2476 = vmatpush1.msra.mxu0 0.0
    %2477 = vmatprep.subr.mxu0 0.0
    %2478 = vmatpush1.msra.mxu0 0.0
    %2479 = vmatprep.subr.mxu0 0.0
    %2480 = vmatpush1.msra.mxu0 0.0
    %2481 = vmatprep.subr.mxu0 0.0
    %2482 = vmatpush1.msra.mxu0 0.0
    %2483 = vmatprep.subr.mxu0 0.0
    %2484 = vmatpush1.msra.mxu0 0.0
    %2485 = vmatprep.subr.mxu0 0.0
    %2486 = vmatpush1.msra.mxu0 0.0
    %2487 = vmatprep.subr.mxu0 0.0
    %2488 = vmatpush1.msra.mxu0 0.0
    %2489 = vmatprep.subr.mxu0 0.0
    %2490 = vmatpush1.msra.mxu0 0.0
    %2491 = vmatprep.subr.mxu0 0.0
    %2492 = vmatpush1.msra.mxu0 0.0
    %2493 = vmatprep.subr.mxu0 0.0
    %2494 = vmatpush1.msra.mxu0 0.0
    %2495 = vmatprep.subr.mxu0 0.0
    %2496 = vmatpush1.msra.mxu0 0.0
    %2497 = vmatprep.subr.mxu0 0.0
    %2498 = vmatpush1.msra.mxu0 0.0
    %2499 = vmatprep.subr.mxu0 0.0
    %2500 = vmatpush1.msra.mxu0 0.0
    %2501 = vmatprep.subr.mxu0 0.0
    %2502 = vmatpush1.msra.mxu0 0.0
    %2503 = vmatprep.subr.mxu0 0.0
    %2504 = vmatpush1.msra.mxu0 0.0
    %2505 = vmatprep.mubr.f32.mxu0 0.0
    %2506 = vmatmul.mubr.f32.gmra.mrb[0].mxu0 %v2430
    %v2507 = vpop.f32.mrb[0].mxu0
    %v2508 = vadd.f32 0.0, %v2507
    %v2509 = vpop.f32.mrb[0].mxu0
    %2510 = vmatprep.mubr.f32.mxu0 0.0
    %2511 = vmatmul.mubr.f32.gmra.mrb[0].mxu0 %v2433
    %v2512 = vpop.f32.mrb[0].mxu0
    %v2513 = vadd.f32 0.0, %v2512
    %v2514 = vpop.f32.mrb[0].mxu0
    %2515 = vmatprep.mubr.f32.mxu0 0.0
    %2516 = vmatmul.mubr.f32.gmra.mrb[0].mxu0 %v2436
    %v2517 = vpop.f32.mrb[0].mxu0
    %v2518 = vadd.f32 0.0, %v2517
    %v2519 = vpop.f32.mrb[0].mxu0
    %2520 = vmatprep.mubr.f32.mxu0 0.0
    %2521 = vmatmul.mubr.f32.gmra.mrb[0].mxu0 %v2439
    %v2522 = vpop.f32.mrb[0].mxu0
    %v2523 = vadd.f32 0.0, %v2522
    %v2524 = vpop.f32.mrb[0].mxu0
    %2525 = vdwg.mxu0
    %2526 = vst.msk [vmem:[#allocation4] sm:$0xff] %vm42, %v2508
    %2527 = vst.msk [vmem:[#allocation4 + $0x8] sm:$0xff] %vm42, %v2513
    %2528 = vst.msk [vmem:[#allocation4 + $0x10] sm:$0xff] %vm42, %v2518
    %2529 = vst.msk [vmem:[#allocation4 + $0x18] sm:$0xff] %vm42, %v2523
    %s2530 = scalar_lea.vmem [#allocation3], 16
    %v2531 = vld [vmem:[%s2530] sm:$0xff]
    %v2532 = vld [vmem:[%s2530 + $0x8] sm:$0xff]
    %2533 = vmatprep.subr.mxu0 0.0
    %2534 = vmatpush1.msra.mxu0 %v2531
    %2535 = vmatprep.subr.mxu0 0.0
    %2536 = vmatpush1.msra.mxu0 %v2532
    %2537 = vmatprep.subr.mxu0 0.0
    %2538 = vmatpush1.msra.mxu0 0.0
    %2539 = vmatprep.subr.mxu0 0.0
    %2540 = vmatpush1.msra.mxu0 0.0
    %2541 = vmatprep.subr.mxu0 0.0
    %2542 = vmatpush1.msra.mxu0 0.0
    %2543 = vmatprep.subr.mxu0 0.0
    %2544 = vmatpush1.msra.mxu0 0.0
    %2545 = vmatprep.subr.mxu0 0.0
    %2546 = vmatpush1.msra.mxu0 0.0
    %2547 = vmatprep.subr.mxu0 0.0
    %2548 = vmatpush1.msra.mxu0 0.0
    %2549 = vmatprep.subr.mxu0 0.0
    %2550 = vmatpush1.msra.mxu0 0.0
    %2551 = vmatprep.subr.mxu0 0.0
    %2552 = vmatpush1.msra.mxu0 0.0
    %2553 = vmatprep.subr.mxu0 0.0
    %2554 = vmatpush1.msra.mxu0 0.0
    %2555 = vmatprep.subr.mxu0 0.0
    %2556 = vmatpush1.msra.mxu0 0.0
    %2557 = vmatprep.subr.mxu0 0.0
    %2558 = vmatpush1.msra.mxu0 0.0
    %2559 = vmatprep.subr.mxu0 0.0
    %2560 = vmatpush1.msra.mxu0 0.0
    %2561 = vmatprep.subr.mxu0 0.0
    %2562 = vmatpush1.msra.mxu0 0.0
    %2563 = vmatprep.subr.mxu0 0.0
    %2564 = vmatpush1.msra.mxu0 0.0
    %2565 = vmatprep.subr.mxu0 0.0
    %2566 = vmatpush1.msra.mxu0 0.0
    %2567 = vmatprep.subr.mxu0 0.0
    %2568 = vmatpush1.msra.mxu0 0.0
    %2569 = vmatprep.subr.mxu0 0.0
    %2570 = vmatpush1.msra.mxu0 0.0
    %2571 = vmatprep.subr.mxu0 0.0
    %2572 = vmatpush1.msra.mxu0 0.0
    %2573 = vmatprep.subr.mxu0 0.0
    %2574 = vmatpush1.msra.mxu0 0.0
    %2575 = vmatprep.subr.mxu0 0.0
    %2576 = vmatpush1.msra.mxu0 0.0
    %2577 = vmatprep.subr.mxu0 0.0
    %2578 = vmatpush1.msra.mxu0 0.0
    %2579 = vmatprep.subr.mxu0 0.0
    %2580 = vmatpush1.msra.mxu0 0.0
    %2581 = vmatprep.subr.mxu0 0.0
    %2582 = vmatpush1.msra.mxu0 0.0
    %2583 = vmatprep.subr.mxu0 0.0
    %2584 = vmatpush1.msra.mxu0 0.0
    %2585 = vmatprep.subr.mxu0 0.0
    %2586 = vmatpush1.msra.mxu0 0.0
    %2587 = vmatprep.subr.mxu0 0.0
    %2588 = vmatpush1.msra.mxu0 0.0
    %2589 = vmatprep.subr.mxu0 0.0
    %2590 = vmatpush1.msra.mxu0 0.0
    %2591 = vmatprep.subr.mxu0 0.0
    %2592 = vmatpush1.msra.mxu0 0.0
    %2593 = vmatprep.subr.mxu0 0.0
    %2594 = vmatpush1.msra.mxu0 0.0
    %2595 = vmatprep.subr.mxu0 0.0
    %2596 = vmatpush1.msra.mxu0 0.0
    %2597 = vmatprep.mubr.f32.mxu0 0.0
    %2598 = vmatmul.mubr.f32.gmra.mrb[0].mxu0 %v2430
    %v2599 = vpop.f32.mrb[0].mxu0
    %v2600 = vadd.f32 0.0, %v2599
    %v2601 = vpop.f32.mrb[0].mxu0
    %2602 = vmatprep.mubr.f32.mxu0 0.0
    %2603 = vmatmul.mubr.f32.gmra.mrb[0].mxu0 %v2433
    %v2604 = vpop.f32.mrb[0].mxu0
    %v2605 = vadd.f32 0.0, %v2604
    %v2606 = vpop.f32.mrb[0].mxu0
    %2607 = vmatprep.mubr.f32.mxu0 0.0
    %2608 = vmatmul.mubr.f32.gmra.mrb[0].mxu0 %v2436
    %v2609 = vpop.f32.mrb[0].mxu0
    %v2610 = vadd.f32 0.0, %v2609
    %v2611 = vpop.f32.mrb[0].mxu0
    %2612 = vmatprep.mubr.f32.mxu0 0.0
    %2613 = vmatmul.mubr.f32.gmra.mrb[0].mxu0 %v2439
    %v2614 = vpop.f32.mrb[0].mxu0
    %v2615 = vadd.f32 0.0, %v2614
    %v2616 = vpop.f32.mrb[0].mxu0
    %2617 = vdwg.mxu0
    %s2618 = scalar_lea.vmem [#allocation4], 32
    %2619 = vst.msk [vmem:[%s2618] sm:$0xff] %vm42, %v2600
    %2620 = vst.msk [vmem:[%s2618 + $0x8] sm:$0xff] %vm42, %v2605
    %2621 = vst.msk [vmem:[%s2618 + $0x10] sm:$0xff] %vm42, %v2610
    %2622 = vst.msk [vmem:[%s2618 + $0x18] sm:$0xff] %vm42, %v2615
    %s2623 = scalar_lea.vmem [#allocation3], 32
    %v2624 = vld [vmem:[%s2623] sm:$0xff]
    %v2625 = vld [vmem:[%s2623 + $0x8] sm:$0xff]
    %2626 = vmatprep.subr.mxu0 0.0
    %2627 = vmatpush1.msra.mxu0 %v2624
    %2628 = vmatprep.subr.mxu0 0.0
    %2629 = vmatpush1.msra.mxu0 %v2625
    %2630 = vmatprep.subr.mxu0 0.0
    %2631 = vmatpush1.msra.mxu0 0.0
    %2632 = vmatprep.subr.mxu0 0.0
    %2633 = vmatpush1.msra.mxu0 0.0
    %2634 = vmatprep.subr.mxu0 0.0
    %2635 = vmatpush1.msra.mxu0 0.0
    %2636 = vmatprep.subr.mxu0 0.0
    %2637 = vmatpush1.msra.mxu0 0.0
    %2638 = vmatprep.subr.mxu0 0.0
    %2639 = vmatpush1.msra.mxu0 0.0
    %2640 = vmatprep.subr.mxu0 0.0
    %2641 = vmatpush1.msra.mxu0 0.0
    %2642 = vmatprep.subr.mxu0 0.0
    %2643 = vmatpush1.msra.mxu0 0.0
    %2644 = vmatprep.subr.mxu0 0.0
    %2645 = vmatpush1.msra.mxu0 0.0
    %2646 = vmatprep.subr.mxu0 0.0
    %2647 = vmatpush1.msra.mxu0 0.0
    %2648 = vmatprep.subr.mxu0 0.0
    %2649 = vmatpush1.msra.mxu0 0.0
    %2650 = vmatprep.subr.mxu0 0.0
    %2651 = vmatpush1.msra.mxu0 0.0
    %2652 = vmatprep.subr.mxu0 0.0
    %2653 = vmatpush1.msra.mxu0 0.0
    %2654 = vmatprep.subr.mxu0 0.0
    %2655 = vmatpush1.msra.mxu0 0.0
    %2656 = vmatprep.subr.mxu0 0.0
    %2657 = vmatpush1.msra.mxu0 0.0
    %2658 = vmatprep.subr.mxu0 0.0
    %2659 = vmatpush1.msra.mxu0 0.0
    %2660 = vmatprep.subr.mxu0 0.0
    %2661 = vmatpush1.msra.mxu0 0.0
    %2662 = vmatprep.subr.mxu0 0.0
    %2663 = vmatpush1.msra.mxu0 0.0
    %2664 = vmatprep.subr.mxu0 0.0
    %2665 = vmatpush1.msra.mxu0 0.0
    %2666 = vmatprep.subr.mxu0 0.0
    %2667 = vmatpush1.msra.mxu0 0.0
    %2668 = vmatprep.subr.mxu0 0.0
    %2669 = vmatpush1.msra.mxu0 0.0
    %2670 = vmatprep.subr.mxu0 0.0
    %2671 = vmatpush1.msra.mxu0 0.0
    %2672 = vmatprep.subr.mxu0 0.0
    %2673 = vmatpush1.msra.mxu0 0.0
    %2674 = vmatprep.subr.mxu0 0.0
    %2675 = vmatpush1.msra.mxu0 0.0
    %2676 = vmatprep.subr.mxu0 0.0
    %2677 = vmatpush1.msra.mxu0 0.0
    %2678 = vmatprep.subr.mxu0 0.0
    %2679 = vmatpush1.msra.mxu0 0.0
    %2680 = vmatprep.subr.mxu0 0.0
    %2681 = vmatpush1.msra.mxu0 0.0
    %2682 = vmatprep.subr.mxu0 0.0
    %2683 = vmatpush1.msra.mxu0 0.0
    %2684 = vmatprep.subr.mxu0 0.0
    %2685 = vmatpush1.msra.mxu0 0.0
    %2686 = vmatprep.subr.mxu0 0.0
    %2687 = vmatpush1.msra.mxu0 0.0
    %2688 = vmatprep.subr.mxu0 0.0
    %2689 = vmatpush1.msra.mxu0 0.0
    %2690 = vmatprep.mubr.f32.mxu0 0.0
    %2691 = vmatmul.mubr.f32.gmra.mrb[0].mxu0 %v2430
    %v2692 = vpop.f32.mrb[0].mxu0
    %v2693 = vadd.f32 0.0, %v2692
    %v2694 = vpop.f32.mrb[0].mxu0
    %2695 = vmatprep.mubr.f32.mxu0 0.0
    %2696 = vmatmul.mubr.f32.gmra.mrb[0].mxu0 %v2433
    %v2697 = vpop.f32.mrb[0].mxu0
    %v2698 = vadd.f32 0.0, %v2697
    %v2699 = vpop.f32.mrb[0].mxu0
    %2700 = vmatprep.mubr.f32.mxu0 0.0
    %2701 = vmatmul.mubr.f32.gmra.mrb[0].mxu0 %v2436
    %v2702 = vpop.f32.mrb[0].mxu0
    %v2703 = vadd.f32 0.0, %v2702
    %v2704 = vpop.f32.mrb[0].mxu0
    %2705 = vmatprep.mubr.f32.mxu0 0.0
    %2706 = vmatmul.mubr.f32.gmra.mrb[0].mxu0 %v2439
    %v2707 = vpop.f32.mrb[0].mxu0
    %v2708 = vadd.f32 0.0, %v2707
    %v2709 = vpop.f32.mrb[0].mxu0
    %2710 = vdwg.mxu0
    %s2711 = scalar_lea.vmem [#allocation4], 64
    %2712 = vst.msk [vmem:[%s2711] sm:$0xff] %vm42, %v2693
    %2713 = vst.msk [vmem:[%s2711 + $0x8] sm:$0xff] %vm42, %v2698
    %2714 = vst.msk [vmem:[%s2711 + $0x10] sm:$0xff] %vm42, %v2703
    %2715 = vst.msk [vmem:[%s2711 + $0x18] sm:$0xff] %vm42, %v2708
    %s2716 = scalar_lea.vmem [#allocation3], 48
    %v2717 = vld [vmem:[%s2716] sm:$0xff]
    %v2718 = vld [vmem:[%s2716 + $0x8] sm:$0xff]
    %2719 = vmatprep.subr.mxu0 0.0
    %2720 = vmatpush1.msra.mxu0 %v2717
    %2721 = vmatprep.subr.mxu0 0.0
    %2722 = vmatpush1.msra.mxu0 %v2718
    %2723 = vmatprep.subr.mxu0 0.0
    %2724 = vmatpush1.msra.mxu0 0.0
    %2725 = vmatprep.subr.mxu0 0.0
    %2726 = vmatpush1.msra.mxu0 0.0
    %2727 = vmatprep.subr.mxu0 0.0
    %2728 = vmatpush1.msra.mxu0 0.0
    %2729 = vmatprep.subr.mxu0 0.0
    %2730 = vmatpush1.msra.mxu0 0.0
    %2731 = vmatprep.subr.mxu0 0.0
    %2732 = vmatpush1.msra.mxu0 0.0
    %2733 = vmatprep.subr.mxu0 0.0
    %2734 = vmatpush1.msra.mxu0 0.0
    %2735 = vmatprep.subr.mxu0 0.0
    %2736 = vmatpush1.msra.mxu0 0.0
    %2737 = vmatprep.subr.mxu0 0.0
    %2738 = vmatpush1.msra.mxu0 0.0
    %2739 = vmatprep.subr.mxu0 0.0
    %2740 = vmatpush1.msra.mxu0 0.0
    %2741 = vmatprep.subr.mxu0 0.0
    %2742 = vmatpush1.msra.mxu0 0.0
    %2743 = vmatprep.subr.mxu0 0.0
    %2744 = vmatpush1.msra.mxu0 0.0
    %2745 = vmatprep.subr.mxu0 0.0
    %2746 = vmatpush1.msra.mxu0 0.0
    %2747 = vmatprep.subr.mxu0 0.0
    %2748 = vmatpush1.msra.mxu0 0.0
    %2749 = vmatprep.subr.mxu0 0.0
    %2750 = vmatpush1.msra.mxu0 0.0
    %2751 = vmatprep.subr.mxu0 0.0
    %2752 = vmatpush1.msra.mxu0 0.0
    %2753 = vmatprep.subr.mxu0 0.0
    %2754 = vmatpush1.msra.mxu0 0.0
    %2755 = vmatprep.subr.mxu0 0.0
    %2756 = vmatpush1.msra.mxu0 0.0
    %2757 = vmatprep.subr.mxu0 0.0
    %2758 = vmatpush1.msra.mxu0 0.0
    %2759 = vmatprep.subr.mxu0 0.0
    %2760 = vmatpush1.msra.mxu0 0.0
    %2761 = vmatprep.subr.mxu0 0.0
    %2762 = vmatpush1.msra.mxu0 0.0
    %2763 = vmatprep.subr.mxu0 0.0
    %2764 = vmatpush1.msra.mxu0 0.0
    %2765 = vmatprep.subr.mxu0 0.0
    %2766 = vmatpush1.msra.mxu0 0.0
    %2767 = vmatprep.subr.mxu0 0.0
    %2768 = vmatpush1.msra.mxu0 0.0
    %2769 = vmatprep.subr.mxu0 0.0
    %2770 = vmatpush1.msra.mxu0 0.0
    %2771 = vmatprep.subr.mxu0 0.0
    %2772 = vmatpush1.msra.mxu0 0.0
    %2773 = vmatprep.subr.mxu0 0.0
    %2774 = vmatpush1.msra.mxu0 0.0
    %2775 = vmatprep.subr.mxu0 0.0
    %2776 = vmatpush1.msra.mxu0 0.0
    %2777 = vmatprep.subr.mxu0 0.0
    %2778 = vmatpush1.msra.mxu0 0.0
    %2779 = vmatprep.subr.mxu0 0.0
    %2780 = vmatpush1.msra.mxu0 0.0
    %2781 = vmatprep.subr.mxu0 0.0
    %2782 = vmatpush1.msra.mxu0 0.0
    %2783 = vmatprep.mubr.f32.mxu0 0.0
    %2784 = vmatmul.mubr.f32.gmra.mrb[0].mxu0 %v2430
    %v2785 = vpop.f32.mrb[0].mxu0
    %v2786 = vadd.f32 0.0, %v2785
    %v2787 = vpop.f32.mrb[0].mxu0
    %2788 = vmatprep.mubr.f32.mxu0 0.0
    %2789 = vmatmul.mubr.f32.gmra.mrb[0].mxu0 %v2433
    %v2790 = vpop.f32.mrb[0].mxu0
    %v2791 = vadd.f32 0.0, %v2790
    %v2792 = vpop.f32.mrb[0].mxu0
    %2793 = vmatprep.mubr.f32.mxu0 0.0
    %2794 = vmatmul.mubr.f32.gmra.mrb[0].mxu0 %v2436
    %v2795 = vpop.f32.mrb[0].mxu0
    %v2796 = vadd.f32 0.0, %v2795
    %v2797 = vpop.f32.mrb[0].mxu0
    %2798 = vmatprep.mubr.f32.mxu0 0.0
    %2799 = vmatmul.mubr.f32.gmra.mrb[0].mxu0 %v2439
    %v2800 = vpop.f32.mrb[0].mxu0
    %v2801 = vadd.f32 0.0, %v2800
    %v2802 = vpop.f32.mrb[0].mxu0
    %2803 = vdwg.mxu0
    %s2804 = scalar_lea.vmem [#allocation4], 96
    %2805 = vst.msk [vmem:[%s2804] sm:$0xff] %vm42, %v2786
    %2806 = vst.msk [vmem:[%s2804 + $0x8] sm:$0xff] %vm42, %v2791
    %2807 = vst.msk [vmem:[%s2804 + $0x10] sm:$0xff] %vm42, %v2796
    %2808 = vst.msk [vmem:[%s2804 + $0x18] sm:$0xff] %vm42, %v2801
    %s2809 = scalar_lea.vmem [#allocation3], 64
    %v2810 = vld [vmem:[%s2809] sm:$0xff]
    %v2811 = vld [vmem:[%s2809 + $0x8] sm:$0xff]
    %2812 = vmatprep.subr.mxu0 0.0
    %2813 = vmatpush1.msra.mxu0 %v2810
    %2814 = vmatprep.subr.mxu0 0.0
    %2815 = vmatpush1.msra.mxu0 %v2811
    %2816 = vmatprep.subr.mxu0 0.0
    %2817 = vmatpush1.msra.mxu0 0.0
    %2818 = vmatprep.subr.mxu0 0.0
    %2819 = vmatpush1.msra.mxu0 0.0
    %2820 = vmatprep.subr.mxu0 0.0
    %2821 = vmatpush1.msra.mxu0 0.0
    %2822 = vmatprep.subr.mxu0 0.0
    %2823 = vmatpush1.msra.mxu0 0.0
    %2824 = vmatprep.subr.mxu0 0.0
    %2825 = vmatpush1.msra.mxu0 0.0
    %2826 = vmatprep.subr.mxu0 0.0
    %2827 = vmatpush1.msra.mxu0 0.0
    %2828 = vmatprep.subr.mxu0 0.0
    %2829 = vmatpush1.msra.mxu0 0.0
    %2830 = vmatprep.subr.mxu0 0.0
    %2831 = vmatpush1.msra.mxu0 0.0
    %2832 = vmatprep.subr.mxu0 0.0
    %2833 = vmatpush1.msra.mxu0 0.0
    %2834 = vmatprep.subr.mxu0 0.0
    %2835 = vmatpush1.msra.mxu0 0.0
    %2836 = vmatprep.subr.mxu0 0.0
    %2837 = vmatpush1.msra.mxu0 0.0
    %2838 = vmatprep.subr.mxu0 0.0
    %2839 = vmatpush1.msra.mxu0 0.0
    %2840 = vmatprep.subr.mxu0 0.0
    %2841 = vmatpush1.msra.mxu0 0.0
    %2842 = vmatprep.subr.mxu0 0.0
    %2843 = vmatpush1.msra.mxu0 0.0
    %2844 = vmatprep.subr.mxu0 0.0
    %2845 = vmatpush1.msra.mxu0 0.0
    %2846 = vmatprep.subr.mxu0 0.0
    %2847 = vmatpush1.msra.mxu0 0.0
    %2848 = vmatprep.subr.mxu0 0.0
    %2849 = vmatpush1.msra.mxu0 0.0
    %2850 = vmatprep.subr.mxu0 0.0
    %2851 = vmatpush1.msra.mxu0 0.0
    %2852 = vmatprep.subr.mxu0 0.0
    %2853 = vmatpush1.msra.mxu0 0.0
    %2854 = vmatprep.subr.mxu0 0.0
    %2855 = vmatpush1.msra.mxu0 0.0
    %2856 = vmatprep.subr.mxu0 0.0
    %2857 = vmatpush1.msra.mxu0 0.0
    %2858 = vmatprep.subr.mxu0 0.0
    %2859 = vmatpush1.msra.mxu0 0.0
    %2860 = vmatprep.subr.mxu0 0.0
    %2861 = vmatpush1.msra.mxu0 0.0
    %2862 = vmatprep.subr.mxu0 0.0
    %2863 = vmatpush1.msra.mxu0 0.0
    %2864 = vmatprep.subr.mxu0 0.0
    %2865 = vmatpush1.msra.mxu0 0.0
    %2866 = vmatprep.subr.mxu0 0.0
    %2867 = vmatpush1.msra.mxu0 0.0
    %2868 = vmatprep.subr.mxu0 0.0
    %2869 = vmatpush1.msra.mxu0 0.0
    %2870 = vmatprep.subr.mxu0 0.0
    %2871 = vmatpush1.msra.mxu0 0.0
    %2872 = vmatprep.subr.mxu0 0.0
    %2873 = vmatpush1.msra.mxu0 0.0
    %2874 = vmatprep.subr.mxu0 0.0
    %2875 = vmatpush1.msra.mxu0 0.0
    %2876 = vmatprep.mubr.f32.mxu0 0.0
    %2877 = vmatmul.mubr.f32.gmra.mrb[0].mxu0 %v2430
    %v2878 = vpop.f32.mrb[0].mxu0
    %v2879 = vadd.f32 0.0, %v2878
    %v2880 = vpop.f32.mrb[0].mxu0
    %2881 = vmatprep.mubr.f32.mxu0 0.0
    %2882 = vmatmul.mubr.f32.gmra.mrb[0].mxu0 %v2433
    %v2883 = vpop.f32.mrb[0].mxu0
    %v2884 = vadd.f32 0.0, %v2883
    %v2885 = vpop.f32.mrb[0].mxu0
    %2886 = vmatprep.mubr.f32.mxu0 0.0
    %2887 = vmatmul.mubr.f32.gmra.mrb[0].mxu0 %v2436
    %v2888 = vpop.f32.mrb[0].mxu0
    %v2889 = vadd.f32 0.0, %v2888
    %v2890 = vpop.f32.mrb[0].mxu0
    %2891 = vmatprep.mubr.f32.mxu0 0.0
    %2892 = vmatmul.mubr.f32.gmra.mrb[0].mxu0 %v2439
    %v2893 = vpop.f32.mrb[0].mxu0
    %v2894 = vadd.f32 0.0, %v2893
    %v2895 = vpop.f32.mrb[0].mxu0
    %2896 = vdwg.mxu0
    %s2897 = scalar_lea.vmem [#allocation4], 128
    %2898 = vst.msk [vmem:[%s2897] sm:$0xff] %vm42, %v2879
    %2899 = vst.msk [vmem:[%s2897 + $0x8] sm:$0xff] %vm42, %v2884
    %2900 = vst.msk [vmem:[%s2897 + $0x10] sm:$0xff] %vm42, %v2889
    %2901 = vst.msk [vmem:[%s2897 + $0x18] sm:$0xff] %vm42, %v2894
    %s2902 = scalar_lea.vmem [#allocation3], 80
    %v2903 = vld [vmem:[%s2902] sm:$0xff]
    %v2904 = vld [vmem:[%s2902 + $0x8] sm:$0xff]
    %2905 = vmatprep.subr.mxu0 0.0
    %2906 = vmatpush1.msra.mxu0 %v2903
    %2907 = vmatprep.subr.mxu0 0.0
    %2908 = vmatpush1.msra.mxu0 %v2904
    %2909 = vmatprep.subr.mxu0 0.0
    %2910 = vmatpush1.msra.mxu0 0.0
    %2911 = vmatprep.subr.mxu0 0.0
    %2912 = vmatpush1.msra.mxu0 0.0
    %2913 = vmatprep.subr.mxu0 0.0
    %2914 = vmatpush1.msra.mxu0 0.0
    %2915 = vmatprep.subr.mxu0 0.0
    %2916 = vmatpush1.msra.mxu0 0.0
    %2917 = vmatprep.subr.mxu0 0.0
    %2918 = vmatpush1.msra.mxu0 0.0
    %2919 = vmatprep.subr.mxu0 0.0
    %2920 = vmatpush1.msra.mxu0 0.0
    %2921 = vmatprep.subr.mxu0 0.0
    %2922 = vmatpush1.msra.mxu0 0.0
    %2923 = vmatprep.subr.mxu0 0.0
    %2924 = vmatpush1.msra.mxu0 0.0
    %2925 = vmatprep.subr.mxu0 0.0
    %2926 = vmatpush1.msra.mxu0 0.0
    %2927 = vmatprep.subr.mxu0 0.0
    %2928 = vmatpush1.msra.mxu0 0.0
    %2929 = vmatprep.subr.mxu0 0.0
    %2930 = vmatpush1.msra.mxu0 0.0
    %2931 = vmatprep.subr.mxu0 0.0
    %2932 = vmatpush1.msra.mxu0 0.0
    %2933 = vmatprep.subr.mxu0 0.0
    %2934 = vmatpush1.msra.mxu0 0.0
    %2935 = vmatprep.subr.mxu0 0.0
    %2936 = vmatpush1.msra.mxu0 0.0
    %2937 = vmatprep.subr.mxu0 0.0
    %2938 = vmatpush1.msra.mxu0 0.0
    %2939 = vmatprep.subr.mxu0 0.0
    %2940 = vmatpush1.msra.mxu0 0.0
    %2941 = vmatprep.subr.mxu0 0.0
    %2942 = vmatpush1.msra.mxu0 0.0
    %2943 = vmatprep.subr.mxu0 0.0
    %2944 = vmatpush1.msra.mxu0 0.0
    %2945 = vmatprep.subr.mxu0 0.0
    %2946 = vmatpush1.msra.mxu0 0.0
    %2947 = vmatprep.subr.mxu0 0.0
    %2948 = vmatpush1.msra.mxu0 0.0
    %2949 = vmatprep.subr.mxu0 0.0
    %2950 = vmatpush1.msra.mxu0 0.0
    %2951 = vmatprep.subr.mxu0 0.0
    %2952 = vmatpush1.msra.mxu0 0.0
    %2953 = vmatprep.subr.mxu0 0.0
    %2954 = vmatpush1.msra.mxu0 0.0
    %2955 = vmatprep.subr.mxu0 0.0
    %2956 = vmatpush1.msra.mxu0 0.0
    %2957 = vmatprep.subr.mxu0 0.0
    %2958 = vmatpush1.msra.mxu0 0.0
    %2959 = vmatprep.subr.mxu0 0.0
    %2960 = vmatpush1.msra.mxu0 0.0
    %2961 = vmatprep.subr.mxu0 0.0
    %2962 = vmatpush1.msra.mxu0 0.0
    %2963 = vmatprep.subr.mxu0 0.0
    %2964 = vmatpush1.msra.mxu0 0.0
    %2965 = vmatprep.subr.mxu0 0.0
    %2966 = vmatpush1.msra.mxu0 0.0
    %2967 = vmatprep.subr.mxu0 0.0
    %2968 = vmatpush1.msra.mxu0 0.0
    %2969 = vmatprep.mubr.f32.mxu0 0.0
    %2970 = vmatmul.mubr.f32.gmra.mrb[0].mxu0 %v2430
    %v2971 = vpop.f32.mrb[0].mxu0
    %v2972 = vadd.f32 0.0, %v2971
    %v2973 = vpop.f32.mrb[0].mxu0
    %2974 = vmatprep.mubr.f32.mxu0 0.0
    %2975 = vmatmul.mubr.f32.gmra.mrb[0].mxu0 %v2433
    %v2976 = vpop.f32.mrb[0].mxu0
    %v2977 = vadd.f32 0.0, %v2976
    %v2978 = vpop.f32.mrb[0].mxu0
    %2979 = vmatprep.mubr.f32.mxu0 0.0
    %2980 = vmatmul.mubr.f32.gmra.mrb[0].mxu0 %v2436
    %v2981 = vpop.f32.mrb[0].mxu0
    %v2982 = vadd.f32 0.0, %v2981
    %v2983 = vpop.f32.mrb[0].mxu0
    %2984 = vmatprep.mubr.f32.mxu0 0.0
    %2985 = vmatmul.mubr.f32.gmra.mrb[0].mxu0 %v2439
    %v2986 = vpop.f32.mrb[0].mxu0
    %v2987 = vadd.f32 0.0, %v2986
    %v2988 = vpop.f32.mrb[0].mxu0
    %2989 = vdwg.mxu0
    %s2990 = scalar_lea.vmem [#allocation4], 160
    %2991 = vst.msk [vmem:[%s2990] sm:$0xff] %vm42, %v2972
    %2992 = vst.msk [vmem:[%s2990 + $0x8] sm:$0xff] %vm42, %v2977
    %2993 = vst.msk [vmem:[%s2990 + $0x10] sm:$0xff] %vm42, %v2982
    %2994 = vst.msk [vmem:[%s2990 + $0x18] sm:$0xff] %vm42, %v2987
    %s2995 = scalar_lea.vmem [#allocation3], 96
    %v2996 = vld [vmem:[%s2995] sm:$0xff]
    %v2997 = vld [vmem:[%s2995 + $0x8] sm:$0xff]
    %2998 = vmatprep.subr.mxu0 0.0
    %2999 = vmatpush1.msra.mxu0 %v2996
    %3000 = vmatprep.subr.mxu0 0.0
    %3001 = vmatpush1.msra.mxu0 %v2997
    %3002 = vmatprep.subr.mxu0 0.0
    %3003 = vmatpush1.msra.mxu0 0.0
    %3004 = vmatprep.subr.mxu0 0.0
    %3005 = vmatpush1.msra.mxu0 0.0
    %3006 = vmatprep.subr.mxu0 0.0
    %3007 = vmatpush1.msra.mxu0 0.0
    %3008 = vmatprep.subr.mxu0 0.0
    %3009 = vmatpush1.msra.mxu0 0.0
    %3010 = vmatprep.subr.mxu0 0.0
    %3011 = vmatpush1.msra.mxu0 0.0
    %3012 = vmatprep.subr.mxu0 0.0
    %3013 = vmatpush1.msra.mxu0 0.0
    %3014 = vmatprep.subr.mxu0 0.0
    %3015 = vmatpush1.msra.mxu0 0.0
    %3016 = vmatprep.subr.mxu0 0.0
    %3017 = vmatpush1.msra.mxu0 0.0
    %3018 = vmatprep.subr.mxu0 0.0
    %3019 = vmatpush1.msra.mxu0 0.0
    %3020 = vmatprep.subr.mxu0 0.0
    %3021 = vmatpush1.msra.mxu0 0.0
    %3022 = vmatprep.subr.mxu0 0.0
    %3023 = vmatpush1.msra.mxu0 0.0
    %3024 = vmatprep.subr.mxu0 0.0
    %3025 = vmatpush1.msra.mxu0 0.0
    %3026 = vmatprep.subr.mxu0 0.0
    %3027 = vmatpush1.msra.mxu0 0.0
    %3028 = vmatprep.subr.mxu0 0.0
    %3029 = vmatpush1.msra.mxu0 0.0
    %3030 = vmatprep.subr.mxu0 0.0
    %3031 = vmatpush1.msra.mxu0 0.0
    %3032 = vmatprep.subr.mxu0 0.0
    %3033 = vmatpush1.msra.mxu0 0.0
    %3034 = vmatprep.subr.mxu0 0.0
    %3035 = vmatpush1.msra.mxu0 0.0
    %3036 = vmatprep.subr.mxu0 0.0
    %3037 = vmatpush1.msra.mxu0 0.0
    %3038 = vmatprep.subr.mxu0 0.0
    %3039 = vmatpush1.msra.mxu0 0.0
    %3040 = vmatprep.subr.mxu0 0.0
    %3041 = vmatpush1.msra.mxu0 0.0
    %3042 = vmatprep.subr.mxu0 0.0
    %3043 = vmatpush1.msra.mxu0 0.0
    %3044 = vmatprep.subr.mxu0 0.0
    %3045 = vmatpush1.msra.mxu0 0.0
    %3046 = vmatprep.subr.mxu0 0.0
    %3047 = vmatpush1.msra.mxu0 0.0
    %3048 = vmatprep.subr.mxu0 0.0
    %3049 = vmatpush1.msra.mxu0 0.0
    %3050 = vmatprep.subr.mxu0 0.0
    %3051 = vmatpush1.msra.mxu0 0.0
    %3052 = vmatprep.subr.mxu0 0.0
    %3053 = vmatpush1.msra.mxu0 0.0
    %3054 = vmatprep.subr.mxu0 0.0
    %3055 = vmatpush1.msra.mxu0 0.0
    %3056 = vmatprep.subr.mxu0 0.0
    %3057 = vmatpush1.msra.mxu0 0.0
    %3058 = vmatprep.subr.mxu0 0.0
    %3059 = vmatpush1.msra.mxu0 0.0
    %3060 = vmatprep.subr.mxu0 0.0
    %3061 = vmatpush1.msra.mxu0 0.0
    %3062 = vmatprep.mubr.f32.mxu0 0.0
    %3063 = vmatmul.mubr.f32.gmra.mrb[0].mxu0 %v2430
    %v3064 = vpop.f32.mrb[0].mxu0
    %v3065 = vadd.f32 0.0, %v3064
    %v3066 = vpop.f32.mrb[0].mxu0
    %3067 = vmatprep.mubr.f32.mxu0 0.0
    %3068 = vmatmul.mubr.f32.gmra.mrb[0].mxu0 %v2433
    %v3069 = vpop.f32.mrb[0].mxu0
    %v3070 = vadd.f32 0.0, %v3069
    %v3071 = vpop.f32.mrb[0].mxu0
    %3072 = vmatprep.mubr.f32.mxu0 0.0
    %3073 = vmatmul.mubr.f32.gmra.mrb[0].mxu0 %v2436
    %v3074 = vpop.f32.mrb[0].mxu0
    %v3075 = vadd.f32 0.0, %v3074
    %v3076 = vpop.f32.mrb[0].mxu0
    %3077 = vmatprep.mubr.f32.mxu0 0.0
    %3078 = vmatmul.mubr.f32.gmra.mrb[0].mxu0 %v2439
    %v3079 = vpop.f32.mrb[0].mxu0
    %v3080 = vadd.f32 0.0, %v3079
    %v3081 = vpop.f32.mrb[0].mxu0
    %3082 = vdwg.mxu0
    %s3083 = scalar_lea.vmem [#allocation4], 192
    %3084 = vst.msk [vmem:[%s3083] sm:$0xff] %vm42, %v3065
    %3085 = vst.msk [vmem:[%s3083 + $0x8] sm:$0xff] %vm42, %v3070
    %3086 = vst.msk [vmem:[%s3083 + $0x10] sm:$0xff] %vm42, %v3075
    %3087 = vst.msk [vmem:[%s3083 + $0x18] sm:$0xff] %vm42, %v3080
    %s3088 = scalar_lea.vmem [#allocation3], 112
    %v3089 = vld [vmem:[%s3088] sm:$0xff]
    %v3090 = vld [vmem:[%s3088 + $0x8] sm:$0xff]
    %3091 = vmatprep.subr.mxu0 0.0
    %3092 = vmatpush1.msra.mxu0 %v3089
    %3093 = vmatprep.subr.mxu0 0.0
    %3094 = vmatpush1.msra.mxu0 %v3090
    %3095 = vmatprep.subr.mxu0 0.0
    %3096 = vmatpush1.msra.mxu0 0.0
    %3097 = vmatprep.subr.mxu0 0.0
    %3098 = vmatpush1.msra.mxu0 0.0
    %3099 = vmatprep.subr.mxu0 0.0
    %3100 = vmatpush1.msra.mxu0 0.0
    %3101 = vmatprep.subr.mxu0 0.0
    %3102 = vmatpush1.msra.mxu0 0.0
    %3103 = vmatprep.subr.mxu0 0.0
    %3104 = vmatpush1.msra.mxu0 0.0
    %3105 = vmatprep.subr.mxu0 0.0
    %3106 = vmatpush1.msra.mxu0 0.0
    %3107 = vmatprep.subr.mxu0 0.0
    %3108 = vmatpush1.msra.mxu0 0.0
    %3109 = vmatprep.subr.mxu0 0.0
    %3110 = vmatpush1.msra.mxu0 0.0
    %3111 = vmatprep.subr.mxu0 0.0
    %3112 = vmatpush1.msra.mxu0 0.0
    %3113 = vmatprep.subr.mxu0 0.0
    %3114 = vmatpush1.msra.mxu0 0.0
    %3115 = vmatprep.subr.mxu0 0.0
    %3116 = vmatpush1.msra.mxu0 0.0
    %3117 = vmatprep.subr.mxu0 0.0
    %3118 = vmatpush1.msra.mxu0 0.0
    %3119 = vmatprep.subr.mxu0 0.0
    %3120 = vmatpush1.msra.mxu0 0.0
    %3121 = vmatprep.subr.mxu0 0.0
    %3122 = vmatpush1.msra.mxu0 0.0
    %3123 = vmatprep.subr.mxu0 0.0
    %3124 = vmatpush1.msra.mxu0 0.0
    %3125 = vmatprep.subr.mxu0 0.0
    %3126 = vmatpush1.msra.mxu0 0.0
    %3127 = vmatprep.subr.mxu0 0.0
    %3128 = vmatpush1.msra.mxu0 0.0
    %3129 = vmatprep.subr.mxu0 0.0
    %3130 = vmatpush1.msra.mxu0 0.0
    %3131 = vmatprep.subr.mxu0 0.0
    %3132 = vmatpush1.msra.mxu0 0.0
    %3133 = vmatprep.subr.mxu0 0.0
    %3134 = vmatpush1.msra.mxu0 0.0
    %3135 = vmatprep.subr.mxu0 0.0
    %3136 = vmatpush1.msra.mxu0 0.0
    %3137 = vmatprep.subr.mxu0 0.0
    %3138 = vmatpush1.msra.mxu0 0.0
    %3139 = vmatprep.subr.mxu0 0.0
    %3140 = vmatpush1.msra.mxu0 0.0
    %3141 = vmatprep.subr.mxu0 0.0
    %3142 = vmatpush1.msra.mxu0 0.0
    %3143 = vmatprep.subr.mxu0 0.0
    %3144 = vmatpush1.msra.mxu0 0.0
    %3145 = vmatprep.subr.mxu0 0.0
    %3146 = vmatpush1.msra.mxu0 0.0
    %3147 = vmatprep.subr.mxu0 0.0
    %3148 = vmatpush1.msra.mxu0 0.0
    %3149 = vmatprep.subr.mxu0 0.0
    %3150 = vmatpush1.msra.mxu0 0.0
    %3151 = vmatprep.subr.mxu0 0.0
    %3152 = vmatpush1.msra.mxu0 0.0
    %3153 = vmatprep.subr.mxu0 0.0
    %3154 = vmatpush1.msra.mxu0 0.0
    %3155 = vmatprep.mubr.f32.mxu0 0.0
    %3156 = vmatmul.mubr.f32.gmra.mrb[0].mxu0 %v2430
    %v3157 = vpop.f32.mrb[0].mxu0
    %v3158 = vadd.f32 0.0, %v3157
    %v3159 = vpop.f32.mrb[0].mxu0
    %3160 = vmatprep.mubr.f32.mxu0 0.0
    %3161 = vmatmul.mubr.f32.gmra.mrb[0].mxu0 %v2433
    %v3162 = vpop.f32.mrb[0].mxu0
    %v3163 = vadd.f32 0.0, %v3162
    %v3164 = vpop.f32.mrb[0].mxu0
    %3165 = vmatprep.mubr.f32.mxu0 0.0
    %3166 = vmatmul.mubr.f32.gmra.mrb[0].mxu0 %v2436
    %v3167 = vpop.f32.mrb[0].mxu0
    %v3168 = vadd.f32 0.0, %v3167
    %v3169 = vpop.f32.mrb[0].mxu0
    %3170 = vmatprep.mubr.f32.mxu0 0.0
    %3171 = vmatmul.mubr.f32.gmra.mrb[0].mxu0 %v2439
    %v3172 = vpop.f32.mrb[0].mxu0
    %v3173 = vadd.f32 0.0, %v3172
    %v3174 = vpop.f32.mrb[0].mxu0
    %3175 = vdwg.mxu0
    %s3176 = scalar_lea.vmem [#allocation4], 224
    %3177 = vst.msk [vmem:[%s3176] sm:$0xff] %vm42, %v3158
    %3178 = vst.msk [vmem:[%s3176 + $0x8] sm:$0xff] %vm42, %v3163
    %3179 = vst.msk [vmem:[%s3176 + $0x10] sm:$0xff] %vm42, %v3168
    %3180 = vst.msk [vmem:[%s3176 + $0x18] sm:$0xff] %vm42, %v3173
    %s3181 = scalar_lea.vmem %s0, 64
    %v3182 = vld [vmem:[%s3181] sm:$0xff]
    %v3183 = vld [vmem:[%s3181 + $0x8] sm:$0xff]
    %v3184 = vld [vmem:[%s3181 + $0x10] sm:$0xff]
    %v3185 = vld [vmem:[%s3181 + $0x18] sm:$0xff]
    %v3186 = vld [vmem:[%s3181 + $0x20] sm:$0xff]
    %v3187 = vld [vmem:[%s3181 + $0x28] sm:$0xff]
    %v3188 = vld [vmem:[%s3181 + $0x30] sm:$0xff]
    %v3189 = vld [vmem:[%s3181 + $0x38] sm:$0xff]
    %3190 = vmatprep.subr.mxu0 %v3183
    %3191 = vmatpush1.msra.mxu0 %v3182
    %3192 = vmatprep.subr.mxu0 %v3185
    %3193 = vmatpush1.msra.mxu0 %v3184
    %3194 = vmatprep.subr.mxu0 %v3187
    %3195 = vmatpush1.msra.mxu0 %v3186
    %3196 = vmatprep.subr.mxu0 %v3189
    %3197 = vmatpush1.msra.mxu0 %v3188
    %3198 = vmatprep.subr.mxu0 0.0
    %3199 = vmatpush1.msra.mxu0 0.0
    %3200 = vmatprep.subr.mxu0 0.0
    %3201 = vmatpush1.msra.mxu0 0.0
    %3202 = vmatprep.subr.mxu0 0.0
    %3203 = vmatpush1.msra.mxu0 0.0
    %3204 = vmatprep.subr.mxu0 0.0
    %3205 = vmatpush1.msra.mxu0 0.0
    %3206 = vmatprep.subr.mxu0 0.0
    %3207 = vmatpush1.msra.mxu0 0.0
    %3208 = vmatprep.subr.mxu0 0.0
    %3209 = vmatpush1.msra.mxu0 0.0
    %3210 = vmatprep.subr.mxu0 0.0
    %3211 = vmatpush1.msra.mxu0 0.0
    %3212 = vmatprep.subr.mxu0 0.0
    %3213 = vmatpush1.msra.mxu0 0.0
    %3214 = vmatprep.subr.mxu0 0.0
    %3215 = vmatpush1.msra.mxu0 0.0
    %3216 = vmatprep.subr.mxu0 0.0
    %3217 = vmatpush1.msra.mxu0 0.0
    %3218 = vmatprep.subr.mxu0 0.0
    %3219 = vmatpush1.msra.mxu0 0.0
    %3220 = vmatprep.subr.mxu0 0.0
    %3221 = vmatpush1.msra.mxu0 0.0
    %3222 = vmatprep.subr.mxu0 0.0
    %3223 = vmatpush1.msra.mxu0 0.0
    %3224 = vmatprep.subr.mxu0 0.0
    %3225 = vmatpush1.msra.mxu0 0.0
    %3226 = vmatprep.subr.mxu0 0.0
    %3227 = vmatpush1.msra.mxu0 0.0
    %3228 = vmatprep.subr.mxu0 0.0
    %3229 = vmatpush1.msra.mxu0 0.0
    %3230 = vmatprep.subr.mxu0 0.0
    %3231 = vmatpush1.msra.mxu0 0.0
    %3232 = vmatprep.subr.mxu0 0.0
    %3233 = vmatpush1.msra.mxu0 0.0
    %3234 = vmatprep.subr.mxu0 0.0
    %3235 = vmatpush1.msra.mxu0 0.0
    %3236 = vmatprep.subr.mxu0 0.0
    %3237 = vmatpush1.msra.mxu0 0.0
    %3238 = vmatprep.subr.mxu0 0.0
    %3239 = vmatpush1.msra.mxu0 0.0
    %3240 = vmatprep.subr.mxu0 0.0
    %3241 = vmatpush1.msra.mxu0 0.0
    %3242 = vmatprep.subr.mxu0 0.0
    %3243 = vmatpush1.msra.mxu0 0.0
    %3244 = vmatprep.subr.mxu0 0.0
    %3245 = vmatpush1.msra.mxu0 0.0
    %3246 = vmatprep.subr.mxu0 0.0
    %3247 = vmatpush1.msra.mxu0 0.0
    %3248 = vmatprep.subr.mxu0 0.0
    %3249 = vmatpush1.msra.mxu0 0.0
    %3250 = vmatprep.subr.mxu0 0.0
    %3251 = vmatpush1.msra.mxu0 0.0
    %3252 = vmatprep.subr.mxu0 0.0
    %3253 = vmatpush1.msra.mxu0 0.0
    %3254 = vmatprep.mubr.f32.mxu0 0.0
    %3255 = vmatmul.mubr.f32.gmra.mrb[0].mxu0 %v44
    %v3256 = vpop.f32.mrb[0].mxu0
    %v3257 = vadd.f32 %v40, %v3256
    %v3258 = vpop.f32.mrb[0].mxu0
    %v3259 = vadd.f32 %v40, %v3258
    %3260 = vdwg.mxu0
    %v3261 = vrot.slane %v3257, 4
    %v3262 = vmax.f32 %v3257, %v3261
    %v3263 = vrot.slane %v3262, 2
    %v3264 = vmax.f32 %v3262, %v3263
    %v3265 = vrot.slane %v3264, 1
    %v3266 = vmax.f32 %v3264, %v3265
    %v3267 = vrot.slane %v3259, 4
    %v3268 = vmax.f32 %v3259, %v3267
    %v3269 = vrot.slane %v3268, 2
    %v3270 = vmax.f32 %v3268, %v3269
    %v3271 = vrot.slane %v3270, 1
    %v3272 = vmax.f32 %v3270, %v3271
    %v3273 = vsub.f32 %v3257, %v3266
    %v3274 = vsub.f32 %v3259, %v3272
    %v3275 = vmul.f32 %v3273, 1.442695
    %v3276 = vpow.pop %v3275
    %v3277 = vmul.f32 %v3274, 1.442695
    %v3278 = vpow.pop %v3277
    %v3279 = vrot.slane %v3276, 4
    %v3280 = vadd.f32 %v3276, %v3279
    %v3281 = vrot.slane %v3280, 2
    %v3282 = vadd.f32 %v3280, %v3281
    %v3283 = vrot.slane %v3282, 1
    %v3284 = vadd.f32 %v3282, %v3283
    %v3285 = vrot.slane %v3278, 4
    %v3286 = vadd.f32 %v3278, %v3285
    %v3287 = vrot.slane %v3286, 2
    %v3288 = vadd.f32 %v3286, %v3287
    %v3289 = vrot.slane %v3288, 1
    %v3290 = vadd.f32 %v3288, %v3289
    %v3291 = vlog2.pop %v3284
    %v3292 = vmul.f32 %v3291, 0.6931472
    %v3293 = vlog2.pop %v3290
    %v3294 = vmul.f32 %v3293, 0.6931472
    %v3295 = vadd.f32 %v3292, %v3266
    %v3296 = vadd.f32 %v3294, %v3272
    %v3297 = vsub.f32 %v3257, %v3295
    %v3298 = vsub.f32 %v3259, %v3296
    %3299 = vst [vmem:[#allocation2] sm:$0xff] %v3297
    %3300 = vst [vmem:[#allocation2 + $0x8] sm:$0xff] %v3298
    %v3301 = vld [vmem:[#allocation2] sm:$0xff]
    %v3303 = vsel %vm158, %v3301, 0
    %3305 = vmatprep.subr.mxu0 0.0
    %3306 = vmatpush1.msra.mxu0 %v23
    %3307 = vmatprep.subr.mxu0 0.0
    %3308 = vmatpush1.msra.mxu0 %v24
    %3309 = vmatprep.subr.mxu0 0.0
    %3310 = vmatpush1.msra.mxu0 0.0
    %3311 = vmatprep.subr.mxu0 0.0
    %3312 = vmatpush1.msra.mxu0 0.0
    %3313 = vmatprep.subr.mxu0 0.0
    %3314 = vmatpush1.msra.mxu0 0.0
    %3315 = vmatprep.subr.mxu0 0.0
    %3316 = vmatpush1.msra.mxu0 0.0
    %3317 = vmatprep.subr.mxu0 0.0
    %3318 = vmatpush1.msra.mxu0 0.0
    %3319 = vmatprep.subr.mxu0 0.0
    %3320 = vmatpush1.msra.mxu0 0.0
    %3321 = vmatprep.subr.mxu0 0.0
    %3322 = vmatpush1.msra.mxu0 0.0
    %3323 = vmatprep.subr.mxu0 0.0
    %3324 = vmatpush1.msra.mxu0 0.0
    %3325 = vmatprep.subr.mxu0 0.0
    %3326 = vmatpush1.msra.mxu0 0.0
    %3327 = vmatprep.subr.mxu0 0.0
    %3328 = vmatpush1.msra.mxu0 0.0
    %3329 = vmatprep.subr.mxu0 0.0
    %3330 = vmatpush1.msra.mxu0 0.0
    %3331 = vmatprep.subr.mxu0 0.0
    %3332 = vmatpush1.msra.mxu0 0.0
    %3333 = vmatprep.subr.mxu0 0.0
    %3334 = vmatpush1.msra.mxu0 0.0
    %3335 = vmatprep.subr.mxu0 0.0
    %3336 = vmatpush1.msra.mxu0 0.0
    %3337 = vmatprep.subr.mxu0 0.0
    %3338 = vmatpush1.msra.mxu0 0.0
    %3339 = vmatprep.subr.mxu0 0.0
    %3340 = vmatpush1.msra.mxu0 0.0
    %3341 = vmatprep.subr.mxu0 0.0
    %3342 = vmatpush1.msra.mxu0 0.0
    %3343 = vmatprep.subr.mxu0 0.0
    %3344 = vmatpush1.msra.mxu0 0.0
    %3345 = vmatprep.subr.mxu0 0.0
    %3346 = vmatpush1.msra.mxu0 0.0
    %3347 = vmatprep.subr.mxu0 0.0
    %3348 = vmatpush1.msra.mxu0 0.0
    %3349 = vmatprep.subr.mxu0 0.0
    %3350 = vmatpush1.msra.mxu0 0.0
    %3351 = vmatprep.subr.mxu0 0.0
    %3352 = vmatpush1.msra.mxu0 0.0
    %3353 = vmatprep.subr.mxu0 0.0
    %3354 = vmatpush1.msra.mxu0 0.0
    %3355 = vmatprep.subr.mxu0 0.0
    %3356 = vmatpush1.msra.mxu0 0.0
    %3357 = vmatprep.subr.mxu0 0.0
    %3358 = vmatpush1.msra.mxu0 0.0
    %3359 = vmatprep.subr.mxu0 0.0
    %3360 = vmatpush1.msra.mxu0 0.0
    %3361 = vmatprep.subr.mxu0 0.0
    %3362 = vmatpush1.msra.mxu0 0.0
    %3363 = vmatprep.subr.mxu0 0.0
    %3364 = vmatpush1.msra.mxu0 0.0
    %3365 = vmatprep.subr.mxu0 0.0
    %3366 = vmatpush1.msra.mxu0 0.0
    %3367 = vmatprep.subr.mxu0 0.0
    %3368 = vmatpush1.msra.mxu0 0.0
    %3369 = vmatprep.mubr.f32.mxu0 0.0
    %3370 = vmatmul.mubr.f32.gmra.mrb[0].mxu0 %v3303
    %v3371 = vpop.f32.mrb[0].mxu0
    %v3372 = vadd.f32 0.0, %v3371
    %v3373 = vpop.f32.mrb[0].mxu0
    %3374 = vdwg.mxu0
    %v3376 = vcombine.high %v3372, %v3372
    %v3378 = vunpack.c.l.s4 1966171168
    %v3379 = vunpack.c.0.s8 %v3378
    %v3380 = vlaneseq
    %v3381 = vshrl.u32 %v3380, 7
    %v3382 = vsub.s32 %v3379, %v3381
    %v3383 = vrot.slane %v3372, %v3382
    %v3385 = vunpack.c.l.s4 1966171168
    %v3386 = vunpack.c.0.s8 %v3385
    %v3387 = vlaneseq
    %v3388 = vshrl.u32 %v3387, 7
    %v3389 = vsub.s32 %v3386, %v3388
    %v3390 = vrot.slane %v3376, %v3389
    %v3391 = vcombine.high %v3383, %v3383
    %v3392 = vcombine.high %v3390, %v3390
    %v3394 = vunpack.c.l.s4 1966171168
    %v3395 = vunpack.c.0.s8 %v3394
    %v3396 = vlaneseq
    %v3397 = vshrl.u32 %v3396, 7
    %v3398 = vsub.s32 %v3395, %v3397
    %v3399 = vrot.slane %v3383, %v3398
    %v3401 = vunpack.c.l.s4 1966171168
    %v3402 = vunpack.c.0.s8 %v3401
    %v3403 = vlaneseq
    %v3404 = vshrl.u32 %v3403, 7
    %v3405 = vsub.s32 %v3402, %v3404
    %v3406 = vrot.slane %v3390, %v3405
    %v3408 = vunpack.c.l.s4 1966171168
    %v3409 = vunpack.c.0.s8 %v3408
    %v3410 = vlaneseq
    %v3411 = vshrl.u32 %v3410, 7
    %v3412 = vsub.s32 %v3409, %v3411
    %v3413 = vrot.slane %v3391, %v3412
    %v3415 = vunpack.c.l.s4 1966171168
    %v3416 = vunpack.c.0.s8 %v3415
    %v3417 = vlaneseq
    %v3418 = vshrl.u32 %v3417, 7
    %v3419 = vsub.s32 %v3416, %v3418
    %v3420 = vrot.slane %v3392, %v3419
    %v3421 = vcombine.high %v3399, %v3399
    %v3422 = vcombine.high %v3406, %v3406
    %v3423 = vcombine.high %v3413, %v3413
    %v3424 = vcombine.high %v3420, %v3420
    %3433 = vst.msk [vmem:[#allocation3] sm:$0x1] %vm290, %v3399
    %3434 = vst.msk [vmem:[#allocation3 + $0x10] sm:$0x1] %vm290, %v3413
    %3435 = vst.msk [vmem:[#allocation3 + $0x20] sm:$0x1] %vm290, %v3421
    %3436 = vst.msk [vmem:[#allocation3 + $0x30] sm:$0x1] %vm290, %v3423
    %3437 = vst.msk [vmem:[#allocation3 + $0x40] sm:$0x1] %vm290, %v3406
    %3438 = vst.msk [vmem:[#allocation3 + $0x50] sm:$0x1] %vm290, %v3420
    %3439 = vst.msk [vmem:[#allocation3 + $0x60] sm:$0x1] %vm290, %v3422
    %3440 = vst.msk [vmem:[#allocation3 + $0x70] sm:$0x1] %vm290, %v3424
    %v3441 = vld [vmem:[#allocation2] sm:$0xff]
    %3443 = vrot.lane.b32.xlu0 %v3441, 112
    %v3444 = vpop.permute.xlu0 %3443
    %v3445 = vsel %vm158, %v3444, 0
    %3447 = vmatprep.subr.mxu0 0.0
    %3448 = vmatpush1.msra.mxu0 %v23
    %3449 = vmatprep.subr.mxu0 0.0
    %3450 = vmatpush1.msra.mxu0 %v24
    %3451 = vmatprep.subr.mxu0 0.0
    %3452 = vmatpush1.msra.mxu0 0.0
    %3453 = vmatprep.subr.mxu0 0.0
    %3454 = vmatpush1.msra.mxu0 0.0
    %3455 = vmatprep.subr.mxu0 0.0
    %3456 = vmatpush1.msra.mxu0 0.0
    %3457 = vmatprep.subr.mxu0 0.0
    %3458 = vmatpush1.msra.mxu0 0.0
    %3459 = vmatprep.subr.mxu0 0.0
    %3460 = vmatpush1.msra.mxu0 0.0
    %3461 = vmatprep.subr.mxu0 0.0
    %3462 = vmatpush1.msra.mxu0 0.0
    %3463 = vmatprep.subr.mxu0 0.0
    %3464 = vmatpush1.msra.mxu0 0.0
    %3465 = vmatprep.subr.mxu0 0.0
    %3466 = vmatpush1.msra.mxu0 0.0
    %3467 = vmatprep.subr.mxu0 0.0
    %3468 = vmatpush1.msra.mxu0 0.0
    %3469 = vmatprep.subr.mxu0 0.0
    %3470 = vmatpush1.msra.mxu0 0.0
    %3471 = vmatprep.subr.mxu0 0.0
    %3472 = vmatpush1.msra.mxu0 0.0
    %3473 = vmatprep.subr.mxu0 0.0
    %3474 = vmatpush1.msra.mxu0 0.0
    %3475 = vmatprep.subr.mxu0 0.0
    %3476 = vmatpush1.msra.mxu0 0.0
    %3477 = vmatprep.subr.mxu0 0.0
    %3478 = vmatpush1.msra.mxu0 0.0
    %3479 = vmatprep.subr.mxu0 0.0
    %3480 = vmatpush1.msra.mxu0 0.0
    %3481 = vmatprep.subr.mxu0 0.0
    %3482 = vmatpush1.msra.mxu0 0.0
    %3483 = vmatprep.subr.mxu0 0.0
    %3484 = vmatpush1.msra.mxu0 0.0
    %3485 = vmatprep.subr.mxu0 0.0
    %3486 = vmatpush1.msra.mxu0 0.0
    %3487 = vmatprep.subr.mxu0 0.0
    %3488 = vmatpush1.msra.mxu0 0.0
    %3489 = vmatprep.subr.mxu0 0.0
    %3490 = vmatpush1.msra.mxu0 0.0
    %3491 = vmatprep.subr.mxu0 0.0
    %3492 = vmatpush1.msra.mxu0 0.0
    %3493 = vmatprep.subr.mxu0 0.0
    %3494 = vmatpush1.msra.mxu0 0.0
    %3495 = vmatprep.subr.mxu0 0.0
    %3496 = vmatpush1.msra.mxu0 0.0
    %3497 = vmatprep.subr.mxu0 0.0
    %3498 = vmatpush1.msra.mxu0 0.0
    %3499 = vmatprep.subr.mxu0 0.0
    %3500 = vmatpush1.msra.mxu0 0.0
    %3501 = vmatprep.subr.mxu0 0.0
    %3502 = vmatpush1.msra.mxu0 0.0
    %3503 = vmatprep.subr.mxu0 0.0
    %3504 = vmatpush1.msra.mxu0 0.0
    %3505 = vmatprep.subr.mxu0 0.0
    %3506 = vmatpush1.msra.mxu0 0.0
    %3507 = vmatprep.subr.mxu0 0.0
    %3508 = vmatpush1.msra.mxu0 0.0
    %3509 = vmatprep.subr.mxu0 0.0
    %3510 = vmatpush1.msra.mxu0 0.0
    %3511 = vmatprep.mubr.f32.mxu0 0.0
    %3512 = vmatmul.mubr.f32.gmra.mrb[0].mxu0 %v3445
    %v3513 = vpop.f32.mrb[0].mxu0
    %v3514 = vadd.f32 0.0, %v3513
    %v3515 = vpop.f32.mrb[0].mxu0
    %3516 = vdwg.mxu0
    %v3518 = vcombine.high %v3514, %v3514
    %v3520 = vunpack.c.l.s4 1966171168
    %v3521 = vunpack.c.0.s8 %v3520
    %v3522 = vlaneseq
    %v3523 = vshrl.u32 %v3522, 7
    %v3524 = vsub.s32 %v3521, %v3523
    %v3525 = vrot.slane %v3514, %v3524
    %v3527 = vunpack.c.l.s4 1966171168
    %v3528 = vunpack.c.0.s8 %v3527
    %v3529 = vlaneseq
    %v3530 = vshrl.u32 %v3529, 7
    %v3531 = vsub.s32 %v3528, %v3530
    %v3532 = vrot.slane %v3518, %v3531
    %v3533 = vcombine.high %v3525, %v3525
    %v3534 = vcombine.high %v3532, %v3532
    %v3536 = vunpack.c.l.s4 1966171168
    %v3537 = vunpack.c.0.s8 %v3536
    %v3538 = vlaneseq
    %v3539 = vshrl.u32 %v3538, 7
    %v3540 = vsub.s32 %v3537, %v3539
    %v3541 = vrot.slane %v3525, %v3540
    %v3543 = vunpack.c.l.s4 1966171168
    %v3544 = vunpack.c.0.s8 %v3543
    %v3545 = vlaneseq
    %v3546 = vshrl.u32 %v3545, 7
    %v3547 = vsub.s32 %v3544, %v3546
    %v3548 = vrot.slane %v3532, %v3547
    %v3550 = vunpack.c.l.s4 1966171168
    %v3551 = vunpack.c.0.s8 %v3550
    %v3552 = vlaneseq
    %v3553 = vshrl.u32 %v3552, 7
    %v3554 = vsub.s32 %v3551, %v3553
    %v3555 = vrot.slane %v3533, %v3554
    %v3557 = vunpack.c.l.s4 1966171168
    %v3558 = vunpack.c.0.s8 %v3557
    %v3559 = vlaneseq
    %v3560 = vshrl.u32 %v3559, 7
    %v3561 = vsub.s32 %v3558, %v3560
    %v3562 = vrot.slane %v3534, %v3561
    %v3563 = vcombine.high %v3541, %v3541
    %v3564 = vcombine.high %v3548, %v3548
    %v3565 = vcombine.high %v3555, %v3555
    %v3566 = vcombine.high %v3562, %v3562
    %3575 = vst.msk [vmem:[#allocation3 + $0x1] sm:$0x1] %vm290, %v3541
    %3576 = vst.msk [vmem:[#allocation3 + $0x11] sm:$0x1] %vm290, %v3555
    %3577 = vst.msk [vmem:[#allocation3 + $0x21] sm:$0x1] %vm290, %v3563
    %3578 = vst.msk [vmem:[#allocation3 + $0x31] sm:$0x1] %vm290, %v3565
    %3579 = vst.msk [vmem:[#allocation3 + $0x41] sm:$0x1] %vm290, %v3548
    %3580 = vst.msk [vmem:[#allocation3 + $0x51] sm:$0x1] %vm290, %v3562
    %3581 = vst.msk [vmem:[#allocation3 + $0x61] sm:$0x1] %vm290, %v3564
    %3582 = vst.msk [vmem:[#allocation3 + $0x71] sm:$0x1] %vm290, %v3566
    %v3583 = vld [vmem:[#allocation2] sm:$0xff]
    %3585 = vrot.lane.b32.xlu0 %v3583, 96
    %v3586 = vpop.permute.xlu0 %3585
    %v3587 = vsel %vm158, %v3586, 0
    %3589 = vmatprep.subr.mxu0 0.0
    %3590 = vmatpush1.msra.mxu0 %v23
    %3591 = vmatprep.subr.mxu0 0.0
    %3592 = vmatpush1.msra.mxu0 %v24
    %3593 = vmatprep.subr.mxu0 0.0
    %3594 = vmatpush1.msra.mxu0 0.0
    %3595 = vmatprep.subr.mxu0 0.0
    %3596 = vmatpush1.msra.mxu0 0.0
    %3597 = vmatprep.subr.mxu0 0.0
    %3598 = vmatpush1.msra.mxu0 0.0
    %3599 = vmatprep.subr.mxu0 0.0
    %3600 = vmatpush1.msra.mxu0 0.0
    %3601 = vmatprep.subr.mxu0 0.0
    %3602 = vmatpush1.msra.mxu0 0.0
    %3603 = vmatprep.subr.mxu0 0.0
    %3604 = vmatpush1.msra.mxu0 0.0
    %3605 = vmatprep.subr.mxu0 0.0
    %3606 = vmatpush1.msra.mxu0 0.0
    %3607 = vmatprep.subr.mxu0 0.0
    %3608 = vmatpush1.msra.mxu0 0.0
    %3609 = vmatprep.subr.mxu0 0.0
    %3610 = vmatpush1.msra.mxu0 0.0
    %3611 = vmatprep.subr.mxu0 0.0
    %3612 = vmatpush1.msra.mxu0 0.0
    %3613 = vmatprep.subr.mxu0 0.0
    %3614 = vmatpush1.msra.mxu0 0.0
    %3615 = vmatprep.subr.mxu0 0.0
    %3616 = vmatpush1.msra.mxu0 0.0
    %3617 = vmatprep.subr.mxu0 0.0
    %3618 = vmatpush1.msra.mxu0 0.0
    %3619 = vmatprep.subr.mxu0 0.0
    %3620 = vmatpush1.msra.mxu0 0.0
    %3621 = vmatprep.subr.mxu0 0.0
    %3622 = vmatpush1.msra.mxu0 0.0
    %3623 = vmatprep.subr.mxu0 0.0
    %3624 = vmatpush1.msra.mxu0 0.0
    %3625 = vmatprep.subr.mxu0 0.0
    %3626 = vmatpush1.msra.mxu0 0.0
    %3627 = vmatprep.subr.mxu0 0.0
    %3628 = vmatpush1.msra.mxu0 0.0
    %3629 = vmatprep.subr.mxu0 0.0
    %3630 = vmatpush1.msra.mxu0 0.0
    %3631 = vmatprep.subr.mxu0 0.0
    %3632 = vmatpush1.msra.mxu0 0.0
    %3633 = vmatprep.subr.mxu0 0.0
    %3634 = vmatpush1.msra.mxu0 0.0
    %3635 = vmatprep.subr.mxu0 0.0
    %3636 = vmatpush1.msra.mxu0 0.0
    %3637 = vmatprep.subr.mxu0 0.0
    %3638 = vmatpush1.msra.mxu0 0.0
    %3639 = vmatprep.subr.mxu0 0.0
    %3640 = vmatpush1.msra.mxu0 0.0
    %3641 = vmatprep.subr.mxu0 0.0
    %3642 = vmatpush1.msra.mxu0 0.0
    %3643 = vmatprep.subr.mxu0 0.0
    %3644 = vmatpush1.msra.mxu0 0.0
    %3645 = vmatprep.subr.mxu0 0.0
    %3646 = vmatpush1.msra.mxu0 0.0
    %3647 = vmatprep.subr.mxu0 0.0
    %3648 = vmatpush1.msra.mxu0 0.0
    %3649 = vmatprep.subr.mxu0 0.0
    %3650 = vmatpush1.msra.mxu0 0.0
    %3651 = vmatprep.subr.mxu0 0.0
    %3652 = vmatpush1.msra.mxu0 0.0
    %3653 = vmatprep.mubr.f32.mxu0 0.0
    %3654 = vmatmul.mubr.f32.gmra.mrb[0].mxu0 %v3587
    %v3655 = vpop.f32.mrb[0].mxu0
    %v3656 = vadd.f32 0.0, %v3655
    %v3657 = vpop.f32.mrb[0].mxu0
    %3658 = vdwg.mxu0
    %v3660 = vcombine.high %v3656, %v3656
    %v3662 = vunpack.c.l.s4 1966171168
    %v3663 = vunpack.c.0.s8 %v3662
    %v3664 = vlaneseq
    %v3665 = vshrl.u32 %v3664, 7
    %v3666 = vsub.s32 %v3663, %v3665
    %v3667 = vrot.slane %v3656, %v3666
    %v3669 = vunpack.c.l.s4 1966171168
    %v3670 = vunpack.c.0.s8 %v3669
    %v3671 = vlaneseq
    %v3672 = vshrl.u32 %v3671, 7
    %v3673 = vsub.s32 %v3670, %v3672
    %v3674 = vrot.slane %v3660, %v3673
    %v3675 = vcombine.high %v3667, %v3667
    %v3676 = vcombine.high %v3674, %v3674
    %v3678 = vunpack.c.l.s4 1966171168
    %v3679 = vunpack.c.0.s8 %v3678
    %v3680 = vlaneseq
    %v3681 = vshrl.u32 %v3680, 7
    %v3682 = vsub.s32 %v3679, %v3681
    %v3683 = vrot.slane %v3667, %v3682
    %v3685 = vunpack.c.l.s4 1966171168
    %v3686 = vunpack.c.0.s8 %v3685
    %v3687 = vlaneseq
    %v3688 = vshrl.u32 %v3687, 7
    %v3689 = vsub.s32 %v3686, %v3688
    %v3690 = vrot.slane %v3674, %v3689
    %v3692 = vunpack.c.l.s4 1966171168
    %v3693 = vunpack.c.0.s8 %v3692
    %v3694 = vlaneseq
    %v3695 = vshrl.u32 %v3694, 7
    %v3696 = vsub.s32 %v3693, %v3695
    %v3697 = vrot.slane %v3675, %v3696
    %v3699 = vunpack.c.l.s4 1966171168
    %v3700 = vunpack.c.0.s8 %v3699
    %v3701 = vlaneseq
    %v3702 = vshrl.u32 %v3701, 7
    %v3703 = vsub.s32 %v3700, %v3702
    %v3704 = vrot.slane %v3676, %v3703
    %v3705 = vcombine.high %v3683, %v3683
    %v3706 = vcombine.high %v3690, %v3690
    %v3707 = vcombine.high %v3697, %v3697
    %v3708 = vcombine.high %v3704, %v3704
    %3717 = vst.msk [vmem:[#allocation3 + $0x2] sm:$0x1] %vm290, %v3683
    %3718 = vst.msk [vmem:[#allocation3 + $0x12] sm:$0x1] %vm290, %v3697
    %3719 = vst.msk [vmem:[#allocation3 + $0x22] sm:$0x1] %vm290, %v3705
    %3720 = vst.msk [vmem:[#allocation3 + $0x32] sm:$0x1] %vm290, %v3707
    %3721 = vst.msk [vmem:[#allocation3 + $0x42] sm:$0x1] %vm290, %v3690
    %3722 = vst.msk [vmem:[#allocation3 + $0x52] sm:$0x1] %vm290, %v3704
    %3723 = vst.msk [vmem:[#allocation3 + $0x62] sm:$0x1] %vm290, %v3706
    %3724 = vst.msk [vmem:[#allocation3 + $0x72] sm:$0x1] %vm290, %v3708
    %v3725 = vld [vmem:[#allocation2] sm:$0xff]
    %3727 = vrot.lane.b32.xlu0 %v3725, 80
    %v3728 = vpop.permute.xlu0 %3727
    %v3729 = vsel %vm158, %v3728, 0
    %3731 = vmatprep.subr.mxu0 0.0
    %3732 = vmatpush1.msra.mxu0 %v23
    %3733 = vmatprep.subr.mxu0 0.0
    %3734 = vmatpush1.msra.mxu0 %v24
    %3735 = vmatprep.subr.mxu0 0.0
    %3736 = vmatpush1.msra.mxu0 0.0
    %3737 = vmatprep.subr.mxu0 0.0
    %3738 = vmatpush1.msra.mxu0 0.0
    %3739 = vmatprep.subr.mxu0 0.0
    %3740 = vmatpush1.msra.mxu0 0.0
    %3741 = vmatprep.subr.mxu0 0.0
    %3742 = vmatpush1.msra.mxu0 0.0
    %3743 = vmatprep.subr.mxu0 0.0
    %3744 = vmatpush1.msra.mxu0 0.0
    %3745 = vmatprep.subr.mxu0 0.0
    %3746 = vmatpush1.msra.mxu0 0.0
    %3747 = vmatprep.subr.mxu0 0.0
    %3748 = vmatpush1.msra.mxu0 0.0
    %3749 = vmatprep.subr.mxu0 0.0
    %3750 = vmatpush1.msra.mxu0 0.0
    %3751 = vmatprep.subr.mxu0 0.0
    %3752 = vmatpush1.msra.mxu0 0.0
    %3753 = vmatprep.subr.mxu0 0.0
    %3754 = vmatpush1.msra.mxu0 0.0
    %3755 = vmatprep.subr.mxu0 0.0
    %3756 = vmatpush1.msra.mxu0 0.0
    %3757 = vmatprep.subr.mxu0 0.0
    %3758 = vmatpush1.msra.mxu0 0.0
    %3759 = vmatprep.subr.mxu0 0.0
    %3760 = vmatpush1.msra.mxu0 0.0
    %3761 = vmatprep.subr.mxu0 0.0
    %3762 = vmatpush1.msra.mxu0 0.0
    %3763 = vmatprep.subr.mxu0 0.0
    %3764 = vmatpush1.msra.mxu0 0.0
    %3765 = vmatprep.subr.mxu0 0.0
    %3766 = vmatpush1.msra.mxu0 0.0
    %3767 = vmatprep.subr.mxu0 0.0
    %3768 = vmatpush1.msra.mxu0 0.0
    %3769 = vmatprep.subr.mxu0 0.0
    %3770 = vmatpush1.msra.mxu0 0.0
    %3771 = vmatprep.subr.mxu0 0.0
    %3772 = vmatpush1.msra.mxu0 0.0
    %3773 = vmatprep.subr.mxu0 0.0
    %3774 = vmatpush1.msra.mxu0 0.0
    %3775 = vmatprep.subr.mxu0 0.0
    %3776 = vmatpush1.msra.mxu0 0.0
    %3777 = vmatprep.subr.mxu0 0.0
    %3778 = vmatpush1.msra.mxu0 0.0
    %3779 = vmatprep.subr.mxu0 0.0
    %3780 = vmatpush1.msra.mxu0 0.0
    %3781 = vmatprep.subr.mxu0 0.0
    %3782 = vmatpush1.msra.mxu0 0.0
    %3783 = vmatprep.subr.mxu0 0.0
    %3784 = vmatpush1.msra.mxu0 0.0
    %3785 = vmatprep.subr.mxu0 0.0
    %3786 = vmatpush1.msra.mxu0 0.0
    %3787 = vmatprep.subr.mxu0 0.0
    %3788 = vmatpush1.msra.mxu0 0.0
    %3789 = vmatprep.subr.mxu0 0.0
    %3790 = vmatpush1.msra.mxu0 0.0
    %3791 = vmatprep.subr.mxu0 0.0
    %3792 = vmatpush1.msra.mxu0 0.0
    %3793 = vmatprep.subr.mxu0 0.0
    %3794 = vmatpush1.msra.mxu0 0.0
    %3795 = vmatprep.mubr.f32.mxu0 0.0
    %3796 = vmatmul.mubr.f32.gmra.mrb[0].mxu0 %v3729
    %v3797 = vpop.f32.mrb[0].mxu0
    %v3798 = vadd.f32 0.0, %v3797
    %v3799 = vpop.f32.mrb[0].mxu0
    %3800 = vdwg.mxu0
    %v3802 = vcombine.high %v3798, %v3798
    %v3804 = vunpack.c.l.s4 1966171168
    %v3805 = vunpack.c.0.s8 %v3804
    %v3806 = vlaneseq
    %v3807 = vshrl.u32 %v3806, 7
    %v3808 = vsub.s32 %v3805, %v3807
    %v3809 = vrot.slane %v3798, %v3808
    %v3811 = vunpack.c.l.s4 1966171168
    %v3812 = vunpack.c.0.s8 %v3811
    %v3813 = vlaneseq
    %v3814 = vshrl.u32 %v3813, 7
    %v3815 = vsub.s32 %v3812, %v3814
    %v3816 = vrot.slane %v3802, %v3815
    %v3817 = vcombine.high %v3809, %v3809
    %v3818 = vcombine.high %v3816, %v3816
    %v3820 = vunpack.c.l.s4 1966171168
    %v3821 = vunpack.c.0.s8 %v3820
    %v3822 = vlaneseq
    %v3823 = vshrl.u32 %v3822, 7
    %v3824 = vsub.s32 %v3821, %v3823
    %v3825 = vrot.slane %v3809, %v3824
    %v3827 = vunpack.c.l.s4 1966171168
    %v3828 = vunpack.c.0.s8 %v3827
    %v3829 = vlaneseq
    %v3830 = vshrl.u32 %v3829, 7
    %v3831 = vsub.s32 %v3828, %v3830
    %v3832 = vrot.slane %v3816, %v3831
    %v3834 = vunpack.c.l.s4 1966171168
    %v3835 = vunpack.c.0.s8 %v3834
    %v3836 = vlaneseq
    %v3837 = vshrl.u32 %v3836, 7
    %v3838 = vsub.s32 %v3835, %v3837
    %v3839 = vrot.slane %v3817, %v3838
    %v3841 = vunpack.c.l.s4 1966171168
    %v3842 = vunpack.c.0.s8 %v3841
    %v3843 = vlaneseq
    %v3844 = vshrl.u32 %v3843, 7
    %v3845 = vsub.s32 %v3842, %v3844
    %v3846 = vrot.slane %v3818, %v3845
    %v3847 = vcombine.high %v3825, %v3825
    %v3848 = vcombine.high %v3832, %v3832
    %v3849 = vcombine.high %v3839, %v3839
    %v3850 = vcombine.high %v3846, %v3846
    %3859 = vst.msk [vmem:[#allocation3 + $0x3] sm:$0x1] %vm290, %v3825
    %3860 = vst.msk [vmem:[#allocation3 + $0x13] sm:$0x1] %vm290, %v3839
    %3861 = vst.msk [vmem:[#allocation3 + $0x23] sm:$0x1] %vm290, %v3847
    %3862 = vst.msk [vmem:[#allocation3 + $0x33] sm:$0x1] %vm290, %v3849
    %3863 = vst.msk [vmem:[#allocation3 + $0x43] sm:$0x1] %vm290, %v3832
    %3864 = vst.msk [vmem:[#allocation3 + $0x53] sm:$0x1] %vm290, %v3846
    %3865 = vst.msk [vmem:[#allocation3 + $0x63] sm:$0x1] %vm290, %v3848
    %3866 = vst.msk [vmem:[#allocation3 + $0x73] sm:$0x1] %vm290, %v3850
    %v3867 = vld [vmem:[#allocation2] sm:$0xff]
    %3869 = vrot.lane.b32.xlu0 %v3867, 64
    %v3870 = vpop.permute.xlu0 %3869
    %v3871 = vsel %vm158, %v3870, 0
    %3873 = vmatprep.subr.mxu0 0.0
    %3874 = vmatpush1.msra.mxu0 %v23
    %3875 = vmatprep.subr.mxu0 0.0
    %3876 = vmatpush1.msra.mxu0 %v24
    %3877 = vmatprep.subr.mxu0 0.0
    %3878 = vmatpush1.msra.mxu0 0.0
    %3879 = vmatprep.subr.mxu0 0.0
    %3880 = vmatpush1.msra.mxu0 0.0
    %3881 = vmatprep.subr.mxu0 0.0
    %3882 = vmatpush1.msra.mxu0 0.0
    %3883 = vmatprep.subr.mxu0 0.0
    %3884 = vmatpush1.msra.mxu0 0.0
    %3885 = vmatprep.subr.mxu0 0.0
    %3886 = vmatpush1.msra.mxu0 0.0
    %3887 = vmatprep.subr.mxu0 0.0
    %3888 = vmatpush1.msra.mxu0 0.0
    %3889 = vmatprep.subr.mxu0 0.0
    %3890 = vmatpush1.msra.mxu0 0.0
    %3891 = vmatprep.subr.mxu0 0.0
    %3892 = vmatpush1.msra.mxu0 0.0
    %3893 = vmatprep.subr.mxu0 0.0
    %3894 = vmatpush1.msra.mxu0 0.0
    %3895 = vmatprep.subr.mxu0 0.0
    %3896 = vmatpush1.msra.mxu0 0.0
    %3897 = vmatprep.subr.mxu0 0.0
    %3898 = vmatpush1.msra.mxu0 0.0
    %3899 = vmatprep.subr.mxu0 0.0
    %3900 = vmatpush1.msra.mxu0 0.0
    %3901 = vmatprep.subr.mxu0 0.0
    %3902 = vmatpush1.msra.mxu0 0.0
    %3903 = vmatprep.subr.mxu0 0.0
    %3904 = vmatpush1.msra.mxu0 0.0
    %3905 = vmatprep.subr.mxu0 0.0
    %3906 = vmatpush1.msra.mxu0 0.0
    %3907 = vmatprep.subr.mxu0 0.0
    %3908 = vmatpush1.msra.mxu0 0.0
    %3909 = vmatprep.subr.mxu0 0.0
    %3910 = vmatpush1.msra.mxu0 0.0
    %3911 = vmatprep.subr.mxu0 0.0
    %3912 = vmatpush1.msra.mxu0 0.0
    %3913 = vmatprep.subr.mxu0 0.0
    %3914 = vmatpush1.msra.mxu0 0.0
    %3915 = vmatprep.subr.mxu0 0.0
    %3916 = vmatpush1.msra.mxu0 0.0
    %3917 = vmatprep.subr.mxu0 0.0
    %3918 = vmatpush1.msra.mxu0 0.0
    %3919 = vmatprep.subr.mxu0 0.0
    %3920 = vmatpush1.msra.mxu0 0.0
    %3921 = vmatprep.subr.mxu0 0.0
    %3922 = vmatpush1.msra.mxu0 0.0
    %3923 = vmatprep.subr.mxu0 0.0
    %3924 = vmatpush1.msra.mxu0 0.0
    %3925 = vmatprep.subr.mxu0 0.0
    %3926 = vmatpush1.msra.mxu0 0.0
    %3927 = vmatprep.subr.mxu0 0.0
    %3928 = vmatpush1.msra.mxu0 0.0
    %3929 = vmatprep.subr.mxu0 0.0
    %3930 = vmatpush1.msra.mxu0 0.0
    %3931 = vmatprep.subr.mxu0 0.0
    %3932 = vmatpush1.msra.mxu0 0.0
    %3933 = vmatprep.subr.mxu0 0.0
    %3934 = vmatpush1.msra.mxu0 0.0
    %3935 = vmatprep.subr.mxu0 0.0
    %3936 = vmatpush1.msra.mxu0 0.0
    %3937 = vmatprep.mubr.f32.mxu0 0.0
    %3938 = vmatmul.mubr.f32.gmra.mrb[0].mxu0 %v3871
    %v3939 = vpop.f32.mrb[0].mxu0
    %v3940 = vadd.f32 0.0, %v3939
    %v3941 = vpop.f32.mrb[0].mxu0
    %3942 = vdwg.mxu0
    %v3944 = vcombine.high %v3940, %v3940
    %v3946 = vunpack.c.l.s4 1966171168
    %v3947 = vunpack.c.0.s8 %v3946
    %v3948 = vlaneseq
    %v3949 = vshrl.u32 %v3948, 7
    %v3950 = vsub.s32 %v3947, %v3949
    %v3951 = vrot.slane %v3940, %v3950
    %v3953 = vunpack.c.l.s4 1966171168
    %v3954 = vunpack.c.0.s8 %v3953
    %v3955 = vlaneseq
    %v3956 = vshrl.u32 %v3955, 7
    %v3957 = vsub.s32 %v3954, %v3956
    %v3958 = vrot.slane %v3944, %v3957
    %v3959 = vcombine.high %v3951, %v3951
    %v3960 = vcombine.high %v3958, %v3958
    %v3962 = vunpack.c.l.s4 1966171168
    %v3963 = vunpack.c.0.s8 %v3962
    %v3964 = vlaneseq
    %v3965 = vshrl.u32 %v3964, 7
    %v3966 = vsub.s32 %v3963, %v3965
    %v3967 = vrot.slane %v3951, %v3966
    %v3969 = vunpack.c.l.s4 1966171168
    %v3970 = vunpack.c.0.s8 %v3969
    %v3971 = vlaneseq
    %v3972 = vshrl.u32 %v3971, 7
    %v3973 = vsub.s32 %v3970, %v3972
    %v3974 = vrot.slane %v3958, %v3973
    %v3976 = vunpack.c.l.s4 1966171168
    %v3977 = vunpack.c.0.s8 %v3976
    %v3978 = vlaneseq
    %v3979 = vshrl.u32 %v3978, 7
    %v3980 = vsub.s32 %v3977, %v3979
    %v3981 = vrot.slane %v3959, %v3980
    %v3983 = vunpack.c.l.s4 1966171168
    %v3984 = vunpack.c.0.s8 %v3983
    %v3985 = vlaneseq
    %v3986 = vshrl.u32 %v3985, 7
    %v3987 = vsub.s32 %v3984, %v3986
    %v3988 = vrot.slane %v3960, %v3987
    %v3989 = vcombine.high %v3967, %v3967
    %v3990 = vcombine.high %v3974, %v3974
    %v3991 = vcombine.high %v3981, %v3981
    %v3992 = vcombine.high %v3988, %v3988
    %4001 = vst.msk [vmem:[#allocation3 + $0x4] sm:$0x1] %vm290, %v3967
    %4002 = vst.msk [vmem:[#allocation3 + $0x14] sm:$0x1] %vm290, %v3981
    %4003 = vst.msk [vmem:[#allocation3 + $0x24] sm:$0x1] %vm290, %v3989
    %4004 = vst.msk [vmem:[#allocation3 + $0x34] sm:$0x1] %vm290, %v3991
    %4005 = vst.msk [vmem:[#allocation3 + $0x44] sm:$0x1] %vm290, %v3974
    %4006 = vst.msk [vmem:[#allocation3 + $0x54] sm:$0x1] %vm290, %v3988
    %4007 = vst.msk [vmem:[#allocation3 + $0x64] sm:$0x1] %vm290, %v3990
    %4008 = vst.msk [vmem:[#allocation3 + $0x74] sm:$0x1] %vm290, %v3992
    %v4009 = vld [vmem:[#allocation2] sm:$0xff]
    %4011 = vrot.lane.b32.xlu0 %v4009, 48
    %v4012 = vpop.permute.xlu0 %4011
    %v4013 = vsel %vm158, %v4012, 0
    %4015 = vmatprep.subr.mxu0 0.0
    %4016 = vmatpush1.msra.mxu0 %v23
    %4017 = vmatprep.subr.mxu0 0.0
    %4018 = vmatpush1.msra.mxu0 %v24
    %4019 = vmatprep.subr.mxu0 0.0
    %4020 = vmatpush1.msra.mxu0 0.0
    %4021 = vmatprep.subr.mxu0 0.0
    %4022 = vmatpush1.msra.mxu0 0.0
    %4023 = vmatprep.subr.mxu0 0.0
    %4024 = vmatpush1.msra.mxu0 0.0
    %4025 = vmatprep.subr.mxu0 0.0
    %4026 = vmatpush1.msra.mxu0 0.0
    %4027 = vmatprep.subr.mxu0 0.0
    %4028 = vmatpush1.msra.mxu0 0.0
    %4029 = vmatprep.subr.mxu0 0.0
    %4030 = vmatpush1.msra.mxu0 0.0
    %4031 = vmatprep.subr.mxu0 0.0
    %4032 = vmatpush1.msra.mxu0 0.0
    %4033 = vmatprep.subr.mxu0 0.0
    %4034 = vmatpush1.msra.mxu0 0.0
    %4035 = vmatprep.subr.mxu0 0.0
    %4036 = vmatpush1.msra.mxu0 0.0
    %4037 = vmatprep.subr.mxu0 0.0
    %4038 = vmatpush1.msra.mxu0 0.0
    %4039 = vmatprep.subr.mxu0 0.0
    %4040 = vmatpush1.msra.mxu0 0.0
    %4041 = vmatprep.subr.mxu0 0.0
    %4042 = vmatpush1.msra.mxu0 0.0
    %4043 = vmatprep.subr.mxu0 0.0
    %4044 = vmatpush1.msra.mxu0 0.0
    %4045 = vmatprep.subr.mxu0 0.0
    %4046 = vmatpush1.msra.mxu0 0.0
    %4047 = vmatprep.subr.mxu0 0.0
    %4048 = vmatpush1.msra.mxu0 0.0
    %4049 = vmatprep.subr.mxu0 0.0
    %4050 = vmatpush1.msra.mxu0 0.0
    %4051 = vmatprep.subr.mxu0 0.0
    %4052 = vmatpush1.msra.mxu0 0.0
    %4053 = vmatprep.subr.mxu0 0.0
    %4054 = vmatpush1.msra.mxu0 0.0
    %4055 = vmatprep.subr.mxu0 0.0
    %4056 = vmatpush1.msra.mxu0 0.0
    %4057 = vmatprep.subr.mxu0 0.0
    %4058 = vmatpush1.msra.mxu0 0.0
    %4059 = vmatprep.subr.mxu0 0.0
    %4060 = vmatpush1.msra.mxu0 0.0
    %4061 = vmatprep.subr.mxu0 0.0
    %4062 = vmatpush1.msra.mxu0 0.0
    %4063 = vmatprep.subr.mxu0 0.0
    %4064 = vmatpush1.msra.mxu0 0.0
    %4065 = vmatprep.subr.mxu0 0.0
    %4066 = vmatpush1.msra.mxu0 0.0
    %4067 = vmatprep.subr.mxu0 0.0
    %4068 = vmatpush1.msra.mxu0 0.0
    %4069 = vmatprep.subr.mxu0 0.0
    %4070 = vmatpush1.msra.mxu0 0.0
    %4071 = vmatprep.subr.mxu0 0.0
    %4072 = vmatpush1.msra.mxu0 0.0
    %4073 = vmatprep.subr.mxu0 0.0
    %4074 = vmatpush1.msra.mxu0 0.0
    %4075 = vmatprep.subr.mxu0 0.0
    %4076 = vmatpush1.msra.mxu0 0.0
    %4077 = vmatprep.subr.mxu0 0.0
    %4078 = vmatpush1.msra.mxu0 0.0
    %4079 = vmatprep.mubr.f32.mxu0 0.0
    %4080 = vmatmul.mubr.f32.gmra.mrb[0].mxu0 %v4013
    %v4081 = vpop.f32.mrb[0].mxu0
    %v4082 = vadd.f32 0.0, %v4081
    %v4083 = vpop.f32.mrb[0].mxu0
    %4084 = vdwg.mxu0
    %v4086 = vcombine.high %v4082, %v4082
    %v4088 = vunpack.c.l.s4 1966171168
    %v4089 = vunpack.c.0.s8 %v4088
    %v4090 = vlaneseq
    %v4091 = vshrl.u32 %v4090, 7
    %v4092 = vsub.s32 %v4089, %v4091
    %v4093 = vrot.slane %v4082, %v4092
    %v4095 = vunpack.c.l.s4 1966171168
    %v4096 = vunpack.c.0.s8 %v4095
    %v4097 = vlaneseq
    %v4098 = vshrl.u32 %v4097, 7
    %v4099 = vsub.s32 %v4096, %v4098
    %v4100 = vrot.slane %v4086, %v4099
    %v4101 = vcombine.high %v4093, %v4093
    %v4102 = vcombine.high %v4100, %v4100
    %v4104 = vunpack.c.l.s4 1966171168
    %v4105 = vunpack.c.0.s8 %v4104
    %v4106 = vlaneseq
    %v4107 = vshrl.u32 %v4106, 7
    %v4108 = vsub.s32 %v4105, %v4107
    %v4109 = vrot.slane %v4093, %v4108
    %v4111 = vunpack.c.l.s4 1966171168
    %v4112 = vunpack.c.0.s8 %v4111
    %v4113 = vlaneseq
    %v4114 = vshrl.u32 %v4113, 7
    %v4115 = vsub.s32 %v4112, %v4114
    %v4116 = vrot.slane %v4100, %v4115
    %v4118 = vunpack.c.l.s4 1966171168
    %v4119 = vunpack.c.0.s8 %v4118
    %v4120 = vlaneseq
    %v4121 = vshrl.u32 %v4120, 7
    %v4122 = vsub.s32 %v4119, %v4121
    %v4123 = vrot.slane %v4101, %v4122
    %v4125 = vunpack.c.l.s4 1966171168
    %v4126 = vunpack.c.0.s8 %v4125
    %v4127 = vlaneseq
    %v4128 = vshrl.u32 %v4127, 7
    %v4129 = vsub.s32 %v4126, %v4128
    %v4130 = vrot.slane %v4102, %v4129
    %v4131 = vcombine.high %v4109, %v4109
    %v4132 = vcombine.high %v4116, %v4116
    %v4133 = vcombine.high %v4123, %v4123
    %v4134 = vcombine.high %v4130, %v4130
    %4143 = vst.msk [vmem:[#allocation3 + $0x5] sm:$0x1] %vm290, %v4109
    %4144 = vst.msk [vmem:[#allocation3 + $0x15] sm:$0x1] %vm290, %v4123
    %4145 = vst.msk [vmem:[#allocation3 + $0x25] sm:$0x1] %vm290, %v4131
    %4146 = vst.msk [vmem:[#allocation3 + $0x35] sm:$0x1] %vm290, %v4133
    %4147 = vst.msk [vmem:[#allocation3 + $0x45] sm:$0x1] %vm290, %v4116
    %4148 = vst.msk [vmem:[#allocation3 + $0x55] sm:$0x1] %vm290, %v4130
    %4149 = vst.msk [vmem:[#allocation3 + $0x65] sm:$0x1] %vm290, %v4132
    %4150 = vst.msk [vmem:[#allocation3 + $0x75] sm:$0x1] %vm290, %v4134
    %v4151 = vld [vmem:[#allocation2] sm:$0xff]
    %4153 = vrot.lane.b32.xlu0 %v4151, 32
    %v4154 = vpop.permute.xlu0 %4153
    %v4155 = vsel %vm158, %v4154, 0
    %4157 = vmatprep.subr.mxu0 0.0
    %4158 = vmatpush1.msra.mxu0 %v23
    %4159 = vmatprep.subr.mxu0 0.0
    %4160 = vmatpush1.msra.mxu0 %v24
    %4161 = vmatprep.subr.mxu0 0.0
    %4162 = vmatpush1.msra.mxu0 0.0
    %4163 = vmatprep.subr.mxu0 0.0
    %4164 = vmatpush1.msra.mxu0 0.0
    %4165 = vmatprep.subr.mxu0 0.0
    %4166 = vmatpush1.msra.mxu0 0.0
    %4167 = vmatprep.subr.mxu0 0.0
    %4168 = vmatpush1.msra.mxu0 0.0
    %4169 = vmatprep.subr.mxu0 0.0
    %4170 = vmatpush1.msra.mxu0 0.0
    %4171 = vmatprep.subr.mxu0 0.0
    %4172 = vmatpush1.msra.mxu0 0.0
    %4173 = vmatprep.subr.mxu0 0.0
    %4174 = vmatpush1.msra.mxu0 0.0
    %4175 = vmatprep.subr.mxu0 0.0
    %4176 = vmatpush1.msra.mxu0 0.0
    %4177 = vmatprep.subr.mxu0 0.0
    %4178 = vmatpush1.msra.mxu0 0.0
    %4179 = vmatprep.subr.mxu0 0.0
    %4180 = vmatpush1.msra.mxu0 0.0
    %4181 = vmatprep.subr.mxu0 0.0
    %4182 = vmatpush1.msra.mxu0 0.0
    %4183 = vmatprep.subr.mxu0 0.0
    %4184 = vmatpush1.msra.mxu0 0.0
    %4185 = vmatprep.subr.mxu0 0.0
    %4186 = vmatpush1.msra.mxu0 0.0
    %4187 = vmatprep.subr.mxu0 0.0
    %4188 = vmatpush1.msra.mxu0 0.0
    %4189 = vmatprep.subr.mxu0 0.0
    %4190 = vmatpush1.msra.mxu0 0.0
    %4191 = vmatprep.subr.mxu0 0.0
    %4192 = vmatpush1.msra.mxu0 0.0
    %4193 = vmatprep.subr.mxu0 0.0
    %4194 = vmatpush1.msra.mxu0 0.0
    %4195 = vmatprep.subr.mxu0 0.0
    %4196 = vmatpush1.msra.mxu0 0.0
    %4197 = vmatprep.subr.mxu0 0.0
    %4198 = vmatpush1.msra.mxu0 0.0
    %4199 = vmatprep.subr.mxu0 0.0
    %4200 = vmatpush1.msra.mxu0 0.0
    %4201 = vmatprep.subr.mxu0 0.0
    %4202 = vmatpush1.msra.mxu0 0.0
    %4203 = vmatprep.subr.mxu0 0.0
    %4204 = vmatpush1.msra.mxu0 0.0
    %4205 = vmatprep.subr.mxu0 0.0
    %4206 = vmatpush1.msra.mxu0 0.0
    %4207 = vmatprep.subr.mxu0 0.0
    %4208 = vmatpush1.msra.mxu0 0.0
    %4209 = vmatprep.subr.mxu0 0.0
    %4210 = vmatpush1.msra.mxu0 0.0
    %4211 = vmatprep.subr.mxu0 0.0
    %4212 = vmatpush1.msra.mxu0 0.0
    %4213 = vmatprep.subr.mxu0 0.0
    %4214 = vmatpush1.msra.mxu0 0.0
    %4215 = vmatprep.subr.mxu0 0.0
    %4216 = vmatpush1.msra.mxu0 0.0
    %4217 = vmatprep.subr.mxu0 0.0
    %4218 = vmatpush1.msra.mxu0 0.0
    %4219 = vmatprep.subr.mxu0 0.0
    %4220 = vmatpush1.msra.mxu0 0.0
    %4221 = vmatprep.mubr.f32.mxu0 0.0
    %4222 = vmatmul.mubr.f32.gmra.mrb[0].mxu0 %v4155
    %v4223 = vpop.f32.mrb[0].mxu0
    %v4224 = vadd.f32 0.0, %v4223
    %v4225 = vpop.f32.mrb[0].mxu0
    %4226 = vdwg.mxu0
    %v4228 = vcombine.high %v4224, %v4224
    %v4230 = vunpack.c.l.s4 1966171168
    %v4231 = vunpack.c.0.s8 %v4230
    %v4232 = vlaneseq
    %v4233 = vshrl.u32 %v4232, 7
    %v4234 = vsub.s32 %v4231, %v4233
    %v4235 = vrot.slane %v4224, %v4234
    %v4237 = vunpack.c.l.s4 1966171168
    %v4238 = vunpack.c.0.s8 %v4237
    %v4239 = vlaneseq
    %v4240 = vshrl.u32 %v4239, 7
    %v4241 = vsub.s32 %v4238, %v4240
    %v4242 = vrot.slane %v4228, %v4241
    %v4243 = vcombine.high %v4235, %v4235
    %v4244 = vcombine.high %v4242, %v4242
    %v4246 = vunpack.c.l.s4 1966171168
    %v4247 = vunpack.c.0.s8 %v4246
    %v4248 = vlaneseq
    %v4249 = vshrl.u32 %v4248, 7
    %v4250 = vsub.s32 %v4247, %v4249
    %v4251 = vrot.slane %v4235, %v4250
    %v4253 = vunpack.c.l.s4 1966171168
    %v4254 = vunpack.c.0.s8 %v4253
    %v4255 = vlaneseq
    %v4256 = vshrl.u32 %v4255, 7
    %v4257 = vsub.s32 %v4254, %v4256
    %v4258 = vrot.slane %v4242, %v4257
    %v4260 = vunpack.c.l.s4 1966171168
    %v4261 = vunpack.c.0.s8 %v4260
    %v4262 = vlaneseq
    %v4263 = vshrl.u32 %v4262, 7
    %v4264 = vsub.s32 %v4261, %v4263
    %v4265 = vrot.slane %v4243, %v4264
    %v4267 = vunpack.c.l.s4 1966171168
    %v4268 = vunpack.c.0.s8 %v4267
    %v4269 = vlaneseq
    %v4270 = vshrl.u32 %v4269, 7
    %v4271 = vsub.s32 %v4268, %v4270
    %v4272 = vrot.slane %v4244, %v4271
    %v4273 = vcombine.high %v4251, %v4251
    %v4274 = vcombine.high %v4258, %v4258
    %v4275 = vcombine.high %v4265, %v4265
    %v4276 = vcombine.high %v4272, %v4272
    %4285 = vst.msk [vmem:[#allocation3 + $0x6] sm:$0x1] %vm290, %v4251
    %4286 = vst.msk [vmem:[#allocation3 + $0x16] sm:$0x1] %vm290, %v4265
    %4287 = vst.msk [vmem:[#allocation3 + $0x26] sm:$0x1] %vm290, %v4273
    %4288 = vst.msk [vmem:[#allocation3 + $0x36] sm:$0x1] %vm290, %v4275
    %4289 = vst.msk [vmem:[#allocation3 + $0x46] sm:$0x1] %vm290, %v4258
    %4290 = vst.msk [vmem:[#allocation3 + $0x56] sm:$0x1] %vm290, %v4272
    %4291 = vst.msk [vmem:[#allocation3 + $0x66] sm:$0x1] %vm290, %v4274
    %4292 = vst.msk [vmem:[#allocation3 + $0x76] sm:$0x1] %vm290, %v4276
    %v4293 = vld [vmem:[#allocation2] sm:$0xff]
    %4295 = vrot.lane.b32.xlu0 %v4293, 16
    %v4296 = vpop.permute.xlu0 %4295
    %v4297 = vsel %vm158, %v4296, 0
    %4299 = vmatprep.subr.mxu0 0.0
    %4300 = vmatpush1.msra.mxu0 %v23
    %4301 = vmatprep.subr.mxu0 0.0
    %4302 = vmatpush1.msra.mxu0 %v24
    %4303 = vmatprep.subr.mxu0 0.0
    %4304 = vmatpush1.msra.mxu0 0.0
    %4305 = vmatprep.subr.mxu0 0.0
    %4306 = vmatpush1.msra.mxu0 0.0
    %4307 = vmatprep.subr.mxu0 0.0
    %4308 = vmatpush1.msra.mxu0 0.0
    %4309 = vmatprep.subr.mxu0 0.0
    %4310 = vmatpush1.msra.mxu0 0.0
    %4311 = vmatprep.subr.mxu0 0.0
    %4312 = vmatpush1.msra.mxu0 0.0
    %4313 = vmatprep.subr.mxu0 0.0
    %4314 = vmatpush1.msra.mxu0 0.0
    %4315 = vmatprep.subr.mxu0 0.0
    %4316 = vmatpush1.msra.mxu0 0.0
    %4317 = vmatprep.subr.mxu0 0.0
    %4318 = vmatpush1.msra.mxu0 0.0
    %4319 = vmatprep.subr.mxu0 0.0
    %4320 = vmatpush1.msra.mxu0 0.0
    %4321 = vmatprep.subr.mxu0 0.0
    %4322 = vmatpush1.msra.mxu0 0.0
    %4323 = vmatprep.subr.mxu0 0.0
    %4324 = vmatpush1.msra.mxu0 0.0
    %4325 = vmatprep.subr.mxu0 0.0
    %4326 = vmatpush1.msra.mxu0 0.0
    %4327 = vmatprep.subr.mxu0 0.0
    %4328 = vmatpush1.msra.mxu0 0.0
    %4329 = vmatprep.subr.mxu0 0.0
    %4330 = vmatpush1.msra.mxu0 0.0
    %4331 = vmatprep.subr.mxu0 0.0
    %4332 = vmatpush1.msra.mxu0 0.0
    %4333 = vmatprep.subr.mxu0 0.0
    %4334 = vmatpush1.msra.mxu0 0.0
    %4335 = vmatprep.subr.mxu0 0.0
    %4336 = vmatpush1.msra.mxu0 0.0
    %4337 = vmatprep.subr.mxu0 0.0
    %4338 = vmatpush1.msra.mxu0 0.0
    %4339 = vmatprep.subr.mxu0 0.0
    %4340 = vmatpush1.msra.mxu0 0.0
    %4341 = vmatprep.subr.mxu0 0.0
    %4342 = vmatpush1.msra.mxu0 0.0
    %4343 = vmatprep.subr.mxu0 0.0
    %4344 = vmatpush1.msra.mxu0 0.0
    %4345 = vmatprep.subr.mxu0 0.0
    %4346 = vmatpush1.msra.mxu0 0.0
    %4347 = vmatprep.subr.mxu0 0.0
    %4348 = vmatpush1.msra.mxu0 0.0
    %4349 = vmatprep.subr.mxu0 0.0
    %4350 = vmatpush1.msra.mxu0 0.0
    %4351 = vmatprep.subr.mxu0 0.0
    %4352 = vmatpush1.msra.mxu0 0.0
    %4353 = vmatprep.subr.mxu0 0.0
    %4354 = vmatpush1.msra.mxu0 0.0
    %4355 = vmatprep.subr.mxu0 0.0
    %4356 = vmatpush1.msra.mxu0 0.0
    %4357 = vmatprep.subr.mxu0 0.0
    %4358 = vmatpush1.msra.mxu0 0.0
    %4359 = vmatprep.subr.mxu0 0.0
    %4360 = vmatpush1.msra.mxu0 0.0
    %4361 = vmatprep.subr.mxu0 0.0
    %4362 = vmatpush1.msra.mxu0 0.0
    %4363 = vmatprep.mubr.f32.mxu0 0.0
    %4364 = vmatmul.mubr.f32.gmra.mrb[0].mxu0 %v4297
    %v4365 = vpop.f32.mrb[0].mxu0
    %v4366 = vadd.f32 0.0, %v4365
    %v4367 = vpop.f32.mrb[0].mxu0
    %4368 = vdwg.mxu0
    %v4370 = vcombine.high %v4366, %v4366
    %v4372 = vunpack.c.l.s4 1966171168
    %v4373 = vunpack.c.0.s8 %v4372
    %v4374 = vlaneseq
    %v4375 = vshrl.u32 %v4374, 7
    %v4376 = vsub.s32 %v4373, %v4375
    %v4377 = vrot.slane %v4366, %v4376
    %v4379 = vunpack.c.l.s4 1966171168
    %v4380 = vunpack.c.0.s8 %v4379
    %v4381 = vlaneseq
    %v4382 = vshrl.u32 %v4381, 7
    %v4383 = vsub.s32 %v4380, %v4382
    %v4384 = vrot.slane %v4370, %v4383
    %v4385 = vcombine.high %v4377, %v4377
    %v4386 = vcombine.high %v4384, %v4384
    %v4388 = vunpack.c.l.s4 1966171168
    %v4389 = vunpack.c.0.s8 %v4388
    %v4390 = vlaneseq
    %v4391 = vshrl.u32 %v4390, 7
    %v4392 = vsub.s32 %v4389, %v4391
    %v4393 = vrot.slane %v4377, %v4392
    %v4395 = vunpack.c.l.s4 1966171168
    %v4396 = vunpack.c.0.s8 %v4395
    %v4397 = vlaneseq
    %v4398 = vshrl.u32 %v4397, 7
    %v4399 = vsub.s32 %v4396, %v4398
    %v4400 = vrot.slane %v4384, %v4399
    %v4402 = vunpack.c.l.s4 1966171168
    %v4403 = vunpack.c.0.s8 %v4402
    %v4404 = vlaneseq
    %v4405 = vshrl.u32 %v4404, 7
    %v4406 = vsub.s32 %v4403, %v4405
    %v4407 = vrot.slane %v4385, %v4406
    %v4409 = vunpack.c.l.s4 1966171168
    %v4410 = vunpack.c.0.s8 %v4409
    %v4411 = vlaneseq
    %v4412 = vshrl.u32 %v4411, 7
    %v4413 = vsub.s32 %v4410, %v4412
    %v4414 = vrot.slane %v4386, %v4413
    %v4415 = vcombine.high %v4393, %v4393
    %v4416 = vcombine.high %v4400, %v4400
    %v4417 = vcombine.high %v4407, %v4407
    %v4418 = vcombine.high %v4414, %v4414
    %4427 = vst.msk [vmem:[#allocation3 + $0x7] sm:$0x1] %vm290, %v4393
    %4428 = vst.msk [vmem:[#allocation3 + $0x17] sm:$0x1] %vm290, %v4407
    %4429 = vst.msk [vmem:[#allocation3 + $0x27] sm:$0x1] %vm290, %v4415
    %4430 = vst.msk [vmem:[#allocation3 + $0x37] sm:$0x1] %vm290, %v4417
    %4431 = vst.msk [vmem:[#allocation3 + $0x47] sm:$0x1] %vm290, %v4400
    %4432 = vst.msk [vmem:[#allocation3 + $0x57] sm:$0x1] %vm290, %v4414
    %4433 = vst.msk [vmem:[#allocation3 + $0x67] sm:$0x1] %vm290, %v4416
    %4434 = vst.msk [vmem:[#allocation3 + $0x77] sm:$0x1] %vm290, %v4418
    %v4435 = vld [vmem:[#allocation2 + $0x8] sm:$0xff]
    %v4437 = vsel %vm158, %v4435, 0
    %4439 = vmatprep.subr.mxu0 0.0
    %4440 = vmatpush1.msra.mxu0 %v23
    %4441 = vmatprep.subr.mxu0 0.0
    %4442 = vmatpush1.msra.mxu0 %v24
    %4443 = vmatprep.subr.mxu0 0.0
    %4444 = vmatpush1.msra.mxu0 0.0
    %4445 = vmatprep.subr.mxu0 0.0
    %4446 = vmatpush1.msra.mxu0 0.0
    %4447 = vmatprep.subr.mxu0 0.0
    %4448 = vmatpush1.msra.mxu0 0.0
    %4449 = vmatprep.subr.mxu0 0.0
    %4450 = vmatpush1.msra.mxu0 0.0
    %4451 = vmatprep.subr.mxu0 0.0
    %4452 = vmatpush1.msra.mxu0 0.0
    %4453 = vmatprep.subr.mxu0 0.0
    %4454 = vmatpush1.msra.mxu0 0.0
    %4455 = vmatprep.subr.mxu0 0.0
    %4456 = vmatpush1.msra.mxu0 0.0
    %4457 = vmatprep.subr.mxu0 0.0
    %4458 = vmatpush1.msra.mxu0 0.0
    %4459 = vmatprep.subr.mxu0 0.0
    %4460 = vmatpush1.msra.mxu0 0.0
    %4461 = vmatprep.subr.mxu0 0.0
    %4462 = vmatpush1.msra.mxu0 0.0
    %4463 = vmatprep.subr.mxu0 0.0
    %4464 = vmatpush1.msra.mxu0 0.0
    %4465 = vmatprep.subr.mxu0 0.0
    %4466 = vmatpush1.msra.mxu0 0.0
    %4467 = vmatprep.subr.mxu0 0.0
    %4468 = vmatpush1.msra.mxu0 0.0
    %4469 = vmatprep.subr.mxu0 0.0
    %4470 = vmatpush1.msra.mxu0 0.0
    %4471 = vmatprep.subr.mxu0 0.0
    %4472 = vmatpush1.msra.mxu0 0.0
    %4473 = vmatprep.subr.mxu0 0.0
    %4474 = vmatpush1.msra.mxu0 0.0
    %4475 = vmatprep.subr.mxu0 0.0
    %4476 = vmatpush1.msra.mxu0 0.0
    %4477 = vmatprep.subr.mxu0 0.0
    %4478 = vmatpush1.msra.mxu0 0.0
    %4479 = vmatprep.subr.mxu0 0.0
    %4480 = vmatpush1.msra.mxu0 0.0
    %4481 = vmatprep.subr.mxu0 0.0
    %4482 = vmatpush1.msra.mxu0 0.0
    %4483 = vmatprep.subr.mxu0 0.0
    %4484 = vmatpush1.msra.mxu0 0.0
    %4485 = vmatprep.subr.mxu0 0.0
    %4486 = vmatpush1.msra.mxu0 0.0
    %4487 = vmatprep.subr.mxu0 0.0
    %4488 = vmatpush1.msra.mxu0 0.0
    %4489 = vmatprep.subr.mxu0 0.0
    %4490 = vmatpush1.msra.mxu0 0.0
    %4491 = vmatprep.subr.mxu0 0.0
    %4492 = vmatpush1.msra.mxu0 0.0
    %4493 = vmatprep.subr.mxu0 0.0
    %4494 = vmatpush1.msra.mxu0 0.0
    %4495 = vmatprep.subr.mxu0 0.0
    %4496 = vmatpush1.msra.mxu0 0.0
    %4497 = vmatprep.subr.mxu0 0.0
    %4498 = vmatpush1.msra.mxu0 0.0
    %4499 = vmatprep.subr.mxu0 0.0
    %4500 = vmatpush1.msra.mxu0 0.0
    %4501 = vmatprep.subr.mxu0 0.0
    %4502 = vmatpush1.msra.mxu0 0.0
    %4503 = vmatprep.mubr.f32.mxu0 0.0
    %4504 = vmatmul.mubr.f32.gmra.mrb[0].mxu0 %v4437
    %v4505 = vpop.f32.mrb[0].mxu0
    %v4506 = vadd.f32 0.0, %v4505
    %v4507 = vpop.f32.mrb[0].mxu0
    %4508 = vdwg.mxu0
    %v4510 = vcombine.high %v4506, %v4506
    %v4512 = vunpack.c.l.s4 1966171168
    %v4513 = vunpack.c.0.s8 %v4512
    %v4514 = vlaneseq
    %v4515 = vshrl.u32 %v4514, 7
    %v4516 = vsub.s32 %v4513, %v4515
    %v4517 = vrot.slane %v4506, %v4516
    %v4519 = vunpack.c.l.s4 1966171168
    %v4520 = vunpack.c.0.s8 %v4519
    %v4521 = vlaneseq
    %v4522 = vshrl.u32 %v4521, 7
    %v4523 = vsub.s32 %v4520, %v4522
    %v4524 = vrot.slane %v4510, %v4523
    %v4525 = vcombine.high %v4517, %v4517
    %v4526 = vcombine.high %v4524, %v4524
    %v4528 = vunpack.c.l.s4 1966171168
    %v4529 = vunpack.c.0.s8 %v4528
    %v4530 = vlaneseq
    %v4531 = vshrl.u32 %v4530, 7
    %v4532 = vsub.s32 %v4529, %v4531
    %v4533 = vrot.slane %v4517, %v4532
    %v4535 = vunpack.c.l.s4 1966171168
    %v4536 = vunpack.c.0.s8 %v4535
    %v4537 = vlaneseq
    %v4538 = vshrl.u32 %v4537, 7
    %v4539 = vsub.s32 %v4536, %v4538
    %v4540 = vrot.slane %v4524, %v4539
    %v4542 = vunpack.c.l.s4 1966171168
    %v4543 = vunpack.c.0.s8 %v4542
    %v4544 = vlaneseq
    %v4545 = vshrl.u32 %v4544, 7
    %v4546 = vsub.s32 %v4543, %v4545
    %v4547 = vrot.slane %v4525, %v4546
    %v4549 = vunpack.c.l.s4 1966171168
    %v4550 = vunpack.c.0.s8 %v4549
    %v4551 = vlaneseq
    %v4552 = vshrl.u32 %v4551, 7
    %v4553 = vsub.s32 %v4550, %v4552
    %v4554 = vrot.slane %v4526, %v4553
    %v4555 = vcombine.high %v4533, %v4533
    %v4556 = vcombine.high %v4540, %v4540
    %v4557 = vcombine.high %v4547, %v4547
    %v4558 = vcombine.high %v4554, %v4554
    %4567 = vst.msk [vmem:[#allocation3 + $0x8] sm:$0x1] %vm290, %v4533
    %4568 = vst.msk [vmem:[#allocation3 + $0x18] sm:$0x1] %vm290, %v4547
    %4569 = vst.msk [vmem:[#allocation3 + $0x28] sm:$0x1] %vm290, %v4555
    %4570 = vst.msk [vmem:[#allocation3 + $0x38] sm:$0x1] %vm290, %v4557
    %4571 = vst.msk [vmem:[#allocation3 + $0x48] sm:$0x1] %vm290, %v4540
    %4572 = vst.msk [vmem:[#allocation3 + $0x58] sm:$0x1] %vm290, %v4554
    %4573 = vst.msk [vmem:[#allocation3 + $0x68] sm:$0x1] %vm290, %v4556
    %4574 = vst.msk [vmem:[#allocation3 + $0x78] sm:$0x1] %vm290, %v4558
    %v4575 = vld [vmem:[#allocation2 + $0x8] sm:$0xff]
    %4577 = vrot.lane.b32.xlu0 %v4575, 112
    %v4578 = vpop.permute.xlu0 %4577
    %v4579 = vsel %vm158, %v4578, 0
    %4581 = vmatprep.subr.mxu0 0.0
    %4582 = vmatpush1.msra.mxu0 %v23
    %4583 = vmatprep.subr.mxu0 0.0
    %4584 = vmatpush1.msra.mxu0 %v24
    %4585 = vmatprep.subr.mxu0 0.0
    %4586 = vmatpush1.msra.mxu0 0.0
    %4587 = vmatprep.subr.mxu0 0.0
    %4588 = vmatpush1.msra.mxu0 0.0
    %4589 = vmatprep.subr.mxu0 0.0
    %4590 = vmatpush1.msra.mxu0 0.0
    %4591 = vmatprep.subr.mxu0 0.0
    %4592 = vmatpush1.msra.mxu0 0.0
    %4593 = vmatprep.subr.mxu0 0.0
    %4594 = vmatpush1.msra.mxu0 0.0
    %4595 = vmatprep.subr.mxu0 0.0
    %4596 = vmatpush1.msra.mxu0 0.0
    %4597 = vmatprep.subr.mxu0 0.0
    %4598 = vmatpush1.msra.mxu0 0.0
    %4599 = vmatprep.subr.mxu0 0.0
    %4600 = vmatpush1.msra.mxu0 0.0
    %4601 = vmatprep.subr.mxu0 0.0
    %4602 = vmatpush1.msra.mxu0 0.0
    %4603 = vmatprep.subr.mxu0 0.0
    %4604 = vmatpush1.msra.mxu0 0.0
    %4605 = vmatprep.subr.mxu0 0.0
    %4606 = vmatpush1.msra.mxu0 0.0
    %4607 = vmatprep.subr.mxu0 0.0
    %4608 = vmatpush1.msra.mxu0 0.0
    %4609 = vmatprep.subr.mxu0 0.0
    %4610 = vmatpush1.msra.mxu0 0.0
    %4611 = vmatprep.subr.mxu0 0.0
    %4612 = vmatpush1.msra.mxu0 0.0
    %4613 = vmatprep.subr.mxu0 0.0
    %4614 = vmatpush1.msra.mxu0 0.0
    %4615 = vmatprep.subr.mxu0 0.0
    %4616 = vmatpush1.msra.mxu0 0.0
    %4617 = vmatprep.subr.mxu0 0.0
    %4618 = vmatpush1.msra.mxu0 0.0
    %4619 = vmatprep.subr.mxu0 0.0
    %4620 = vmatpush1.msra.mxu0 0.0
    %4621 = vmatprep.subr.mxu0 0.0
    %4622 = vmatpush1.msra.mxu0 0.0
    %4623 = vmatprep.subr.mxu0 0.0
    %4624 = vmatpush1.msra.mxu0 0.0
    %4625 = vmatprep.subr.mxu0 0.0
    %4626 = vmatpush1.msra.mxu0 0.0
    %4627 = vmatprep.subr.mxu0 0.0
    %4628 = vmatpush1.msra.mxu0 0.0
    %4629 = vmatprep.subr.mxu0 0.0
    %4630 = vmatpush1.msra.mxu0 0.0
    %4631 = vmatprep.subr.mxu0 0.0
    %4632 = vmatpush1.msra.mxu0 0.0
    %4633 = vmatprep.subr.mxu0 0.0
    %4634 = vmatpush1.msra.mxu0 0.0
    %4635 = vmatprep.subr.mxu0 0.0
    %4636 = vmatpush1.msra.mxu0 0.0
    %4637 = vmatprep.subr.mxu0 0.0
    %4638 = vmatpush1.msra.mxu0 0.0
    %4639 = vmatprep.subr.mxu0 0.0
    %4640 = vmatpush1.msra.mxu0 0.0
    %4641 = vmatprep.subr.mxu0 0.0
    %4642 = vmatpush1.msra.mxu0 0.0
    %4643 = vmatprep.subr.mxu0 0.0
    %4644 = vmatpush1.msra.mxu0 0.0
    %4645 = vmatprep.mubr.f32.mxu0 0.0
    %4646 = vmatmul.mubr.f32.gmra.mrb[0].mxu0 %v4579
    %v4647 = vpop.f32.mrb[0].mxu0
    %v4648 = vadd.f32 0.0, %v4647
    %v4649 = vpop.f32.mrb[0].mxu0
    %4650 = vdwg.mxu0
    %v4652 = vcombine.high %v4648, %v4648
    %v4654 = vunpack.c.l.s4 1966171168
    %v4655 = vunpack.c.0.s8 %v4654
    %v4656 = vlaneseq
    %v4657 = vshrl.u32 %v4656, 7
    %v4658 = vsub.s32 %v4655, %v4657
    %v4659 = vrot.slane %v4648, %v4658
    %v4661 = vunpack.c.l.s4 1966171168
    %v4662 = vunpack.c.0.s8 %v4661
    %v4663 = vlaneseq
    %v4664 = vshrl.u32 %v4663, 7
    %v4665 = vsub.s32 %v4662, %v4664
    %v4666 = vrot.slane %v4652, %v4665
    %v4667 = vcombine.high %v4659, %v4659
    %v4668 = vcombine.high %v4666, %v4666
    %v4670 = vunpack.c.l.s4 1966171168
    %v4671 = vunpack.c.0.s8 %v4670
    %v4672 = vlaneseq
    %v4673 = vshrl.u32 %v4672, 7
    %v4674 = vsub.s32 %v4671, %v4673
    %v4675 = vrot.slane %v4659, %v4674
    %v4677 = vunpack.c.l.s4 1966171168
    %v4678 = vunpack.c.0.s8 %v4677
    %v4679 = vlaneseq
    %v4680 = vshrl.u32 %v4679, 7
    %v4681 = vsub.s32 %v4678, %v4680
    %v4682 = vrot.slane %v4666, %v4681
    %v4684 = vunpack.c.l.s4 1966171168
    %v4685 = vunpack.c.0.s8 %v4684
    %v4686 = vlaneseq
    %v4687 = vshrl.u32 %v4686, 7
    %v4688 = vsub.s32 %v4685, %v4687
    %v4689 = vrot.slane %v4667, %v4688
    %v4691 = vunpack.c.l.s4 1966171168
    %v4692 = vunpack.c.0.s8 %v4691
    %v4693 = vlaneseq
    %v4694 = vshrl.u32 %v4693, 7
    %v4695 = vsub.s32 %v4692, %v4694
    %v4696 = vrot.slane %v4668, %v4695
    %v4697 = vcombine.high %v4675, %v4675
    %v4698 = vcombine.high %v4682, %v4682
    %v4699 = vcombine.high %v4689, %v4689
    %v4700 = vcombine.high %v4696, %v4696
    %4709 = vst.msk [vmem:[#allocation3 + $0x9] sm:$0x1] %vm290, %v4675
    %4710 = vst.msk [vmem:[#allocation3 + $0x19] sm:$0x1] %vm290, %v4689
    %4711 = vst.msk [vmem:[#allocation3 + $0x29] sm:$0x1] %vm290, %v4697
    %4712 = vst.msk [vmem:[#allocation3 + $0x39] sm:$0x1] %vm290, %v4699
    %4713 = vst.msk [vmem:[#allocation3 + $0x49] sm:$0x1] %vm290, %v4682
    %4714 = vst.msk [vmem:[#allocation3 + $0x59] sm:$0x1] %vm290, %v4696
    %4715 = vst.msk [vmem:[#allocation3 + $0x69] sm:$0x1] %vm290, %v4698
    %4716 = vst.msk [vmem:[#allocation3 + $0x79] sm:$0x1] %vm290, %v4700
    %v4717 = vld [vmem:[#allocation2 + $0x8] sm:$0xff]
    %4719 = vrot.lane.b32.xlu0 %v4717, 96
    %v4720 = vpop.permute.xlu0 %4719
    %v4721 = vsel %vm158, %v4720, 0
    %4723 = vmatprep.subr.mxu0 0.0
    %4724 = vmatpush1.msra.mxu0 %v23
    %4725 = vmatprep.subr.mxu0 0.0
    %4726 = vmatpush1.msra.mxu0 %v24
    %4727 = vmatprep.subr.mxu0 0.0
    %4728 = vmatpush1.msra.mxu0 0.0
    %4729 = vmatprep.subr.mxu0 0.0
    %4730 = vmatpush1.msra.mxu0 0.0
    %4731 = vmatprep.subr.mxu0 0.0
    %4732 = vmatpush1.msra.mxu0 0.0
    %4733 = vmatprep.subr.mxu0 0.0
    %4734 = vmatpush1.msra.mxu0 0.0
    %4735 = vmatprep.subr.mxu0 0.0
    %4736 = vmatpush1.msra.mxu0 0.0
    %4737 = vmatprep.subr.mxu0 0.0
    %4738 = vmatpush1.msra.mxu0 0.0
    %4739 = vmatprep.subr.mxu0 0.0
    %4740 = vmatpush1.msra.mxu0 0.0
    %4741 = vmatprep.subr.mxu0 0.0
    %4742 = vmatpush1.msra.mxu0 0.0
    %4743 = vmatprep.subr.mxu0 0.0
    %4744 = vmatpush1.msra.mxu0 0.0
    %4745 = vmatprep.subr.mxu0 0.0
    %4746 = vmatpush1.msra.mxu0 0.0
    %4747 = vmatprep.subr.mxu0 0.0
    %4748 = vmatpush1.msra.mxu0 0.0
    %4749 = vmatprep.subr.mxu0 0.0
    %4750 = vmatpush1.msra.mxu0 0.0
    %4751 = vmatprep.subr.mxu0 0.0
    %4752 = vmatpush1.msra.mxu0 0.0
    %4753 = vmatprep.subr.mxu0 0.0
    %4754 = vmatpush1.msra.mxu0 0.0
    %4755 = vmatprep.subr.mxu0 0.0
    %4756 = vmatpush1.msra.mxu0 0.0
    %4757 = vmatprep.subr.mxu0 0.0
    %4758 = vmatpush1.msra.mxu0 0.0
    %4759 = vmatprep.subr.mxu0 0.0
    %4760 = vmatpush1.msra.mxu0 0.0
    %4761 = vmatprep.subr.mxu0 0.0
    %4762 = vmatpush1.msra.mxu0 0.0
    %4763 = vmatprep.subr.mxu0 0.0
    %4764 = vmatpush1.msra.mxu0 0.0
    %4765 = vmatprep.subr.mxu0 0.0
    %4766 = vmatpush1.msra.mxu0 0.0
    %4767 = vmatprep.subr.mxu0 0.0
    %4768 = vmatpush1.msra.mxu0 0.0
    %4769 = vmatprep.subr.mxu0 0.0
    %4770 = vmatpush1.msra.mxu0 0.0
    %4771 = vmatprep.subr.mxu0 0.0
    %4772 = vmatpush1.msra.mxu0 0.0
    %4773 = vmatprep.subr.mxu0 0.0
    %4774 = vmatpush1.msra.mxu0 0.0
    %4775 = vmatprep.subr.mxu0 0.0
    %4776 = vmatpush1.msra.mxu0 0.0
    %4777 = vmatprep.subr.mxu0 0.0
    %4778 = vmatpush1.msra.mxu0 0.0
    %4779 = vmatprep.subr.mxu0 0.0
    %4780 = vmatpush1.msra.mxu0 0.0
    %4781 = vmatprep.subr.mxu0 0.0
    %4782 = vmatpush1.msra.mxu0 0.0
    %4783 = vmatprep.subr.mxu0 0.0
    %4784 = vmatpush1.msra.mxu0 0.0
    %4785 = vmatprep.subr.mxu0 0.0
    %4786 = vmatpush1.msra.mxu0 0.0
    %4787 = vmatprep.mubr.f32.mxu0 0.0
    %4788 = vmatmul.mubr.f32.gmra.mrb[0].mxu0 %v4721
    %v4789 = vpop.f32.mrb[0].mxu0
    %v4790 = vadd.f32 0.0, %v4789
    %v4791 = vpop.f32.mrb[0].mxu0
    %4792 = vdwg.mxu0
    %v4794 = vcombine.high %v4790, %v4790
    %v4796 = vunpack.c.l.s4 1966171168
    %v4797 = vunpack.c.0.s8 %v4796
    %v4798 = vlaneseq
    %v4799 = vshrl.u32 %v4798, 7
    %v4800 = vsub.s32 %v4797, %v4799
    %v4801 = vrot.slane %v4790, %v4800
    %v4803 = vunpack.c.l.s4 1966171168
    %v4804 = vunpack.c.0.s8 %v4803
    %v4805 = vlaneseq
    %v4806 = vshrl.u32 %v4805, 7
    %v4807 = vsub.s32 %v4804, %v4806
    %v4808 = vrot.slane %v4794, %v4807
    %v4809 = vcombine.high %v4801, %v4801
    %v4810 = vcombine.high %v4808, %v4808
    %v4812 = vunpack.c.l.s4 1966171168
    %v4813 = vunpack.c.0.s8 %v4812
    %v4814 = vlaneseq
    %v4815 = vshrl.u32 %v4814, 7
    %v4816 = vsub.s32 %v4813, %v4815
    %v4817 = vrot.slane %v4801, %v4816
    %v4819 = vunpack.c.l.s4 1966171168
    %v4820 = vunpack.c.0.s8 %v4819
    %v4821 = vlaneseq
    %v4822 = vshrl.u32 %v4821, 7
    %v4823 = vsub.s32 %v4820, %v4822
    %v4824 = vrot.slane %v4808, %v4823
    %v4826 = vunpack.c.l.s4 1966171168
    %v4827 = vunpack.c.0.s8 %v4826
    %v4828 = vlaneseq
    %v4829 = vshrl.u32 %v4828, 7
    %v4830 = vsub.s32 %v4827, %v4829
    %v4831 = vrot.slane %v4809, %v4830
    %v4833 = vunpack.c.l.s4 1966171168
    %v4834 = vunpack.c.0.s8 %v4833
    %v4835 = vlaneseq
    %v4836 = vshrl.u32 %v4835, 7
    %v4837 = vsub.s32 %v4834, %v4836
    %v4838 = vrot.slane %v4810, %v4837
    %v4839 = vcombine.high %v4817, %v4817
    %v4840 = vcombine.high %v4824, %v4824
    %v4841 = vcombine.high %v4831, %v4831
    %v4842 = vcombine.high %v4838, %v4838
    %4851 = vst.msk [vmem:[#allocation3 + $0xa] sm:$0x1] %vm290, %v4817
    %4852 = vst.msk [vmem:[#allocation3 + $0x1a] sm:$0x1] %vm290, %v4831
    %4853 = vst.msk [vmem:[#allocation3 + $0x2a] sm:$0x1] %vm290, %v4839
    %4854 = vst.msk [vmem:[#allocation3 + $0x3a] sm:$0x1] %vm290, %v4841
    %4855 = vst.msk [vmem:[#allocation3 + $0x4a] sm:$0x1] %vm290, %v4824
    %4856 = vst.msk [vmem:[#allocation3 + $0x5a] sm:$0x1] %vm290, %v4838
    %4857 = vst.msk [vmem:[#allocation3 + $0x6a] sm:$0x1] %vm290, %v4840
    %4858 = vst.msk [vmem:[#allocation3 + $0x7a] sm:$0x1] %vm290, %v4842
    %v4859 = vld [vmem:[#allocation2 + $0x8] sm:$0xff]
    %4861 = vrot.lane.b32.xlu0 %v4859, 80
    %v4862 = vpop.permute.xlu0 %4861
    %v4863 = vsel %vm158, %v4862, 0
    %4865 = vmatprep.subr.mxu0 0.0
    %4866 = vmatpush1.msra.mxu0 %v23
    %4867 = vmatprep.subr.mxu0 0.0
    %4868 = vmatpush1.msra.mxu0 %v24
    %4869 = vmatprep.subr.mxu0 0.0
    %4870 = vmatpush1.msra.mxu0 0.0
    %4871 = vmatprep.subr.mxu0 0.0
    %4872 = vmatpush1.msra.mxu0 0.0
    %4873 = vmatprep.subr.mxu0 0.0
    %4874 = vmatpush1.msra.mxu0 0.0
    %4875 = vmatprep.subr.mxu0 0.0
    %4876 = vmatpush1.msra.mxu0 0.0
    %4877 = vmatprep.subr.mxu0 0.0
    %4878 = vmatpush1.msra.mxu0 0.0
    %4879 = vmatprep.subr.mxu0 0.0
    %4880 = vmatpush1.msra.mxu0 0.0
    %4881 = vmatprep.subr.mxu0 0.0
    %4882 = vmatpush1.msra.mxu0 0.0
    %4883 = vmatprep.subr.mxu0 0.0
    %4884 = vmatpush1.msra.mxu0 0.0
    %4885 = vmatprep.subr.mxu0 0.0
    %4886 = vmatpush1.msra.mxu0 0.0
    %4887 = vmatprep.subr.mxu0 0.0
    %4888 = vmatpush1.msra.mxu0 0.0
    %4889 = vmatprep.subr.mxu0 0.0
    %4890 = vmatpush1.msra.mxu0 0.0
    %4891 = vmatprep.subr.mxu0 0.0
    %4892 = vmatpush1.msra.mxu0 0.0
    %4893 = vmatprep.subr.mxu0 0.0
    %4894 = vmatpush1.msra.mxu0 0.0
    %4895 = vmatprep.subr.mxu0 0.0
    %4896 = vmatpush1.msra.mxu0 0.0
    %4897 = vmatprep.subr.mxu0 0.0
    %4898 = vmatpush1.msra.mxu0 0.0
    %4899 = vmatprep.subr.mxu0 0.0
    %4900 = vmatpush1.msra.mxu0 0.0
    %4901 = vmatprep.subr.mxu0 0.0
    %4902 = vmatpush1.msra.mxu0 0.0
    %4903 = vmatprep.subr.mxu0 0.0
    %4904 = vmatpush1.msra.mxu0 0.0
    %4905 = vmatprep.subr.mxu0 0.0
    %4906 = vmatpush1.msra.mxu0 0.0
    %4907 = vmatprep.subr.mxu0 0.0
    %4908 = vmatpush1.msra.mxu0 0.0
    %4909 = vmatprep.subr.mxu0 0.0
    %4910 = vmatpush1.msra.mxu0 0.0
    %4911 = vmatprep.subr.mxu0 0.0
    %4912 = vmatpush1.msra.mxu0 0.0
    %4913 = vmatprep.subr.mxu0 0.0
    %4914 = vmatpush1.msra.mxu0 0.0
    %4915 = vmatprep.subr.mxu0 0.0
    %4916 = vmatpush1.msra.mxu0 0.0
    %4917 = vmatprep.subr.mxu0 0.0
    %4918 = vmatpush1.msra.mxu0 0.0
    %4919 = vmatprep.subr.mxu0 0.0
    %4920 = vmatpush1.msra.mxu0 0.0
    %4921 = vmatprep.subr.mxu0 0.0
    %4922 = vmatpush1.msra.mxu0 0.0
    %4923 = vmatprep.subr.mxu0 0.0
    %4924 = vmatpush1.msra.mxu0 0.0
    %4925 = vmatprep.subr.mxu0 0.0
    %4926 = vmatpush1.msra.mxu0 0.0
    %4927 = vmatprep.subr.mxu0 0.0
    %4928 = vmatpush1.msra.mxu0 0.0
    %4929 = vmatprep.mubr.f32.mxu0 0.0
    %4930 = vmatmul.mubr.f32.gmra.mrb[0].mxu0 %v4863
    %v4931 = vpop.f32.mrb[0].mxu0
    %v4932 = vadd.f32 0.0, %v4931
    %v4933 = vpop.f32.mrb[0].mxu0
    %4934 = vdwg.mxu0
    %v4936 = vcombine.high %v4932, %v4932
    %v4938 = vunpack.c.l.s4 1966171168
    %v4939 = vunpack.c.0.s8 %v4938
    %v4940 = vlaneseq
    %v4941 = vshrl.u32 %v4940, 7
    %v4942 = vsub.s32 %v4939, %v4941
    %v4943 = vrot.slane %v4932, %v4942
    %v4945 = vunpack.c.l.s4 1966171168
    %v4946 = vunpack.c.0.s8 %v4945
    %v4947 = vlaneseq
    %v4948 = vshrl.u32 %v4947, 7
    %v4949 = vsub.s32 %v4946, %v4948
    %v4950 = vrot.slane %v4936, %v4949
    %v4951 = vcombine.high %v4943, %v4943
    %v4952 = vcombine.high %v4950, %v4950
    %v4954 = vunpack.c.l.s4 1966171168
    %v4955 = vunpack.c.0.s8 %v4954
    %v4956 = vlaneseq
    %v4957 = vshrl.u32 %v4956, 7
    %v4958 = vsub.s32 %v4955, %v4957
    %v4959 = vrot.slane %v4943, %v4958
    %v4961 = vunpack.c.l.s4 1966171168
    %v4962 = vunpack.c.0.s8 %v4961
    %v4963 = vlaneseq
    %v4964 = vshrl.u32 %v4963, 7
    %v4965 = vsub.s32 %v4962, %v4964
    %v4966 = vrot.slane %v4950, %v4965
    %v4968 = vunpack.c.l.s4 1966171168
    %v4969 = vunpack.c.0.s8 %v4968
    %v4970 = vlaneseq
    %v4971 = vshrl.u32 %v4970, 7
    %v4972 = vsub.s32 %v4969, %v4971
    %v4973 = vrot.slane %v4951, %v4972
    %v4975 = vunpack.c.l.s4 1966171168
    %v4976 = vunpack.c.0.s8 %v4975
    %v4977 = vlaneseq
    %v4978 = vshrl.u32 %v4977, 7
    %v4979 = vsub.s32 %v4976, %v4978
    %v4980 = vrot.slane %v4952, %v4979
    %v4981 = vcombine.high %v4959, %v4959
    %v4982 = vcombine.high %v4966, %v4966
    %v4983 = vcombine.high %v4973, %v4973
    %v4984 = vcombine.high %v4980, %v4980
    %4993 = vst.msk [vmem:[#allocation3 + $0xb] sm:$0x1] %vm290, %v4959
    %4994 = vst.msk [vmem:[#allocation3 + $0x1b] sm:$0x1] %vm290, %v4973
    %4995 = vst.msk [vmem:[#allocation3 + $0x2b] sm:$0x1] %vm290, %v4981
    %4996 = vst.msk [vmem:[#allocation3 + $0x3b] sm:$0x1] %vm290, %v4983
    %4997 = vst.msk [vmem:[#allocation3 + $0x4b] sm:$0x1] %vm290, %v4966
    %4998 = vst.msk [vmem:[#allocation3 + $0x5b] sm:$0x1] %vm290, %v4980
    %4999 = vst.msk [vmem:[#allocation3 + $0x6b] sm:$0x1] %vm290, %v4982
    %5000 = vst.msk [vmem:[#allocation3 + $0x7b] sm:$0x1] %vm290, %v4984
    %v5001 = vld [vmem:[#allocation2 + $0x8] sm:$0xff]
    %5003 = vrot.lane.b32.xlu0 %v5001, 64
    %v5004 = vpop.permute.xlu0 %5003
    %v5005 = vsel %vm158, %v5004, 0
    %5007 = vmatprep.subr.mxu0 0.0
    %5008 = vmatpush1.msra.mxu0 %v23
    %5009 = vmatprep.subr.mxu0 0.0
    %5010 = vmatpush1.msra.mxu0 %v24
    %5011 = vmatprep.subr.mxu0 0.0
    %5012 = vmatpush1.msra.mxu0 0.0
    %5013 = vmatprep.subr.mxu0 0.0
    %5014 = vmatpush1.msra.mxu0 0.0
    %5015 = vmatprep.subr.mxu0 0.0
    %5016 = vmatpush1.msra.mxu0 0.0
    %5017 = vmatprep.subr.mxu0 0.0
    %5018 = vmatpush1.msra.mxu0 0.0
    %5019 = vmatprep.subr.mxu0 0.0
    %5020 = vmatpush1.msra.mxu0 0.0
    %5021 = vmatprep.subr.mxu0 0.0
    %5022 = vmatpush1.msra.mxu0 0.0
    %5023 = vmatprep.subr.mxu0 0.0
    %5024 = vmatpush1.msra.mxu0 0.0
    %5025 = vmatprep.subr.mxu0 0.0
    %5026 = vmatpush1.msra.mxu0 0.0
    %5027 = vmatprep.subr.mxu0 0.0
    %5028 = vmatpush1.msra.mxu0 0.0
    %5029 = vmatprep.subr.mxu0 0.0
    %5030 = vmatpush1.msra.mxu0 0.0
    %5031 = vmatprep.subr.mxu0 0.0
    %5032 = vmatpush1.msra.mxu0 0.0
    %5033 = vmatprep.subr.mxu0 0.0
    %5034 = vmatpush1.msra.mxu0 0.0
    %5035 = vmatprep.subr.mxu0 0.0
    %5036 = vmatpush1.msra.mxu0 0.0
    %5037 = vmatprep.subr.mxu0 0.0
    %5038 = vmatpush1.msra.mxu0 0.0
    %5039 = vmatprep.subr.mxu0 0.0
    %5040 = vmatpush1.msra.mxu0 0.0
    %5041 = vmatprep.subr.mxu0 0.0
    %5042 = vmatpush1.msra.mxu0 0.0
    %5043 = vmatprep.subr.mxu0 0.0
    %5044 = vmatpush1.msra.mxu0 0.0
    %5045 = vmatprep.subr.mxu0 0.0
    %5046 = vmatpush1.msra.mxu0 0.0
    %5047 = vmatprep.subr.mxu0 0.0
    %5048 = vmatpush1.msra.mxu0 0.0
    %5049 = vmatprep.subr.mxu0 0.0
    %5050 = vmatpush1.msra.mxu0 0.0
    %5051 = vmatprep.subr.mxu0 0.0
    %5052 = vmatpush1.msra.mxu0 0.0
    %5053 = vmatprep.subr.mxu0 0.0
    %5054 = vmatpush1.msra.mxu0 0.0
    %5055 = vmatprep.subr.mxu0 0.0
    %5056 = vmatpush1.msra.mxu0 0.0
    %5057 = vmatprep.subr.mxu0 0.0
    %5058 = vmatpush1.msra.mxu0 0.0
    %5059 = vmatprep.subr.mxu0 0.0
    %5060 = vmatpush1.msra.mxu0 0.0
    %5061 = vmatprep.subr.mxu0 0.0
    %5062 = vmatpush1.msra.mxu0 0.0
    %5063 = vmatprep.subr.mxu0 0.0
    %5064 = vmatpush1.msra.mxu0 0.0
    %5065 = vmatprep.subr.mxu0 0.0
    %5066 = vmatpush1.msra.mxu0 0.0
    %5067 = vmatprep.subr.mxu0 0.0
    %5068 = vmatpush1.msra.mxu0 0.0
    %5069 = vmatprep.subr.mxu0 0.0
    %5070 = vmatpush1.msra.mxu0 0.0
    %5071 = vmatprep.mubr.f32.mxu0 0.0
    %5072 = vmatmul.mubr.f32.gmra.mrb[0].mxu0 %v5005
    %v5073 = vpop.f32.mrb[0].mxu0
    %v5074 = vadd.f32 0.0, %v5073
    %v5075 = vpop.f32.mrb[0].mxu0
    %5076 = vdwg.mxu0
    %v5078 = vcombine.high %v5074, %v5074
    %v5080 = vunpack.c.l.s4 1966171168
    %v5081 = vunpack.c.0.s8 %v5080
    %v5082 = vlaneseq
    %v5083 = vshrl.u32 %v5082, 7
    %v5084 = vsub.s32 %v5081, %v5083
    %v5085 = vrot.slane %v5074, %v5084
    %v5087 = vunpack.c.l.s4 1966171168
    %v5088 = vunpack.c.0.s8 %v5087
    %v5089 = vlaneseq
    %v5090 = vshrl.u32 %v5089, 7
    %v5091 = vsub.s32 %v5088, %v5090
    %v5092 = vrot.slane %v5078, %v5091
    %v5093 = vcombine.high %v5085, %v5085
    %v5094 = vcombine.high %v5092, %v5092
    %v5096 = vunpack.c.l.s4 1966171168
    %v5097 = vunpack.c.0.s8 %v5096
    %v5098 = vlaneseq
    %v5099 = vshrl.u32 %v5098, 7
    %v5100 = vsub.s32 %v5097, %v5099
    %v5101 = vrot.slane %v5085, %v5100
    %v5103 = vunpack.c.l.s4 1966171168
    %v5104 = vunpack.c.0.s8 %v5103
    %v5105 = vlaneseq
    %v5106 = vshrl.u32 %v5105, 7
    %v5107 = vsub.s32 %v5104, %v5106
    %v5108 = vrot.slane %v5092, %v5107
    %v5110 = vunpack.c.l.s4 1966171168
    %v5111 = vunpack.c.0.s8 %v5110
    %v5112 = vlaneseq
    %v5113 = vshrl.u32 %v5112, 7
    %v5114 = vsub.s32 %v5111, %v5113
    %v5115 = vrot.slane %v5093, %v5114
    %v5117 = vunpack.c.l.s4 1966171168
    %v5118 = vunpack.c.0.s8 %v5117
    %v5119 = vlaneseq
    %v5120 = vshrl.u32 %v5119, 7
    %v5121 = vsub.s32 %v5118, %v5120
    %v5122 = vrot.slane %v5094, %v5121
    %v5123 = vcombine.high %v5101, %v5101
    %v5124 = vcombine.high %v5108, %v5108
    %v5125 = vcombine.high %v5115, %v5115
    %v5126 = vcombine.high %v5122, %v5122
    %5135 = vst.msk [vmem:[#allocation3 + $0xc] sm:$0x1] %vm290, %v5101
    %5136 = vst.msk [vmem:[#allocation3 + $0x1c] sm:$0x1] %vm290, %v5115
    %5137 = vst.msk [vmem:[#allocation3 + $0x2c] sm:$0x1] %vm290, %v5123
    %5138 = vst.msk [vmem:[#allocation3 + $0x3c] sm:$0x1] %vm290, %v5125
    %5139 = vst.msk [vmem:[#allocation3 + $0x4c] sm:$0x1] %vm290, %v5108
    %5140 = vst.msk [vmem:[#allocation3 + $0x5c] sm:$0x1] %vm290, %v5122
    %5141 = vst.msk [vmem:[#allocation3 + $0x6c] sm:$0x1] %vm290, %v5124
    %5142 = vst.msk [vmem:[#allocation3 + $0x7c] sm:$0x1] %vm290, %v5126
    %v5143 = vld [vmem:[#allocation2 + $0x8] sm:$0xff]
    %5145 = vrot.lane.b32.xlu0 %v5143, 48
    %v5146 = vpop.permute.xlu0 %5145
    %v5147 = vsel %vm158, %v5146, 0
    %5149 = vmatprep.subr.mxu0 0.0
    %5150 = vmatpush1.msra.mxu0 %v23
    %5151 = vmatprep.subr.mxu0 0.0
    %5152 = vmatpush1.msra.mxu0 %v24
    %5153 = vmatprep.subr.mxu0 0.0
    %5154 = vmatpush1.msra.mxu0 0.0
    %5155 = vmatprep.subr.mxu0 0.0
    %5156 = vmatpush1.msra.mxu0 0.0
    %5157 = vmatprep.subr.mxu0 0.0
    %5158 = vmatpush1.msra.mxu0 0.0
    %5159 = vmatprep.subr.mxu0 0.0
    %5160 = vmatpush1.msra.mxu0 0.0
    %5161 = vmatprep.subr.mxu0 0.0
    %5162 = vmatpush1.msra.mxu0 0.0
    %5163 = vmatprep.subr.mxu0 0.0
    %5164 = vmatpush1.msra.mxu0 0.0
    %5165 = vmatprep.subr.mxu0 0.0
    %5166 = vmatpush1.msra.mxu0 0.0
    %5167 = vmatprep.subr.mxu0 0.0
    %5168 = vmatpush1.msra.mxu0 0.0
    %5169 = vmatprep.subr.mxu0 0.0
    %5170 = vmatpush1.msra.mxu0 0.0
    %5171 = vmatprep.subr.mxu0 0.0
    %5172 = vmatpush1.msra.mxu0 0.0
    %5173 = vmatprep.subr.mxu0 0.0
    %5174 = vmatpush1.msra.mxu0 0.0
    %5175 = vmatprep.subr.mxu0 0.0
    %5176 = vmatpush1.msra.mxu0 0.0
    %5177 = vmatprep.subr.mxu0 0.0
    %5178 = vmatpush1.msra.mxu0 0.0
    %5179 = vmatprep.subr.mxu0 0.0
    %5180 = vmatpush1.msra.mxu0 0.0
    %5181 = vmatprep.subr.mxu0 0.0
    %5182 = vmatpush1.msra.mxu0 0.0
    %5183 = vmatprep.subr.mxu0 0.0
    %5184 = vmatpush1.msra.mxu0 0.0
    %5185 = vmatprep.subr.mxu0 0.0
    %5186 = vmatpush1.msra.mxu0 0.0
    %5187 = vmatprep.subr.mxu0 0.0
    %5188 = vmatpush1.msra.mxu0 0.0
    %5189 = vmatprep.subr.mxu0 0.0
    %5190 = vmatpush1.msra.mxu0 0.0
    %5191 = vmatprep.subr.mxu0 0.0
    %5192 = vmatpush1.msra.mxu0 0.0
    %5193 = vmatprep.subr.mxu0 0.0
    %5194 = vmatpush1.msra.mxu0 0.0
    %5195 = vmatprep.subr.mxu0 0.0
    %5196 = vmatpush1.msra.mxu0 0.0
    %5197 = vmatprep.subr.mxu0 0.0
    %5198 = vmatpush1.msra.mxu0 0.0
    %5199 = vmatprep.subr.mxu0 0.0
    %5200 = vmatpush1.msra.mxu0 0.0
    %5201 = vmatprep.subr.mxu0 0.0
    %5202 = vmatpush1.msra.mxu0 0.0
    %5203 = vmatprep.subr.mxu0 0.0
    %5204 = vmatpush1.msra.mxu0 0.0
    %5205 = vmatprep.subr.mxu0 0.0
    %5206 = vmatpush1.msra.mxu0 0.0
    %5207 = vmatprep.subr.mxu0 0.0
    %5208 = vmatpush1.msra.mxu0 0.0
    %5209 = vmatprep.subr.mxu0 0.0
    %5210 = vmatpush1.msra.mxu0 0.0
    %5211 = vmatprep.subr.mxu0 0.0
    %5212 = vmatpush1.msra.mxu0 0.0
    %5213 = vmatprep.mubr.f32.mxu0 0.0
    %5214 = vmatmul.mubr.f32.gmra.mrb[0].mxu0 %v5147
    %v5215 = vpop.f32.mrb[0].mxu0
    %v5216 = vadd.f32 0.0, %v5215
    %v5217 = vpop.f32.mrb[0].mxu0
    %5218 = vdwg.mxu0
    %v5220 = vcombine.high %v5216, %v5216
    %v5222 = vunpack.c.l.s4 1966171168
    %v5223 = vunpack.c.0.s8 %v5222
    %v5224 = vlaneseq
    %v5225 = vshrl.u32 %v5224, 7
    %v5226 = vsub.s32 %v5223, %v5225
    %v5227 = vrot.slane %v5216, %v5226
    %v5229 = vunpack.c.l.s4 1966171168
    %v5230 = vunpack.c.0.s8 %v5229
    %v5231 = vlaneseq
    %v5232 = vshrl.u32 %v5231, 7
    %v5233 = vsub.s32 %v5230, %v5232
    %v5234 = vrot.slane %v5220, %v5233
    %v5235 = vcombine.high %v5227, %v5227
    %v5236 = vcombine.high %v5234, %v5234
    %v5238 = vunpack.c.l.s4 1966171168
    %v5239 = vunpack.c.0.s8 %v5238
    %v5240 = vlaneseq
    %v5241 = vshrl.u32 %v5240, 7
    %v5242 = vsub.s32 %v5239, %v5241
    %v5243 = vrot.slane %v5227, %v5242
    %v5245 = vunpack.c.l.s4 1966171168
    %v5246 = vunpack.c.0.s8 %v5245
    %v5247 = vlaneseq
    %v5248 = vshrl.u32 %v5247, 7
    %v5249 = vsub.s32 %v5246, %v5248
    %v5250 = vrot.slane %v5234, %v5249
    %v5252 = vunpack.c.l.s4 1966171168
    %v5253 = vunpack.c.0.s8 %v5252
    %v5254 = vlaneseq
    %v5255 = vshrl.u32 %v5254, 7
    %v5256 = vsub.s32 %v5253, %v5255
    %v5257 = vrot.slane %v5235, %v5256
    %v5259 = vunpack.c.l.s4 1966171168
    %v5260 = vunpack.c.0.s8 %v5259
    %v5261 = vlaneseq
    %v5262 = vshrl.u32 %v5261, 7
    %v5263 = vsub.s32 %v5260, %v5262
    %v5264 = vrot.slane %v5236, %v5263
    %v5265 = vcombine.high %v5243, %v5243
    %v5266 = vcombine.high %v5250, %v5250
    %v5267 = vcombine.high %v5257, %v5257
    %v5268 = vcombine.high %v5264, %v5264
    %5277 = vst.msk [vmem:[#allocation3 + $0xd] sm:$0x1] %vm290, %v5243
    %5278 = vst.msk [vmem:[#allocation3 + $0x1d] sm:$0x1] %vm290, %v5257
    %5279 = vst.msk [vmem:[#allocation3 + $0x2d] sm:$0x1] %vm290, %v5265
    %5280 = vst.msk [vmem:[#allocation3 + $0x3d] sm:$0x1] %vm290, %v5267
    %5281 = vst.msk [vmem:[#allocation3 + $0x4d] sm:$0x1] %vm290, %v5250
    %5282 = vst.msk [vmem:[#allocation3 + $0x5d] sm:$0x1] %vm290, %v5264
    %5283 = vst.msk [vmem:[#allocation3 + $0x6d] sm:$0x1] %vm290, %v5266
    %5284 = vst.msk [vmem:[#allocation3 + $0x7d] sm:$0x1] %vm290, %v5268
    %v5285 = vld [vmem:[#allocation2 + $0x8] sm:$0xff]
    %5287 = vrot.lane.b32.xlu0 %v5285, 32
    %v5288 = vpop.permute.xlu0 %5287
    %v5289 = vsel %vm158, %v5288, 0
    %5291 = vmatprep.subr.mxu0 0.0
    %5292 = vmatpush1.msra.mxu0 %v23
    %5293 = vmatprep.subr.mxu0 0.0
    %5294 = vmatpush1.msra.mxu0 %v24
    %5295 = vmatprep.subr.mxu0 0.0
    %5296 = vmatpush1.msra.mxu0 0.0
    %5297 = vmatprep.subr.mxu0 0.0
    %5298 = vmatpush1.msra.mxu0 0.0
    %5299 = vmatprep.subr.mxu0 0.0
    %5300 = vmatpush1.msra.mxu0 0.0
    %5301 = vmatprep.subr.mxu0 0.0
    %5302 = vmatpush1.msra.mxu0 0.0
    %5303 = vmatprep.subr.mxu0 0.0
    %5304 = vmatpush1.msra.mxu0 0.0
    %5305 = vmatprep.subr.mxu0 0.0
    %5306 = vmatpush1.msra.mxu0 0.0
    %5307 = vmatprep.subr.mxu0 0.0
    %5308 = vmatpush1.msra.mxu0 0.0
    %5309 = vmatprep.subr.mxu0 0.0
    %5310 = vmatpush1.msra.mxu0 0.0
    %5311 = vmatprep.subr.mxu0 0.0
    %5312 = vmatpush1.msra.mxu0 0.0
    %5313 = vmatprep.subr.mxu0 0.0
    %5314 = vmatpush1.msra.mxu0 0.0
    %5315 = vmatprep.subr.mxu0 0.0
    %5316 = vmatpush1.msra.mxu0 0.0
    %5317 = vmatprep.subr.mxu0 0.0
    %5318 = vmatpush1.msra.mxu0 0.0
    %5319 = vmatprep.subr.mxu0 0.0
    %5320 = vmatpush1.msra.mxu0 0.0
    %5321 = vmatprep.subr.mxu0 0.0
    %5322 = vmatpush1.msra.mxu0 0.0
    %5323 = vmatprep.subr.mxu0 0.0
    %5324 = vmatpush1.msra.mxu0 0.0
    %5325 = vmatprep.subr.mxu0 0.0
    %5326 = vmatpush1.msra.mxu0 0.0
    %5327 = vmatprep.subr.mxu0 0.0
    %5328 = vmatpush1.msra.mxu0 0.0
    %5329 = vmatprep.subr.mxu0 0.0
    %5330 = vmatpush1.msra.mxu0 0.0
    %5331 = vmatprep.subr.mxu0 0.0
    %5332 = vmatpush1.msra.mxu0 0.0
    %5333 = vmatprep.subr.mxu0 0.0
    %5334 = vmatpush1.msra.mxu0 0.0
    %5335 = vmatprep.subr.mxu0 0.0
    %5336 = vmatpush1.msra.mxu0 0.0
    %5337 = vmatprep.subr.mxu0 0.0
    %5338 = vmatpush1.msra.mxu0 0.0
    %5339 = vmatprep.subr.mxu0 0.0
    %5340 = vmatpush1.msra.mxu0 0.0
    %5341 = vmatprep.subr.mxu0 0.0
    %5342 = vmatpush1.msra.mxu0 0.0
    %5343 = vmatprep.subr.mxu0 0.0
    %5344 = vmatpush1.msra.mxu0 0.0
    %5345 = vmatprep.subr.mxu0 0.0
    %5346 = vmatpush1.msra.mxu0 0.0
    %5347 = vmatprep.subr.mxu0 0.0
    %5348 = vmatpush1.msra.mxu0 0.0
    %5349 = vmatprep.subr.mxu0 0.0
    %5350 = vmatpush1.msra.mxu0 0.0
    %5351 = vmatprep.subr.mxu0 0.0
    %5352 = vmatpush1.msra.mxu0 0.0
    %5353 = vmatprep.subr.mxu0 0.0
    %5354 = vmatpush1.msra.mxu0 0.0
    %5355 = vmatprep.mubr.f32.mxu0 0.0
    %5356 = vmatmul.mubr.f32.gmra.mrb[0].mxu0 %v5289
    %v5357 = vpop.f32.mrb[0].mxu0
    %v5358 = vadd.f32 0.0, %v5357
    %v5359 = vpop.f32.mrb[0].mxu0
    %5360 = vdwg.mxu0
    %v5362 = vcombine.high %v5358, %v5358
    %v5364 = vunpack.c.l.s4 1966171168
    %v5365 = vunpack.c.0.s8 %v5364
    %v5366 = vlaneseq
    %v5367 = vshrl.u32 %v5366, 7
    %v5368 = vsub.s32 %v5365, %v5367
    %v5369 = vrot.slane %v5358, %v5368
    %v5371 = vunpack.c.l.s4 1966171168
    %v5372 = vunpack.c.0.s8 %v5371
    %v5373 = vlaneseq
    %v5374 = vshrl.u32 %v5373, 7
    %v5375 = vsub.s32 %v5372, %v5374
    %v5376 = vrot.slane %v5362, %v5375
    %v5377 = vcombine.high %v5369, %v5369
    %v5378 = vcombine.high %v5376, %v5376
    %v5380 = vunpack.c.l.s4 1966171168
    %v5381 = vunpack.c.0.s8 %v5380
    %v5382 = vlaneseq
    %v5383 = vshrl.u32 %v5382, 7
    %v5384 = vsub.s32 %v5381, %v5383
    %v5385 = vrot.slane %v5369, %v5384
    %v5387 = vunpack.c.l.s4 1966171168
    %v5388 = vunpack.c.0.s8 %v5387
    %v5389 = vlaneseq
    %v5390 = vshrl.u32 %v5389, 7
    %v5391 = vsub.s32 %v5388, %v5390
    %v5392 = vrot.slane %v5376, %v5391
    %v5394 = vunpack.c.l.s4 1966171168
    %v5395 = vunpack.c.0.s8 %v5394
    %v5396 = vlaneseq
    %v5397 = vshrl.u32 %v5396, 7
    %v5398 = vsub.s32 %v5395, %v5397
    %v5399 = vrot.slane %v5377, %v5398
    %v5401 = vunpack.c.l.s4 1966171168
    %v5402 = vunpack.c.0.s8 %v5401
    %v5403 = vlaneseq
    %v5404 = vshrl.u32 %v5403, 7
    %v5405 = vsub.s32 %v5402, %v5404
    %v5406 = vrot.slane %v5378, %v5405
    %v5407 = vcombine.high %v5385, %v5385
    %v5408 = vcombine.high %v5392, %v5392
    %v5409 = vcombine.high %v5399, %v5399
    %v5410 = vcombine.high %v5406, %v5406
    %5419 = vst.msk [vmem:[#allocation3 + $0xe] sm:$0x1] %vm290, %v5385
    %5420 = vst.msk [vmem:[#allocation3 + $0x1e] sm:$0x1] %vm290, %v5399
    %5421 = vst.msk [vmem:[#allocation3 + $0x2e] sm:$0x1] %vm290, %v5407
    %5422 = vst.msk [vmem:[#allocation3 + $0x3e] sm:$0x1] %vm290, %v5409
    %5423 = vst.msk [vmem:[#allocation3 + $0x4e] sm:$0x1] %vm290, %v5392
    %5424 = vst.msk [vmem:[#allocation3 + $0x5e] sm:$0x1] %vm290, %v5406
    %5425 = vst.msk [vmem:[#allocation3 + $0x6e] sm:$0x1] %vm290, %v5408
    %5426 = vst.msk [vmem:[#allocation3 + $0x7e] sm:$0x1] %vm290, %v5410
    %v5427 = vld [vmem:[#allocation2 + $0x8] sm:$0xff]
    %5429 = vrot.lane.b32.xlu0 %v5427, 16
    %v5430 = vpop.permute.xlu0 %5429
    %v5431 = vsel %vm158, %v5430, 0
    %5433 = vmatprep.subr.mxu0 0.0
    %5434 = vmatpush1.msra.mxu0 %v23
    %5435 = vmatprep.subr.mxu0 0.0
    %5436 = vmatpush1.msra.mxu0 %v24
    %5437 = vmatprep.subr.mxu0 0.0
    %5438 = vmatpush1.msra.mxu0 0.0
    %5439 = vmatprep.subr.mxu0 0.0
    %5440 = vmatpush1.msra.mxu0 0.0
    %5441 = vmatprep.subr.mxu0 0.0
    %5442 = vmatpush1.msra.mxu0 0.0
    %5443 = vmatprep.subr.mxu0 0.0
    %5444 = vmatpush1.msra.mxu0 0.0
    %5445 = vmatprep.subr.mxu0 0.0
    %5446 = vmatpush1.msra.mxu0 0.0
    %5447 = vmatprep.subr.mxu0 0.0
    %5448 = vmatpush1.msra.mxu0 0.0
    %5449 = vmatprep.subr.mxu0 0.0
    %5450 = vmatpush1.msra.mxu0 0.0
    %5451 = vmatprep.subr.mxu0 0.0
    %5452 = vmatpush1.msra.mxu0 0.0
    %5453 = vmatprep.subr.mxu0 0.0
    %5454 = vmatpush1.msra.mxu0 0.0
    %5455 = vmatprep.subr.mxu0 0.0
    %5456 = vmatpush1.msra.mxu0 0.0
    %5457 = vmatprep.subr.mxu0 0.0
    %5458 = vmatpush1.msra.mxu0 0.0
    %5459 = vmatprep.subr.mxu0 0.0
    %5460 = vmatpush1.msra.mxu0 0.0
    %5461 = vmatprep.subr.mxu0 0.0
    %5462 = vmatpush1.msra.mxu0 0.0
    %5463 = vmatprep.subr.mxu0 0.0
    %5464 = vmatpush1.msra.mxu0 0.0
    %5465 = vmatprep.subr.mxu0 0.0
    %5466 = vmatpush1.msra.mxu0 0.0
    %5467 = vmatprep.subr.mxu0 0.0
    %5468 = vmatpush1.msra.mxu0 0.0
    %5469 = vmatprep.subr.mxu0 0.0
    %5470 = vmatpush1.msra.mxu0 0.0
    %5471 = vmatprep.subr.mxu0 0.0
    %5472 = vmatpush1.msra.mxu0 0.0
    %5473 = vmatprep.subr.mxu0 0.0
    %5474 = vmatpush1.msra.mxu0 0.0
    %5475 = vmatprep.subr.mxu0 0.0
    %5476 = vmatpush1.msra.mxu0 0.0
    %5477 = vmatprep.subr.mxu0 0.0
    %5478 = vmatpush1.msra.mxu0 0.0
    %5479 = vmatprep.subr.mxu0 0.0
    %5480 = vmatpush1.msra.mxu0 0.0
    %5481 = vmatprep.subr.mxu0 0.0
    %5482 = vmatpush1.msra.mxu0 0.0
    %5483 = vmatprep.subr.mxu0 0.0
    %5484 = vmatpush1.msra.mxu0 0.0
    %5485 = vmatprep.subr.mxu0 0.0
    %5486 = vmatpush1.msra.mxu0 0.0
    %5487 = vmatprep.subr.mxu0 0.0
    %5488 = vmatpush1.msra.mxu0 0.0
    %5489 = vmatprep.subr.mxu0 0.0
    %5490 = vmatpush1.msra.mxu0 0.0
    %5491 = vmatprep.subr.mxu0 0.0
    %5492 = vmatpush1.msra.mxu0 0.0
    %5493 = vmatprep.subr.mxu0 0.0
    %5494 = vmatpush1.msra.mxu0 0.0
    %5495 = vmatprep.subr.mxu0 0.0
    %5496 = vmatpush1.msra.mxu0 0.0
    %5497 = vmatprep.mubr.f32.mxu0 0.0
    %5498 = vmatmul.mubr.f32.gmra.mrb[0].mxu0 %v5431
    %v5499 = vpop.f32.mrb[0].mxu0
    %v5500 = vadd.f32 0.0, %v5499
    %v5501 = vpop.f32.mrb[0].mxu0
    %5502 = vdwg.mxu0
    %v5504 = vcombine.high %v5500, %v5500
    %v5506 = vunpack.c.l.s4 1966171168
    %v5507 = vunpack.c.0.s8 %v5506
    %v5508 = vlaneseq
    %v5509 = vshrl.u32 %v5508, 7
    %v5510 = vsub.s32 %v5507, %v5509
    %v5511 = vrot.slane %v5500, %v5510
    %v5513 = vunpack.c.l.s4 1966171168
    %v5514 = vunpack.c.0.s8 %v5513
    %v5515 = vlaneseq
    %v5516 = vshrl.u32 %v5515, 7
    %v5517 = vsub.s32 %v5514, %v5516
    %v5518 = vrot.slane %v5504, %v5517
    %v5519 = vcombine.high %v5511, %v5511
    %v5520 = vcombine.high %v5518, %v5518
    %v5522 = vunpack.c.l.s4 1966171168
    %v5523 = vunpack.c.0.s8 %v5522
    %v5524 = vlaneseq
    %v5525 = vshrl.u32 %v5524, 7
    %v5526 = vsub.s32 %v5523, %v5525
    %v5527 = vrot.slane %v5511, %v5526
    %v5529 = vunpack.c.l.s4 1966171168
    %v5530 = vunpack.c.0.s8 %v5529
    %v5531 = vlaneseq
    %v5532 = vshrl.u32 %v5531, 7
    %v5533 = vsub.s32 %v5530, %v5532
    %v5534 = vrot.slane %v5518, %v5533
    %v5536 = vunpack.c.l.s4 1966171168
    %v5537 = vunpack.c.0.s8 %v5536
    %v5538 = vlaneseq
    %v5539 = vshrl.u32 %v5538, 7
    %v5540 = vsub.s32 %v5537, %v5539
    %v5541 = vrot.slane %v5519, %v5540
    %v5543 = vunpack.c.l.s4 1966171168
    %v5544 = vunpack.c.0.s8 %v5543
    %v5545 = vlaneseq
    %v5546 = vshrl.u32 %v5545, 7
    %v5547 = vsub.s32 %v5544, %v5546
    %v5548 = vrot.slane %v5520, %v5547
    %v5549 = vcombine.high %v5527, %v5527
    %v5550 = vcombine.high %v5534, %v5534
    %v5551 = vcombine.high %v5541, %v5541
    %v5552 = vcombine.high %v5548, %v5548
    %5561 = vst.msk [vmem:[#allocation3 + $0xf] sm:$0x1] %vm290, %v5527
    %5562 = vst.msk [vmem:[#allocation3 + $0x1f] sm:$0x1] %vm290, %v5541
    %5563 = vst.msk [vmem:[#allocation3 + $0x2f] sm:$0x1] %vm290, %v5549
    %5564 = vst.msk [vmem:[#allocation3 + $0x3f] sm:$0x1] %vm290, %v5551
    %5565 = vst.msk [vmem:[#allocation3 + $0x4f] sm:$0x1] %vm290, %v5534
    %5566 = vst.msk [vmem:[#allocation3 + $0x5f] sm:$0x1] %vm290, %v5548
    %5567 = vst.msk [vmem:[#allocation3 + $0x6f] sm:$0x1] %vm290, %v5550
    %5568 = vst.msk [vmem:[#allocation3 + $0x7f] sm:$0x1] %vm290, %v5552
    %v5569 = vld [vmem:[#allocation3] sm:$0xff]
    %v5570 = vld [vmem:[#allocation3 + $0x8] sm:$0xff]
    %5571 = vmatprep.subr.mxu0 0.0
    %5572 = vmatpush1.msra.mxu0 %v5569
    %5573 = vmatprep.subr.mxu0 0.0
    %5574 = vmatpush1.msra.mxu0 %v5570
    %5575 = vmatprep.subr.mxu0 0.0
    %5576 = vmatpush1.msra.mxu0 0.0
    %5577 = vmatprep.subr.mxu0 0.0
    %5578 = vmatpush1.msra.mxu0 0.0
    %5579 = vmatprep.subr.mxu0 0.0
    %5580 = vmatpush1.msra.mxu0 0.0
    %5581 = vmatprep.subr.mxu0 0.0
    %5582 = vmatpush1.msra.mxu0 0.0
    %5583 = vmatprep.subr.mxu0 0.0
    %5584 = vmatpush1.msra.mxu0 0.0
    %5585 = vmatprep.subr.mxu0 0.0
    %5586 = vmatpush1.msra.mxu0 0.0
    %5587 = vmatprep.subr.mxu0 0.0
    %5588 = vmatpush1.msra.mxu0 0.0
    %5589 = vmatprep.subr.mxu0 0.0
    %5590 = vmatpush1.msra.mxu0 0.0
    %5591 = vmatprep.subr.mxu0 0.0
    %5592 = vmatpush1.msra.mxu0 0.0
    %5593 = vmatprep.subr.mxu0 0.0
    %5594 = vmatpush1.msra.mxu0 0.0
    %5595 = vmatprep.subr.mxu0 0.0
    %5596 = vmatpush1.msra.mxu0 0.0
    %5597 = vmatprep.subr.mxu0 0.0
    %5598 = vmatpush1.msra.mxu0 0.0
    %5599 = vmatprep.subr.mxu0 0.0
    %5600 = vmatpush1.msra.mxu0 0.0
    %5601 = vmatprep.subr.mxu0 0.0
    %5602 = vmatpush1.msra.mxu0 0.0
    %5603 = vmatprep.subr.mxu0 0.0
    %5604 = vmatpush1.msra.mxu0 0.0
    %5605 = vmatprep.subr.mxu0 0.0
    %5606 = vmatpush1.msra.mxu0 0.0
    %5607 = vmatprep.subr.mxu0 0.0
    %5608 = vmatpush1.msra.mxu0 0.0
    %5609 = vmatprep.subr.mxu0 0.0
    %5610 = vmatpush1.msra.mxu0 0.0
    %5611 = vmatprep.subr.mxu0 0.0
    %5612 = vmatpush1.msra.mxu0 0.0
    %5613 = vmatprep.subr.mxu0 0.0
    %5614 = vmatpush1.msra.mxu0 0.0
    %5615 = vmatprep.subr.mxu0 0.0
    %5616 = vmatpush1.msra.mxu0 0.0
    %5617 = vmatprep.subr.mxu0 0.0
    %5618 = vmatpush1.msra.mxu0 0.0
    %5619 = vmatprep.subr.mxu0 0.0
    %5620 = vmatpush1.msra.mxu0 0.0
    %5621 = vmatprep.subr.mxu0 0.0
    %5622 = vmatpush1.msra.mxu0 0.0
    %5623 = vmatprep.subr.mxu0 0.0
    %5624 = vmatpush1.msra.mxu0 0.0
    %5625 = vmatprep.subr.mxu0 0.0
    %5626 = vmatpush1.msra.mxu0 0.0
    %5627 = vmatprep.subr.mxu0 0.0
    %5628 = vmatpush1.msra.mxu0 0.0
    %5629 = vmatprep.subr.mxu0 0.0
    %5630 = vmatpush1.msra.mxu0 0.0
    %5631 = vmatprep.subr.mxu0 0.0
    %5632 = vmatpush1.msra.mxu0 0.0
    %5633 = vmatprep.subr.mxu0 0.0
    %5634 = vmatpush1.msra.mxu0 0.0
    %5635 = vmatprep.mubr.f32.mxu0 0.0
    %5636 = vmatmul.mubr.f32.gmra.mrb[0].mxu0 %v2430
    %v5637 = vpop.f32.mrb[0].mxu0
    %v5638 = vadd.f32 0.0, %v5637
    %v5639 = vpop.f32.mrb[0].mxu0
    %5640 = vmatprep.mubr.f32.mxu0 0.0
    %5641 = vmatmul.mubr.f32.gmra.mrb[0].mxu0 %v2433
    %v5642 = vpop.f32.mrb[0].mxu0
    %v5643 = vadd.f32 0.0, %v5642
    %v5644 = vpop.f32.mrb[0].mxu0
    %5645 = vmatprep.mubr.f32.mxu0 0.0
    %5646 = vmatmul.mubr.f32.gmra.mrb[0].mxu0 %v2436
    %v5647 = vpop.f32.mrb[0].mxu0
    %v5648 = vadd.f32 0.0, %v5647
    %v5649 = vpop.f32.mrb[0].mxu0
    %5650 = vmatprep.mubr.f32.mxu0 0.0
    %5651 = vmatmul.mubr.f32.gmra.mrb[0].mxu0 %v2439
    %v5652 = vpop.f32.mrb[0].mxu0
    %v5653 = vadd.f32 0.0, %v5652
    %v5654 = vpop.f32.mrb[0].mxu0
    %5655 = vdwg.mxu0
    %s5656 = scalar_lea.vmem [#allocation4], 256
    %5657 = vst.msk [vmem:[%s5656] sm:$0xff] %vm42, %v5638
    %5658 = vst.msk [vmem:[%s5656 + $0x8] sm:$0xff] %vm42, %v5643
    %5659 = vst.msk [vmem:[%s5656 + $0x10] sm:$0xff] %vm42, %v5648
    %5660 = vst.msk [vmem:[%s5656 + $0x18] sm:$0xff] %vm42, %v5653
    %v5661 = vld [vmem:[%s2530] sm:$0xff]
    %v5662 = vld [vmem:[%s2530 + $0x8] sm:$0xff]
    %5663 = vmatprep.subr.mxu0 0.0
    %5664 = vmatpush1.msra.mxu0 %v5661
    %5665 = vmatprep.subr.mxu0 0.0
    %5666 = vmatpush1.msra.mxu0 %v5662
    %5667 = vmatprep.subr.mxu0 0.0
    %5668 = vmatpush1.msra.mxu0 0.0
    %5669 = vmatprep.subr.mxu0 0.0
    %5670 = vmatpush1.msra.mxu0 0.0
    %5671 = vmatprep.subr.mxu0 0.0
    %5672 = vmatpush1.msra.mxu0 0.0
    %5673 = vmatprep.subr.mxu0 0.0
    %5674 = vmatpush1.msra.mxu0 0.0
    %5675 = vmatprep.subr.mxu0 0.0
    %5676 = vmatpush1.msra.mxu0 0.0
    %5677 = vmatprep.subr.mxu0 0.0
    %5678 = vmatpush1.msra.mxu0 0.0
    %5679 = vmatprep.subr.mxu0 0.0
    %5680 = vmatpush1.msra.mxu0 0.0
    %5681 = vmatprep.subr.mxu0 0.0
    %5682 = vmatpush1.msra.mxu0 0.0
    %5683 = vmatprep.subr.mxu0 0.0
    %5684 = vmatpush1.msra.mxu0 0.0
    %5685 = vmatprep.subr.mxu0 0.0
    %5686 = vmatpush1.msra.mxu0 0.0
    %5687 = vmatprep.subr.mxu0 0.0
    %5688 = vmatpush1.msra.mxu0 0.0
    %5689 = vmatprep.subr.mxu0 0.0
    %5690 = vmatpush1.msra.mxu0 0.0
    %5691 = vmatprep.subr.mxu0 0.0
    %5692 = vmatpush1.msra.mxu0 0.0
    %5693 = vmatprep.subr.mxu0 0.0
    %5694 = vmatpush1.msra.mxu0 0.0
    %5695 = vmatprep.subr.mxu0 0.0
    %5696 = vmatpush1.msra.mxu0 0.0
    %5697 = vmatprep.subr.mxu0 0.0
    %5698 = vmatpush1.msra.mxu0 0.0
    %5699 = vmatprep.subr.mxu0 0.0
    %5700 = vmatpush1.msra.mxu0 0.0
    %5701 = vmatprep.subr.mxu0 0.0
    %5702 = vmatpush1.msra.mxu0 0.0
    %5703 = vmatprep.subr.mxu0 0.0
    %5704 = vmatpush1.msra.mxu0 0.0
    %5705 = vmatprep.subr.mxu0 0.0
    %5706 = vmatpush1.msra.mxu0 0.0
    %5707 = vmatprep.subr.mxu0 0.0
    %5708 = vmatpush1.msra.mxu0 0.0
    %5709 = vmatprep.subr.mxu0 0.0
    %5710 = vmatpush1.msra.mxu0 0.0
    %5711 = vmatprep.subr.mxu0 0.0
    %5712 = vmatpush1.msra.mxu0 0.0
    %5713 = vmatprep.subr.mxu0 0.0
    %5714 = vmatpush1.msra.mxu0 0.0
    %5715 = vmatprep.subr.mxu0 0.0
    %5716 = vmatpush1.msra.mxu0 0.0
    %5717 = vmatprep.subr.mxu0 0.0
    %5718 = vmatpush1.msra.mxu0 0.0
    %5719 = vmatprep.subr.mxu0 0.0
    %5720 = vmatpush1.msra.mxu0 0.0
    %5721 = vmatprep.subr.mxu0 0.0
    %5722 = vmatpush1.msra.mxu0 0.0
    %5723 = vmatprep.subr.mxu0 0.0
    %5724 = vmatpush1.msra.mxu0 0.0
    %5725 = vmatprep.subr.mxu0 0.0
    %5726 = vmatpush1.msra.mxu0 0.0
    %5727 = vmatprep.mubr.f32.mxu0 0.0
    %5728 = vmatmul.mubr.f32.gmra.mrb[0].mxu0 %v2430
    %v5729 = vpop.f32.mrb[0].mxu0
    %v5730 = vadd.f32 0.0, %v5729
    %v5731 = vpop.f32.mrb[0].mxu0
    %5732 = vmatprep.mubr.f32.mxu0 0.0
    %5733 = vmatmul.mubr.f32.gmra.mrb[0].mxu0 %v2433
    %v5734 = vpop.f32.mrb[0].mxu0
    %v5735 = vadd.f32 0.0, %v5734
    %v5736 = vpop.f32.mrb[0].mxu0
    %5737 = vmatprep.mubr.f32.mxu0 0.0
    %5738 = vmatmul.mubr.f32.gmra.mrb[0].mxu0 %v2436
    %v5739 = vpop.f32.mrb[0].mxu0
    %v5740 = vadd.f32 0.0, %v5739
    %v5741 = vpop.f32.mrb[0].mxu0
    %5742 = vmatprep.mubr.f32.mxu0 0.0
    %5743 = vmatmul.mubr.f32.gmra.mrb[0].mxu0 %v2439
    %v5744 = vpop.f32.mrb[0].mxu0
    %v5745 = vadd.f32 0.0, %v5744
    %v5746 = vpop.f32.mrb[0].mxu0
    %5747 = vdwg.mxu0
    %s5748 = scalar_lea.vmem [#allocation4], 288
    %5749 = vst.msk [vmem:[%s5748] sm:$0xff] %vm42, %v5730
    %5750 = vst.msk [vmem:[%s5748 + $0x8] sm:$0xff] %vm42, %v5735
    %5751 = vst.msk [vmem:[%s5748 + $0x10] sm:$0xff] %vm42, %v5740
    %5752 = vst.msk [vmem:[%s5748 + $0x18] sm:$0xff] %vm42, %v5745
    %v5753 = vld [vmem:[%s2623] sm:$0xff]
    %v5754 = vld [vmem:[%s2623 + $0x8] sm:$0xff]
    %5755 = vmatprep.subr.mxu0 0.0
    %5756 = vmatpush1.msra.mxu0 %v5753
    %5757 = vmatprep.subr.mxu0 0.0
    %5758 = vmatpush1.msra.mxu0 %v5754
    %5759 = vmatprep.subr.mxu0 0.0
    %5760 = vmatpush1.msra.mxu0 0.0
    %5761 = vmatprep.subr.mxu0 0.0
    %5762 = vmatpush1.msra.mxu0 0.0
    %5763 = vmatprep.subr.mxu0 0.0
    %5764 = vmatpush1.msra.mxu0 0.0
    %5765 = vmatprep.subr.mxu0 0.0
    %5766 = vmatpush1.msra.mxu0 0.0
    %5767 = vmatprep.subr.mxu0 0.0
    %5768 = vmatpush1.msra.mxu0 0.0
    %5769 = vmatprep.subr.mxu0 0.0
    %5770 = vmatpush1.msra.mxu0 0.0
    %5771 = vmatprep.subr.mxu0 0.0
    %5772 = vmatpush1.msra.mxu0 0.0
    %5773 = vmatprep.subr.mxu0 0.0
    %5774 = vmatpush1.msra.mxu0 0.0
    %5775 = vmatprep.subr.mxu0 0.0
    %5776 = vmatpush1.msra.mxu0 0.0
    %5777 = vmatprep.subr.mxu0 0.0
    %5778 = vmatpush1.msra.mxu0 0.0
    %5779 = vmatprep.subr.mxu0 0.0
    %5780 = vmatpush1.msra.mxu0 0.0
    %5781 = vmatprep.subr.mxu0 0.0
    %5782 = vmatpush1.msra.mxu0 0.0
    %5783 = vmatprep.subr.mxu0 0.0
    %5784 = vmatpush1.msra.mxu0 0.0
    %5785 = vmatprep.subr.mxu0 0.0
    %5786 = vmatpush1.msra.mxu0 0.0
    %5787 = vmatprep.subr.mxu0 0.0
    %5788 = vmatpush1.msra.mxu0 0.0
    %5789 = vmatprep.subr.mxu0 0.0
    %5790 = vmatpush1.msra.mxu0 0.0
    %5791 = vmatprep.subr.mxu0 0.0
    %5792 = vmatpush1.msra.mxu0 0.0
    %5793 = vmatprep.subr.mxu0 0.0
    %5794 = vmatpush1.msra.mxu0 0.0
    %5795 = vmatprep.subr.mxu0 0.0
    %5796 = vmatpush1.msra.mxu0 0.0
    %5797 = vmatprep.subr.mxu0 0.0
    %5798 = vmatpush1.msra.mxu0 0.0
    %5799 = vmatprep.subr.mxu0 0.0
    %5800 = vmatpush1.msra.mxu0 0.0
    %5801 = vmatprep.subr.mxu0 0.0
    %5802 = vmatpush1.msra.mxu0 0.0
    %5803 = vmatprep.subr.mxu0 0.0
    %5804 = vmatpush1.msra.mxu0 0.0
    %5805 = vmatprep.subr.mxu0 0.0
    %5806 = vmatpush1.msra.mxu0 0.0
    %5807 = vmatprep.subr.mxu0 0.0
    %5808 = vmatpush1.msra.mxu0 0.0
    %5809 = vmatprep.subr.mxu0 0.0
    %5810 = vmatpush1.msra.mxu0 0.0
    %5811 = vmatprep.subr.mxu0 0.0
    %5812 = vmatpush1.msra.mxu0 0.0
    %5813 = vmatprep.subr.mxu0 0.0
    %5814 = vmatpush1.msra.mxu0 0.0
    %5815 = vmatprep.subr.mxu0 0.0
    %5816 = vmatpush1.msra.mxu0 0.0
    %5817 = vmatprep.subr.mxu0 0.0
    %5818 = vmatpush1.msra.mxu0 0.0
    %5819 = vmatprep.mubr.f32.mxu0 0.0
    %5820 = vmatmul.mubr.f32.gmra.mrb[0].mxu0 %v2430
    %v5821 = vpop.f32.mrb[0].mxu0
    %v5822 = vadd.f32 0.0, %v5821
    %v5823 = vpop.f32.mrb[0].mxu0
    %5824 = vmatprep.mubr.f32.mxu0 0.0
    %5825 = vmatmul.mubr.f32.gmra.mrb[0].mxu0 %v2433
    %v5826 = vpop.f32.mrb[0].mxu0
    %v5827 = vadd.f32 0.0, %v5826
    %v5828 = vpop.f32.mrb[0].mxu0
    %5829 = vmatprep.mubr.f32.mxu0 0.0
    %5830 = vmatmul.mubr.f32.gmra.mrb[0].mxu0 %v2436
    %v5831 = vpop.f32.mrb[0].mxu0
    %v5832 = vadd.f32 0.0, %v5831
    %v5833 = vpop.f32.mrb[0].mxu0
    %5834 = vmatprep.mubr.f32.mxu0 0.0
    %5835 = vmatmul.mubr.f32.gmra.mrb[0].mxu0 %v2439
    %v5836 = vpop.f32.mrb[0].mxu0
    %v5837 = vadd.f32 0.0, %v5836
    %v5838 = vpop.f32.mrb[0].mxu0
    %5839 = vdwg.mxu0
    %s5840 = scalar_lea.vmem [#allocation4], 320
    %5841 = vst.msk [vmem:[%s5840] sm:$0xff] %vm42, %v5822
    %5842 = vst.msk [vmem:[%s5840 + $0x8] sm:$0xff] %vm42, %v5827
    %5843 = vst.msk [vmem:[%s5840 + $0x10] sm:$0xff] %vm42, %v5832
    %5844 = vst.msk [vmem:[%s5840 + $0x18] sm:$0xff] %vm42, %v5837
    %v5845 = vld [vmem:[%s2716] sm:$0xff]
    %v5846 = vld [vmem:[%s2716 + $0x8] sm:$0xff]
    %5847 = vmatprep.subr.mxu0 0.0
    %5848 = vmatpush1.msra.mxu0 %v5845
    %5849 = vmatprep.subr.mxu0 0.0
    %5850 = vmatpush1.msra.mxu0 %v5846
    %5851 = vmatprep.subr.mxu0 0.0
    %5852 = vmatpush1.msra.mxu0 0.0
    %5853 = vmatprep.subr.mxu0 0.0
    %5854 = vmatpush1.msra.mxu0 0.0
    %5855 = vmatprep.subr.mxu0 0.0
    %5856 = vmatpush1.msra.mxu0 0.0
    %5857 = vmatprep.subr.mxu0 0.0
    %5858 = vmatpush1.msra.mxu0 0.0
    %5859 = vmatprep.subr.mxu0 0.0
    %5860 = vmatpush1.msra.mxu0 0.0
    %5861 = vmatprep.subr.mxu0 0.0
    %5862 = vmatpush1.msra.mxu0 0.0
    %5863 = vmatprep.subr.mxu0 0.0
    %5864 = vmatpush1.msra.mxu0 0.0
    %5865 = vmatprep.subr.mxu0 0.0
    %5866 = vmatpush1.msra.mxu0 0.0
    %5867 = vmatprep.subr.mxu0 0.0
    %5868 = vmatpush1.msra.mxu0 0.0
    %5869 = vmatprep.subr.mxu0 0.0
    %5870 = vmatpush1.msra.mxu0 0.0
    %5871 = vmatprep.subr.mxu0 0.0
    %5872 = vmatpush1.msra.mxu0 0.0
    %5873 = vmatprep.subr.mxu0 0.0
    %5874 = vmatpush1.msra.mxu0 0.0
    %5875 = vmatprep.subr.mxu0 0.0
    %5876 = vmatpush1.msra.mxu0 0.0
    %5877 = vmatprep.subr.mxu0 0.0
    %5878 = vmatpush1.msra.mxu0 0.0
    %5879 = vmatprep.subr.mxu0 0.0
    %5880 = vmatpush1.msra.mxu0 0.0
    %5881 = vmatprep.subr.mxu0 0.0
    %5882 = vmatpush1.msra.mxu0 0.0
    %5883 = vmatprep.subr.mxu0 0.0
    %5884 = vmatpush1.msra.mxu0 0.0
    %5885 = vmatprep.subr.mxu0 0.0
    %5886 = vmatpush1.msra.mxu0 0.0
    %5887 = vmatprep.subr.mxu0 0.0
    %5888 = vmatpush1.msra.mxu0 0.0
    %5889 = vmatprep.subr.mxu0 0.0
    %5890 = vmatpush1.msra.mxu0 0.0
    %5891 = vmatprep.subr.mxu0 0.0
    %5892 = vmatpush1.msra.mxu0 0.0
    %5893 = vmatprep.subr.mxu0 0.0
    %5894 = vmatpush1.msra.mxu0 0.0
    %5895 = vmatprep.subr.mxu0 0.0
    %5896 = vmatpush1.msra.mxu0 0.0
    %5897 = vmatprep.subr.mxu0 0.0
    %5898 = vmatpush1.msra.mxu0 0.0
    %5899 = vmatprep.subr.mxu0 0.0
    %5900 = vmatpush1.msra.mxu0 0.0
    %5901 = vmatprep.subr.mxu0 0.0
    %5902 = vmatpush1.msra.mxu0 0.0
    %5903 = vmatprep.subr.mxu0 0.0
    %5904 = vmatpush1.msra.mxu0 0.0
    %5905 = vmatprep.subr.mxu0 0.0
    %5906 = vmatpush1.msra.mxu0 0.0
    %5907 = vmatprep.subr.mxu0 0.0
    %5908 = vmatpush1.msra.mxu0 0.0
    %5909 = vmatprep.subr.mxu0 0.0
    %5910 = vmatpush1.msra.mxu0 0.0
    %5911 = vmatprep.mubr.f32.mxu0 0.0
    %5912 = vmatmul.mubr.f32.gmra.mrb[0].mxu0 %v2430
    %v5913 = vpop.f32.mrb[0].mxu0
    %v5914 = vadd.f32 0.0, %v5913
    %v5915 = vpop.f32.mrb[0].mxu0
    %5916 = vmatprep.mubr.f32.mxu0 0.0
    %5917 = vmatmul.mubr.f32.gmra.mrb[0].mxu0 %v2433
    %v5918 = vpop.f32.mrb[0].mxu0
    %v5919 = vadd.f32 0.0, %v5918
    %v5920 = vpop.f32.mrb[0].mxu0
    %5921 = vmatprep.mubr.f32.mxu0 0.0
    %5922 = vmatmul.mubr.f32.gmra.mrb[0].mxu0 %v2436
    %v5923 = vpop.f32.mrb[0].mxu0
    %v5924 = vadd.f32 0.0, %v5923
    %v5925 = vpop.f32.mrb[0].mxu0
    %5926 = vmatprep.mubr.f32.mxu0 0.0
    %5927 = vmatmul.mubr.f32.gmra.mrb[0].mxu0 %v2439
    %v5928 = vpop.f32.mrb[0].mxu0
    %v5929 = vadd.f32 0.0, %v5928
    %v5930 = vpop.f32.mrb[0].mxu0
    %5931 = vdwg.mxu0
    %s5932 = scalar_lea.vmem [#allocation4], 352
    %5933 = vst.msk [vmem:[%s5932] sm:$0xff] %vm42, %v5914
    %5934 = vst.msk [vmem:[%s5932 + $0x8] sm:$0xff] %vm42, %v5919
    %5935 = vst.msk [vmem:[%s5932 + $0x10] sm:$0xff] %vm42, %v5924
    %5936 = vst.msk [vmem:[%s5932 + $0x18] sm:$0xff] %vm42, %v5929
    %v5937 = vld [vmem:[%s2809] sm:$0xff]
    %v5938 = vld [vmem:[%s2809 + $0x8] sm:$0xff]
    %5939 = vmatprep.subr.mxu0 0.0
    %5940 = vmatpush1.msra.mxu0 %v5937
    %5941 = vmatprep.subr.mxu0 0.0
    %5942 = vmatpush1.msra.mxu0 %v5938
    %5943 = vmatprep.subr.mxu0 0.0
    %5944 = vmatpush1.msra.mxu0 0.0
    %5945 = vmatprep.subr.mxu0 0.0
    %5946 = vmatpush1.msra.mxu0 0.0
    %5947 = vmatprep.subr.mxu0 0.0
    %5948 = vmatpush1.msra.mxu0 0.0
    %5949 = vmatprep.subr.mxu0 0.0
    %5950 = vmatpush1.msra.mxu0 0.0
    %5951 = vmatprep.subr.mxu0 0.0
    %5952 = vmatpush1.msra.mxu0 0.0
    %5953 = vmatprep.subr.mxu0 0.0
    %5954 = vmatpush1.msra.mxu0 0.0
    %5955 = vmatprep.subr.mxu0 0.0
    %5956 = vmatpush1.msra.mxu0 0.0
    %5957 = vmatprep.subr.mxu0 0.0
    %5958 = vmatpush1.msra.mxu0 0.0
    %5959 = vmatprep.subr.mxu0 0.0
    %5960 = vmatpush1.msra.mxu0 0.0
    %5961 = vmatprep.subr.mxu0 0.0
    %5962 = vmatpush1.msra.mxu0 0.0
    %5963 = vmatprep.subr.mxu0 0.0
    %5964 = vmatpush1.msra.mxu0 0.0
    %5965 = vmatprep.subr.mxu0 0.0
    %5966 = vmatpush1.msra.mxu0 0.0
    %5967 = vmatprep.subr.mxu0 0.0
    %5968 = vmatpush1.msra.mxu0 0.0
    %5969 = vmatprep.subr.mxu0 0.0
    %5970 = vmatpush1.msra.mxu0 0.0
    %5971 = vmatprep.subr.mxu0 0.0
    %5972 = vmatpush1.msra.mxu0 0.0
    %5973 = vmatprep.subr.mxu0 0.0
    %5974 = vmatpush1.msra.mxu0 0.0
    %5975 = vmatprep.subr.mxu0 0.0
    %5976 = vmatpush1.msra.mxu0 0.0
    %5977 = vmatprep.subr.mxu0 0.0
    %5978 = vmatpush1.msra.mxu0 0.0
    %5979 = vmatprep.subr.mxu0 0.0
    %5980 = vmatpush1.msra.mxu0 0.0
    %5981 = vmatprep.subr.mxu0 0.0
    %5982 = vmatpush1.msra.mxu0 0.0
    %5983 = vmatprep.subr.mxu0 0.0
    %5984 = vmatpush1.msra.mxu0 0.0
    %5985 = vmatprep.subr.mxu0 0.0
    %5986 = vmatpush1.msra.mxu0 0.0
    %5987 = vmatprep.subr.mxu0 0.0
    %5988 = vmatpush1.msra.mxu0 0.0
    %5989 = vmatprep.subr.mxu0 0.0
    %5990 = vmatpush1.msra.mxu0 0.0
    %5991 = vmatprep.subr.mxu0 0.0
    %5992 = vmatpush1.msra.mxu0 0.0
    %5993 = vmatprep.subr.mxu0 0.0
    %5994 = vmatpush1.msra.mxu0 0.0
    %5995 = vmatprep.subr.mxu0 0.0
    %5996 = vmatpush1.msra.mxu0 0.0
    %5997 = vmatprep.subr.mxu0 0.0
    %5998 = vmatpush1.msra.mxu0 0.0
    %5999 = vmatprep.subr.mxu0 0.0
    %6000 = vmatpush1.msra.mxu0 0.0
    %6001 = vmatprep.subr.mxu0 0.0
    %6002 = vmatpush1.msra.mxu0 0.0
    %6003 = vmatprep.mubr.f32.mxu0 0.0
    %6004 = vmatmul.mubr.f32.gmra.mrb[0].mxu0 %v2430
    %v6005 = vpop.f32.mrb[0].mxu0
    %v6006 = vadd.f32 0.0, %v6005
    %v6007 = vpop.f32.mrb[0].mxu0
    %6008 = vmatprep.mubr.f32.mxu0 0.0
    %6009 = vmatmul.mubr.f32.gmra.mrb[0].mxu0 %v2433
    %v6010 = vpop.f32.mrb[0].mxu0
    %v6011 = vadd.f32 0.0, %v6010
    %v6012 = vpop.f32.mrb[0].mxu0
    %6013 = vmatprep.mubr.f32.mxu0 0.0
    %6014 = vmatmul.mubr.f32.gmra.mrb[0].mxu0 %v2436
    %v6015 = vpop.f32.mrb[0].mxu0
    %v6016 = vadd.f32 0.0, %v6015
    %v6017 = vpop.f32.mrb[0].mxu0
    %6018 = vmatprep.mubr.f32.mxu0 0.0
    %6019 = vmatmul.mubr.f32.gmra.mrb[0].mxu0 %v2439
    %v6020 = vpop.f32.mrb[0].mxu0
    %v6021 = vadd.f32 0.0, %v6020
    %v6022 = vpop.f32.mrb[0].mxu0
    %6023 = vdwg.mxu0
    %s6024 = scalar_lea.vmem [#allocation4], 384
    %6025 = vst.msk [vmem:[%s6024] sm:$0xff] %vm42, %v6006
    %6026 = vst.msk [vmem:[%s6024 + $0x8] sm:$0xff] %vm42, %v6011
    %6027 = vst.msk [vmem:[%s6024 + $0x10] sm:$0xff] %vm42, %v6016
    %6028 = vst.msk [vmem:[%s6024 + $0x18] sm:$0xff] %vm42, %v6021
    %v6029 = vld [vmem:[%s2902] sm:$0xff]
    %v6030 = vld [vmem:[%s2902 + $0x8] sm:$0xff]
    %6031 = vmatprep.subr.mxu0 0.0
    %6032 = vmatpush1.msra.mxu0 %v6029
    %6033 = vmatprep.subr.mxu0 0.0
    %6034 = vmatpush1.msra.mxu0 %v6030
    %6035 = vmatprep.subr.mxu0 0.0
    %6036 = vmatpush1.msra.mxu0 0.0
    %6037 = vmatprep.subr.mxu0 0.0
    %6038 = vmatpush1.msra.mxu0 0.0
    %6039 = vmatprep.subr.mxu0 0.0
    %6040 = vmatpush1.msra.mxu0 0.0
    %6041 = vmatprep.subr.mxu0 0.0
    %6042 = vmatpush1.msra.mxu0 0.0
    %6043 = vmatprep.subr.mxu0 0.0
    %6044 = vmatpush1.msra.mxu0 0.0
    %6045 = vmatprep.subr.mxu0 0.0
    %6046 = vmatpush1.msra.mxu0 0.0
    %6047 = vmatprep.subr.mxu0 0.0
    %6048 = vmatpush1.msra.mxu0 0.0
    %6049 = vmatprep.subr.mxu0 0.0
    %6050 = vmatpush1.msra.mxu0 0.0
    %6051 = vmatprep.subr.mxu0 0.0
    %6052 = vmatpush1.msra.mxu0 0.0
    %6053 = vmatprep.subr.mxu0 0.0
    %6054 = vmatpush1.msra.mxu0 0.0
    %6055 = vmatprep.subr.mxu0 0.0
    %6056 = vmatpush1.msra.mxu0 0.0
    %6057 = vmatprep.subr.mxu0 0.0
    %6058 = vmatpush1.msra.mxu0 0.0
    %6059 = vmatprep.subr.mxu0 0.0
    %6060 = vmatpush1.msra.mxu0 0.0
    %6061 = vmatprep.subr.mxu0 0.0
    %6062 = vmatpush1.msra.mxu0 0.0
    %6063 = vmatprep.subr.mxu0 0.0
    %6064 = vmatpush1.msra.mxu0 0.0
    %6065 = vmatprep.subr.mxu0 0.0
    %6066 = vmatpush1.msra.mxu0 0.0
    %6067 = vmatprep.subr.mxu0 0.0
    %6068 = vmatpush1.msra.mxu0 0.0
    %6069 = vmatprep.subr.mxu0 0.0
    %6070 = vmatpush1.msra.mxu0 0.0
    %6071 = vmatprep.subr.mxu0 0.0
    %6072 = vmatpush1.msra.mxu0 0.0
    %6073 = vmatprep.subr.mxu0 0.0
    %6074 = vmatpush1.msra.mxu0 0.0
    %6075 = vmatprep.subr.mxu0 0.0
    %6076 = vmatpush1.msra.mxu0 0.0
    %6077 = vmatprep.subr.mxu0 0.0
    %6078 = vmatpush1.msra.mxu0 0.0
    %6079 = vmatprep.subr.mxu0 0.0
    %6080 = vmatpush1.msra.mxu0 0.0
    %6081 = vmatprep.subr.mxu0 0.0
    %6082 = vmatpush1.msra.mxu0 0.0
    %6083 = vmatprep.subr.mxu0 0.0
    %6084 = vmatpush1.msra.mxu0 0.0
    %6085 = vmatprep.subr.mxu0 0.0
    %6086 = vmatpush1.msra.mxu0 0.0
    %6087 = vmatprep.subr.mxu0 0.0
    %6088 = vmatpush1.msra.mxu0 0.0
    %6089 = vmatprep.subr.mxu0 0.0
    %6090 = vmatpush1.msra.mxu0 0.0
    %6091 = vmatprep.subr.mxu0 0.0
    %6092 = vmatpush1.msra.mxu0 0.0
    %6093 = vmatprep.subr.mxu0 0.0
    %6094 = vmatpush1.msra.mxu0 0.0
    %6095 = vmatprep.mubr.f32.mxu0 0.0
    %6096 = vmatmul.mubr.f32.gmra.mrb[0].mxu0 %v2430
    %v6097 = vpop.f32.mrb[0].mxu0
    %v6098 = vadd.f32 0.0, %v6097
    %v6099 = vpop.f32.mrb[0].mxu0
    %6100 = vmatprep.mubr.f32.mxu0 0.0
    %6101 = vmatmul.mubr.f32.gmra.mrb[0].mxu0 %v2433
    %v6102 = vpop.f32.mrb[0].mxu0
    %v6103 = vadd.f32 0.0, %v6102
    %v6104 = vpop.f32.mrb[0].mxu0
    %6105 = vmatprep.mubr.f32.mxu0 0.0
    %6106 = vmatmul.mubr.f32.gmra.mrb[0].mxu0 %v2436
    %v6107 = vpop.f32.mrb[0].mxu0
    %v6108 = vadd.f32 0.0, %v6107
    %v6109 = vpop.f32.mrb[0].mxu0
    %6110 = vmatprep.mubr.f32.mxu0 0.0
    %6111 = vmatmul.mubr.f32.gmra.mrb[0].mxu0 %v2439
    %v6112 = vpop.f32.mrb[0].mxu0
    %v6113 = vadd.f32 0.0, %v6112
    %v6114 = vpop.f32.mrb[0].mxu0
    %6115 = vdwg.mxu0
    %s6116 = scalar_lea.vmem [#allocation4], 416
    %6117 = vst.msk [vmem:[%s6116] sm:$0xff] %vm42, %v6098
    %6118 = vst.msk [vmem:[%s6116 + $0x8] sm:$0xff] %vm42, %v6103
    %6119 = vst.msk [vmem:[%s6116 + $0x10] sm:$0xff] %vm42, %v6108
    %6120 = vst.msk [vmem:[%s6116 + $0x18] sm:$0xff] %vm42, %v6113
    %v6121 = vld [vmem:[%s2995] sm:$0xff]
    %v6122 = vld [vmem:[%s2995 + $0x8] sm:$0xff]
    %6123 = vmatprep.subr.mxu0 0.0
    %6124 = vmatpush1.msra.mxu0 %v6121
    %6125 = vmatprep.subr.mxu0 0.0
    %6126 = vmatpush1.msra.mxu0 %v6122
    %6127 = vmatprep.subr.mxu0 0.0
    %6128 = vmatpush1.msra.mxu0 0.0
    %6129 = vmatprep.subr.mxu0 0.0
    %6130 = vmatpush1.msra.mxu0 0.0
    %6131 = vmatprep.subr.mxu0 0.0
    %6132 = vmatpush1.msra.mxu0 0.0
    %6133 = vmatprep.subr.mxu0 0.0
    %6134 = vmatpush1.msra.mxu0 0.0
    %6135 = vmatprep.subr.mxu0 0.0
    %6136 = vmatpush1.msra.mxu0 0.0
    %6137 = vmatprep.subr.mxu0 0.0
    %6138 = vmatpush1.msra.mxu0 0.0
    %6139 = vmatprep.subr.mxu0 0.0
    %6140 = vmatpush1.msra.mxu0 0.0
    %6141 = vmatprep.subr.mxu0 0.0
    %6142 = vmatpush1.msra.mxu0 0.0
    %6143 = vmatprep.subr.mxu0 0.0
    %6144 = vmatpush1.msra.mxu0 0.0
    %6145 = vmatprep.subr.mxu0 0.0
    %6146 = vmatpush1.msra.mxu0 0.0
    %6147 = vmatprep.subr.mxu0 0.0
    %6148 = vmatpush1.msra.mxu0 0.0
    %6149 = vmatprep.subr.mxu0 0.0
    %6150 = vmatpush1.msra.mxu0 0.0
    %6151 = vmatprep.subr.mxu0 0.0
    %6152 = vmatpush1.msra.mxu0 0.0
    %6153 = vmatprep.subr.mxu0 0.0
    %6154 = vmatpush1.msra.mxu0 0.0
    %6155 = vmatprep.subr.mxu0 0.0
    %6156 = vmatpush1.msra.mxu0 0.0
    %6157 = vmatprep.subr.mxu0 0.0
    %6158 = vmatpush1.msra.mxu0 0.0
    %6159 = vmatprep.subr.mxu0 0.0
    %6160 = vmatpush1.msra.mxu0 0.0
    %6161 = vmatprep.subr.mxu0 0.0
    %6162 = vmatpush1.msra.mxu0 0.0
    %6163 = vmatprep.subr.mxu0 0.0
    %6164 = vmatpush1.msra.mxu0 0.0
    %6165 = vmatprep.subr.mxu0 0.0
    %6166 = vmatpush1.msra.mxu0 0.0
    %6167 = vmatprep.subr.mxu0 0.0
    %6168 = vmatpush1.msra.mxu0 0.0
    %6169 = vmatprep.subr.mxu0 0.0
    %6170 = vmatpush1.msra.mxu0 0.0
    %6171 = vmatprep.subr.mxu0 0.0
    %6172 = vmatpush1.msra.mxu0 0.0
    %6173 = vmatprep.subr.mxu0 0.0
    %6174 = vmatpush1.msra.mxu0 0.0
    %6175 = vmatprep.subr.mxu0 0.0
    %6176 = vmatpush1.msra.mxu0 0.0
    %6177 = vmatprep.subr.mxu0 0.0
    %6178 = vmatpush1.msra.mxu0 0.0
    %6179 = vmatprep.subr.mxu0 0.0
    %6180 = vmatpush1.msra.mxu0 0.0
    %6181 = vmatprep.subr.mxu0 0.0
    %6182 = vmatpush1.msra.mxu0 0.0
    %6183 = vmatprep.subr.mxu0 0.0
    %6184 = vmatpush1.msra.mxu0 0.0
    %6185 = vmatprep.subr.mxu0 0.0
    %6186 = vmatpush1.msra.mxu0 0.0
    %6187 = vmatprep.mubr.f32.mxu0 0.0
    %6188 = vmatmul.mubr.f32.gmra.mrb[0].mxu0 %v2430
    %v6189 = vpop.f32.mrb[0].mxu0
    %v6190 = vadd.f32 0.0, %v6189
    %v6191 = vpop.f32.mrb[0].mxu0
    %6192 = vmatprep.mubr.f32.mxu0 0.0
    %6193 = vmatmul.mubr.f32.gmra.mrb[0].mxu0 %v2433
    %v6194 = vpop.f32.mrb[0].mxu0
    %v6195 = vadd.f32 0.0, %v6194
    %v6196 = vpop.f32.mrb[0].mxu0
    %6197 = vmatprep.mubr.f32.mxu0 0.0
    %6198 = vmatmul.mubr.f32.gmra.mrb[0].mxu0 %v2436
    %v6199 = vpop.f32.mrb[0].mxu0
    %v6200 = vadd.f32 0.0, %v6199
    %v6201 = vpop.f32.mrb[0].mxu0
    %6202 = vmatprep.mubr.f32.mxu0 0.0
    %6203 = vmatmul.mubr.f32.gmra.mrb[0].mxu0 %v2439
    %v6204 = vpop.f32.mrb[0].mxu0
    %v6205 = vadd.f32 0.0, %v6204
    %v6206 = vpop.f32.mrb[0].mxu0
    %6207 = vdwg.mxu0
    %s6208 = scalar_lea.vmem [#allocation4], 448
    %6209 = vst.msk [vmem:[%s6208] sm:$0xff] %vm42, %v6190
    %6210 = vst.msk [vmem:[%s6208 + $0x8] sm:$0xff] %vm42, %v6195
    %6211 = vst.msk [vmem:[%s6208 + $0x10] sm:$0xff] %vm42, %v6200
    %6212 = vst.msk [vmem:[%s6208 + $0x18] sm:$0xff] %vm42, %v6205
    %v6213 = vld [vmem:[%s3088] sm:$0xff]
    %v6214 = vld [vmem:[%s3088 + $0x8] sm:$0xff]
    %6215 = vmatprep.subr.mxu0 0.0
    %6216 = vmatpush1.msra.mxu0 %v6213
    %6217 = vmatprep.subr.mxu0 0.0
    %6218 = vmatpush1.msra.mxu0 %v6214
    %6219 = vmatprep.subr.mxu0 0.0
    %6220 = vmatpush1.msra.mxu0 0.0
    %6221 = vmatprep.subr.mxu0 0.0
    %6222 = vmatpush1.msra.mxu0 0.0
    %6223 = vmatprep.subr.mxu0 0.0
    %6224 = vmatpush1.msra.mxu0 0.0
    %6225 = vmatprep.subr.mxu0 0.0
    %6226 = vmatpush1.msra.mxu0 0.0
    %6227 = vmatprep.subr.mxu0 0.0
    %6228 = vmatpush1.msra.mxu0 0.0
    %6229 = vmatprep.subr.mxu0 0.0
    %6230 = vmatpush1.msra.mxu0 0.0
    %6231 = vmatprep.subr.mxu0 0.0
    %6232 = vmatpush1.msra.mxu0 0.0
    %6233 = vmatprep.subr.mxu0 0.0
    %6234 = vmatpush1.msra.mxu0 0.0
    %6235 = vmatprep.subr.mxu0 0.0
    %6236 = vmatpush1.msra.mxu0 0.0
    %6237 = vmatprep.subr.mxu0 0.0
    %6238 = vmatpush1.msra.mxu0 0.0
    %6239 = vmatprep.subr.mxu0 0.0
    %6240 = vmatpush1.msra.mxu0 0.0
    %6241 = vmatprep.subr.mxu0 0.0
    %6242 = vmatpush1.msra.mxu0 0.0
    %6243 = vmatprep.subr.mxu0 0.0
    %6244 = vmatpush1.msra.mxu0 0.0
    %6245 = vmatprep.subr.mxu0 0.0
    %6246 = vmatpush1.msra.mxu0 0.0
    %6247 = vmatprep.subr.mxu0 0.0
    %6248 = vmatpush1.msra.mxu0 0.0
    %6249 = vmatprep.subr.mxu0 0.0
    %6250 = vmatpush1.msra.mxu0 0.0
    %6251 = vmatprep.subr.mxu0 0.0
    %6252 = vmatpush1.msra.mxu0 0.0
    %6253 = vmatprep.subr.mxu0 0.0
    %6254 = vmatpush1.msra.mxu0 0.0
    %6255 = vmatprep.subr.mxu0 0.0
    %6256 = vmatpush1.msra.mxu0 0.0
    %6257 = vmatprep.subr.mxu0 0.0
    %6258 = vmatpush1.msra.mxu0 0.0
    %6259 = vmatprep.subr.mxu0 0.0
    %6260 = vmatpush1.msra.mxu0 0.0
    %6261 = vmatprep.subr.mxu0 0.0
    %6262 = vmatpush1.msra.mxu0 0.0
    %6263 = vmatprep.subr.mxu0 0.0
    %6264 = vmatpush1.msra.mxu0 0.0
    %6265 = vmatprep.subr.mxu0 0.0
    %6266 = vmatpush1.msra.mxu0 0.0
    %6267 = vmatprep.subr.mxu0 0.0
    %6268 = vmatpush1.msra.mxu0 0.0
    %6269 = vmatprep.subr.mxu0 0.0
    %6270 = vmatpush1.msra.mxu0 0.0
    %6271 = vmatprep.subr.mxu0 0.0
    %6272 = vmatpush1.msra.mxu0 0.0
    %6273 = vmatprep.subr.mxu0 0.0
    %6274 = vmatpush1.msra.mxu0 0.0
    %6275 = vmatprep.subr.mxu0 0.0
    %6276 = vmatpush1.msra.mxu0 0.0
    %6277 = vmatprep.subr.mxu0 0.0
    %6278 = vmatpush1.msra.mxu0 0.0
    %6279 = vmatprep.mubr.f32.mxu0 0.0
    %6280 = vmatmul.mubr.f32.gmra.mrb[0].mxu0 %v2430
    %v6281 = vpop.f32.mrb[0].mxu0
    %v6282 = vadd.f32 0.0, %v6281
    %v6283 = vpop.f32.mrb[0].mxu0
    %6284 = vmatprep.mubr.f32.mxu0 0.0
    %6285 = vmatmul.mubr.f32.gmra.mrb[0].mxu0 %v2433
    %v6286 = vpop.f32.mrb[0].mxu0
    %v6287 = vadd.f32 0.0, %v6286
    %v6288 = vpop.f32.mrb[0].mxu0
    %6289 = vmatprep.mubr.f32.mxu0 0.0
    %6290 = vmatmul.mubr.f32.gmra.mrb[0].mxu0 %v2436
    %v6291 = vpop.f32.mrb[0].mxu0
    %v6292 = vadd.f32 0.0, %v6291
    %v6293 = vpop.f32.mrb[0].mxu0
    %6294 = vmatprep.mubr.f32.mxu0 0.0
    %6295 = vmatmul.mubr.f32.gmra.mrb[0].mxu0 %v2439
    %v6296 = vpop.f32.mrb[0].mxu0
    %v6297 = vadd.f32 0.0, %v6296
    %v6298 = vpop.f32.mrb[0].mxu0
    %6299 = vdwg.mxu0
    %s6300 = scalar_lea.vmem [#allocation4], 480
    %6301 = vst.msk [vmem:[%s6300] sm:$0xff] %vm42, %v6282
    %6302 = vst.msk [vmem:[%s6300 + $0x8] sm:$0xff] %vm42, %v6287
    %6303 = vst.msk [vmem:[%s6300 + $0x10] sm:$0xff] %vm42, %v6292
    %6304 = vst.msk [vmem:[%s6300 + $0x18] sm:$0xff] %vm42, %v6297
    // Predicated region
    $region22: #{resize_and_classify.1} parent=1 // pred_check
      _
    $region23: #{resize_and_classify.1} parent=1 // pred_check_branch
      %6306 = sbr.rel (0) target = $region25
    $region24: #{resize_and_classify.1} parent=1 // pred_region
      %s6308 = ssub.s32 8192, 8192
      %6309 = vsyncadd [#allocation5], %s6308
      %s6310 = sshll.u32 [#allocation4], 4
      %s6311 = int_to_ptr.vmem [resolvable:$true] %s6310
      %6316 = dma.vmem_to_hbm [thread:$0]  %s6311, 8192, %s5, [#allocation5], 128, 128, 8
    $region25: #{resize_and_classify.1} parent=1 // pred_fallthru
      _
    // Predicated region
    $region26: #{resize_and_classify.1} parent=1 // pred_check
      _
    $region27: #{resize_and_classify.1} parent=1 // pred_check_branch
      %6318 = sbr.rel (0) target = $region29
    $region28: #{resize_and_classify.1} parent=1 // pred_region
      %6319 = dma.done [#allocation5], 8192
    $region29: #{resize_and_classify.1} parent=1 // pred_fallthru
      _
    %6320 = vsyncpa [#allocation5], 1

</llo_original>
